<compile_context>
chip_gen: v7x
topology: tpu7x:2x2x1
jax: 0.10.0
libtpu: 0.0.40
codegen_flags: <defaults>
</compile_context>

<pallas_src>
import numpy as np
import jax
import jax.numpy as jnp
from jax import lax
from jax.experimental import pallas as pl
from jax.experimental.pallas import tpu as pltpu

# ---------------------------------------------------------------------------
# Geometry for MNIST-shaped inputs: 28 -> 13 -> 5 -> 1   (kernel 4, stride 2)
K = 4                      # conv kernel size
S = 2                      # conv stride
H0 = 28                    # input spatial size
OH1 = (H0 - K) // S + 1    # 13
OH2 = (OH1 - K) // S + 1   # 5
OH3 = (OH2 - K) // S + 1   # 1
M1 = OH1 * OH1             # 169 layer-1 output positions per image
M1P = 176                  # padded to a multiple of 16 (bf16 sublane tile)
M2 = OH2 * OH2             # 25 layer-2 output positions per image
M2P = 32                   # padded
NPOS = K * K               # 16 kernel offsets
LANES = 128                # per-image channel lane block
B = 4                      # images per grid step (batch tile)
BL = B * LANES             # lane width of the batched activations


# ---------------------------------------------------------------------------
# Fused per-step kernel: conv1+BN+LReLU -> conv2+BN+LReLU -> conv3, B images.
def _disc_fused_kernel(p_ref, w1_ref, r2_ref, w2_ref, w3p_ref, sel_ref, aff_ref, o_ref):
    f32 = jnp.float32
    bf16 = jnp.bfloat16

    # ---- layer 1: one matmul for all B images (block-diagonal W1) -----------
    y1 = jnp.dot(p_ref[...], w1_ref[...], preferred_element_type=f32)    # (M1P, BL)
    a1 = y1 + aff_ref[0:1, :]                                            # folded BN shift
    a1 = jnp.maximum(a1, 0.2 * a1)                                       # LeakyReLU(0.2)
    # NOTE: padded rows 169..175 of a1 equal lrelu(shift1); r2 never selects them.

    # ---- layer 2: spatial im2col gather = one selection matmul on the MXU ---
    q = jnp.dot(r2_ref[...], a1.astype(bf16), preferred_element_type=f32)  # (NPOS*M2P, BL)
    q = q.reshape(NPOS, M2P, BL).astype(bf16)

    # ---- layer 2: channel contraction, batched over the 16 kernel offsets ---
    w2v = w2_ref[...]                                                    # (NPOS, 128, 128)
    blocks = []
    for b in range(B):                                                   # static, lane-aligned
        qb = q[:, :, b * LANES:(b + 1) * LANES]                          # (NPOS, M2P, 128)
        yb = jnp.einsum('tpc,tco->tpo', qb, w2v,
                        preferred_element_type=f32)                      # batched matmul
        blocks.append(jnp.sum(yb, axis=0))                               # (M2P, 128)
    y2 = jnp.concatenate(blocks, axis=-1)                                # (M2P, BL)
    a2 = y2 + aff_ref[1:2, :]
    a2 = jnp.maximum(a2, 0.2 * a2)

    # ---- layer 3 (single 1x1 output position): elementwise * packed w3 ------
    z = (a2 * w3p_ref[...]).astype(bf16)                                 # (M2P, BL)
    zz = jnp.dot(z, sel_ref[...], preferred_element_type=f32)            # (M2P, 128) lane-block sums
    out = jnp.sum(zz, axis=0, keepdims=True) + aff_ref[2:3, 0:1]         # (1, 128); lane b = image b
    o_ref[...] = jnp.broadcast_to(out, o_ref.shape).astype(o_ref.dtype)  # dense (8,128) store


# ---------------------------------------------------------------------------
# Constant matrices (built once at trace time, numpy)
def _selection_matrix():
    """R2[t*M2P + pos, r] = 1 iff layer-2 output position pos reads layer-1 row r
    at kernel offset t=(kh,kw).  Padded a1 rows (>=169) are never selected."""
    r2 = np.zeros((NPOS * M2P, M1P), np.float32)
    for kh in range(K):
        for kw in range(K):
            t = kh * K + kw
            for oh in range(OH2):
                for ow in range(OH2):
                    pos = oh * OH2 + ow
                    r = (S * oh + kh) * OH1 + (S * ow + kw)
                    r2[t * M2P + pos, r] = 1.0
    return jnp.asarray(r2, jnp.bfloat16)


def _lane_block_sum_matrix():
    """sel[b*128+c, b] = 1: sums each per-image 128-lane block into lane b."""
    sel = np.zeros((BL, LANES), np.float32)
    for b in range(B):
        sel[b * LANES:(b + 1) * LANES, b] = 1.0
    return jnp.asarray(sel, jnp.bfloat16)


# ---------------------------------------------------------------------------
# Wrapper-side data prep (regular XLA, runs once per call)
def _im2col_layer1(x):
    """x: (N,1,28,28) f32 -> (NB, M1P, B*NPOS) bf16; lane index = b*16 + kernel_pos."""
    N = x.shape[0]
    cols = [x[:, 0, kh:kh + S * OH1:S, kw:kw + S * OH1:S]
            for kh in range(K) for kw in range(K)]                 # each (N, 13, 13)
    p = jnp.stack(cols, axis=-1).reshape(N, M1, NPOS)
    p = jnp.pad(p, ((0, 0), (0, M1P - M1), (0, 0)))
    nb = -(-N // B)
    p = jnp.pad(p, ((0, nb * B - N), (0, 0), (0, 0)))
    p = p.reshape(nb, B, M1P, NPOS).transpose(0, 2, 1, 3).reshape(nb, M1P, B * NPOS)
    return p.astype(jnp.bfloat16)


def _pack_weights(p, eps=1e-5):
    """Pad/reorder PyTorch-layout weights; fold eval-mode BN scales into them."""
    f32, bf16 = jnp.float32, jnp.bfloat16
    hc = p["w1"].shape[0]          # 16
    hc2 = p["w2"].shape[0]         # 32

    scale1 = p["g1"] / jnp.sqrt(1.0 + eps)
    shift1 = p["be1"] + p["b1"] * scale1
    scale2 = p["g2"] / jnp.sqrt(1.0 + eps)
    shift2 = p["be2"] + p["b2"] * scale2

    # layer-1 weight (BN scale folded into oc), block-diagonal over the B images
    w1k = p["w1"].reshape(hc, NPOS).T * scale1[None, :]          # (NPOS, hc)
    w1 = jnp.zeros((B * NPOS, BL), f32)
    for b in range(B):
        w1 = w1.at[b * NPOS:(b + 1) * NPOS, b * LANES:b * LANES + hc].set(w1k)

    # layer-2 per-kernel-offset weights (t, c, oc) with BN scale folded into oc
    w2 = jnp.zeros((NPOS, LANES, LANES), f32)
    for kh in range(K):
        for kw in range(K):
            t = kh * K + kw
            w2 = w2.at[t, :hc, :hc2].set(p["w2"][:, :, kh, kw].T * scale2[None, :])

    # layer-3 weights packed per layer-2 spatial row (row = kh*5+kw), tiled over images
    w3p = jnp.zeros((M2P, LANES), f32)
    for kh in range(K):
        for kw in range(K):
            w3p = w3p.at[kh * OH2 + kw, :hc2].set(p["w3"][0, :, kh, kw])
    w3p = jnp.tile(w3p, (1, B))                                   # (M2P, BL)

    # per-channel shifts (tiled over images) + conv3 bias
    row1 = jnp.zeros((LANES,), f32).at[:hc].set(shift1)
    row2 = jnp.zeros((LANES,), f32).at[:hc2].set(shift2)
    aff = jnp.zeros((8, BL), f32)
    aff = aff.at[0, :].set(jnp.tile(row1, (B,)))
    aff = aff.at[1, :].set(jnp.tile(row2, (B,)))
    aff = aff.at[2, :].set(p["b3"][0])
    return w1.astype(bf16), w2.astype(bf16), w3p, aff


@jax.jit
def discriminator_forward(x, p):
    """x: (N, 1, 28, 28) float32 NCHW -> (N, 1), same as the PyTorch module."""
    assert x.shape[1] == 1 and x.shape[2] == H0 and x.shape[3] == H0
    N = x.shape[0]
    nb = -(-N // B)

    patches = _im2col_layer1(x.astype(jnp.float32))               # (nb, M1P, B*16)
    w1, w2, w3p, aff = _pack_weights(p)
    r2 = _selection_matrix()
    sel = _lane_block_sum_matrix()

    flops = 2 * nb * (M1P * (B * NPOS) * BL                       # layer 1
                      + (NPOS * M2P) * M1P * BL                   # layer-2 gather
                      + B * NPOS * M2P * LANES * LANES            # layer-2 contraction
                      + M2P * BL * LANES)                         # layer-3 lane sums
    bytes_accessed = int(2 * (patches.size + w1.size + w2.size + r2.size + sel.size)
                         + 4 * (w3p.size + aff.size) + 4 * nb * 8 * LANES)

    out = pl.pallas_call(
        _disc_fused_kernel,
        out_shape=jax.ShapeDtypeStruct((nb, 8, LANES), jnp.float32),
        grid=(nb,),
        in_specs=[
            pl.BlockSpec((None, M1P, B * NPOS), lambda s: (s, 0, 0)),   # patches (streamed)
            pl.BlockSpec((B * NPOS, BL), lambda s: (0, 0)),             # W1 (block-diag)
            pl.BlockSpec((NPOS * M2P, M1P), lambda s: (0, 0)),          # R2 gather matrix
            pl.BlockSpec((NPOS, LANES, LANES), lambda s: (0, 0, 0)),    # W2
            pl.BlockSpec((M2P, BL), lambda s: (0, 0)),                  # W3 packed
            pl.BlockSpec((BL, LANES), lambda s: (0, 0)),                # lane-block sum matrix
            pl.BlockSpec((8, BL), lambda s: (0, 0)),                    # shifts + conv3 bias
        ],
        out_specs=pl.BlockSpec((None, 8, LANES), lambda s: (s, 0, 0)),
        compiler_params=pltpu.CompilerParams(
            dimension_semantics=("parallel",)),
        cost_estimate=pl.CostEstimate(flops=flops, transcendentals=0,
                                      bytes_accessed=bytes_accessed),
    )(patches, w1, r2, w2, w3p, sel, aff)

    # lane b of step s holds the conv3 output for image s*B + b
    return out[:, 0, :B].reshape(-1)[:N].reshape(N, 1)


# ---------------------------------------------------------------------------
def init_params(key, img_channel=1, hidden_channel=16):
    ks = jax.random.split(key, 8)
    p = {}
    p["w1"] = 0.05 * jax.random.normal(ks[0], (hidden_channel, img_channel, 4, 4), jnp.float32)
    p["b1"] = 0.01 * jax.random.normal(ks[1], (hidden_channel,), jnp.float32)
    p["g1"] = 1.0 + 0.1 * jax.random.normal(ks[2], (hidden_channel,), jnp.float32)
    p["be1"] = 0.1 * jax.random.normal(ks[3], (hidden_channel,), jnp.float32)

    p["w2"] = 0.05 * jax.random.normal(ks[4], (hidden_channel * 2, hidden_channel, 4, 4), jnp.float32)
    p["b2"] = 0.01 * jax.random.normal(ks[5], (hidden_channel * 2,), jnp.float32)
    p["g2"] = 1.0 + 0.1 * jax.random.normal(ks[6], (hidden_channel * 2,), jnp.float32)
    p["be2"] = 0.1 * jax.random.normal(ks[7], (hidden_channel * 2,), jnp.float32)

    p["w3"] = 0.05 * jax.random.normal(jax.random.fold_in(key, 99), (1, hidden_channel * 2, 4, 4), jnp.float32)
    p["b3"] = 0.01 * jax.random.normal(jax.random.fold_in(key, 100), (1,), jnp.float32)
    return p


def discriminator_reference(x, p):
    """Pure-JAX (lax.conv) reference for correctness checking."""
    def conv(x, w, b, stride):
        y = lax.conv_general_dilated(
            x, w, (stride, stride), "VALID",
            dimension_numbers=("NCHW", "OIHW", "NCHW"))
        return y + b.reshape(1, -1, 1, 1)

    def bn_exact(x, gamma, beta, eps=1e-5):
        scale = gamma / jnp.sqrt(1.0 + eps)     # eval-mode: mean=0, var=1
        return scale.reshape(1, -1, 1, 1) * x + beta.reshape(1, -1, 1, 1)

    def lrelu(x):
        return jnp.where(x >= 0, x, 0.2 * x)

    y = lrelu(bn_exact(conv(x, p["w1"], p["b1"], 2), p["g1"], p["be1"]))
    y = lrelu(bn_exact(conv(y, p["w2"], p["b2"], 2), p["g2"], p["be2"]))
    y = conv(y, p["w3"], p["b3"], 2)
    return y.reshape(y.shape[0], -1)


if __name__ == "__main__":
    key = jax.random.PRNGKey(0)
    kx, kp = jax.random.split(key)

    N, C, H, W = 8, 1, 28, 28   # MNIST-shaped input (NCHW); 2 grid steps of B=4
    x = jax.random.normal(kx, (N, C, H, W), jnp.float32)
    params = init_params(kp, img_channel=C, hidden_channel=16)

    out = jax.block_until_ready(discriminator_forward(x, params))
    ref = jax.block_until_ready(discriminator_reference(x, params))

    assert out.shape == (N, 1), out.shape
    # bf16 MXU operands with f32 accumulation -> loosened tolerance
    assert jnp.allclose(out, ref, atol=2e-2, rtol=2e-2), (out, ref)

    print("KERNEL_OK")
</pallas_src>

<mosaic_0001>
module attributes {stable_mosaic.version = 11 : i64} {
  func.func @_disc_fused_kernel(%arg0: i32, %arg1: memref<1x176x64xbf16, #tpu.memory_space<vmem>>, %arg2: memref<64x512xbf16, #tpu.memory_space<vmem>>, %arg3: memref<512x176xbf16, #tpu.memory_space<vmem>>, %arg4: memref<16x128x128xbf16, #tpu.memory_space<vmem>>, %arg5: memref<32x512xf32, #tpu.memory_space<vmem>>, %arg6: memref<512x128xbf16, #tpu.memory_space<vmem>>, %arg7: memref<8x512xf32, #tpu.memory_space<vmem>>, %arg8: memref<1x8x128xf32, #tpu.memory_space<vmem>>) attributes {dimension_semantics = [#tpu.dimension_semantics<parallel>], iteration_bounds = array<i64: 2>, scalar_prefetch = 0 : i64, scratch_operands = 0 : i64, tpu.core_type = #tpu.core_type<tc>, window_params = [{transform_indices = @transform_0, window_bounds = array<i64: 1, 176, 64>}, {pipeline_mode = #tpu.pipeline_mode<synchronous>, transform_indices = @transform_1, window_bounds = array<i64: 64, 512>}, {pipeline_mode = #tpu.pipeline_mode<synchronous>, transform_indices = @transform_2, window_bounds = array<i64: 512, 176>}, {pipeline_mode = #tpu.pipeline_mode<synchronous>, transform_indices = @transform_3, window_bounds = array<i64: 16, 128, 128>}, {pipeline_mode = #tpu.pipeline_mode<synchronous>, transform_indices = @transform_4, window_bounds = array<i64: 32, 512>}, {pipeline_mode = #tpu.pipeline_mode<synchronous>, transform_indices = @transform_5, window_bounds = array<i64: 512, 128>}, {pipeline_mode = #tpu.pipeline_mode<synchronous>, transform_indices = @transform_6, window_bounds = array<i64: 8, 512>}, {transform_indices = @transform_7, window_bounds = array<i64: 1, 8, 128>}]} {
    %c0 = arith.constant 0 : index
    %c0_0 = arith.constant 0 : index
    %c0_1 = arith.constant 0 : index
    %0 = vector.load %arg1[%c0, %c0_0, %c0_1] : memref<1x176x64xbf16, #tpu.memory_space<vmem>>, vector<1x176x64xbf16>
    %1 = vector.shape_cast %0 : vector<1x176x64xbf16> to vector<176x64xbf16>
    %c0_2 = arith.constant 0 : index
    %c0_3 = arith.constant 0 : index
    %2 = vector.load %arg2[%c0_2, %c0_3] : memref<64x512xbf16, #tpu.memory_space<vmem>>, vector<64x512xbf16>
    %cst = arith.constant dense<0.000000e+00> : vector<176x512xf32>
    %3 = tpu.matmul %1, %2, %cst {dimension_numbers = #tpu.dot_dimension_numbers<[1], [0], [0], [1], [0, 0, 1, 1], [], []>} : vector<176x64xbf16>, vector<64x512xbf16>, vector<176x512xf32> -> vector<176x512xf32>
    %c0_4 = arith.constant 0 : index
    %c0_5 = arith.constant 0 : index
    %4 = vector.load %arg7[%c0_4, %c0_5] : memref<8x512xf32, #tpu.memory_space<vmem>>, vector<1x512xf32>
    %5 = vector.broadcast %4 : vector<1x512xf32> to vector<176x512xf32>
    %6 = arith.addf %3, %5 : vector<176x512xf32>
    %cst_6 = arith.constant 2.000000e-01 : f32
    %7 = vector.broadcast %cst_6 : f32 to vector<176x512xf32>
    %8 = arith.mulf %7, %6 : vector<176x512xf32>
    %9 = arith.maximumf %6, %8 : vector<176x512xf32>
    %c0_7 = arith.constant 0 : index
    %c0_8 = arith.constant 0 : index
    %10 = vector.load %arg3[%c0_7, %c0_8] : memref<512x176xbf16, #tpu.memory_space<vmem>>, vector<512x176xbf16>
    %11 = arith.truncf %9 : vector<176x512xf32> to vector<176x512xbf16>
    %cst_9 = arith.constant dense<0.000000e+00> : vector<512x512xf32>
    %12 = tpu.matmul %10, %11, %cst_9 {dimension_numbers = #tpu.dot_dimension_numbers<[1], [0], [0], [1], [0, 0, 1, 1], [], []>} : vector<512x176xbf16>, vector<176x512xbf16>, vector<512x512xf32> -> vector<512x512xf32>
    %13 = vector.shape_cast %12 : vector<512x512xf32> to vector<16x32x512xf32>
    %14 = arith.truncf %13 : vector<16x32x512xf32> to vector<16x32x512xbf16>
    %c0_10 = arith.constant 0 : index
    %c0_11 = arith.constant 0 : index
    %c0_12 = arith.constant 0 : index
    %15 = vector.load %arg4[%c0_10, %c0_11, %c0_12] : memref<16x128x128xbf16, #tpu.memory_space<vmem>>, vector<16x128x128xbf16>
    %16 = vector.extract_strided_slice %14 {offsets = [0, 0, 0], sizes = [16, 32, 128], strides = [1, 1, 1]} : vector<16x32x512xbf16> to vector<16x32x128xbf16>
    "tpu.trace_start"() <{level = 10 : i32, message = "tpc,tco->tpo"}> : () -> ()
    %cst_13 = arith.constant dense<0.000000e+00> : vector<16x32x128xf32>
    %17 = tpu.matmul %16, %15, %cst_13 {dimension_numbers = #tpu.dot_dimension_numbers<[2], [1], [1], [2], [0, 0, 0, 1, 1, 2], [0], [0]>} : vector<16x32x128xbf16>, vector<16x128x128xbf16>, vector<16x32x128xf32> -> vector<16x32x128xf32>
    "tpu.trace_stop"() : () -> ()
    %cst_14 = arith.constant dense<0.000000e+00> : vector<32x128xf32>
    %18 = vector.multi_reduction <add>, %17, %cst_14 [0] : vector<16x32x128xf32> to vector<32x128xf32>
    %19 = vector.extract_strided_slice %14 {offsets = [0, 0, 128], sizes = [16, 32, 128], strides = [1, 1, 1]} : vector<16x32x512xbf16> to vector<16x32x128xbf16>
    "tpu.trace_start"() <{level = 10 : i32, message = "tpc,tco->tpo"}> : () -> ()
    %cst_15 = arith.constant dense<0.000000e+00> : vector<16x32x128xf32>
    %20 = tpu.matmul %19, %15, %cst_15 {dimension_numbers = #tpu.dot_dimension_numbers<[2], [1], [1], [2], [0, 0, 0, 1, 1, 2], [0], [0]>} : vector<16x32x128xbf16>, vector<16x128x128xbf16>, vector<16x32x128xf32> -> vector<16x32x128xf32>
    "tpu.trace_stop"() : () -> ()
    %cst_16 = arith.constant dense<0.000000e+00> : vector<32x128xf32>
    %21 = vector.multi_reduction <add>, %20, %cst_16 [0] : vector<16x32x128xf32> to vector<32x128xf32>
    %22 = vector.extract_strided_slice %14 {offsets = [0, 0, 256], sizes = [16, 32, 128], strides = [1, 1, 1]} : vector<16x32x512xbf16> to vector<16x32x128xbf16>
    "tpu.trace_start"() <{level = 10 : i32, message = "tpc,tco->tpo"}> : () -> ()
    %cst_17 = arith.constant dense<0.000000e+00> : vector<16x32x128xf32>
    %23 = tpu.matmul %22, %15, %cst_17 {dimension_numbers = #tpu.dot_dimension_numbers<[2], [1], [1], [2], [0, 0, 0, 1, 1, 2], [0], [0]>} : vector<16x32x128xbf16>, vector<16x128x128xbf16>, vector<16x32x128xf32> -> vector<16x32x128xf32>
    "tpu.trace_stop"() : () -> ()
    %cst_18 = arith.constant dense<0.000000e+00> : vector<32x128xf32>
    %24 = vector.multi_reduction <add>, %23, %cst_18 [0] : vector<16x32x128xf32> to vector<32x128xf32>
    %25 = vector.extract_strided_slice %14 {offsets = [0, 0, 384], sizes = [16, 32, 128], strides = [1, 1, 1]} : vector<16x32x512xbf16> to vector<16x32x128xbf16>
    "tpu.trace_start"() <{level = 10 : i32, message = "tpc,tco->tpo"}> : () -> ()
    %cst_19 = arith.constant dense<0.000000e+00> : vector<16x32x128xf32>
    %26 = tpu.matmul %25, %15, %cst_19 {dimension_numbers = #tpu.dot_dimension_numbers<[2], [1], [1], [2], [0, 0, 0, 1, 1, 2], [0], [0]>} : vector<16x32x128xbf16>, vector<16x128x128xbf16>, vector<16x32x128xf32> -> vector<16x32x128xf32>
    "tpu.trace_stop"() : () -> ()
    %cst_20 = arith.constant dense<0.000000e+00> : vector<32x128xf32>
    %27 = vector.multi_reduction <add>, %26, %cst_20 [0] : vector<16x32x128xf32> to vector<32x128xf32>
    %28 = tpu.concatenate %18, %21, %24, %27 in 1 : vector<32x128xf32>, vector<32x128xf32>, vector<32x128xf32>, vector<32x128xf32> -> vector<32x512xf32>
    %c1 = arith.constant 1 : index
    %c0_21 = arith.constant 0 : index
    %29 = vector.load %arg7[%c1, %c0_21] : memref<8x512xf32, #tpu.memory_space<vmem>>, vector<1x512xf32>
    %30 = vector.broadcast %29 : vector<1x512xf32> to vector<32x512xf32>
    %31 = arith.addf %28, %30 : vector<32x512xf32>
    %cst_22 = arith.constant 2.000000e-01 : f32
    %32 = vector.broadcast %cst_22 : f32 to vector<32x512xf32>
    %33 = arith.mulf %32, %31 : vector<32x512xf32>
    %34 = arith.maximumf %31, %33 : vector<32x512xf32>
    %c0_23 = arith.constant 0 : index
    %c0_24 = arith.constant 0 : index
    %35 = vector.load %arg5[%c0_23, %c0_24] : memref<32x512xf32, #tpu.memory_space<vmem>>, vector<32x512xf32>
    %36 = arith.mulf %34, %35 : vector<32x512xf32>
    %37 = arith.truncf %36 : vector<32x512xf32> to vector<32x512xbf16>
    %c0_25 = arith.constant 0 : index
    %c0_26 = arith.constant 0 : index
    %38 = vector.load %arg6[%c0_25, %c0_26] : memref<512x128xbf16, #tpu.memory_space<vmem>>, vector<512x128xbf16>
    %cst_27 = arith.constant dense<0.000000e+00> : vector<32x128xf32>
    %39 = tpu.matmul %37, %38, %cst_27 {dimension_numbers = #tpu.dot_dimension_numbers<[1], [0], [0], [1], [0, 0, 1, 1], [], []>} : vector<32x512xbf16>, vector<512x128xbf16>, vector<32x128xf32> -> vector<32x128xf32>
    %cst_28 = arith.constant dense<0.000000e+00> : vector<128xf32>
    %40 = vector.multi_reduction <add>, %39, %cst_28 [0] : vector<32x128xf32> to vector<128xf32>
    %41 = vector.shape_cast %40 : vector<128xf32> to vector<1x128xf32>
    %c2 = arith.constant 2 : index
    %c0_29 = arith.constant 0 : index
    %42 = vector.load %arg7[%c2, %c0_29] : memref<8x512xf32, #tpu.memory_space<vmem>>, vector<1x1xf32>
    %43 = vector.broadcast %42 : vector<1x1xf32> to vector<1x128xf32>
    %44 = arith.addf %41, %43 : vector<1x128xf32>
    %45 = vector.shape_cast %44 : vector<1x128xf32> to vector<1x128xf32>
    %46 = vector.broadcast %45 : vector<1x128xf32> to vector<8x128xf32>
    %c0_30 = arith.constant 0 : index
    %c0_31 = arith.constant 0 : index
    %c0_32 = arith.constant 0 : index
    %47 = vector.load %arg8[%c0_30, %c0_31, %c0_32] : memref<1x8x128xf32, #tpu.memory_space<vmem>>, vector<1x8x128xf32>
    %48 = vector.shape_cast %47 : vector<1x8x128xf32> to vector<8x128xf32>
    %49 = vector.shape_cast %46 : vector<8x128xf32> to vector<1x8x128xf32>
    tpu.vector_store %arg8[%c0_30, %c0_31, %c0_32], %49 {strides = array<i32>} : memref<1x8x128xf32, #tpu.memory_space<vmem>>, vector<1x8x128xf32>,
    return
  }
  func.func @transform_0(%arg0: i32) -> (i32, i32, i32) {
    %c0_i32 = arith.constant 0 : i32
    %c0_i32_0 = arith.constant 0 : i32
    %c0_i32_1 = arith.constant 0 : i32
    return %arg0, %c0_i32, %c0_i32_0 : i32, i32, i32
  }
  func.func @transform_1(%arg0: i32) -> (i32, i32) {
    %c0_i32 = arith.constant 0 : i32
    %c0_i32_0 = arith.constant 0 : i32
    %c0_i32_1 = arith.constant 0 : i32
    return %c0_i32, %c0_i32_0 : i32, i32
  }
  func.func @transform_2(%arg0: i32) -> (i32, i32) {
    %c0_i32 = arith.constant 0 : i32
    %c0_i32_0 = arith.constant 0 : i32
    %c0_i32_1 = arith.constant 0 : i32
    return %c0_i32, %c0_i32_0 : i32, i32
  }
  func.func @transform_3(%arg0: i32) -> (i32, i32, i32) {
    %c0_i32 = arith.constant 0 : i32
    %c0_i32_0 = arith.constant 0 : i32
    %c0_i32_1 = arith.constant 0 : i32
    %c0_i32_2 = arith.constant 0 : i32
    return %c0_i32, %c0_i32_0, %c0_i32_1 : i32, i32, i32
  }
  func.func @transform_4(%arg0: i32) -> (i32, i32) {
    %c0_i32 = arith.constant 0 : i32
    %c0_i32_0 = arith.constant 0 : i32
    %c0_i32_1 = arith.constant 0 : i32
    return %c0_i32, %c0_i32_0 : i32, i32
  }
  func.func @transform_5(%arg0: i32) -> (i32, i32) {
    %c0_i32 = arith.constant 0 : i32
    %c0_i32_0 = arith.constant 0 : i32
    %c0_i32_1 = arith.constant 0 : i32
    return %c0_i32, %c0_i32_0 : i32, i32
  }
  func.func @transform_6(%arg0: i32) -> (i32, i32) {
    %c0_i32 = arith.constant 0 : i32
    %c0_i32_0 = arith.constant 0 : i32
    %c0_i32_1 = arith.constant 0 : i32
    return %c0_i32, %c0_i32_0 : i32, i32
  }
  func.func @transform_7(%arg0: i32) -> (i32, i32, i32) {
    %c0_i32 = arith.constant 0 : i32
    %c0_i32_0 = arith.constant 0 : i32
    %c0_i32_1 = arith.constant 0 : i32
    return %arg0, %c0_i32, %c0_i32_0 : i32, i32, i32
  }
}

</mosaic_0001>

<llo_original>
// kernel: tile.23
$region0: #{tile.23}
  #allocation0 [shape = 's32[1]{0}', space=sflag, size = 0x4, scoped, tag = 'scoped memory for tile.23']
  %s0 = inlined_call_operand.vmem [shape: f32[128], index: 0, kind: input, shape index: {}]
  %s1 = inlined_call_operand.vmem [shape: f32[4,128], index: 1, kind: output, shape index: {}]
  // Predicated region
  $region2: #{tile.23} parent=0 // pred_check
    _
  $region3: #{tile.23} parent=0 // pred_check_branch
    %3 = sbr.rel (0) target = $region5
  $region4: #{tile.23} parent=0 // pred_region
    _
  $region5: #{tile.23} parent=0 // pred_fallthru
    _
  %v4 = vld [vmem:[%s0] ss:$0 sm:$0xff]
  %5 = vst [vmem:[%s1] sm:$0xf] %v4

// kernel: squeeze.99
$region0: #{squeeze.99}
  %s0 = inlined_call_operand.vmem [shape: f32[2,4], index: 0, kind: input, shape index: {}]
  %s1 = inlined_call_operand.hbm [shape: f32[8,1], index: 1, kind: output, shape index: {}]
  $region1: #{squeeze.99} parent=0
    #allocation0 [shape = 'u8[512]{0}', space=vmem, size = 0x400, scoped, tag = 'operand span for operand 1']
    #allocation1 [shape = 's32[1]{0}', space=sflag, size = 0x4, scoped, tag = 'scoped memory for squeeze.99']
    #allocation2 [shape = 'u8[4096]{0}', space=vmem, size = 0x1000, scoped, tag = 'scoped mem for output reshape']
    #allocation3 [shape = 'u8[4096]{0}', space=vmem, size = 0x1000, scoped, tag = 'scoped mem for input reshape']
    %2 = vsyncpa [#allocation1], 0
    %s4 = sshllo.u32 0, 2
    %v5 = vld [vmem:[%s0] sm:%s4]
    %6 = vst [vmem:[#allocation3] sm:%s4] %v5
    %v7 = vld [vmem:[#allocation3] sm:$0x1]
    %vm8 = vcmask 31744
    %9 = vst.msk [vmem:[#allocation2] sm:$0x1] %vm8, %v7
    %s10 = scalar_lea.vmem [#allocation3], 1
    %v11 = vld [vmem:[%s10] sm:$0x1]
    %12 = vrot.lane.b32.xlu0 %v11, 4
    %v13 = vpop.permute.xlu0 %12
    %vm14 = vcmask 64544
    %15 = vst.msk [vmem:[#allocation2] sm:$0x1] %vm14, %v13
    %s17 = sshllo.u32 0, 1
    %v19 = vld [vmem:[#allocation2] sm:%s17]
    %s20 = sshllo.u32 0, 1
    %21 = vst [vmem:[#allocation0] sm:%s20] %v19
    %s23 = ssub.s32 16, 16
    %24 = vsyncadd [#allocation1], %s23
    %s26 = sshll.u32 [#allocation0], 4
    %s27 = int_to_ptr.vmem [resolvable:$true] %s26
    %29 = dma.vmem_to_hbm [thread:$0]  %s27, 16, %s1, [#allocation1]
    %30 = dma.done [#allocation1], 16
    %31 = vsyncpa [#allocation1], 1

// kernel: discriminator_forward.1
$region0: #{discriminator_forward.1}
  #allocation0 [shape = 'u32[]', space=smem, size = 0x4, offset = 0x4, fixed_abs, tag = 'smem constant byte address 0x4 - core index']
  #allocation1 [shape = 'u32[144,128]{1,0:T(1,128)}', space=vmem, size = 0x12000, scoped, tag = 'internal scratch']
  %s0 = inlined_call_operand.vmem [shape: bf16[2,176,64], index: 0, kind: input, shape index: {}]
  %s1 = inlined_call_operand.vmem [shape: bf16[64,512], index: 1, kind: input, shape index: {}]
  %s2 = inlined_call_operand.vmem [shape: bf16[512,176], index: 2, kind: input, shape index: {}]
  %s3 = inlined_call_operand.vmem [shape: bf16[16,128,128], index: 3, kind: input, shape index: {}]
  %s4 = inlined_call_operand.vmem [shape: f32[32,512], index: 4, kind: input, shape index: {}]
  %s5 = inlined_call_operand.vmem [shape: bf16[512,128], index: 5, kind: input, shape index: {}]
  %s6 = inlined_call_operand.vmem [shape: f32[8,512], index: 6, kind: input, shape index: {}]
  %s7 = inlined_call_operand.vmem [shape: f32[2,8,128], index: 7, kind: output, shape index: {}]
  %s8 = sld [smem:[#allocation0]]
  $region61: #{discriminator_forward.1} parent=0
    _
  %s10 = ssub.s32 1, %s8
  %s11 = scalar_select 0, %s10, %s8
  loop: start=0, step=1, limit=4
  $region2: #{discriminator_forward.1} parent=0 // loop_pre_header
    _
  $region3: #{discriminator_forward.1} parent=0 // loop_header
    %s13 = sphi 0, %s17
    %p14 = scmp.ge.s32.totalorder %s13, 4
    %s23 = sphi 0, %s25
    %s26 = sphi 0, %s23
    %s27 = sphi 0, %s26
    %s43 = sphi 0, %s27
    %s47 = sphi 0, %s47
    %s49 = sphi 0, %s47
    %s50 = sphi 0, %s49
    %s64 = sphi 0, %s50
    %s68 = sphi 0, %s68
    %s70 = sphi 0, %s68
    %s71 = sphi 0, %s70
    %s85 = sphi 0, %s71
    %s89 = sphi 0, %s89
    %s91 = sphi 0, %s89
    %s92 = sphi 0, %s91
    %s106 = sphi 0, %s92
    %s110 = sphi 0, %s110
    %s112 = sphi 0, %s110
    %s113 = sphi 0, %s112
    %s127 = sphi 0, %s113
    %s131 = sphi 0, %s131
    %s133 = sphi 0, %s131
    %s134 = sphi 0, %s133
    %s148 = sphi 0, %s134
    %s152 = sphi 0, %s152
    %s154 = sphi 0, %s152
    %s155 = sphi 0, %s154
    %s169 = sphi 0, %s155
    %s175 = sphi 0, %s177
    %s178 = sphi 0, %s175
    %s179 = sphi 0, %s178
    %s195 = sphi 0, %s179
  $region4: #{discriminator_forward.1} parent=0 // loop_header_branch
    %16 = sbr.rel (%p14) target = $region8
  $region5: #{discriminator_forward.1} parent=0 // loop_body
    %s18 = ssub.s32 %s13, 1
    %s19 = ssub.s32 %s13, 2
    %s20 = sadd.s32 %s13, 1
    %s21 = ssub.s32 %s13, %s20
    %p22 = scmp.eq.s32.totalorder %s21, 0
    %s24 = sadd.s32 %s23, 1
    %s25 = scalar_select %p22, %s23, %s24
    %p28 = pneg %p22
    %p29 = scmp.eq.s32.totalorder %s13, 1
    %p30 = por %p28, %p29
    %p31 = scmp.ne.s32.totalorder %s23, %s26
    %p32 = scmp.eq.s32.totalorder %s13, 0
    %p33 = por %p31, %p32
    %p34 = scmp.ne.s32.totalorder %s23, %s26
    %p35 = scmp.eq.s32.totalorder %s18, 1
    %p36 = por %p34, %p35
    %p37 = scmp.ne.s32.totalorder %s26, %s27
    %p38 = scmp.eq.s32.totalorder %s18, 0
    %p39 = por %p37, %p38
    %p40 = scmp.ne.s32.totalorder %s26, %s27
    %p41 = scmp.eq.s32.totalorder %s19, 1
    %p42 = por %p40, %p41
    %p44 = scmp.ne.s32.totalorder %s27, %s43
    %p45 = scmp.eq.s32.totalorder %s19, 0
    %p46 = por %p44, %p45
    %s48 = sadd.s32 %s47, 1
    %p51 = scmp.eq.s32.totalorder %s13, 1
    %p52 = scmp.ne.s32.totalorder %s47, %s49
    %p53 = scmp.eq.s32.totalorder %s13, 0
    %p54 = por %p52, %p53
    %p55 = scmp.ne.s32.totalorder %s47, %s49
    %p56 = scmp.eq.s32.totalorder %s18, 1
    %p57 = por %p55, %p56
    %p58 = scmp.ne.s32.totalorder %s49, %s50
    %p59 = scmp.eq.s32.totalorder %s18, 0
    %p60 = por %p58, %p59
    %p61 = scmp.ne.s32.totalorder %s49, %s50
    %p62 = scmp.eq.s32.totalorder %s19, 1
    %p63 = por %p61, %p62
    %p65 = scmp.ne.s32.totalorder %s50, %s64
    %p66 = scmp.eq.s32.totalorder %s19, 0
    %p67 = por %p65, %p66
    %s69 = sadd.s32 %s68, 1
    %p72 = scmp.eq.s32.totalorder %s13, 1
    %p73 = scmp.ne.s32.totalorder %s68, %s70
    %p74 = scmp.eq.s32.totalorder %s13, 0
    %p75 = por %p73, %p74
    %p76 = scmp.ne.s32.totalorder %s68, %s70
    %p77 = scmp.eq.s32.totalorder %s18, 1
    %p78 = por %p76, %p77
    %p79 = scmp.ne.s32.totalorder %s70, %s71
    %p80 = scmp.eq.s32.totalorder %s18, 0
    %p81 = por %p79, %p80
    %p82 = scmp.ne.s32.totalorder %s70, %s71
    %p83 = scmp.eq.s32.totalorder %s19, 1
    %p84 = por %p82, %p83
    %p86 = scmp.ne.s32.totalorder %s71, %s85
    %p87 = scmp.eq.s32.totalorder %s19, 0
    %p88 = por %p86, %p87
    %s90 = sadd.s32 %s89, 1
    %p93 = scmp.eq.s32.totalorder %s13, 1
    %p94 = scmp.ne.s32.totalorder %s89, %s91
    %p95 = scmp.eq.s32.totalorder %s13, 0
    %p96 = por %p94, %p95
    %p97 = scmp.ne.s32.totalorder %s89, %s91
    %p98 = scmp.eq.s32.totalorder %s18, 1
    %p99 = por %p97, %p98
    %p100 = scmp.ne.s32.totalorder %s91, %s92
    %p101 = scmp.eq.s32.totalorder %s18, 0
    %p102 = por %p100, %p101
    %p103 = scmp.ne.s32.totalorder %s91, %s92
    %p104 = scmp.eq.s32.totalorder %s19, 1
    %p105 = por %p103, %p104
    %p107 = scmp.ne.s32.totalorder %s92, %s106
    %p108 = scmp.eq.s32.totalorder %s19, 0
    %p109 = por %p107, %p108
    %s111 = sadd.s32 %s110, 1
    %p114 = scmp.eq.s32.totalorder %s13, 1
    %p115 = scmp.ne.s32.totalorder %s110, %s112
    %p116 = scmp.eq.s32.totalorder %s13, 0
    %p117 = por %p115, %p116
    %p118 = scmp.ne.s32.totalorder %s110, %s112
    %p119 = scmp.eq.s32.totalorder %s18, 1
    %p120 = por %p118, %p119
    %p121 = scmp.ne.s32.totalorder %s112, %s113
    %p122 = scmp.eq.s32.totalorder %s18, 0
    %p123 = por %p121, %p122
    %p124 = scmp.ne.s32.totalorder %s112, %s113
    %p125 = scmp.eq.s32.totalorder %s19, 1
    %p126 = por %p124, %p125
    %p128 = scmp.ne.s32.totalorder %s113, %s127
    %p129 = scmp.eq.s32.totalorder %s19, 0
    %p130 = por %p128, %p129
    %s132 = sadd.s32 %s131, 1
    %p135 = scmp.eq.s32.totalorder %s13, 1
    %p136 = scmp.ne.s32.totalorder %s131, %s133
    %p137 = scmp.eq.s32.totalorder %s13, 0
    %p138 = por %p136, %p137
    %p139 = scmp.ne.s32.totalorder %s131, %s133
    %p140 = scmp.eq.s32.totalorder %s18, 1
    %p141 = por %p139, %p140
    %p142 = scmp.ne.s32.totalorder %s133, %s134
    %p143 = scmp.eq.s32.totalorder %s18, 0
    %p144 = por %p142, %p143
    %p145 = scmp.ne.s32.totalorder %s133, %s134
    %p146 = scmp.eq.s32.totalorder %s19, 1
    %p147 = por %p145, %p146
    %p149 = scmp.ne.s32.totalorder %s134, %s148
    %p150 = scmp.eq.s32.totalorder %s19, 0
    %p151 = por %p149, %p150
    %s153 = sadd.s32 %s152, 1
    %p156 = scmp.eq.s32.totalorder %s13, 1
    %p157 = scmp.ne.s32.totalorder %s152, %s154
    %p158 = scmp.eq.s32.totalorder %s13, 0
    %p159 = por %p157, %p158
    %p160 = scmp.ne.s32.totalorder %s152, %s154
    %p161 = scmp.eq.s32.totalorder %s18, 1
    %p162 = por %p160, %p161
    %p163 = scmp.ne.s32.totalorder %s154, %s155
    %p164 = scmp.eq.s32.totalorder %s18, 0
    %p165 = por %p163, %p164
    %p166 = scmp.ne.s32.totalorder %s154, %s155
    %p167 = scmp.eq.s32.totalorder %s19, 1
    %p168 = por %p166, %p167
    %p170 = scmp.ne.s32.totalorder %s155, %s169
    %p171 = scmp.eq.s32.totalorder %s19, 0
    %p172 = por %p170, %p171
    %s173 = ssub.s32 %s13, %s20
    %p174 = scmp.eq.s32.totalorder %s173, 0
    %s176 = sadd.s32 %s175, 1
    %s177 = scalar_select %p174, %s175, %s176
    %p180 = pneg %p174
    %p181 = scmp.eq.s32.totalorder %s13, 1
    %p182 = por %p180, %p181
    %p183 = scmp.ne.s32.totalorder %s175, %s178
    %p184 = scmp.eq.s32.totalorder %s13, 0
    %p185 = por %p183, %p184
    %p186 = scmp.ne.s32.totalorder %s175, %s178
    %p187 = scmp.eq.s32.totalorder %s18, 1
    %p188 = por %p186, %p187
    %p189 = scmp.ne.s32.totalorder %s178, %s179
    %p190 = scmp.eq.s32.totalorder %s18, 0
    %p191 = por %p189, %p190
    %p192 = scmp.ne.s32.totalorder %s178, %s179
    %p193 = scmp.eq.s32.totalorder %s19, 1
    %p194 = por %p192, %p193
    %p196 = scmp.ne.s32.totalorder %s179, %s195
    %p197 = scmp.eq.s32.totalorder %s19, 0
    %p198 = por %p196, %p197
    %p199 = scmp.le.s32.totalorder 1, %s13
    %p200 = scmp.lt.s32.totalorder %s13, 3
    %p201 = pnand %p199, %p200
    %p202 = pneg %p201
    // Predicated region
    $region9: #{discriminator_forward.1} parent=5 // pred_check
      _
    $region10: #{discriminator_forward.1} parent=5 // pred_check_branch
      %204 = sbr.rel (%p201) target = $region12
    $region11: #{discriminator_forward.1} parent=5 // pred_region
      %s205 = ssub.s32 %s13, 1
      // Predicated region
      $region13: #{discriminator_forward.1} parent=11 // pred_check
        %p206 = pneg %p60
      $region14: #{discriminator_forward.1} parent=11 // pred_check_branch
        %208 = sbr.rel (%p206) target = $region16
      $region15: #{discriminator_forward.1} parent=11 // pred_region
        _
      $region16: #{discriminator_forward.1} parent=11 // pred_fallthru
        _
      // Predicated region
      $region17: #{discriminator_forward.1} parent=11 // pred_check
        %p209 = pneg %p81
      $region18: #{discriminator_forward.1} parent=11 // pred_check_branch
        %211 = sbr.rel (%p209) target = $region20
      $region19: #{discriminator_forward.1} parent=11 // pred_region
        _
      $region20: #{discriminator_forward.1} parent=11 // pred_fallthru
        _
      // Predicated region
      $region21: #{discriminator_forward.1} parent=11 // pred_check
        %p212 = pneg %p102
      $region22: #{discriminator_forward.1} parent=11 // pred_check_branch
        %214 = sbr.rel (%p212) target = $region24
      $region23: #{discriminator_forward.1} parent=11 // pred_region
        _
      $region24: #{discriminator_forward.1} parent=11 // pred_fallthru
        _
      // Predicated region
      $region25: #{discriminator_forward.1} parent=11 // pred_check
        %p215 = pneg %p123
      $region26: #{discriminator_forward.1} parent=11 // pred_check_branch
        %217 = sbr.rel (%p215) target = $region28
      $region27: #{discriminator_forward.1} parent=11 // pred_region
        _
      $region28: #{discriminator_forward.1} parent=11 // pred_fallthru
        _
      // Predicated region
      $region29: #{discriminator_forward.1} parent=11 // pred_check
        %p218 = pneg %p144
      $region30: #{discriminator_forward.1} parent=11 // pred_check_branch
        %220 = sbr.rel (%p218) target = $region32
      $region31: #{discriminator_forward.1} parent=11 // pred_region
        _
      $region32: #{discriminator_forward.1} parent=11 // pred_fallthru
        _
      // Predicated region
      $region33: #{discriminator_forward.1} parent=11 // pred_check
        %p221 = pneg %p165
      $region34: #{discriminator_forward.1} parent=11 // pred_check_branch
        %223 = sbr.rel (%p221) target = $region36
      $region35: #{discriminator_forward.1} parent=11 // pred_region
        _
      $region36: #{discriminator_forward.1} parent=11 // pred_fallthru
        _
    $region12: #{discriminator_forward.1} parent=5 // pred_fallthru
      _
    %p224 = scmp.lt.s32.totalorder %s13, 2
    // Predicated region
    $region37: #{discriminator_forward.1} parent=5 // pred_check
      %p225 = pneg %p224
    $region38: #{discriminator_forward.1} parent=5 // pred_check_branch
      %227 = sbr.rel (%p225) target = $region40
    $region39: #{discriminator_forward.1} parent=5 // pred_region
      // Predicated region
      $region41: #{discriminator_forward.1} parent=39 // pred_check
        %p228 = pneg %p33
      $region42: #{discriminator_forward.1} parent=39 // pred_check_branch
        %230 = sbr.rel (%p228) target = $region44
      $region43: #{discriminator_forward.1} parent=39 // pred_region
        %p231 = scmp.lt.s32.totalorder %s13, 1
        %s232 = scalar_select %p231, %s13, 1
        %s233 = smul.addr %s232, 22
        %s234 = smul.addr %s233, 4
        %s235 = scalar_lea.vmem %s0, %s234
      $region44: #{discriminator_forward.1} parent=39 // pred_fallthru
        _
    $region40: #{discriminator_forward.1} parent=5 // pred_fallthru
      _
    %p236 = scmp.le.s32.totalorder 1, %s13
    %p237 = scmp.lt.s32.totalorder %s13, 3
    %p238 = pnand %p236, %p237
    %p239 = pneg %p238
    // Predicated region
    $region45: #{discriminator_forward.1} parent=5 // pred_check
      _
    $region46: #{discriminator_forward.1} parent=5 // pred_check_branch
      %241 = sbr.rel (%p238) target = $region48
    $region47: #{discriminator_forward.1} parent=5 // pred_region
      %s242 = ssub.s32 %s13, 1
      %p243 = scmp.lt.s32.totalorder %s18, 1
      %s244 = scalar_select %p243, %s18, 1
      %s245 = smul.addr %s244, 22
      %s246 = smul.addr %s245, 4
      %s247 = scalar_lea.vmem %s0, %s246
      %p248 = pneg %p39
      %p249 = pneg %p36
      %p250 = pneg %p60
      %p251 = pneg %p57
      %p252 = pneg %p81
      %p253 = pneg %p78
      %p254 = pneg %p102
      %p255 = pneg %p99
      %p256 = pneg %p123
      %p257 = pneg %p120
      %p258 = pneg %p144
      %p259 = pneg %p141
      %p260 = pneg %p165
      %p261 = pneg %p162
      %p262 = pneg %p191
      %p263 = pneg %p188
      %p264 = scmp.lt.s32.totalorder %s18, 1
      %s265 = scalar_select %p264, %s18, 1
      %s266 = smul.addr %s265, 8
      %s267 = scalar_lea.vmem %s7, %s266
      %p268 = scmp.lt.s32.totalorder %s18, 1
      %s269 = scalar_select %p268, %s18, 1
      %s270 = smul.addr %s269, 22
      %s271 = smul.addr %s270, 4
      %s272 = scalar_lea.vmem %s0, %s271
      %p273 = scmp.lt.s32.totalorder %s18, 1
      %s274 = scalar_select %p273, %s18, 1
      %s275 = smul.addr %s274, 8
      %s276 = scalar_lea.vmem %s7, %s275
      %v278 = vld [vmem:[%s272] sm:$0xf]
      %v279 = vld [vmem:[%s272 + $0x4] sm:$0xf]
      %v280 = vld [vmem:[%s272 + $0x8] sm:$0xf]
      %v281 = vld [vmem:[%s272 + $0xc] sm:$0xf]
      %v282 = vld [vmem:[%s272 + $0x10] sm:$0xf]
      %v283 = vld [vmem:[%s272 + $0x14] sm:$0xf]
      %v284 = vld [vmem:[%s272 + $0x18] sm:$0xf]
      %v285 = vld [vmem:[%s272 + $0x1c] sm:$0xf]
      %v286 = vld [vmem:[%s272 + $0x20] sm:$0xf]
      %v287 = vld [vmem:[%s272 + $0x24] sm:$0xf]
      %v288 = vld [vmem:[%s272 + $0x28] sm:$0xf]
      %v289 = vld [vmem:[%s272 + $0x2c] sm:$0xf]
      %v290 = vld [vmem:[%s272 + $0x30] sm:$0xf]
      %v291 = vld [vmem:[%s272 + $0x34] sm:$0xf]
      %v292 = vld [vmem:[%s272 + $0x38] sm:$0xf]
      %v293 = vld [vmem:[%s272 + $0x3c] sm:$0xf]
      %v294 = vld [vmem:[%s272 + $0x40] sm:$0xf]
      %v295 = vld [vmem:[%s272 + $0x44] sm:$0xf]
      %v296 = vld [vmem:[%s272 + $0x48] sm:$0xf]
      %v297 = vld [vmem:[%s272 + $0x4c] sm:$0xf]
      %v298 = vld [vmem:[%s272 + $0x50] sm:$0xf]
      %v299 = vld [vmem:[%s272 + $0x54] sm:$0xf]
      %v300 = vld [vmem:[%s1] sm:$0xff]
      %v301 = vld [vmem:[%s1 + $0x8] sm:$0xff]
      %v302 = vld [vmem:[%s1 + $0x10] sm:$0xff]
      %v303 = vld [vmem:[%s1 + $0x18] sm:$0xff]
      %v304 = vld [vmem:[%s1 + $0x20] sm:$0xff]
      %v305 = vld [vmem:[%s1 + $0x28] sm:$0xff]
      %v306 = vld [vmem:[%s1 + $0x30] sm:$0xff]
      %v307 = vld [vmem:[%s1 + $0x38] sm:$0xff]
      %v308 = vld [vmem:[%s1 + $0x40] sm:$0xff]
      %v309 = vld [vmem:[%s1 + $0x48] sm:$0xff]
      %v310 = vld [vmem:[%s1 + $0x50] sm:$0xff]
      %v311 = vld [vmem:[%s1 + $0x58] sm:$0xff]
      %v312 = vld [vmem:[%s1 + $0x60] sm:$0xff]
      %v313 = vld [vmem:[%s1 + $0x68] sm:$0xff]
      %v314 = vld [vmem:[%s1 + $0x70] sm:$0xff]
      %v315 = vld [vmem:[%s1 + $0x78] sm:$0xff]
      %v316 = vld [vmem:[%s6] ss:$8 sm:$0xf]
      %v318 = vlaneseq
      %v319 = vshrl.u32 %v318, 7
      %v320 = vsub.s32 0, %v319
      %v321 = vrot.slane %v316, %v320
      %v322 = vlaneseq
      %v323 = vshrl.u32 %v322, 7
      %v324 = vsub.s32 1, %v323
      %v325 = vrot.slane %v316, %v324
      %v326 = vlaneseq
      %v327 = vshrl.u32 %v326, 7
      %v328 = vsub.s32 2, %v327
      %v329 = vrot.slane %v316, %v328
      %v330 = vlaneseq
      %v331 = vshrl.u32 %v330, 7
      %v332 = vsub.s32 3, %v331
      %v333 = vrot.slane %v316, %v332
      %v360 = vunpack.c.l.b16 %v278
      %v361 = vunpack.c.l.b16 %v279
      %v362 = vunpack.c.l.b16 %v280
      %v363 = vunpack.c.l.b16 %v281
      %v364 = vunpack.c.l.b16 %v282
      %v365 = vunpack.c.l.b16 %v283
      %v366 = vunpack.c.l.b16 %v284
      %v367 = vunpack.c.l.b16 %v285
      %v368 = vunpack.c.l.b16 %v286
      %v369 = vunpack.c.l.b16 %v287
      %v370 = vunpack.c.l.b16 %v288
      %v371 = vunpack.c.l.b16 %v289
      %v372 = vunpack.c.l.b16 %v290
      %v373 = vunpack.c.l.b16 %v291
      %v374 = vunpack.c.l.b16 %v292
      %v375 = vunpack.c.l.b16 %v293
      %v376 = vunpack.c.l.b16 %v294
      %v377 = vunpack.c.l.b16 %v295
      %v378 = vunpack.c.l.b16 %v296
      %v379 = vunpack.c.l.b16 %v297
      %v380 = vunpack.c.l.b16 %v298
      %v381 = vunpack.c.l.b16 %v299
      %v382 = vpack.c.b16 %v361, %v360
      %v383 = vpack.c.b16 %v363, %v362
      %v384 = vpack.c.b16 %v365, %v364
      %v385 = vpack.c.b16 %v367, %v366
      %v386 = vpack.c.b16 %v369, %v368
      %v387 = vpack.c.b16 %v371, %v370
      %v388 = vpack.c.b16 %v373, %v372
      %v389 = vpack.c.b16 %v375, %v374
      %v390 = vpack.c.b16 %v377, %v376
      %v391 = vpack.c.b16 %v379, %v378
      %v392 = vpack.c.b16 %v381, %v380
      %v409 = vunpack.c.l.b16 %v300
      %v410 = vunpack.c.h.b16 %v300
      %v411 = vunpack.c.l.b16 %v301
      %v412 = vunpack.c.h.b16 %v301
      %v413 = vunpack.c.l.b16 %v302
      %v414 = vunpack.c.h.b16 %v302
      %v415 = vunpack.c.l.b16 %v303
      %v416 = vunpack.c.h.b16 %v303
      %v417 = vunpack.c.l.b16 %v304
      %v418 = vunpack.c.h.b16 %v304
      %v419 = vunpack.c.l.b16 %v305
      %v420 = vunpack.c.h.b16 %v305
      %v421 = vunpack.c.l.b16 %v306
      %v422 = vunpack.c.h.b16 %v306
      %v423 = vunpack.c.l.b16 %v307
      %v424 = vunpack.c.h.b16 %v307
      %v425 = vunpack.c.l.b16 %v308
      %v426 = vunpack.c.h.b16 %v308
      %v427 = vunpack.c.l.b16 %v309
      %v428 = vunpack.c.h.b16 %v309
      %v429 = vunpack.c.l.b16 %v310
      %v430 = vunpack.c.h.b16 %v310
      %v431 = vunpack.c.l.b16 %v311
      %v432 = vunpack.c.h.b16 %v311
      %v433 = vunpack.c.l.b16 %v312
      %v434 = vunpack.c.h.b16 %v312
      %v435 = vunpack.c.l.b16 %v313
      %v436 = vunpack.c.h.b16 %v313
      %v437 = vunpack.c.l.b16 %v314
      %v438 = vunpack.c.h.b16 %v314
      %v439 = vunpack.c.l.b16 %v315
      %v440 = vunpack.c.h.b16 %v315
      %v441 = vpack.c.b16 %v413, %v409
      %v442 = vpack.c.b16 %v414, %v410
      %v443 = vpack.c.b16 %v415, %v411
      %v444 = vpack.c.b16 %v416, %v412
      %v445 = vpack.c.b16 %v421, %v417
      %v446 = vpack.c.b16 %v422, %v418
      %v447 = vpack.c.b16 %v423, %v419
      %v448 = vpack.c.b16 %v424, %v420
      %v449 = vpack.c.b16 %v429, %v425
      %v450 = vpack.c.b16 %v430, %v426
      %v451 = vpack.c.b16 %v431, %v427
      %v452 = vpack.c.b16 %v432, %v428
      %v453 = vpack.c.b16 %v437, %v433
      %v454 = vpack.c.b16 %v438, %v434
      %v455 = vpack.c.b16 %v439, %v435
      %v456 = vpack.c.b16 %v440, %v436
      %vm473 = vcmask 523264
      %v475 = vsel %vm473, %v382, 0
      %v478 = vsel %vm473, %v383, 0
      %v481 = vsel %vm473, %v384, 0
      %v484 = vsel %vm473, %v385, 0
      %v487 = vsel %vm473, %v386, 0
      %v490 = vsel %vm473, %v387, 0
      %v493 = vsel %vm473, %v388, 0
      %v496 = vsel %vm473, %v389, 0
      %v499 = vsel %vm473, %v390, 0
      %v502 = vsel %vm473, %v391, 0
      %v505 = vsel %vm473, %v392, 0
      %507 = vmatprep.subr.bf16.mxu0 %v442
      %508 = vmatpush1.bf16.msra.mxu0 %v441
      %509 = vmatprep.subr.bf16.mxu0 %v446
      %510 = vmatpush1.bf16.msra.mxu0 %v445
      %511 = vmatprep.subr.bf16.mxu0 %v450
      %512 = vmatpush1.bf16.msra.mxu0 %v449
      %513 = vmatprep.subr.bf16.mxu0 %v454
      %514 = vmatpush1.bf16.msra.mxu0 %v453
      %515 = vmatprep.subr.bf16.mxu0 0
      %516 = vmatpush1.bf16.msra.mxu0 0
      %517 = vmatprep.subr.bf16.mxu0 0
      %518 = vmatpush1.bf16.msra.mxu0 0
      %519 = vmatprep.subr.bf16.mxu0 0
      %520 = vmatpush1.bf16.msra.mxu0 0
      %521 = vmatprep.subr.bf16.mxu0 0
      %522 = vmatpush1.bf16.msra.mxu0 0
      %523 = vmatprep.subr.bf16.mxu0 0
      %524 = vmatpush1.bf16.msra.mxu0 0
      %525 = vmatprep.subr.bf16.mxu0 0
      %526 = vmatpush1.bf16.msra.mxu0 0
      %527 = vmatprep.subr.bf16.mxu0 0
      %528 = vmatpush1.bf16.msra.mxu0 0
      %529 = vmatprep.subr.bf16.mxu0 0
      %530 = vmatpush1.bf16.msra.mxu0 0
      %531 = vmatprep.subr.bf16.mxu0 0
      %532 = vmatpush1.bf16.msra.mxu0 0
      %533 = vmatprep.subr.bf16.mxu0 0
      %534 = vmatpush1.bf16.msra.mxu0 0
      %535 = vmatprep.subr.bf16.mxu0 0
      %536 = vmatpush1.bf16.msra.mxu0 0
      %537 = vmatprep.subr.bf16.mxu0 0
      %538 = vmatpush1.bf16.msra.mxu0 0
      %539 = vmatprep.mubr.bf16.mxu0 0
      %540 = vmatmul.mubr.bf16.gmra.mrb[0].mxu0 %v475
      %v541 = vpop.f32.mrb[0].mxu0
      %v542 = vadd.f32 %v321, %v541
      %v543 = vpop.f32.mrb[0].mxu0
      %v544 = vadd.f32 %v325, %v543
      %v545 = vpop.f32.mrb[0].mxu0
      %v546 = vadd.f32 %v321, %v545
      %v547 = vpop.f32.mrb[0].mxu0
      %v548 = vadd.f32 %v325, %v547
      %549 = vmatprep.mubr.bf16.mxu0 0
      %550 = vmatmul.mubr.bf16.gmra.mrb[0].mxu0 %v478
      %v551 = vpop.f32.mrb[0].mxu0
      %v552 = vadd.f32 %v321, %v551
      %v553 = vpop.f32.mrb[0].mxu0
      %v554 = vadd.f32 %v325, %v553
      %v555 = vpop.f32.mrb[0].mxu0
      %v556 = vadd.f32 %v321, %v555
      %v557 = vpop.f32.mrb[0].mxu0
      %v558 = vadd.f32 %v325, %v557
      %559 = vmatprep.mubr.bf16.mxu0 0
      %560 = vmatmul.mubr.bf16.gmra.mrb[0].mxu0 %v481
      %v561 = vpop.f32.mrb[0].mxu0
      %v562 = vadd.f32 %v321, %v561
      %v563 = vpop.f32.mrb[0].mxu0
      %v564 = vadd.f32 %v325, %v563
      %v565 = vpop.f32.mrb[0].mxu0
      %v566 = vadd.f32 %v321, %v565
      %v567 = vpop.f32.mrb[0].mxu0
      %v568 = vadd.f32 %v325, %v567
      %569 = vmatprep.mubr.bf16.mxu0 0
      %570 = vmatmul.mubr.bf16.gmra.mrb[0].mxu0 %v484
      %v571 = vpop.f32.mrb[0].mxu0
      %v572 = vadd.f32 %v321, %v571
      %v573 = vpop.f32.mrb[0].mxu0
      %v574 = vadd.f32 %v325, %v573
      %v575 = vpop.f32.mrb[0].mxu0
      %v576 = vadd.f32 %v321, %v575
      %v577 = vpop.f32.mrb[0].mxu0
      %v578 = vadd.f32 %v325, %v577
      %579 = vmatprep.mubr.bf16.mxu0 0
      %580 = vmatmul.mubr.bf16.gmra.mrb[0].mxu0 %v487
      %v581 = vpop.f32.mrb[0].mxu0
      %v582 = vadd.f32 %v321, %v581
      %v583 = vpop.f32.mrb[0].mxu0
      %v584 = vadd.f32 %v325, %v583
      %v585 = vpop.f32.mrb[0].mxu0
      %v586 = vadd.f32 %v321, %v585
      %v587 = vpop.f32.mrb[0].mxu0
      %v588 = vadd.f32 %v325, %v587
      %589 = vmatprep.mubr.bf16.mxu0 0
      %590 = vmatmul.mubr.bf16.gmra.mrb[0].mxu0 %v490
      %v591 = vpop.f32.mrb[0].mxu0
      %v592 = vadd.f32 %v321, %v591
      %v593 = vpop.f32.mrb[0].mxu0
      %v594 = vadd.f32 %v325, %v593
      %v595 = vpop.f32.mrb[0].mxu0
      %v596 = vadd.f32 %v321, %v595
      %v597 = vpop.f32.mrb[0].mxu0
      %v598 = vadd.f32 %v325, %v597
      %599 = vmatprep.mubr.bf16.mxu0 0
      %600 = vmatmul.mubr.bf16.gmra.mrb[0].mxu0 %v493
      %v601 = vpop.f32.mrb[0].mxu0
      %v602 = vadd.f32 %v321, %v601
      %v603 = vpop.f32.mrb[0].mxu0
      %v604 = vadd.f32 %v325, %v603
      %v605 = vpop.f32.mrb[0].mxu0
      %v606 = vadd.f32 %v321, %v605
      %v607 = vpop.f32.mrb[0].mxu0
      %v608 = vadd.f32 %v325, %v607
      %609 = vmatprep.mubr.bf16.mxu0 0
      %610 = vmatmul.mubr.bf16.gmra.mrb[0].mxu0 %v496
      %v611 = vpop.f32.mrb[0].mxu0
      %v612 = vadd.f32 %v321, %v611
      %v613 = vpop.f32.mrb[0].mxu0
      %v614 = vadd.f32 %v325, %v613
      %v615 = vpop.f32.mrb[0].mxu0
      %v616 = vadd.f32 %v321, %v615
      %v617 = vpop.f32.mrb[0].mxu0
      %v618 = vadd.f32 %v325, %v617
      %619 = vmatprep.mubr.bf16.mxu0 0
      %620 = vmatmul.mubr.bf16.gmra.mrb[0].mxu0 %v499
      %v621 = vpop.f32.mrb[0].mxu0
      %v622 = vadd.f32 %v321, %v621
      %v623 = vpop.f32.mrb[0].mxu0
      %v624 = vadd.f32 %v325, %v623
      %v625 = vpop.f32.mrb[0].mxu0
      %v626 = vadd.f32 %v321, %v625
      %v627 = vpop.f32.mrb[0].mxu0
      %v628 = vadd.f32 %v325, %v627
      %629 = vmatprep.mubr.bf16.mxu0 0
      %630 = vmatmul.mubr.bf16.gmra.mrb[0].mxu0 %v502
      %v631 = vpop.f32.mrb[0].mxu0
      %v632 = vadd.f32 %v321, %v631
      %v633 = vpop.f32.mrb[0].mxu0
      %v634 = vadd.f32 %v325, %v633
      %v635 = vpop.f32.mrb[0].mxu0
      %v636 = vadd.f32 %v321, %v635
      %v637 = vpop.f32.mrb[0].mxu0
      %v638 = vadd.f32 %v325, %v637
      %639 = vmatprep.mubr.bf16.mxu0 0
      %640 = vmatmul.mubr.bf16.gmra.mrb[0].mxu0 %v505
      %v641 = vpop.f32.mrb[0].mxu0
      %v642 = vadd.f32 %v321, %v641
      %v643 = vpop.f32.mrb[0].mxu0
      %v644 = vadd.f32 %v325, %v643
      %v645 = vpop.f32.mrb[0].mxu0
      %v646 = vadd.f32 %v321, %v645
      %v647 = vpop.f32.mrb[0].mxu0
      %v648 = vadd.f32 %v325, %v647
      %649 = vdwg.mxu0
      %650 = vmatprep.subr.bf16.mxu0 %v444
      %651 = vmatpush1.bf16.msra.mxu0 %v443
      %652 = vmatprep.subr.bf16.mxu0 %v448
      %653 = vmatpush1.bf16.msra.mxu0 %v447
      %654 = vmatprep.subr.bf16.mxu0 %v452
      %655 = vmatpush1.bf16.msra.mxu0 %v451
      %656 = vmatprep.subr.bf16.mxu0 %v456
      %657 = vmatpush1.bf16.msra.mxu0 %v455
      %658 = vmatprep.subr.bf16.mxu0 0
      %659 = vmatpush1.bf16.msra.mxu0 0
      %660 = vmatprep.subr.bf16.mxu0 0
      %661 = vmatpush1.bf16.msra.mxu0 0
      %662 = vmatprep.subr.bf16.mxu0 0
      %663 = vmatpush1.bf16.msra.mxu0 0
      %664 = vmatprep.subr.bf16.mxu0 0
      %665 = vmatpush1.bf16.msra.mxu0 0
      %666 = vmatprep.subr.bf16.mxu0 0
      %667 = vmatpush1.bf16.msra.mxu0 0
      %668 = vmatprep.subr.bf16.mxu0 0
      %669 = vmatpush1.bf16.msra.mxu0 0
      %670 = vmatprep.subr.bf16.mxu0 0
      %671 = vmatpush1.bf16.msra.mxu0 0
      %672 = vmatprep.subr.bf16.mxu0 0
      %673 = vmatpush1.bf16.msra.mxu0 0
      %674 = vmatprep.subr.bf16.mxu0 0
      %675 = vmatpush1.bf16.msra.mxu0 0
      %676 = vmatprep.subr.bf16.mxu0 0
      %677 = vmatpush1.bf16.msra.mxu0 0
      %678 = vmatprep.subr.bf16.mxu0 0
      %679 = vmatpush1.bf16.msra.mxu0 0
      %680 = vmatprep.subr.bf16.mxu0 0
      %681 = vmatpush1.bf16.msra.mxu0 0
      %682 = vmatprep.mubr.bf16.mxu0 0
      %683 = vmatmul.mubr.bf16.gmra.mrb[0].mxu0 %v475
      %v684 = vpop.f32.mrb[0].mxu0
      %v685 = vadd.f32 %v329, %v684
      %v686 = vpop.f32.mrb[0].mxu0
      %v687 = vadd.f32 %v333, %v686
      %v688 = vpop.f32.mrb[0].mxu0
      %v689 = vadd.f32 %v329, %v688
      %v690 = vpop.f32.mrb[0].mxu0
      %v691 = vadd.f32 %v333, %v690
      %692 = vmatprep.mubr.bf16.mxu0 0
      %693 = vmatmul.mubr.bf16.gmra.mrb[0].mxu0 %v478
      %v694 = vpop.f32.mrb[0].mxu0
      %v695 = vadd.f32 %v329, %v694
      %v696 = vpop.f32.mrb[0].mxu0
      %v697 = vadd.f32 %v333, %v696
      %v698 = vpop.f32.mrb[0].mxu0
      %v699 = vadd.f32 %v329, %v698
      %v700 = vpop.f32.mrb[0].mxu0
      %v701 = vadd.f32 %v333, %v700
      %702 = vmatprep.mubr.bf16.mxu0 0
      %703 = vmatmul.mubr.bf16.gmra.mrb[0].mxu0 %v481
      %v704 = vpop.f32.mrb[0].mxu0
      %v705 = vadd.f32 %v329, %v704
      %v706 = vpop.f32.mrb[0].mxu0
      %v707 = vadd.f32 %v333, %v706
      %v708 = vpop.f32.mrb[0].mxu0
      %v709 = vadd.f32 %v329, %v708
      %v710 = vpop.f32.mrb[0].mxu0
      %v711 = vadd.f32 %v333, %v710
      %712 = vmatprep.mubr.bf16.mxu0 0
      %713 = vmatmul.mubr.bf16.gmra.mrb[0].mxu0 %v484
      %v714 = vpop.f32.mrb[0].mxu0
      %v715 = vadd.f32 %v329, %v714
      %v716 = vpop.f32.mrb[0].mxu0
      %v717 = vadd.f32 %v333, %v716
      %v718 = vpop.f32.mrb[0].mxu0
      %v719 = vadd.f32 %v329, %v718
      %v720 = vpop.f32.mrb[0].mxu0
      %v721 = vadd.f32 %v333, %v720
      %722 = vmatprep.mubr.bf16.mxu0 0
      %723 = vmatmul.mubr.bf16.gmra.mrb[0].mxu0 %v487
      %v724 = vpop.f32.mrb[0].mxu0
      %v725 = vadd.f32 %v329, %v724
      %v726 = vpop.f32.mrb[0].mxu0
      %v727 = vadd.f32 %v333, %v726
      %v728 = vpop.f32.mrb[0].mxu0
      %v729 = vadd.f32 %v329, %v728
      %v730 = vpop.f32.mrb[0].mxu0
      %v731 = vadd.f32 %v333, %v730
      %732 = vmatprep.mubr.bf16.mxu0 0
      %733 = vmatmul.mubr.bf16.gmra.mrb[0].mxu0 %v490
      %v734 = vpop.f32.mrb[0].mxu0
      %v735 = vadd.f32 %v329, %v734
      %v736 = vpop.f32.mrb[0].mxu0
      %v737 = vadd.f32 %v333, %v736
      %v738 = vpop.f32.mrb[0].mxu0
      %v739 = vadd.f32 %v329, %v738
      %v740 = vpop.f32.mrb[0].mxu0
      %v741 = vadd.f32 %v333, %v740
      %742 = vmatprep.mubr.bf16.mxu0 0
      %743 = vmatmul.mubr.bf16.gmra.mrb[0].mxu0 %v493
      %v744 = vpop.f32.mrb[0].mxu0
      %v745 = vadd.f32 %v329, %v744
      %v746 = vpop.f32.mrb[0].mxu0
      %v747 = vadd.f32 %v333, %v746
      %v748 = vpop.f32.mrb[0].mxu0
      %v749 = vadd.f32 %v329, %v748
      %v750 = vpop.f32.mrb[0].mxu0
      %v751 = vadd.f32 %v333, %v750
      %752 = vmatprep.mubr.bf16.mxu0 0
      %753 = vmatmul.mubr.bf16.gmra.mrb[0].mxu0 %v496
      %v754 = vpop.f32.mrb[0].mxu0
      %v755 = vadd.f32 %v329, %v754
      %v756 = vpop.f32.mrb[0].mxu0
      %v757 = vadd.f32 %v333, %v756
      %v758 = vpop.f32.mrb[0].mxu0
      %v759 = vadd.f32 %v329, %v758
      %v760 = vpop.f32.mrb[0].mxu0
      %v761 = vadd.f32 %v333, %v760
      %762 = vmatprep.mubr.bf16.mxu0 0
      %763 = vmatmul.mubr.bf16.gmra.mrb[0].mxu0 %v499
      %v764 = vpop.f32.mrb[0].mxu0
      %v765 = vadd.f32 %v329, %v764
      %v766 = vpop.f32.mrb[0].mxu0
      %v767 = vadd.f32 %v333, %v766
      %v768 = vpop.f32.mrb[0].mxu0
      %v769 = vadd.f32 %v329, %v768
      %v770 = vpop.f32.mrb[0].mxu0
      %v771 = vadd.f32 %v333, %v770
      %772 = vmatprep.mubr.bf16.mxu0 0
      %773 = vmatmul.mubr.bf16.gmra.mrb[0].mxu0 %v502
      %v774 = vpop.f32.mrb[0].mxu0
      %v775 = vadd.f32 %v329, %v774
      %v776 = vpop.f32.mrb[0].mxu0
      %v777 = vadd.f32 %v333, %v776
      %v778 = vpop.f32.mrb[0].mxu0
      %v779 = vadd.f32 %v329, %v778
      %v780 = vpop.f32.mrb[0].mxu0
      %v781 = vadd.f32 %v333, %v780
      %782 = vmatprep.mubr.bf16.mxu0 0
      %783 = vmatmul.mubr.bf16.gmra.mrb[0].mxu0 %v505
      %v784 = vpop.f32.mrb[0].mxu0
      %v785 = vadd.f32 %v329, %v784
      %v786 = vpop.f32.mrb[0].mxu0
      %v787 = vadd.f32 %v333, %v786
      %v788 = vpop.f32.mrb[0].mxu0
      %v789 = vadd.f32 %v329, %v788
      %v790 = vpop.f32.mrb[0].mxu0
      %v791 = vadd.f32 %v333, %v790
      %792 = vdwg.mxu0
      %v793 = vmul.f32 %v542, 0.2
      %v794 = vmul.f32 %v544, 0.2
      %v795 = vmul.f32 %v685, 0.2
      %v796 = vmul.f32 %v687, 0.2
      %v797 = vmul.f32 %v546, 0.2
      %v798 = vmul.f32 %v548, 0.2
      %v799 = vmul.f32 %v689, 0.2
      %v800 = vmul.f32 %v691, 0.2
      %v801 = vmul.f32 %v552, 0.2
      %v802 = vmul.f32 %v554, 0.2
      %v803 = vmul.f32 %v695, 0.2
      %v804 = vmul.f32 %v697, 0.2
      %v805 = vmul.f32 %v556, 0.2
      %v806 = vmul.f32 %v558, 0.2
      %v807 = vmul.f32 %v699, 0.2
      %v808 = vmul.f32 %v701, 0.2
      %v809 = vmul.f32 %v562, 0.2
      %v810 = vmul.f32 %v564, 0.2
      %v811 = vmul.f32 %v705, 0.2
      %v812 = vmul.f32 %v707, 0.2
      %v813 = vmul.f32 %v566, 0.2
      %v814 = vmul.f32 %v568, 0.2
      %v815 = vmul.f32 %v709, 0.2
      %v816 = vmul.f32 %v711, 0.2
      %v817 = vmul.f32 %v572, 0.2
      %v818 = vmul.f32 %v574, 0.2
      %v819 = vmul.f32 %v715, 0.2
      %v820 = vmul.f32 %v717, 0.2
      %v821 = vmul.f32 %v576, 0.2
      %v822 = vmul.f32 %v578, 0.2
      %v823 = vmul.f32 %v719, 0.2
      %v824 = vmul.f32 %v721, 0.2
      %v825 = vmul.f32 %v582, 0.2
      %v826 = vmul.f32 %v584, 0.2
      %v827 = vmul.f32 %v725, 0.2
      %v828 = vmul.f32 %v727, 0.2
      %v829 = vmul.f32 %v586, 0.2
      %v830 = vmul.f32 %v588, 0.2
      %v831 = vmul.f32 %v729, 0.2
      %v832 = vmul.f32 %v731, 0.2
      %v833 = vmul.f32 %v592, 0.2
      %v834 = vmul.f32 %v594, 0.2
      %v835 = vmul.f32 %v735, 0.2
      %v836 = vmul.f32 %v737, 0.2
      %v837 = vmul.f32 %v596, 0.2
      %v838 = vmul.f32 %v598, 0.2
      %v839 = vmul.f32 %v739, 0.2
      %v840 = vmul.f32 %v741, 0.2
      %v841 = vmul.f32 %v602, 0.2
      %v842 = vmul.f32 %v604, 0.2
      %v843 = vmul.f32 %v745, 0.2
      %v844 = vmul.f32 %v747, 0.2
      %v845 = vmul.f32 %v606, 0.2
      %v846 = vmul.f32 %v608, 0.2
      %v847 = vmul.f32 %v749, 0.2
      %v848 = vmul.f32 %v751, 0.2
      %v849 = vmul.f32 %v612, 0.2
      %v850 = vmul.f32 %v614, 0.2
      %v851 = vmul.f32 %v755, 0.2
      %v852 = vmul.f32 %v757, 0.2
      %v853 = vmul.f32 %v616, 0.2
      %v854 = vmul.f32 %v618, 0.2
      %v855 = vmul.f32 %v759, 0.2
      %v856 = vmul.f32 %v761, 0.2
      %v857 = vmul.f32 %v622, 0.2
      %v858 = vmul.f32 %v624, 0.2
      %v859 = vmul.f32 %v765, 0.2
      %v860 = vmul.f32 %v767, 0.2
      %v861 = vmul.f32 %v626, 0.2
      %v862 = vmul.f32 %v628, 0.2
      %v863 = vmul.f32 %v769, 0.2
      %v864 = vmul.f32 %v771, 0.2
      %v865 = vmul.f32 %v632, 0.2
      %v866 = vmul.f32 %v634, 0.2
      %v867 = vmul.f32 %v775, 0.2
      %v868 = vmul.f32 %v777, 0.2
      %v869 = vmul.f32 %v636, 0.2
      %v870 = vmul.f32 %v638, 0.2
      %v871 = vmul.f32 %v779, 0.2
      %v872 = vmul.f32 %v781, 0.2
      %v873 = vmul.f32 %v642, 0.2
      %v874 = vmul.f32 %v644, 0.2
      %v875 = vmul.f32 %v785, 0.2
      %v876 = vmul.f32 %v787, 0.2
      %v877 = vmul.f32 %v646, 0.2
      %v878 = vmul.f32 %v648, 0.2
      %v879 = vmul.f32 %v789, 0.2
      %v880 = vmul.f32 %v791, 0.2
      %v881 = vmax.f32 %v542, %v793
      %v882 = vmax.f32 %v544, %v794
      %v883 = vmax.f32 %v685, %v795
      %v884 = vmax.f32 %v687, %v796
      %v885 = vmax.f32 %v546, %v797
      %v886 = vmax.f32 %v548, %v798
      %v887 = vmax.f32 %v689, %v799
      %v888 = vmax.f32 %v691, %v800
      %v889 = vmax.f32 %v552, %v801
      %v890 = vmax.f32 %v554, %v802
      %v891 = vmax.f32 %v695, %v803
      %v892 = vmax.f32 %v697, %v804
      %v893 = vmax.f32 %v556, %v805
      %v894 = vmax.f32 %v558, %v806
      %v895 = vmax.f32 %v699, %v807
      %v896 = vmax.f32 %v701, %v808
      %v897 = vmax.f32 %v562, %v809
      %v898 = vmax.f32 %v564, %v810
      %v899 = vmax.f32 %v705, %v811
      %v900 = vmax.f32 %v707, %v812
      %v901 = vmax.f32 %v566, %v813
      %v902 = vmax.f32 %v568, %v814
      %v903 = vmax.f32 %v709, %v815
      %v904 = vmax.f32 %v711, %v816
      %v905 = vmax.f32 %v572, %v817
      %v906 = vmax.f32 %v574, %v818
      %v907 = vmax.f32 %v715, %v819
      %v908 = vmax.f32 %v717, %v820
      %v909 = vmax.f32 %v576, %v821
      %v910 = vmax.f32 %v578, %v822
      %v911 = vmax.f32 %v719, %v823
      %v912 = vmax.f32 %v721, %v824
      %v913 = vmax.f32 %v582, %v825
      %v914 = vmax.f32 %v584, %v826
      %v915 = vmax.f32 %v725, %v827
      %v916 = vmax.f32 %v727, %v828
      %v917 = vmax.f32 %v586, %v829
      %v918 = vmax.f32 %v588, %v830
      %v919 = vmax.f32 %v729, %v831
      %v920 = vmax.f32 %v731, %v832
      %v921 = vmax.f32 %v592, %v833
      %v922 = vmax.f32 %v594, %v834
      %v923 = vmax.f32 %v735, %v835
      %v924 = vmax.f32 %v737, %v836
      %v925 = vmax.f32 %v596, %v837
      %v926 = vmax.f32 %v598, %v838
      %v927 = vmax.f32 %v739, %v839
      %v928 = vmax.f32 %v741, %v840
      %v929 = vmax.f32 %v602, %v841
      %v930 = vmax.f32 %v604, %v842
      %v931 = vmax.f32 %v745, %v843
      %v932 = vmax.f32 %v747, %v844
      %v933 = vmax.f32 %v606, %v845
      %v934 = vmax.f32 %v608, %v846
      %v935 = vmax.f32 %v749, %v847
      %v936 = vmax.f32 %v751, %v848
      %v937 = vmax.f32 %v612, %v849
      %v938 = vmax.f32 %v614, %v850
      %v939 = vmax.f32 %v755, %v851
      %v940 = vmax.f32 %v757, %v852
      %v941 = vmax.f32 %v616, %v853
      %v942 = vmax.f32 %v618, %v854
      %v943 = vmax.f32 %v759, %v855
      %v944 = vmax.f32 %v761, %v856
      %v945 = vmax.f32 %v622, %v857
      %v946 = vmax.f32 %v624, %v858
      %v947 = vmax.f32 %v765, %v859
      %v948 = vmax.f32 %v767, %v860
      %v949 = vmax.f32 %v626, %v861
      %v950 = vmax.f32 %v628, %v862
      %v951 = vmax.f32 %v769, %v863
      %v952 = vmax.f32 %v771, %v864
      %v953 = vmax.f32 %v632, %v865
      %v954 = vmax.f32 %v634, %v866
      %v955 = vmax.f32 %v775, %v867
      %v956 = vmax.f32 %v777, %v868
      %v957 = vmax.f32 %v636, %v869
      %v958 = vmax.f32 %v638, %v870
      %v959 = vmax.f32 %v779, %v871
      %v960 = vmax.f32 %v781, %v872
      %v961 = vmax.f32 %v642, %v873
      %v962 = vmax.f32 %v644, %v874
      %v963 = vmax.f32 %v785, %v875
      %v964 = vmax.f32 %v787, %v876
      %v965 = vmax.f32 %v646, %v877
      %v966 = vmax.f32 %v648, %v878
      %v967 = vmax.f32 %v789, %v879
      %v968 = vmax.f32 %v791, %v880
      %v969 = vld [vmem:[%s2] sm:$0xff]
      %v970 = vld [vmem:[%s2 + $0x8] sm:$0xff]
      %v971 = vld [vmem:[%s2 + $0x10] sm:$0xff]
      %v972 = vld [vmem:[%s2 + $0x18] sm:$0xff]
      %v973 = vld [vmem:[%s2 + $0x20] sm:$0xff]
      %v974 = vld [vmem:[%s2 + $0x28] sm:$0xff]
      %v975 = vld [vmem:[%s2 + $0x30] sm:$0xff]
      %v976 = vld [vmem:[%s2 + $0x38] sm:$0xff]
      %v977 = vld [vmem:[%s2 + $0x40] sm:$0xff]
      %v978 = vld [vmem:[%s2 + $0x48] sm:$0xff]
      %v979 = vld [vmem:[%s2 + $0x50] sm:$0xff]
      %v980 = vld [vmem:[%s2 + $0x58] sm:$0xff]
      %v981 = vld [vmem:[%s2 + $0x60] sm:$0xff]
      %v982 = vld [vmem:[%s2 + $0x68] sm:$0xff]
      %v983 = vld [vmem:[%s2 + $0x70] sm:$0xff]
      %v984 = vld [vmem:[%s2 + $0x78] sm:$0xff]
      %v985 = vld [vmem:[%s2 + $0x80] sm:$0xff]
      %v986 = vld [vmem:[%s2 + $0x88] sm:$0xff]
      %v987 = vld [vmem:[%s2 + $0x90] sm:$0xff]
      %v988 = vld [vmem:[%s2 + $0x98] sm:$0xff]
      %v989 = vld [vmem:[%s2 + $0xa0] sm:$0xff]
      %v990 = vld [vmem:[%s2 + $0xa8] sm:$0xff]
      %v991 = vld [vmem:[%s2 + $0xb0] sm:$0xff]
      %v992 = vld [vmem:[%s2 + $0xb8] sm:$0xff]
      %v993 = vld [vmem:[%s2 + $0xc0] sm:$0xff]
      %v994 = vld [vmem:[%s2 + $0xc8] sm:$0xff]
      %v995 = vld [vmem:[%s2 + $0xd0] sm:$0xff]
      %v996 = vld [vmem:[%s2 + $0xd8] sm:$0xff]
      %v997 = vld [vmem:[%s2 + $0xe0] sm:$0xff]
      %v998 = vld [vmem:[%s2 + $0xe8] sm:$0xff]
      %v999 = vld [vmem:[%s2 + $0xf0] sm:$0xff]
      %v1000 = vld [vmem:[%s2 + $0xf8] sm:$0xff]
      %v1001 = vld [vmem:[%s2 + $0x100] sm:$0xff]
      %v1002 = vld [vmem:[%s2 + $0x108] sm:$0xff]
      %v1003 = vld [vmem:[%s2 + $0x110] sm:$0xff]
      %v1004 = vld [vmem:[%s2 + $0x118] sm:$0xff]
      %v1005 = vld [vmem:[%s2 + $0x120] sm:$0xff]
      %v1006 = vld [vmem:[%s2 + $0x128] sm:$0xff]
      %v1007 = vld [vmem:[%s2 + $0x130] sm:$0xff]
      %v1008 = vld [vmem:[%s2 + $0x138] sm:$0xff]
      %v1009 = vld [vmem:[%s2 + $0x140] sm:$0xff]
      %v1010 = vld [vmem:[%s2 + $0x148] sm:$0xff]
      %v1011 = vld [vmem:[%s2 + $0x150] sm:$0xff]
      %v1012 = vld [vmem:[%s2 + $0x158] sm:$0xff]
      %v1013 = vld [vmem:[%s2 + $0x160] sm:$0xff]
      %v1014 = vld [vmem:[%s2 + $0x168] sm:$0xff]
      %v1015 = vld [vmem:[%s2 + $0x170] sm:$0xff]
      %v1016 = vld [vmem:[%s2 + $0x178] sm:$0xff]
      %v1017 = vld [vmem:[%s2 + $0x180] sm:$0xff]
      %v1018 = vld [vmem:[%s2 + $0x188] sm:$0xff]
      %v1019 = vld [vmem:[%s2 + $0x190] sm:$0xff]
      %v1020 = vld [vmem:[%s2 + $0x198] sm:$0xff]
      %v1021 = vld [vmem:[%s2 + $0x1a0] sm:$0xff]
      %v1022 = vld [vmem:[%s2 + $0x1a8] sm:$0xff]
      %v1023 = vld [vmem:[%s2 + $0x1b0] sm:$0xff]
      %v1024 = vld [vmem:[%s2 + $0x1b8] sm:$0xff]
      %v1025 = vld [vmem:[%s2 + $0x1c0] sm:$0xff]
      %v1026 = vld [vmem:[%s2 + $0x1c8] sm:$0xff]
      %v1027 = vld [vmem:[%s2 + $0x1d0] sm:$0xff]
      %v1028 = vld [vmem:[%s2 + $0x1d8] sm:$0xff]
      %v1029 = vld [vmem:[%s2 + $0x1e0] sm:$0xff]
      %v1030 = vld [vmem:[%s2 + $0x1e8] sm:$0xff]
      %v1031 = vld [vmem:[%s2 + $0x1f0] sm:$0xff]
      %v1032 = vld [vmem:[%s2 + $0x1f8] sm:$0xff]
      %v1033 = vpack.c.bf16 %v885, %v881
      %v1034 = vpack.c.bf16 %v886, %v882
      %v1035 = vpack.c.bf16 %v887, %v883
      %v1036 = vpack.c.bf16 %v888, %v884
      %v1037 = vpack.c.bf16 %v893, %v889
      %v1038 = vpack.c.bf16 %v894, %v890
      %v1039 = vpack.c.bf16 %v895, %v891
      %v1040 = vpack.c.bf16 %v896, %v892
      %v1041 = vpack.c.bf16 %v901, %v897
      %v1042 = vpack.c.bf16 %v902, %v898
      %v1043 = vpack.c.bf16 %v903, %v899
      %v1044 = vpack.c.bf16 %v904, %v900
      %v1045 = vpack.c.bf16 %v909, %v905
      %v1046 = vpack.c.bf16 %v910, %v906
      %v1047 = vpack.c.bf16 %v911, %v907
      %v1048 = vpack.c.bf16 %v912, %v908
      %v1049 = vpack.c.bf16 %v917, %v913
      %v1050 = vpack.c.bf16 %v918, %v914
      %v1051 = vpack.c.bf16 %v919, %v915
      %v1052 = vpack.c.bf16 %v920, %v916
      %v1053 = vpack.c.bf16 %v925, %v921
      %v1054 = vpack.c.bf16 %v926, %v922
      %v1055 = vpack.c.bf16 %v927, %v923
      %v1056 = vpack.c.bf16 %v928, %v924
      %v1057 = vpack.c.bf16 %v933, %v929
      %v1058 = vpack.c.bf16 %v934, %v930
      %v1059 = vpack.c.bf16 %v935, %v931
      %v1060 = vpack.c.bf16 %v936, %v932
      %v1061 = vpack.c.bf16 %v941, %v937
      %v1062 = vpack.c.bf16 %v942, %v938
      %v1063 = vpack.c.bf16 %v943, %v939
      %v1064 = vpack.c.bf16 %v944, %v940
      %v1065 = vpack.c.bf16 %v949, %v945
      %v1066 = vpack.c.bf16 %v950, %v946
      %v1067 = vpack.c.bf16 %v951, %v947
      %v1068 = vpack.c.bf16 %v952, %v948
      %v1069 = vpack.c.bf16 %v957, %v953
      %v1070 = vpack.c.bf16 %v958, %v954
      %v1071 = vpack.c.bf16 %v959, %v955
      %v1072 = vpack.c.bf16 %v960, %v956
      %v1073 = vpack.c.bf16 %v965, %v961
      %v1074 = vpack.c.bf16 %v966, %v962
      %v1075 = vpack.c.bf16 %v967, %v963
      %v1076 = vpack.c.bf16 %v968, %v964
      %v1141 = vunpack.c.l.b16 %v969
      %v1142 = vunpack.c.h.b16 %v969
      %v1143 = vunpack.c.l.b16 %v970
      %v1144 = vunpack.c.h.b16 %v970
      %v1145 = vunpack.c.l.b16 %v971
      %v1146 = vunpack.c.h.b16 %v971
      %v1147 = vunpack.c.l.b16 %v972
      %v1148 = vunpack.c.h.b16 %v972
      %v1149 = vunpack.c.l.b16 %v973
      %v1150 = vunpack.c.h.b16 %v973
      %v1151 = vunpack.c.l.b16 %v974
      %v1152 = vunpack.c.h.b16 %v974
      %v1153 = vunpack.c.l.b16 %v975
      %v1154 = vunpack.c.h.b16 %v975
      %v1155 = vunpack.c.l.b16 %v976
      %v1156 = vunpack.c.h.b16 %v976
      %v1157 = vunpack.c.l.b16 %v977
      %v1158 = vunpack.c.h.b16 %v977
      %v1159 = vunpack.c.l.b16 %v978
      %v1160 = vunpack.c.h.b16 %v978
      %v1161 = vunpack.c.l.b16 %v979
      %v1162 = vunpack.c.h.b16 %v979
      %v1163 = vunpack.c.l.b16 %v980
      %v1164 = vunpack.c.h.b16 %v980
      %v1165 = vunpack.c.l.b16 %v981
      %v1166 = vunpack.c.h.b16 %v981
      %v1167 = vunpack.c.l.b16 %v982
      %v1168 = vunpack.c.h.b16 %v982
      %v1169 = vunpack.c.l.b16 %v983
      %v1170 = vunpack.c.h.b16 %v983
      %v1171 = vunpack.c.l.b16 %v984
      %v1172 = vunpack.c.h.b16 %v984
      %v1173 = vunpack.c.l.b16 %v985
      %v1174 = vunpack.c.h.b16 %v985
      %v1175 = vunpack.c.l.b16 %v986
      %v1176 = vunpack.c.h.b16 %v986
      %v1177 = vunpack.c.l.b16 %v987
      %v1178 = vunpack.c.h.b16 %v987
      %v1179 = vunpack.c.l.b16 %v988
      %v1180 = vunpack.c.h.b16 %v988
      %v1181 = vunpack.c.l.b16 %v989
      %v1182 = vunpack.c.h.b16 %v989
      %v1183 = vunpack.c.l.b16 %v990
      %v1184 = vunpack.c.h.b16 %v990
      %v1185 = vunpack.c.l.b16 %v991
      %v1186 = vunpack.c.h.b16 %v991
      %v1187 = vunpack.c.l.b16 %v992
      %v1188 = vunpack.c.h.b16 %v992
      %v1189 = vunpack.c.l.b16 %v993
      %v1190 = vunpack.c.h.b16 %v993
      %v1191 = vunpack.c.l.b16 %v994
      %v1192 = vunpack.c.h.b16 %v994
      %v1193 = vunpack.c.l.b16 %v995
      %v1194 = vunpack.c.h.b16 %v995
      %v1195 = vunpack.c.l.b16 %v996
      %v1196 = vunpack.c.h.b16 %v996
      %v1197 = vunpack.c.l.b16 %v997
      %v1198 = vunpack.c.h.b16 %v997
      %v1199 = vunpack.c.l.b16 %v998
      %v1200 = vunpack.c.h.b16 %v998
      %v1201 = vunpack.c.l.b16 %v999
      %v1202 = vunpack.c.h.b16 %v999
      %v1203 = vunpack.c.l.b16 %v1000
      %v1204 = vunpack.c.h.b16 %v1000
      %v1205 = vunpack.c.l.b16 %v1001
      %v1206 = vunpack.c.h.b16 %v1001
      %v1207 = vunpack.c.l.b16 %v1002
      %v1208 = vunpack.c.h.b16 %v1002
      %v1209 = vunpack.c.l.b16 %v1003
      %v1210 = vunpack.c.h.b16 %v1003
      %v1211 = vunpack.c.l.b16 %v1004
      %v1212 = vunpack.c.h.b16 %v1004
      %v1213 = vunpack.c.l.b16 %v1005
      %v1214 = vunpack.c.h.b16 %v1005
      %v1215 = vunpack.c.l.b16 %v1006
      %v1216 = vunpack.c.h.b16 %v1006
      %v1217 = vunpack.c.l.b16 %v1007
      %v1218 = vunpack.c.h.b16 %v1007
      %v1219 = vunpack.c.l.b16 %v1008
      %v1220 = vunpack.c.h.b16 %v1008
      %v1221 = vunpack.c.l.b16 %v1009
      %v1222 = vunpack.c.h.b16 %v1009
      %v1223 = vunpack.c.l.b16 %v1010
      %v1224 = vunpack.c.h.b16 %v1010
      %v1225 = vunpack.c.l.b16 %v1011
      %v1226 = vunpack.c.h.b16 %v1011
      %v1227 = vunpack.c.l.b16 %v1012
      %v1228 = vunpack.c.h.b16 %v1012
      %v1229 = vunpack.c.l.b16 %v1013
      %v1230 = vunpack.c.h.b16 %v1013
      %v1231 = vunpack.c.l.b16 %v1014
      %v1232 = vunpack.c.h.b16 %v1014
      %v1233 = vunpack.c.l.b16 %v1015
      %v1234 = vunpack.c.h.b16 %v1015
      %v1235 = vunpack.c.l.b16 %v1016
      %v1236 = vunpack.c.h.b16 %v1016
      %v1237 = vunpack.c.l.b16 %v1017
      %v1238 = vunpack.c.h.b16 %v1017
      %v1239 = vunpack.c.l.b16 %v1018
      %v1240 = vunpack.c.h.b16 %v1018
      %v1241 = vunpack.c.l.b16 %v1019
      %v1242 = vunpack.c.h.b16 %v1019
      %v1243 = vunpack.c.l.b16 %v1020
      %v1244 = vunpack.c.h.b16 %v1020
      %v1245 = vunpack.c.l.b16 %v1021
      %v1246 = vunpack.c.h.b16 %v1021
      %v1247 = vunpack.c.l.b16 %v1022
      %v1248 = vunpack.c.h.b16 %v1022
      %v1249 = vunpack.c.l.b16 %v1023
      %v1250 = vunpack.c.h.b16 %v1023
      %v1251 = vunpack.c.l.b16 %v1024
      %v1252 = vunpack.c.h.b16 %v1024
      %v1253 = vunpack.c.l.b16 %v1025
      %v1254 = vunpack.c.h.b16 %v1025
      %v1255 = vunpack.c.l.b16 %v1026
      %v1256 = vunpack.c.h.b16 %v1026
      %v1257 = vunpack.c.l.b16 %v1027
      %v1258 = vunpack.c.h.b16 %v1027
      %v1259 = vunpack.c.l.b16 %v1028
      %v1260 = vunpack.c.h.b16 %v1028
      %v1261 = vunpack.c.l.b16 %v1029
      %v1262 = vunpack.c.h.b16 %v1029
      %v1263 = vunpack.c.l.b16 %v1030
      %v1264 = vunpack.c.h.b16 %v1030
      %v1265 = vunpack.c.l.b16 %v1031
      %v1266 = vunpack.c.h.b16 %v1031
      %v1267 = vunpack.c.l.b16 %v1032
      %v1268 = vunpack.c.h.b16 %v1032
      %v1269 = vpack.c.b16 %v1143, %v1141
      %v1270 = vpack.c.b16 %v1144, %v1142
      %v1271 = vpack.c.b16 %v1147, %v1145
      %v1272 = vpack.c.b16 %v1148, %v1146
      %v1273 = vpack.c.b16 %v1151, %v1149
      %v1274 = vpack.c.b16 %v1152, %v1150
      %v1275 = vpack.c.b16 %v1155, %v1153
      %v1276 = vpack.c.b16 %v1156, %v1154
      %v1277 = vpack.c.b16 %v1159, %v1157
      %v1278 = vpack.c.b16 %v1160, %v1158
      %v1279 = vpack.c.b16 %v1163, %v1161
      %v1280 = vpack.c.b16 %v1164, %v1162
      %v1281 = vpack.c.b16 %v1167, %v1165
      %v1282 = vpack.c.b16 %v1168, %v1166
      %v1283 = vpack.c.b16 %v1171, %v1169
      %v1284 = vpack.c.b16 %v1172, %v1170
      %v1285 = vpack.c.b16 %v1175, %v1173
      %v1286 = vpack.c.b16 %v1176, %v1174
      %v1287 = vpack.c.b16 %v1179, %v1177
      %v1288 = vpack.c.b16 %v1180, %v1178
      %v1289 = vpack.c.b16 %v1183, %v1181
      %v1290 = vpack.c.b16 %v1184, %v1182
      %v1291 = vpack.c.b16 %v1187, %v1185
      %v1292 = vpack.c.b16 %v1188, %v1186
      %v1293 = vpack.c.b16 %v1191, %v1189
      %v1294 = vpack.c.b16 %v1192, %v1190
      %v1295 = vpack.c.b16 %v1195, %v1193
      %v1296 = vpack.c.b16 %v1196, %v1194
      %v1297 = vpack.c.b16 %v1199, %v1197
      %v1298 = vpack.c.b16 %v1200, %v1198
      %v1299 = vpack.c.b16 %v1203, %v1201
      %v1300 = vpack.c.b16 %v1204, %v1202
      %v1301 = vpack.c.b16 %v1207, %v1205
      %v1302 = vpack.c.b16 %v1208, %v1206
      %v1303 = vpack.c.b16 %v1211, %v1209
      %v1304 = vpack.c.b16 %v1212, %v1210
      %v1305 = vpack.c.b16 %v1215, %v1213
      %v1306 = vpack.c.b16 %v1216, %v1214
      %v1307 = vpack.c.b16 %v1219, %v1217
      %v1308 = vpack.c.b16 %v1220, %v1218
      %v1309 = vpack.c.b16 %v1223, %v1221
      %v1310 = vpack.c.b16 %v1224, %v1222
      %v1311 = vpack.c.b16 %v1227, %v1225
      %v1312 = vpack.c.b16 %v1228, %v1226
      %v1313 = vpack.c.b16 %v1231, %v1229
      %v1314 = vpack.c.b16 %v1232, %v1230
      %v1315 = vpack.c.b16 %v1235, %v1233
      %v1316 = vpack.c.b16 %v1236, %v1234
      %v1317 = vpack.c.b16 %v1239, %v1237
      %v1318 = vpack.c.b16 %v1240, %v1238
      %v1319 = vpack.c.b16 %v1243, %v1241
      %v1320 = vpack.c.b16 %v1244, %v1242
      %v1321 = vpack.c.b16 %v1247, %v1245
      %v1322 = vpack.c.b16 %v1248, %v1246
      %v1323 = vpack.c.b16 %v1251, %v1249
      %v1324 = vpack.c.b16 %v1252, %v1250
      %v1325 = vpack.c.b16 %v1255, %v1253
      %v1326 = vpack.c.b16 %v1256, %v1254
      %v1327 = vpack.c.b16 %v1259, %v1257
      %v1328 = vpack.c.b16 %v1260, %v1258
      %v1329 = vpack.c.b16 %v1263, %v1261
      %v1330 = vpack.c.b16 %v1264, %v1262
      %v1331 = vpack.c.b16 %v1267, %v1265
      %v1332 = vpack.c.b16 %v1268, %v1266
      %vm1365 = vcmask 392192
      %v1367 = vsel %vm1365, %v1270, 0
      %v1370 = vsel %vm1365, %v1272, 0
      %v1373 = vsel %vm1365, %v1274, 0
      %v1376 = vsel %vm1365, %v1276, 0
      %v1379 = vsel %vm1365, %v1278, 0
      %v1382 = vsel %vm1365, %v1280, 0
      %v1385 = vsel %vm1365, %v1282, 0
      %v1388 = vsel %vm1365, %v1284, 0
      %v1391 = vsel %vm1365, %v1286, 0
      %v1394 = vsel %vm1365, %v1288, 0
      %v1397 = vsel %vm1365, %v1290, 0
      %v1400 = vsel %vm1365, %v1292, 0
      %v1403 = vsel %vm1365, %v1294, 0
      %v1406 = vsel %vm1365, %v1296, 0
      %v1409 = vsel %vm1365, %v1298, 0
      %v1412 = vsel %vm1365, %v1300, 0
      %v1415 = vsel %vm1365, %v1302, 0
      %v1418 = vsel %vm1365, %v1304, 0
      %v1421 = vsel %vm1365, %v1306, 0
      %v1424 = vsel %vm1365, %v1308, 0
      %v1427 = vsel %vm1365, %v1310, 0
      %v1430 = vsel %vm1365, %v1312, 0
      %v1433 = vsel %vm1365, %v1314, 0
      %v1436 = vsel %vm1365, %v1316, 0
      %v1439 = vsel %vm1365, %v1318, 0
      %v1442 = vsel %vm1365, %v1320, 0
      %v1445 = vsel %vm1365, %v1322, 0
      %v1448 = vsel %vm1365, %v1324, 0
      %v1451 = vsel %vm1365, %v1326, 0
      %v1454 = vsel %vm1365, %v1328, 0
      %v1457 = vsel %vm1365, %v1330, 0
      %v1460 = vsel %vm1365, %v1332, 0
      %1462 = vmatprep.subr.bf16.mxu0 %v1034
      %1463 = vmatpush1.bf16.msra.mxu0 %v1033
      %1464 = vmatprep.subr.bf16.mxu0 %v1038
      %1465 = vmatpush1.bf16.msra.mxu0 %v1037
      %1466 = vmatprep.subr.bf16.mxu0 %v1042
      %1467 = vmatpush1.bf16.msra.mxu0 %v1041
      %1468 = vmatprep.subr.bf16.mxu0 %v1046
      %1469 = vmatpush1.bf16.msra.mxu0 %v1045
      %1470 = vmatprep.subr.bf16.mxu0 %v1050
      %1471 = vmatpush1.bf16.msra.mxu0 %v1049
      %1472 = vmatprep.subr.bf16.mxu0 %v1054
      %1473 = vmatpush1.bf16.msra.mxu0 %v1053
      %1474 = vmatprep.subr.bf16.mxu0 %v1058
      %1475 = vmatpush1.bf16.msra.mxu0 %v1057
      %1476 = vmatprep.subr.bf16.mxu0 %v1062
      %1477 = vmatpush1.bf16.msra.mxu0 %v1061
      %1478 = vmatprep.subr.bf16.mxu0 %v1066
      %1479 = vmatpush1.bf16.msra.mxu0 %v1065
      %1480 = vmatprep.subr.bf16.mxu0 %v1070
      %1481 = vmatpush1.bf16.msra.mxu0 %v1069
      %1482 = vmatprep.subr.bf16.mxu0 %v1074
      %1483 = vmatpush1.bf16.msra.mxu0 %v1073
      %1484 = vmatprep.subr.bf16.mxu0 0
      %1485 = vmatpush1.bf16.msra.mxu0 0
      %1486 = vmatprep.subr.bf16.mxu0 0
      %1487 = vmatpush1.bf16.msra.mxu0 0
      %1488 = vmatprep.subr.bf16.mxu0 0
      %1489 = vmatpush1.bf16.msra.mxu0 0
      %1490 = vmatprep.subr.bf16.mxu0 0
      %1491 = vmatpush1.bf16.msra.mxu0 0
      %1492 = vmatprep.subr.bf16.mxu0 0
      %1493 = vmatpush1.bf16.msra.mxu0 0
      %1494 = vmatprep.mubr.bf16.mxu0 %v1367
      %1495 = vmatmul.mubr.bf16.gmra.mrb[0].mxu0 %v1269
      %v1496 = vpop.f32.mrb[0].mxu0
      %v1497 = vadd.f32 0.0, %v1496
      %v1498 = vpop.f32.mrb[0].mxu0
      %v1499 = vadd.f32 0.0, %v1498
      %v1500 = vpop.f32.mrb[0].mxu0
      %v1501 = vadd.f32 0.0, %v1500
      %v1502 = vpop.f32.mrb[0].mxu0
      %v1503 = vadd.f32 0.0, %v1502
      %1504 = vmatprep.mubr.bf16.mxu0 %v1370
      %1505 = vmatmul.mubr.bf16.gmra.mrb[0].mxu0 %v1271
      %v1506 = vpop.f32.mrb[0].mxu0
      %v1507 = vadd.f32 0.0, %v1506
      %v1508 = vpop.f32.mrb[0].mxu0
      %v1509 = vadd.f32 0.0, %v1508
      %v1510 = vpop.f32.mrb[0].mxu0
      %v1511 = vadd.f32 0.0, %v1510
      %v1512 = vpop.f32.mrb[0].mxu0
      %v1513 = vadd.f32 0.0, %v1512
      %1514 = vmatprep.mubr.bf16.mxu0 %v1373
      %1515 = vmatmul.mubr.bf16.gmra.mrb[0].mxu0 %v1273
      %v1516 = vpop.f32.mrb[0].mxu0
      %v1517 = vadd.f32 0.0, %v1516
      %v1518 = vpop.f32.mrb[0].mxu0
      %v1519 = vadd.f32 0.0, %v1518
      %v1520 = vpop.f32.mrb[0].mxu0
      %v1521 = vadd.f32 0.0, %v1520
      %v1522 = vpop.f32.mrb[0].mxu0
      %v1523 = vadd.f32 0.0, %v1522
      %1524 = vmatprep.mubr.bf16.mxu0 %v1376
      %1525 = vmatmul.mubr.bf16.gmra.mrb[0].mxu0 %v1275
      %v1526 = vpop.f32.mrb[0].mxu0
      %v1527 = vadd.f32 0.0, %v1526
      %v1528 = vpop.f32.mrb[0].mxu0
      %v1529 = vadd.f32 0.0, %v1528
      %v1530 = vpop.f32.mrb[0].mxu0
      %v1531 = vadd.f32 0.0, %v1530
      %v1532 = vpop.f32.mrb[0].mxu0
      %v1533 = vadd.f32 0.0, %v1532
      %1534 = vmatprep.mubr.bf16.mxu0 %v1379
      %1535 = vmatmul.mubr.bf16.gmra.mrb[0].mxu0 %v1277
      %v1536 = vpop.f32.mrb[0].mxu0
      %v1537 = vadd.f32 0.0, %v1536
      %v1538 = vpop.f32.mrb[0].mxu0
      %v1539 = vadd.f32 0.0, %v1538
      %v1540 = vpop.f32.mrb[0].mxu0
      %v1541 = vadd.f32 0.0, %v1540
      %v1542 = vpop.f32.mrb[0].mxu0
      %v1543 = vadd.f32 0.0, %v1542
      %1544 = vmatprep.mubr.bf16.mxu0 %v1382
      %1545 = vmatmul.mubr.bf16.gmra.mrb[0].mxu0 %v1279
      %v1546 = vpop.f32.mrb[0].mxu0
      %v1547 = vadd.f32 0.0, %v1546
      %v1548 = vpop.f32.mrb[0].mxu0
      %v1549 = vadd.f32 0.0, %v1548
      %v1550 = vpop.f32.mrb[0].mxu0
      %v1551 = vadd.f32 0.0, %v1550
      %v1552 = vpop.f32.mrb[0].mxu0
      %v1553 = vadd.f32 0.0, %v1552
      %1554 = vmatprep.mubr.bf16.mxu0 %v1385
      %1555 = vmatmul.mubr.bf16.gmra.mrb[0].mxu0 %v1281
      %v1556 = vpop.f32.mrb[0].mxu0
      %v1557 = vadd.f32 0.0, %v1556
      %v1558 = vpop.f32.mrb[0].mxu0
      %v1559 = vadd.f32 0.0, %v1558
      %v1560 = vpop.f32.mrb[0].mxu0
      %v1561 = vadd.f32 0.0, %v1560
      %v1562 = vpop.f32.mrb[0].mxu0
      %v1563 = vadd.f32 0.0, %v1562
      %1564 = vmatprep.mubr.bf16.mxu0 %v1388
      %1565 = vmatmul.mubr.bf16.gmra.mrb[0].mxu0 %v1283
      %v1566 = vpop.f32.mrb[0].mxu0
      %v1567 = vadd.f32 0.0, %v1566
      %v1568 = vpop.f32.mrb[0].mxu0
      %v1569 = vadd.f32 0.0, %v1568
      %v1570 = vpop.f32.mrb[0].mxu0
      %v1571 = vadd.f32 0.0, %v1570
      %v1572 = vpop.f32.mrb[0].mxu0
      %v1573 = vadd.f32 0.0, %v1572
      %1574 = vmatprep.mubr.bf16.mxu0 %v1391
      %1575 = vmatmul.mubr.bf16.gmra.mrb[0].mxu0 %v1285
      %v1576 = vpop.f32.mrb[0].mxu0
      %v1577 = vadd.f32 0.0, %v1576
      %v1578 = vpop.f32.mrb[0].mxu0
      %v1579 = vadd.f32 0.0, %v1578
      %v1580 = vpop.f32.mrb[0].mxu0
      %v1581 = vadd.f32 0.0, %v1580
      %v1582 = vpop.f32.mrb[0].mxu0
      %v1583 = vadd.f32 0.0, %v1582
      %1584 = vmatprep.mubr.bf16.mxu0 %v1394
      %1585 = vmatmul.mubr.bf16.gmra.mrb[0].mxu0 %v1287
      %v1586 = vpop.f32.mrb[0].mxu0
      %v1587 = vadd.f32 0.0, %v1586
      %v1588 = vpop.f32.mrb[0].mxu0
      %v1589 = vadd.f32 0.0, %v1588
      %v1590 = vpop.f32.mrb[0].mxu0
      %v1591 = vadd.f32 0.0, %v1590
      %v1592 = vpop.f32.mrb[0].mxu0
      %v1593 = vadd.f32 0.0, %v1592
      %1594 = vmatprep.mubr.bf16.mxu0 %v1397
      %1595 = vmatmul.mubr.bf16.gmra.mrb[0].mxu0 %v1289
      %v1596 = vpop.f32.mrb[0].mxu0
      %v1597 = vadd.f32 0.0, %v1596
      %v1598 = vpop.f32.mrb[0].mxu0
      %v1599 = vadd.f32 0.0, %v1598
      %v1600 = vpop.f32.mrb[0].mxu0
      %v1601 = vadd.f32 0.0, %v1600
      %v1602 = vpop.f32.mrb[0].mxu0
      %v1603 = vadd.f32 0.0, %v1602
      %1604 = vmatprep.mubr.bf16.mxu0 %v1400
      %1605 = vmatmul.mubr.bf16.gmra.mrb[0].mxu0 %v1291
      %v1606 = vpop.f32.mrb[0].mxu0
      %v1607 = vadd.f32 0.0, %v1606
      %v1608 = vpop.f32.mrb[0].mxu0
      %v1609 = vadd.f32 0.0, %v1608
      %v1610 = vpop.f32.mrb[0].mxu0
      %v1611 = vadd.f32 0.0, %v1610
      %v1612 = vpop.f32.mrb[0].mxu0
      %v1613 = vadd.f32 0.0, %v1612
      %1614 = vmatprep.mubr.bf16.mxu0 %v1403
      %1615 = vmatmul.mubr.bf16.gmra.mrb[0].mxu0 %v1293
      %v1616 = vpop.f32.mrb[0].mxu0
      %v1617 = vadd.f32 0.0, %v1616
      %v1618 = vpop.f32.mrb[0].mxu0
      %v1619 = vadd.f32 0.0, %v1618
      %v1620 = vpop.f32.mrb[0].mxu0
      %v1621 = vadd.f32 0.0, %v1620
      %v1622 = vpop.f32.mrb[0].mxu0
      %v1623 = vadd.f32 0.0, %v1622
      %1624 = vmatprep.mubr.bf16.mxu0 %v1406
      %1625 = vmatmul.mubr.bf16.gmra.mrb[0].mxu0 %v1295
      %v1626 = vpop.f32.mrb[0].mxu0
      %v1627 = vadd.f32 0.0, %v1626
      %v1628 = vpop.f32.mrb[0].mxu0
      %v1629 = vadd.f32 0.0, %v1628
      %v1630 = vpop.f32.mrb[0].mxu0
      %v1631 = vadd.f32 0.0, %v1630
      %v1632 = vpop.f32.mrb[0].mxu0
      %v1633 = vadd.f32 0.0, %v1632
      %1634 = vmatprep.mubr.bf16.mxu0 %v1409
      %1635 = vmatmul.mubr.bf16.gmra.mrb[0].mxu0 %v1297
      %v1636 = vpop.f32.mrb[0].mxu0
      %v1637 = vadd.f32 0.0, %v1636
      %v1638 = vpop.f32.mrb[0].mxu0
      %v1639 = vadd.f32 0.0, %v1638
      %v1640 = vpop.f32.mrb[0].mxu0
      %v1641 = vadd.f32 0.0, %v1640
      %v1642 = vpop.f32.mrb[0].mxu0
      %v1643 = vadd.f32 0.0, %v1642
      %1644 = vmatprep.mubr.bf16.mxu0 %v1412
      %1645 = vmatmul.mubr.bf16.gmra.mrb[0].mxu0 %v1299
      %v1646 = vpop.f32.mrb[0].mxu0
      %v1647 = vadd.f32 0.0, %v1646
      %v1648 = vpop.f32.mrb[0].mxu0
      %v1649 = vadd.f32 0.0, %v1648
      %v1650 = vpop.f32.mrb[0].mxu0
      %v1651 = vadd.f32 0.0, %v1650
      %v1652 = vpop.f32.mrb[0].mxu0
      %v1653 = vadd.f32 0.0, %v1652
      %1654 = vmatprep.mubr.bf16.mxu0 %v1415
      %1655 = vmatmul.mubr.bf16.gmra.mrb[0].mxu0 %v1301
      %v1656 = vpop.f32.mrb[0].mxu0
      %v1657 = vadd.f32 0.0, %v1656
      %v1658 = vpop.f32.mrb[0].mxu0
      %v1659 = vadd.f32 0.0, %v1658
      %v1660 = vpop.f32.mrb[0].mxu0
      %v1661 = vadd.f32 0.0, %v1660
      %v1662 = vpop.f32.mrb[0].mxu0
      %v1663 = vadd.f32 0.0, %v1662
      %1664 = vmatprep.mubr.bf16.mxu0 %v1418
      %1665 = vmatmul.mubr.bf16.gmra.mrb[0].mxu0 %v1303
      %v1666 = vpop.f32.mrb[0].mxu0
      %v1667 = vadd.f32 0.0, %v1666
      %v1668 = vpop.f32.mrb[0].mxu0
      %v1669 = vadd.f32 0.0, %v1668
      %v1670 = vpop.f32.mrb[0].mxu0
      %v1671 = vadd.f32 0.0, %v1670
      %v1672 = vpop.f32.mrb[0].mxu0
      %v1673 = vadd.f32 0.0, %v1672
      %1674 = vmatprep.mubr.bf16.mxu0 %v1421
      %1675 = vmatmul.mubr.bf16.gmra.mrb[0].mxu0 %v1305
      %v1676 = vpop.f32.mrb[0].mxu0
      %v1677 = vadd.f32 0.0, %v1676
      %v1678 = vpop.f32.mrb[0].mxu0
      %v1679 = vadd.f32 0.0, %v1678
      %v1680 = vpop.f32.mrb[0].mxu0
      %v1681 = vadd.f32 0.0, %v1680
      %v1682 = vpop.f32.mrb[0].mxu0
      %v1683 = vadd.f32 0.0, %v1682
      %1684 = vmatprep.mubr.bf16.mxu0 %v1424
      %1685 = vmatmul.mubr.bf16.gmra.mrb[0].mxu0 %v1307
      %v1686 = vpop.f32.mrb[0].mxu0
      %v1687 = vadd.f32 0.0, %v1686
      %v1688 = vpop.f32.mrb[0].mxu0
      %v1689 = vadd.f32 0.0, %v1688
      %v1690 = vpop.f32.mrb[0].mxu0
      %v1691 = vadd.f32 0.0, %v1690
      %v1692 = vpop.f32.mrb[0].mxu0
      %v1693 = vadd.f32 0.0, %v1692
      %1694 = vmatprep.mubr.bf16.mxu0 %v1427
      %1695 = vmatmul.mubr.bf16.gmra.mrb[0].mxu0 %v1309
      %v1696 = vpop.f32.mrb[0].mxu0
      %v1697 = vadd.f32 0.0, %v1696
      %v1698 = vpop.f32.mrb[0].mxu0
      %v1699 = vadd.f32 0.0, %v1698
      %v1700 = vpop.f32.mrb[0].mxu0
      %v1701 = vadd.f32 0.0, %v1700
      %v1702 = vpop.f32.mrb[0].mxu0
      %v1703 = vadd.f32 0.0, %v1702
      %1704 = vmatprep.mubr.bf16.mxu0 %v1430
      %1705 = vmatmul.mubr.bf16.gmra.mrb[0].mxu0 %v1311
      %v1706 = vpop.f32.mrb[0].mxu0
      %v1707 = vadd.f32 0.0, %v1706
      %v1708 = vpop.f32.mrb[0].mxu0
      %v1709 = vadd.f32 0.0, %v1708
      %v1710 = vpop.f32.mrb[0].mxu0
      %v1711 = vadd.f32 0.0, %v1710
      %v1712 = vpop.f32.mrb[0].mxu0
      %v1713 = vadd.f32 0.0, %v1712
      %1714 = vmatprep.mubr.bf16.mxu0 %v1433
      %1715 = vmatmul.mubr.bf16.gmra.mrb[0].mxu0 %v1313
      %v1716 = vpop.f32.mrb[0].mxu0
      %v1717 = vadd.f32 0.0, %v1716
      %v1718 = vpop.f32.mrb[0].mxu0
      %v1719 = vadd.f32 0.0, %v1718
      %v1720 = vpop.f32.mrb[0].mxu0
      %v1721 = vadd.f32 0.0, %v1720
      %v1722 = vpop.f32.mrb[0].mxu0
      %v1723 = vadd.f32 0.0, %v1722
      %1724 = vmatprep.mubr.bf16.mxu0 %v1436
      %1725 = vmatmul.mubr.bf16.gmra.mrb[0].mxu0 %v1315
      %v1726 = vpop.f32.mrb[0].mxu0
      %v1727 = vadd.f32 0.0, %v1726
      %v1728 = vpop.f32.mrb[0].mxu0
      %v1729 = vadd.f32 0.0, %v1728
      %v1730 = vpop.f32.mrb[0].mxu0
      %v1731 = vadd.f32 0.0, %v1730
      %v1732 = vpop.f32.mrb[0].mxu0
      %v1733 = vadd.f32 0.0, %v1732
      %1734 = vmatprep.mubr.bf16.mxu0 %v1439
      %1735 = vmatmul.mubr.bf16.gmra.mrb[0].mxu0 %v1317
      %v1736 = vpop.f32.mrb[0].mxu0
      %v1737 = vadd.f32 0.0, %v1736
      %v1738 = vpop.f32.mrb[0].mxu0
      %v1739 = vadd.f32 0.0, %v1738
      %v1740 = vpop.f32.mrb[0].mxu0
      %v1741 = vadd.f32 0.0, %v1740
      %v1742 = vpop.f32.mrb[0].mxu0
      %v1743 = vadd.f32 0.0, %v1742
      %1744 = vmatprep.mubr.bf16.mxu0 %v1442
      %1745 = vmatmul.mubr.bf16.gmra.mrb[0].mxu0 %v1319
      %v1746 = vpop.f32.mrb[0].mxu0
      %v1747 = vadd.f32 0.0, %v1746
      %v1748 = vpop.f32.mrb[0].mxu0
      %v1749 = vadd.f32 0.0, %v1748
      %v1750 = vpop.f32.mrb[0].mxu0
      %v1751 = vadd.f32 0.0, %v1750
      %v1752 = vpop.f32.mrb[0].mxu0
      %v1753 = vadd.f32 0.0, %v1752
      %1754 = vmatprep.mubr.bf16.mxu0 %v1445
      %1755 = vmatmul.mubr.bf16.gmra.mrb[0].mxu0 %v1321
      %v1756 = vpop.f32.mrb[0].mxu0
      %v1757 = vadd.f32 0.0, %v1756
      %v1758 = vpop.f32.mrb[0].mxu0
      %v1759 = vadd.f32 0.0, %v1758
      %v1760 = vpop.f32.mrb[0].mxu0
      %v1761 = vadd.f32 0.0, %v1760
      %v1762 = vpop.f32.mrb[0].mxu0
      %v1763 = vadd.f32 0.0, %v1762
      %1764 = vmatprep.mubr.bf16.mxu0 %v1448
      %1765 = vmatmul.mubr.bf16.gmra.mrb[0].mxu0 %v1323
      %v1766 = vpop.f32.mrb[0].mxu0
      %v1767 = vadd.f32 0.0, %v1766
      %v1768 = vpop.f32.mrb[0].mxu0
      %v1769 = vadd.f32 0.0, %v1768
      %v1770 = vpop.f32.mrb[0].mxu0
      %v1771 = vadd.f32 0.0, %v1770
      %v1772 = vpop.f32.mrb[0].mxu0
      %v1773 = vadd.f32 0.0, %v1772
      %1774 = vmatprep.mubr.bf16.mxu0 %v1451
      %1775 = vmatmul.mubr.bf16.gmra.mrb[0].mxu0 %v1325
      %v1776 = vpop.f32.mrb[0].mxu0
      %v1777 = vadd.f32 0.0, %v1776
      %v1778 = vpop.f32.mrb[0].mxu0
      %v1779 = vadd.f32 0.0, %v1778
      %v1780 = vpop.f32.mrb[0].mxu0
      %v1781 = vadd.f32 0.0, %v1780
      %v1782 = vpop.f32.mrb[0].mxu0
      %v1783 = vadd.f32 0.0, %v1782
      %1784 = vmatprep.mubr.bf16.mxu0 %v1454
      %1785 = vmatmul.mubr.bf16.gmra.mrb[0].mxu0 %v1327
      %v1786 = vpop.f32.mrb[0].mxu0
      %v1787 = vadd.f32 0.0, %v1786
      %v1788 = vpop.f32.mrb[0].mxu0
      %v1789 = vadd.f32 0.0, %v1788
      %v1790 = vpop.f32.mrb[0].mxu0
      %v1791 = vadd.f32 0.0, %v1790
      %v1792 = vpop.f32.mrb[0].mxu0
      %v1793 = vadd.f32 0.0, %v1792
      %1794 = vmatprep.mubr.bf16.mxu0 %v1457
      %1795 = vmatmul.mubr.bf16.gmra.mrb[0].mxu0 %v1329
      %v1796 = vpop.f32.mrb[0].mxu0
      %v1797 = vadd.f32 0.0, %v1796
      %v1798 = vpop.f32.mrb[0].mxu0
      %v1799 = vadd.f32 0.0, %v1798
      %v1800 = vpop.f32.mrb[0].mxu0
      %v1801 = vadd.f32 0.0, %v1800
      %v1802 = vpop.f32.mrb[0].mxu0
      %v1803 = vadd.f32 0.0, %v1802
      %1804 = vmatprep.mubr.bf16.mxu0 %v1460
      %1805 = vmatmul.mubr.bf16.gmra.mrb[0].mxu0 %v1331
      %v1806 = vpop.f32.mrb[0].mxu0
      %v1807 = vadd.f32 0.0, %v1806
      %v1808 = vpop.f32.mrb[0].mxu0
      %v1809 = vadd.f32 0.0, %v1808
      %v1810 = vpop.f32.mrb[0].mxu0
      %v1811 = vadd.f32 0.0, %v1810
      %v1812 = vpop.f32.mrb[0].mxu0
      %v1813 = vadd.f32 0.0, %v1812
      %1814 = vdwg.mxu0
      %1815 = vmatprep.subr.bf16.mxu0 %v1036
      %1816 = vmatpush1.bf16.msra.mxu0 %v1035
      %1817 = vmatprep.subr.bf16.mxu0 %v1040
      %1818 = vmatpush1.bf16.msra.mxu0 %v1039
      %1819 = vmatprep.subr.bf16.mxu0 %v1044
      %1820 = vmatpush1.bf16.msra.mxu0 %v1043
      %1821 = vmatprep.subr.bf16.mxu0 %v1048
      %1822 = vmatpush1.bf16.msra.mxu0 %v1047
      %1823 = vmatprep.subr.bf16.mxu0 %v1052
      %1824 = vmatpush1.bf16.msra.mxu0 %v1051
      %1825 = vmatprep.subr.bf16.mxu0 %v1056
      %1826 = vmatpush1.bf16.msra.mxu0 %v1055
      %1827 = vmatprep.subr.bf16.mxu0 %v1060
      %1828 = vmatpush1.bf16.msra.mxu0 %v1059
      %1829 = vmatprep.subr.bf16.mxu0 %v1064
      %1830 = vmatpush1.bf16.msra.mxu0 %v1063
      %1831 = vmatprep.subr.bf16.mxu0 %v1068
      %1832 = vmatpush1.bf16.msra.mxu0 %v1067
      %1833 = vmatprep.subr.bf16.mxu0 %v1072
      %1834 = vmatpush1.bf16.msra.mxu0 %v1071
      %1835 = vmatprep.subr.bf16.mxu0 %v1076
      %1836 = vmatpush1.bf16.msra.mxu0 %v1075
      %1837 = vmatprep.subr.bf16.mxu0 0
      %1838 = vmatpush1.bf16.msra.mxu0 0
      %1839 = vmatprep.subr.bf16.mxu0 0
      %1840 = vmatpush1.bf16.msra.mxu0 0
      %1841 = vmatprep.subr.bf16.mxu0 0
      %1842 = vmatpush1.bf16.msra.mxu0 0
      %1843 = vmatprep.subr.bf16.mxu0 0
      %1844 = vmatpush1.bf16.msra.mxu0 0
      %1845 = vmatprep.subr.bf16.mxu0 0
      %1846 = vmatpush1.bf16.msra.mxu0 0
      %1847 = vmatprep.mubr.bf16.mxu0 %v1367
      %1848 = vmatmul.mubr.bf16.gmra.mrb[0].mxu0 %v1269
      %v1849 = vpop.f32.mrb[0].mxu0
      %v1850 = vadd.f32 0.0, %v1849
      %v1851 = vpop.f32.mrb[0].mxu0
      %v1852 = vadd.f32 0.0, %v1851
      %v1853 = vpop.f32.mrb[0].mxu0
      %v1854 = vadd.f32 0.0, %v1853
      %v1855 = vpop.f32.mrb[0].mxu0
      %v1856 = vadd.f32 0.0, %v1855
      %1857 = vmatprep.mubr.bf16.mxu0 %v1370
      %1858 = vmatmul.mubr.bf16.gmra.mrb[0].mxu0 %v1271
      %v1859 = vpop.f32.mrb[0].mxu0
      %v1860 = vadd.f32 0.0, %v1859
      %v1861 = vpop.f32.mrb[0].mxu0
      %v1862 = vadd.f32 0.0, %v1861
      %v1863 = vpop.f32.mrb[0].mxu0
      %v1864 = vadd.f32 0.0, %v1863
      %v1865 = vpop.f32.mrb[0].mxu0
      %v1866 = vadd.f32 0.0, %v1865
      %1867 = vmatprep.mubr.bf16.mxu0 %v1373
      %1868 = vmatmul.mubr.bf16.gmra.mrb[0].mxu0 %v1273
      %v1869 = vpop.f32.mrb[0].mxu0
      %v1870 = vadd.f32 0.0, %v1869
      %v1871 = vpop.f32.mrb[0].mxu0
      %v1872 = vadd.f32 0.0, %v1871
      %v1873 = vpop.f32.mrb[0].mxu0
      %v1874 = vadd.f32 0.0, %v1873
      %v1875 = vpop.f32.mrb[0].mxu0
      %v1876 = vadd.f32 0.0, %v1875
      %1877 = vmatprep.mubr.bf16.mxu0 %v1376
      %1878 = vmatmul.mubr.bf16.gmra.mrb[0].mxu0 %v1275
      %v1879 = vpop.f32.mrb[0].mxu0
      %v1880 = vadd.f32 0.0, %v1879
      %v1881 = vpop.f32.mrb[0].mxu0
      %v1882 = vadd.f32 0.0, %v1881
      %v1883 = vpop.f32.mrb[0].mxu0
      %v1884 = vadd.f32 0.0, %v1883
      %v1885 = vpop.f32.mrb[0].mxu0
      %v1886 = vadd.f32 0.0, %v1885
      %1887 = vmatprep.mubr.bf16.mxu0 %v1379
      %1888 = vmatmul.mubr.bf16.gmra.mrb[0].mxu0 %v1277
      %v1889 = vpop.f32.mrb[0].mxu0
      %v1890 = vadd.f32 0.0, %v1889
      %v1891 = vpop.f32.mrb[0].mxu0
      %v1892 = vadd.f32 0.0, %v1891
      %v1893 = vpop.f32.mrb[0].mxu0
      %v1894 = vadd.f32 0.0, %v1893
      %v1895 = vpop.f32.mrb[0].mxu0
      %v1896 = vadd.f32 0.0, %v1895
      %1897 = vmatprep.mubr.bf16.mxu0 %v1382
      %1898 = vmatmul.mubr.bf16.gmra.mrb[0].mxu0 %v1279
      %v1899 = vpop.f32.mrb[0].mxu0
      %v1900 = vadd.f32 0.0, %v1899
      %v1901 = vpop.f32.mrb[0].mxu0
      %v1902 = vadd.f32 0.0, %v1901
      %v1903 = vpop.f32.mrb[0].mxu0
      %v1904 = vadd.f32 0.0, %v1903
      %v1905 = vpop.f32.mrb[0].mxu0
      %v1906 = vadd.f32 0.0, %v1905
      %1907 = vmatprep.mubr.bf16.mxu0 %v1385
      %1908 = vmatmul.mubr.bf16.gmra.mrb[0].mxu0 %v1281
      %v1909 = vpop.f32.mrb[0].mxu0
      %v1910 = vadd.f32 0.0, %v1909
      %v1911 = vpop.f32.mrb[0].mxu0
      %v1912 = vadd.f32 0.0, %v1911
      %v1913 = vpop.f32.mrb[0].mxu0
      %v1914 = vadd.f32 0.0, %v1913
      %v1915 = vpop.f32.mrb[0].mxu0
      %v1916 = vadd.f32 0.0, %v1915
      %1917 = vmatprep.mubr.bf16.mxu0 %v1388
      %1918 = vmatmul.mubr.bf16.gmra.mrb[0].mxu0 %v1283
      %v1919 = vpop.f32.mrb[0].mxu0
      %v1920 = vadd.f32 0.0, %v1919
      %v1921 = vpop.f32.mrb[0].mxu0
      %v1922 = vadd.f32 0.0, %v1921
      %v1923 = vpop.f32.mrb[0].mxu0
      %v1924 = vadd.f32 0.0, %v1923
      %v1925 = vpop.f32.mrb[0].mxu0
      %v1926 = vadd.f32 0.0, %v1925
      %1927 = vmatprep.mubr.bf16.mxu0 %v1391
      %1928 = vmatmul.mubr.bf16.gmra.mrb[0].mxu0 %v1285
      %v1929 = vpop.f32.mrb[0].mxu0
      %v1930 = vadd.f32 0.0, %v1929
      %v1931 = vpop.f32.mrb[0].mxu0
      %v1932 = vadd.f32 0.0, %v1931
      %v1933 = vpop.f32.mrb[0].mxu0
      %v1934 = vadd.f32 0.0, %v1933
      %v1935 = vpop.f32.mrb[0].mxu0
      %v1936 = vadd.f32 0.0, %v1935
      %1937 = vmatprep.mubr.bf16.mxu0 %v1394
      %1938 = vmatmul.mubr.bf16.gmra.mrb[0].mxu0 %v1287
      %v1939 = vpop.f32.mrb[0].mxu0
      %v1940 = vadd.f32 0.0, %v1939
      %v1941 = vpop.f32.mrb[0].mxu0
      %v1942 = vadd.f32 0.0, %v1941
      %v1943 = vpop.f32.mrb[0].mxu0
      %v1944 = vadd.f32 0.0, %v1943
      %v1945 = vpop.f32.mrb[0].mxu0
      %v1946 = vadd.f32 0.0, %v1945
      %1947 = vmatprep.mubr.bf16.mxu0 %v1397
      %1948 = vmatmul.mubr.bf16.gmra.mrb[0].mxu0 %v1289
      %v1949 = vpop.f32.mrb[0].mxu0
      %v1950 = vadd.f32 0.0, %v1949
      %v1951 = vpop.f32.mrb[0].mxu0
      %v1952 = vadd.f32 0.0, %v1951
      %v1953 = vpop.f32.mrb[0].mxu0
      %v1954 = vadd.f32 0.0, %v1953
      %v1955 = vpop.f32.mrb[0].mxu0
      %v1956 = vadd.f32 0.0, %v1955
      %1957 = vmatprep.mubr.bf16.mxu0 %v1400
      %1958 = vmatmul.mubr.bf16.gmra.mrb[0].mxu0 %v1291
      %v1959 = vpop.f32.mrb[0].mxu0
      %v1960 = vadd.f32 0.0, %v1959
      %v1961 = vpop.f32.mrb[0].mxu0
      %v1962 = vadd.f32 0.0, %v1961
      %v1963 = vpop.f32.mrb[0].mxu0
      %v1964 = vadd.f32 0.0, %v1963
      %v1965 = vpop.f32.mrb[0].mxu0
      %v1966 = vadd.f32 0.0, %v1965
      %1967 = vmatprep.mubr.bf16.mxu0 %v1403
      %1968 = vmatmul.mubr.bf16.gmra.mrb[0].mxu0 %v1293
      %v1969 = vpop.f32.mrb[0].mxu0
      %v1970 = vadd.f32 0.0, %v1969
      %v1971 = vpop.f32.mrb[0].mxu0
      %v1972 = vadd.f32 0.0, %v1971
      %v1973 = vpop.f32.mrb[0].mxu0
      %v1974 = vadd.f32 0.0, %v1973
      %v1975 = vpop.f32.mrb[0].mxu0
      %v1976 = vadd.f32 0.0, %v1975
      %1977 = vmatprep.mubr.bf16.mxu0 %v1406
      %1978 = vmatmul.mubr.bf16.gmra.mrb[0].mxu0 %v1295
      %v1979 = vpop.f32.mrb[0].mxu0
      %v1980 = vadd.f32 0.0, %v1979
      %v1981 = vpop.f32.mrb[0].mxu0
      %v1982 = vadd.f32 0.0, %v1981
      %v1983 = vpop.f32.mrb[0].mxu0
      %v1984 = vadd.f32 0.0, %v1983
      %v1985 = vpop.f32.mrb[0].mxu0
      %v1986 = vadd.f32 0.0, %v1985
      %1987 = vmatprep.mubr.bf16.mxu0 %v1409
      %1988 = vmatmul.mubr.bf16.gmra.mrb[0].mxu0 %v1297
      %v1989 = vpop.f32.mrb[0].mxu0
      %v1990 = vadd.f32 0.0, %v1989
      %v1991 = vpop.f32.mrb[0].mxu0
      %v1992 = vadd.f32 0.0, %v1991
      %v1993 = vpop.f32.mrb[0].mxu0
      %v1994 = vadd.f32 0.0, %v1993
      %v1995 = vpop.f32.mrb[0].mxu0
      %v1996 = vadd.f32 0.0, %v1995
      %1997 = vmatprep.mubr.bf16.mxu0 %v1412
      %1998 = vmatmul.mubr.bf16.gmra.mrb[0].mxu0 %v1299
      %v1999 = vpop.f32.mrb[0].mxu0
      %v2000 = vadd.f32 0.0, %v1999
      %v2001 = vpop.f32.mrb[0].mxu0
      %v2002 = vadd.f32 0.0, %v2001
      %v2003 = vpop.f32.mrb[0].mxu0
      %v2004 = vadd.f32 0.0, %v2003
      %v2005 = vpop.f32.mrb[0].mxu0
      %v2006 = vadd.f32 0.0, %v2005
      %2007 = vmatprep.mubr.bf16.mxu0 %v1415
      %2008 = vmatmul.mubr.bf16.gmra.mrb[0].mxu0 %v1301
      %v2009 = vpop.f32.mrb[0].mxu0
      %v2010 = vadd.f32 0.0, %v2009
      %v2011 = vpop.f32.mrb[0].mxu0
      %v2012 = vadd.f32 0.0, %v2011
      %v2013 = vpop.f32.mrb[0].mxu0
      %v2014 = vadd.f32 0.0, %v2013
      %v2015 = vpop.f32.mrb[0].mxu0
      %v2016 = vadd.f32 0.0, %v2015
      %2017 = vmatprep.mubr.bf16.mxu0 %v1418
      %2018 = vmatmul.mubr.bf16.gmra.mrb[0].mxu0 %v1303
      %v2019 = vpop.f32.mrb[0].mxu0
      %v2020 = vadd.f32 0.0, %v2019
      %v2021 = vpop.f32.mrb[0].mxu0
      %v2022 = vadd.f32 0.0, %v2021
      %v2023 = vpop.f32.mrb[0].mxu0
      %v2024 = vadd.f32 0.0, %v2023
      %v2025 = vpop.f32.mrb[0].mxu0
      %v2026 = vadd.f32 0.0, %v2025
      %2027 = vmatprep.mubr.bf16.mxu0 %v1421
      %2028 = vmatmul.mubr.bf16.gmra.mrb[0].mxu0 %v1305
      %v2029 = vpop.f32.mrb[0].mxu0
      %v2030 = vadd.f32 0.0, %v2029
      %v2031 = vpop.f32.mrb[0].mxu0
      %v2032 = vadd.f32 0.0, %v2031
      %v2033 = vpop.f32.mrb[0].mxu0
      %v2034 = vadd.f32 0.0, %v2033
      %v2035 = vpop.f32.mrb[0].mxu0
      %v2036 = vadd.f32 0.0, %v2035
      %2037 = vmatprep.mubr.bf16.mxu0 %v1424
      %2038 = vmatmul.mubr.bf16.gmra.mrb[0].mxu0 %v1307
      %v2039 = vpop.f32.mrb[0].mxu0
      %v2040 = vadd.f32 0.0, %v2039
      %v2041 = vpop.f32.mrb[0].mxu0
      %v2042 = vadd.f32 0.0, %v2041
      %v2043 = vpop.f32.mrb[0].mxu0
      %v2044 = vadd.f32 0.0, %v2043
      %v2045 = vpop.f32.mrb[0].mxu0
      %v2046 = vadd.f32 0.0, %v2045
      %2047 = vmatprep.mubr.bf16.mxu0 %v1427
      %2048 = vmatmul.mubr.bf16.gmra.mrb[0].mxu0 %v1309
      %v2049 = vpop.f32.mrb[0].mxu0
      %v2050 = vadd.f32 0.0, %v2049
      %v2051 = vpop.f32.mrb[0].mxu0
      %v2052 = vadd.f32 0.0, %v2051
      %v2053 = vpop.f32.mrb[0].mxu0
      %v2054 = vadd.f32 0.0, %v2053
      %v2055 = vpop.f32.mrb[0].mxu0
      %v2056 = vadd.f32 0.0, %v2055
      %2057 = vmatprep.mubr.bf16.mxu0 %v1430
      %2058 = vmatmul.mubr.bf16.gmra.mrb[0].mxu0 %v1311
      %v2059 = vpop.f32.mrb[0].mxu0
      %v2060 = vadd.f32 0.0, %v2059
      %v2061 = vpop.f32.mrb[0].mxu0
      %v2062 = vadd.f32 0.0, %v2061
      %v2063 = vpop.f32.mrb[0].mxu0
      %v2064 = vadd.f32 0.0, %v2063
      %v2065 = vpop.f32.mrb[0].mxu0
      %v2066 = vadd.f32 0.0, %v2065
      %2067 = vmatprep.mubr.bf16.mxu0 %v1433
      %2068 = vmatmul.mubr.bf16.gmra.mrb[0].mxu0 %v1313
      %v2069 = vpop.f32.mrb[0].mxu0
      %v2070 = vadd.f32 0.0, %v2069
      %v2071 = vpop.f32.mrb[0].mxu0
      %v2072 = vadd.f32 0.0, %v2071
      %v2073 = vpop.f32.mrb[0].mxu0
      %v2074 = vadd.f32 0.0, %v2073
      %v2075 = vpop.f32.mrb[0].mxu0
      %v2076 = vadd.f32 0.0, %v2075
      %2077 = vmatprep.mubr.bf16.mxu0 %v1436
      %2078 = vmatmul.mubr.bf16.gmra.mrb[0].mxu0 %v1315
      %v2079 = vpop.f32.mrb[0].mxu0
      %v2080 = vadd.f32 0.0, %v2079
      %v2081 = vpop.f32.mrb[0].mxu0
      %v2082 = vadd.f32 0.0, %v2081
      %v2083 = vpop.f32.mrb[0].mxu0
      %v2084 = vadd.f32 0.0, %v2083
      %v2085 = vpop.f32.mrb[0].mxu0
      %v2086 = vadd.f32 0.0, %v2085
      %2087 = vmatprep.mubr.bf16.mxu0 %v1439
      %2088 = vmatmul.mubr.bf16.gmra.mrb[0].mxu0 %v1317
      %v2089 = vpop.f32.mrb[0].mxu0
      %v2090 = vadd.f32 0.0, %v2089
      %v2091 = vpop.f32.mrb[0].mxu0
      %v2092 = vadd.f32 0.0, %v2091
      %v2093 = vpop.f32.mrb[0].mxu0
      %v2094 = vadd.f32 0.0, %v2093
      %v2095 = vpop.f32.mrb[0].mxu0
      %v2096 = vadd.f32 0.0, %v2095
      %2097 = vmatprep.mubr.bf16.mxu0 %v1442
      %2098 = vmatmul.mubr.bf16.gmra.mrb[0].mxu0 %v1319
      %v2099 = vpop.f32.mrb[0].mxu0
      %v2100 = vadd.f32 0.0, %v2099
      %v2101 = vpop.f32.mrb[0].mxu0
      %v2102 = vadd.f32 0.0, %v2101
      %v2103 = vpop.f32.mrb[0].mxu0
      %v2104 = vadd.f32 0.0, %v2103
      %v2105 = vpop.f32.mrb[0].mxu0
      %v2106 = vadd.f32 0.0, %v2105
      %2107 = vmatprep.mubr.bf16.mxu0 %v1445
      %2108 = vmatmul.mubr.bf16.gmra.mrb[0].mxu0 %v1321
      %v2109 = vpop.f32.mrb[0].mxu0
      %v2110 = vadd.f32 0.0, %v2109
      %v2111 = vpop.f32.mrb[0].mxu0
      %v2112 = vadd.f32 0.0, %v2111
      %v2113 = vpop.f32.mrb[0].mxu0
      %v2114 = vadd.f32 0.0, %v2113
      %v2115 = vpop.f32.mrb[0].mxu0
      %v2116 = vadd.f32 0.0, %v2115
      %2117 = vmatprep.mubr.bf16.mxu0 %v1448
      %2118 = vmatmul.mubr.bf16.gmra.mrb[0].mxu0 %v1323
      %v2119 = vpop.f32.mrb[0].mxu0
      %v2120 = vadd.f32 0.0, %v2119
      %v2121 = vpop.f32.mrb[0].mxu0
      %v2122 = vadd.f32 0.0, %v2121
      %v2123 = vpop.f32.mrb[0].mxu0
      %v2124 = vadd.f32 0.0, %v2123
      %v2125 = vpop.f32.mrb[0].mxu0
      %v2126 = vadd.f32 0.0, %v2125
      %2127 = vmatprep.mubr.bf16.mxu0 %v1451
      %2128 = vmatmul.mubr.bf16.gmra.mrb[0].mxu0 %v1325
      %v2129 = vpop.f32.mrb[0].mxu0
      %v2130 = vadd.f32 0.0, %v2129
      %v2131 = vpop.f32.mrb[0].mxu0
      %v2132 = vadd.f32 0.0, %v2131
      %v2133 = vpop.f32.mrb[0].mxu0
      %v2134 = vadd.f32 0.0, %v2133
      %v2135 = vpop.f32.mrb[0].mxu0
      %v2136 = vadd.f32 0.0, %v2135
      %2137 = vmatprep.mubr.bf16.mxu0 %v1454
      %2138 = vmatmul.mubr.bf16.gmra.mrb[0].mxu0 %v1327
      %v2139 = vpop.f32.mrb[0].mxu0
      %v2140 = vadd.f32 0.0, %v2139
      %v2141 = vpop.f32.mrb[0].mxu0
      %v2142 = vadd.f32 0.0, %v2141
      %v2143 = vpop.f32.mrb[0].mxu0
      %v2144 = vadd.f32 0.0, %v2143
      %v2145 = vpop.f32.mrb[0].mxu0
      %v2146 = vadd.f32 0.0, %v2145
      %2147 = vmatprep.mubr.bf16.mxu0 %v1457
      %2148 = vmatmul.mubr.bf16.gmra.mrb[0].mxu0 %v1329
      %v2149 = vpop.f32.mrb[0].mxu0
      %v2150 = vadd.f32 0.0, %v2149
      %v2151 = vpop.f32.mrb[0].mxu0
      %v2152 = vadd.f32 0.0, %v2151
      %v2153 = vpop.f32.mrb[0].mxu0
      %v2154 = vadd.f32 0.0, %v2153
      %v2155 = vpop.f32.mrb[0].mxu0
      %v2156 = vadd.f32 0.0, %v2155
      %2157 = vmatprep.mubr.bf16.mxu0 %v1460
      %2158 = vmatmul.mubr.bf16.gmra.mrb[0].mxu0 %v1331
      %v2159 = vpop.f32.mrb[0].mxu0
      %v2160 = vadd.f32 0.0, %v2159
      %v2161 = vpop.f32.mrb[0].mxu0
      %v2162 = vadd.f32 0.0, %v2161
      %v2163 = vpop.f32.mrb[0].mxu0
      %v2164 = vadd.f32 0.0, %v2163
      %v2165 = vpop.f32.mrb[0].mxu0
      %v2166 = vadd.f32 0.0, %v2165
      %2167 = vdwg.mxu0
      %v2168 = vpack.c.bf16 %v1501, %v1497
      %v2169 = vpack.c.bf16 %v1503, %v1499
      %v2170 = vpack.c.bf16 %v1854, %v1850
      %v2171 = vpack.c.bf16 %v1856, %v1852
      %v2172 = vpack.c.bf16 %v1511, %v1507
      %v2173 = vpack.c.bf16 %v1513, %v1509
      %v2174 = vpack.c.bf16 %v1864, %v1860
      %v2175 = vpack.c.bf16 %v1866, %v1862
      %v2176 = vpack.c.bf16 %v1521, %v1517
      %v2177 = vpack.c.bf16 %v1523, %v1519
      %v2178 = vpack.c.bf16 %v1874, %v1870
      %v2179 = vpack.c.bf16 %v1876, %v1872
      %v2180 = vpack.c.bf16 %v1531, %v1527
      %v2181 = vpack.c.bf16 %v1533, %v1529
      %v2182 = vpack.c.bf16 %v1884, %v1880
      %v2183 = vpack.c.bf16 %v1886, %v1882
      %v2184 = vpack.c.bf16 %v1541, %v1537
      %v2185 = vpack.c.bf16 %v1543, %v1539
      %v2186 = vpack.c.bf16 %v1894, %v1890
      %v2187 = vpack.c.bf16 %v1896, %v1892
      %v2188 = vpack.c.bf16 %v1551, %v1547
      %v2189 = vpack.c.bf16 %v1553, %v1549
      %v2190 = vpack.c.bf16 %v1904, %v1900
      %v2191 = vpack.c.bf16 %v1906, %v1902
      %v2192 = vpack.c.bf16 %v1561, %v1557
      %v2193 = vpack.c.bf16 %v1563, %v1559
      %v2194 = vpack.c.bf16 %v1914, %v1910
      %v2195 = vpack.c.bf16 %v1916, %v1912
      %v2196 = vpack.c.bf16 %v1571, %v1567
      %v2197 = vpack.c.bf16 %v1573, %v1569
      %v2198 = vpack.c.bf16 %v1924, %v1920
      %v2199 = vpack.c.bf16 %v1926, %v1922
      %v2200 = vpack.c.bf16 %v1581, %v1577
      %v2201 = vpack.c.bf16 %v1583, %v1579
      %v2202 = vpack.c.bf16 %v1934, %v1930
      %v2203 = vpack.c.bf16 %v1936, %v1932
      %v2204 = vpack.c.bf16 %v1591, %v1587
      %v2205 = vpack.c.bf16 %v1593, %v1589
      %v2206 = vpack.c.bf16 %v1944, %v1940
      %v2207 = vpack.c.bf16 %v1946, %v1942
      %v2208 = vpack.c.bf16 %v1601, %v1597
      %v2209 = vpack.c.bf16 %v1603, %v1599
      %v2210 = vpack.c.bf16 %v1954, %v1950
      %v2211 = vpack.c.bf16 %v1956, %v1952
      %v2212 = vpack.c.bf16 %v1611, %v1607
      %v2213 = vpack.c.bf16 %v1613, %v1609
      %v2214 = vpack.c.bf16 %v1964, %v1960
      %v2215 = vpack.c.bf16 %v1966, %v1962
      %v2216 = vpack.c.bf16 %v1621, %v1617
      %v2217 = vpack.c.bf16 %v1623, %v1619
      %v2218 = vpack.c.bf16 %v1974, %v1970
      %v2219 = vpack.c.bf16 %v1976, %v1972
      %v2220 = vpack.c.bf16 %v1631, %v1627
      %v2221 = vpack.c.bf16 %v1633, %v1629
      %v2222 = vpack.c.bf16 %v1984, %v1980
      %v2223 = vpack.c.bf16 %v1986, %v1982
      %v2224 = vpack.c.bf16 %v1641, %v1637
      %v2225 = vpack.c.bf16 %v1643, %v1639
      %v2226 = vpack.c.bf16 %v1994, %v1990
      %v2227 = vpack.c.bf16 %v1996, %v1992
      %v2228 = vpack.c.bf16 %v1651, %v1647
      %v2229 = vpack.c.bf16 %v1653, %v1649
      %v2230 = vpack.c.bf16 %v2004, %v2000
      %v2231 = vpack.c.bf16 %v2006, %v2002
      %v2232 = vpack.c.bf16 %v1661, %v1657
      %v2233 = vpack.c.bf16 %v1663, %v1659
      %v2234 = vpack.c.bf16 %v2014, %v2010
      %v2235 = vpack.c.bf16 %v2016, %v2012
      %v2236 = vpack.c.bf16 %v1671, %v1667
      %v2237 = vpack.c.bf16 %v1673, %v1669
      %v2238 = vpack.c.bf16 %v2024, %v2020
      %v2239 = vpack.c.bf16 %v2026, %v2022
      %v2240 = vpack.c.bf16 %v1681, %v1677
      %v2241 = vpack.c.bf16 %v1683, %v1679
      %v2242 = vpack.c.bf16 %v2034, %v2030
      %v2243 = vpack.c.bf16 %v2036, %v2032
      %v2244 = vpack.c.bf16 %v1691, %v1687
      %v2245 = vpack.c.bf16 %v1693, %v1689
      %v2246 = vpack.c.bf16 %v2044, %v2040
      %v2247 = vpack.c.bf16 %v2046, %v2042
      %v2248 = vpack.c.bf16 %v1701, %v1697
      %v2249 = vpack.c.bf16 %v1703, %v1699
      %v2250 = vpack.c.bf16 %v2054, %v2050
      %v2251 = vpack.c.bf16 %v2056, %v2052
      %v2252 = vpack.c.bf16 %v1711, %v1707
      %v2253 = vpack.c.bf16 %v1713, %v1709
      %v2254 = vpack.c.bf16 %v2064, %v2060
      %v2255 = vpack.c.bf16 %v2066, %v2062
      %v2256 = vpack.c.bf16 %v1721, %v1717
      %v2257 = vpack.c.bf16 %v1723, %v1719
      %v2258 = vpack.c.bf16 %v2074, %v2070
      %v2259 = vpack.c.bf16 %v2076, %v2072
      %v2260 = vpack.c.bf16 %v1731, %v1727
      %v2261 = vpack.c.bf16 %v1733, %v1729
      %v2262 = vpack.c.bf16 %v2084, %v2080
      %v2263 = vpack.c.bf16 %v2086, %v2082
      %v2264 = vpack.c.bf16 %v1741, %v1737
      %v2265 = vpack.c.bf16 %v1743, %v1739
      %v2266 = vpack.c.bf16 %v2094, %v2090
      %v2267 = vpack.c.bf16 %v2096, %v2092
      %v2268 = vpack.c.bf16 %v1751, %v1747
      %v2269 = vpack.c.bf16 %v1753, %v1749
      %v2270 = vpack.c.bf16 %v2104, %v2100
      %v2271 = vpack.c.bf16 %v2106, %v2102
      %v2272 = vpack.c.bf16 %v1761, %v1757
      %v2273 = vpack.c.bf16 %v1763, %v1759
      %v2274 = vpack.c.bf16 %v2114, %v2110
      %v2275 = vpack.c.bf16 %v2116, %v2112
      %v2276 = vpack.c.bf16 %v1771, %v1767
      %v2277 = vpack.c.bf16 %v1773, %v1769
      %v2278 = vpack.c.bf16 %v2124, %v2120
      %v2279 = vpack.c.bf16 %v2126, %v2122
      %v2280 = vpack.c.bf16 %v1781, %v1777
      %v2281 = vpack.c.bf16 %v1783, %v1779
      %v2282 = vpack.c.bf16 %v2134, %v2130
      %v2283 = vpack.c.bf16 %v2136, %v2132
      %v2284 = vpack.c.bf16 %v1791, %v1787
      %v2285 = vpack.c.bf16 %v1793, %v1789
      %v2286 = vpack.c.bf16 %v2144, %v2140
      %v2287 = vpack.c.bf16 %v2146, %v2142
      %v2288 = vpack.c.bf16 %v1801, %v1797
      %v2289 = vpack.c.bf16 %v1803, %v1799
      %v2290 = vpack.c.bf16 %v2154, %v2150
      %v2291 = vpack.c.bf16 %v2156, %v2152
      %v2292 = vpack.c.bf16 %v1811, %v1807
      %v2293 = vpack.c.bf16 %v1813, %v1809
      %v2294 = vpack.c.bf16 %v2164, %v2160
      %v2295 = vpack.c.bf16 %v2166, %v2162
      %v2296 = vld [vmem:[%s3] sm:$0xf]
      %v2297 = vld [vmem:[%s3 + $0x4] sm:$0xf]
      %v2298 = vld [vmem:[%s3 + $0x8] sm:$0xf]
      %v2299 = vld [vmem:[%s3 + $0xc] sm:$0xf]
      %v2300 = vld [vmem:[%s3 + $0x10] sm:$0xf]
      %v2301 = vld [vmem:[%s3 + $0x14] sm:$0xf]
      %v2302 = vld [vmem:[%s3 + $0x18] sm:$0xf]
      %v2303 = vld [vmem:[%s3 + $0x1c] sm:$0xf]
      %v2304 = vld [vmem:[%s3 + $0x20] sm:$0xf]
      %v2305 = vld [vmem:[%s3 + $0x24] sm:$0xf]
      %v2306 = vld [vmem:[%s3 + $0x28] sm:$0xf]
      %v2307 = vld [vmem:[%s3 + $0x2c] sm:$0xf]
      %v2308 = vld [vmem:[%s3 + $0x30] sm:$0xf]
      %v2309 = vld [vmem:[%s3 + $0x34] sm:$0xf]
      %v2310 = vld [vmem:[%s3 + $0x38] sm:$0xf]
      %v2311 = vld [vmem:[%s3 + $0x3c] sm:$0xf]
      %v2312 = vld [vmem:[%s3 + $0x40] sm:$0xf]
      %v2313 = vld [vmem:[%s3 + $0x44] sm:$0xf]
      %v2314 = vld [vmem:[%s3 + $0x48] sm:$0xf]
      %v2315 = vld [vmem:[%s3 + $0x4c] sm:$0xf]
      %v2316 = vld [vmem:[%s3 + $0x50] sm:$0xf]
      %v2317 = vld [vmem:[%s3 + $0x54] sm:$0xf]
      %v2318 = vld [vmem:[%s3 + $0x58] sm:$0xf]
      %v2319 = vld [vmem:[%s3 + $0x5c] sm:$0xf]
      %v2320 = vld [vmem:[%s3 + $0x60] sm:$0xf]
      %v2321 = vld [vmem:[%s3 + $0x64] sm:$0xf]
      %v2322 = vld [vmem:[%s3 + $0x68] sm:$0xf]
      %v2323 = vld [vmem:[%s3 + $0x6c] sm:$0xf]
      %v2324 = vld [vmem:[%s3 + $0x70] sm:$0xf]
      %v2325 = vld [vmem:[%s3 + $0x74] sm:$0xf]
      %v2326 = vld [vmem:[%s3 + $0x78] sm:$0xf]
      %v2327 = vld [vmem:[%s3 + $0x7c] sm:$0xf]
      %v2328 = vld [vmem:[%s3 + $0x80] sm:$0xf]
      %v2329 = vld [vmem:[%s3 + $0x84] sm:$0xf]
      %v2330 = vld [vmem:[%s3 + $0x88] sm:$0xf]
      %v2331 = vld [vmem:[%s3 + $0x8c] sm:$0xf]
      %v2332 = vld [vmem:[%s3 + $0x90] sm:$0xf]
      %v2333 = vld [vmem:[%s3 + $0x94] sm:$0xf]
      %v2334 = vld [vmem:[%s3 + $0x98] sm:$0xf]
      %v2335 = vld [vmem:[%s3 + $0x9c] sm:$0xf]
      %v2336 = vld [vmem:[%s3 + $0xa0] sm:$0xf]
      %v2337 = vld [vmem:[%s3 + $0xa4] sm:$0xf]
      %v2338 = vld [vmem:[%s3 + $0xa8] sm:$0xf]
      %v2339 = vld [vmem:[%s3 + $0xac] sm:$0xf]
      %v2340 = vld [vmem:[%s3 + $0xb0] sm:$0xf]
      %v2341 = vld [vmem:[%s3 + $0xb4] sm:$0xf]
      %v2342 = vld [vmem:[%s3 + $0xb8] sm:$0xf]
      %v2343 = vld [vmem:[%s3 + $0xbc] sm:$0xf]
      %v2344 = vld [vmem:[%s3 + $0xc0] sm:$0xf]
      %v2345 = vld [vmem:[%s3 + $0xc4] sm:$0xf]
      %v2346 = vld [vmem:[%s3 + $0xc8] sm:$0xf]
      %v2347 = vld [vmem:[%s3 + $0xcc] sm:$0xf]
      %v2348 = vld [vmem:[%s3 + $0xd0] sm:$0xf]
      %v2349 = vld [vmem:[%s3 + $0xd4] sm:$0xf]
      %v2350 = vld [vmem:[%s3 + $0xd8] sm:$0xf]
      %v2351 = vld [vmem:[%s3 + $0xdc] sm:$0xf]
      %v2352 = vld [vmem:[%s3 + $0xe0] sm:$0xf]
      %v2353 = vld [vmem:[%s3 + $0xe4] sm:$0xf]
      %v2354 = vld [vmem:[%s3 + $0xe8] sm:$0xf]
      %v2355 = vld [vmem:[%s3 + $0xec] sm:$0xf]
      %v2356 = vld [vmem:[%s3 + $0xf0] sm:$0xf]
      %v2357 = vld [vmem:[%s3 + $0xf4] sm:$0xf]
      %v2358 = vld [vmem:[%s3 + $0xf8] sm:$0xf]
      %v2359 = vld [vmem:[%s3 + $0xfc] sm:$0xf]
      %v2360 = vld [vmem:[%s3 + $0x100] sm:$0xf]
      %v2361 = vld [vmem:[%s3 + $0x104] sm:$0xf]
      %v2362 = vld [vmem:[%s3 + $0x108] sm:$0xf]
      %v2363 = vld [vmem:[%s3 + $0x10c] sm:$0xf]
      %v2364 = vld [vmem:[%s3 + $0x110] sm:$0xf]
      %v2365 = vld [vmem:[%s3 + $0x114] sm:$0xf]
      %v2366 = vld [vmem:[%s3 + $0x118] sm:$0xf]
      %v2367 = vld [vmem:[%s3 + $0x11c] sm:$0xf]
      %v2368 = vld [vmem:[%s3 + $0x120] sm:$0xf]
      %v2369 = vld [vmem:[%s3 + $0x124] sm:$0xf]
      %v2370 = vld [vmem:[%s3 + $0x128] sm:$0xf]
      %v2371 = vld [vmem:[%s3 + $0x12c] sm:$0xf]
      %v2372 = vld [vmem:[%s3 + $0x130] sm:$0xf]
      %v2373 = vld [vmem:[%s3 + $0x134] sm:$0xf]
      %v2374 = vld [vmem:[%s3 + $0x138] sm:$0xf]
      %v2375 = vld [vmem:[%s3 + $0x13c] sm:$0xf]
      %v2376 = vld [vmem:[%s3 + $0x140] sm:$0xf]
      %v2377 = vld [vmem:[%s3 + $0x144] sm:$0xf]
      %v2378 = vld [vmem:[%s3 + $0x148] sm:$0xf]
      %v2379 = vld [vmem:[%s3 + $0x14c] sm:$0xf]
      %v2380 = vld [vmem:[%s3 + $0x150] sm:$0xf]
      %v2381 = vld [vmem:[%s3 + $0x154] sm:$0xf]
      %v2382 = vld [vmem:[%s3 + $0x158] sm:$0xf]
      %v2383 = vld [vmem:[%s3 + $0x15c] sm:$0xf]
      %v2384 = vld [vmem:[%s3 + $0x160] sm:$0xf]
      %v2385 = vld [vmem:[%s3 + $0x164] sm:$0xf]
      %v2386 = vld [vmem:[%s3 + $0x168] sm:$0xf]
      %v2387 = vld [vmem:[%s3 + $0x16c] sm:$0xf]
      %v2388 = vld [vmem:[%s3 + $0x170] sm:$0xf]
      %v2389 = vld [vmem:[%s3 + $0x174] sm:$0xf]
      %v2390 = vld [vmem:[%s3 + $0x178] sm:$0xf]
      %v2391 = vld [vmem:[%s3 + $0x17c] sm:$0xf]
      %v2392 = vld [vmem:[%s3 + $0x180] sm:$0xf]
      %v2393 = vld [vmem:[%s3 + $0x184] sm:$0xf]
      %v2394 = vld [vmem:[%s3 + $0x188] sm:$0xf]
      %v2395 = vld [vmem:[%s3 + $0x18c] sm:$0xf]
      %v2396 = vld [vmem:[%s3 + $0x190] sm:$0xf]
      %v2397 = vld [vmem:[%s3 + $0x194] sm:$0xf]
      %v2398 = vld [vmem:[%s3 + $0x198] sm:$0xf]
      %v2399 = vld [vmem:[%s3 + $0x19c] sm:$0xf]
      %v2400 = vld [vmem:[%s3 + $0x1a0] sm:$0xf]
      %v2401 = vld [vmem:[%s3 + $0x1a4] sm:$0xf]
      %v2402 = vld [vmem:[%s3 + $0x1a8] sm:$0xf]
      %v2403 = vld [vmem:[%s3 + $0x1ac] sm:$0xf]
      %v2404 = vld [vmem:[%s3 + $0x1b0] sm:$0xf]
      %v2405 = vld [vmem:[%s3 + $0x1b4] sm:$0xf]
      %v2406 = vld [vmem:[%s3 + $0x1b8] sm:$0xf]
      %v2407 = vld [vmem:[%s3 + $0x1bc] sm:$0xf]
      %v2408 = vld [vmem:[%s3 + $0x1c0] sm:$0xf]
      %v2409 = vld [vmem:[%s3 + $0x1c4] sm:$0xf]
      %v2410 = vld [vmem:[%s3 + $0x1c8] sm:$0xf]
      %v2411 = vld [vmem:[%s3 + $0x1cc] sm:$0xf]
      %v2412 = vld [vmem:[%s3 + $0x1d0] sm:$0xf]
      %v2413 = vld [vmem:[%s3 + $0x1d4] sm:$0xf]
      %v2414 = vld [vmem:[%s3 + $0x1d8] sm:$0xf]
      %v2415 = vld [vmem:[%s3 + $0x1dc] sm:$0xf]
      %v2416 = vld [vmem:[%s3 + $0x1e0] sm:$0xf]
      %v2417 = vld [vmem:[%s3 + $0x1e4] sm:$0xf]
      %v2418 = vld [vmem:[%s3 + $0x1e8] sm:$0xf]
      %v2419 = vld [vmem:[%s3 + $0x1ec] sm:$0xf]
      %v2420 = vld [vmem:[%s3 + $0x1f0] sm:$0xf]
      %v2421 = vld [vmem:[%s3 + $0x1f4] sm:$0xf]
      %v2422 = vld [vmem:[%s3 + $0x1f8] sm:$0xf]
      %v2423 = vld [vmem:[%s3 + $0x1fc] sm:$0xf]
      %v2424 = vld [vmem:[%s3 + $0x200] sm:$0xf]
      %v2425 = vld [vmem:[%s3 + $0x204] sm:$0xf]
      %v2426 = vld [vmem:[%s3 + $0x208] sm:$0xf]
      %v2427 = vld [vmem:[%s3 + $0x20c] sm:$0xf]
      %v2428 = vld [vmem:[%s3 + $0x210] sm:$0xf]
      %v2429 = vld [vmem:[%s3 + $0x214] sm:$0xf]
      %v2430 = vld [vmem:[%s3 + $0x218] sm:$0xf]
      %v2431 = vld [vmem:[%s3 + $0x21c] sm:$0xf]
      %v2432 = vld [vmem:[%s3 + $0x220] sm:$0xf]
      %v2433 = vld [vmem:[%s3 + $0x224] sm:$0xf]
      %v2434 = vld [vmem:[%s3 + $0x228] sm:$0xf]
      %v2435 = vld [vmem:[%s3 + $0x22c] sm:$0xf]
      %v2436 = vld [vmem:[%s3 + $0x230] sm:$0xf]
      %v2437 = vld [vmem:[%s3 + $0x234] sm:$0xf]
      %v2438 = vld [vmem:[%s3 + $0x238] sm:$0xf]
      %v2439 = vld [vmem:[%s3 + $0x23c] sm:$0xf]
      %v2440 = vld [vmem:[%s3 + $0x240] sm:$0xf]
      %v2441 = vld [vmem:[%s3 + $0x244] sm:$0xf]
      %v2442 = vld [vmem:[%s3 + $0x248] sm:$0xf]
      %v2443 = vld [vmem:[%s3 + $0x24c] sm:$0xf]
      %v2444 = vld [vmem:[%s3 + $0x250] sm:$0xf]
      %v2445 = vld [vmem:[%s3 + $0x254] sm:$0xf]
      %v2446 = vld [vmem:[%s3 + $0x258] sm:$0xf]
      %v2447 = vld [vmem:[%s3 + $0x25c] sm:$0xf]
      %v2448 = vld [vmem:[%s3 + $0x260] sm:$0xf]
      %v2449 = vld [vmem:[%s3 + $0x264] sm:$0xf]
      %v2450 = vld [vmem:[%s3 + $0x268] sm:$0xf]
      %v2451 = vld [vmem:[%s3 + $0x26c] sm:$0xf]
      %v2452 = vld [vmem:[%s3 + $0x270] sm:$0xf]
      %v2453 = vld [vmem:[%s3 + $0x274] sm:$0xf]
      %v2454 = vld [vmem:[%s3 + $0x278] sm:$0xf]
      %v2455 = vld [vmem:[%s3 + $0x27c] sm:$0xf]
      %v2456 = vld [vmem:[%s3 + $0x280] sm:$0xf]
      %v2457 = vld [vmem:[%s3 + $0x284] sm:$0xf]
      %v2458 = vld [vmem:[%s3 + $0x288] sm:$0xf]
      %v2459 = vld [vmem:[%s3 + $0x28c] sm:$0xf]
      %v2460 = vld [vmem:[%s3 + $0x290] sm:$0xf]
      %v2461 = vld [vmem:[%s3 + $0x294] sm:$0xf]
      %v2462 = vld [vmem:[%s3 + $0x298] sm:$0xf]
      %v2463 = vld [vmem:[%s3 + $0x29c] sm:$0xf]
      %v2464 = vld [vmem:[%s3 + $0x2a0] sm:$0xf]
      %v2465 = vld [vmem:[%s3 + $0x2a4] sm:$0xf]
      %v2466 = vld [vmem:[%s3 + $0x2a8] sm:$0xf]
      %v2467 = vld [vmem:[%s3 + $0x2ac] sm:$0xf]
      %v2468 = vld [vmem:[%s3 + $0x2b0] sm:$0xf]
      %v2469 = vld [vmem:[%s3 + $0x2b4] sm:$0xf]
      %v2470 = vld [vmem:[%s3 + $0x2b8] sm:$0xf]
      %v2471 = vld [vmem:[%s3 + $0x2bc] sm:$0xf]
      %v2472 = vld [vmem:[%s3 + $0x2c0] sm:$0xf]
      %v2473 = vld [vmem:[%s3 + $0x2c4] sm:$0xf]
      %v2474 = vld [vmem:[%s3 + $0x2c8] sm:$0xf]
      %v2475 = vld [vmem:[%s3 + $0x2cc] sm:$0xf]
      %v2476 = vld [vmem:[%s3 + $0x2d0] sm:$0xf]
      %v2477 = vld [vmem:[%s3 + $0x2d4] sm:$0xf]
      %v2478 = vld [vmem:[%s3 + $0x2d8] sm:$0xf]
      %v2479 = vld [vmem:[%s3 + $0x2dc] sm:$0xf]
      %v2480 = vld [vmem:[%s3 + $0x2e0] sm:$0xf]
      %v2481 = vld [vmem:[%s3 + $0x2e4] sm:$0xf]
      %v2482 = vld [vmem:[%s3 + $0x2e8] sm:$0xf]
      %v2483 = vld [vmem:[%s3 + $0x2ec] sm:$0xf]
      %v2484 = vld [vmem:[%s3 + $0x2f0] sm:$0xf]
      %v2485 = vld [vmem:[%s3 + $0x2f4] sm:$0xf]
      %v2486 = vld [vmem:[%s3 + $0x2f8] sm:$0xf]
      %v2487 = vld [vmem:[%s3 + $0x2fc] sm:$0xf]
      %v2488 = vld [vmem:[%s3 + $0x300] sm:$0xf]
      %v2489 = vld [vmem:[%s3 + $0x304] sm:$0xf]
      %v2490 = vld [vmem:[%s3 + $0x308] sm:$0xf]
      %v2491 = vld [vmem:[%s3 + $0x30c] sm:$0xf]
      %v2492 = vld [vmem:[%s3 + $0x310] sm:$0xf]
      %v2493 = vld [vmem:[%s3 + $0x314] sm:$0xf]
      %v2494 = vld [vmem:[%s3 + $0x318] sm:$0xf]
      %v2495 = vld [vmem:[%s3 + $0x31c] sm:$0xf]
      %v2496 = vld [vmem:[%s3 + $0x320] sm:$0xf]
      %v2497 = vld [vmem:[%s3 + $0x324] sm:$0xf]
      %v2498 = vld [vmem:[%s3 + $0x328] sm:$0xf]
      %v2499 = vld [vmem:[%s3 + $0x32c] sm:$0xf]
      %v2500 = vld [vmem:[%s3 + $0x330] sm:$0xf]
      %v2501 = vld [vmem:[%s3 + $0x334] sm:$0xf]
      %v2502 = vld [vmem:[%s3 + $0x338] sm:$0xf]
      %v2503 = vld [vmem:[%s3 + $0x33c] sm:$0xf]
      %v2504 = vld [vmem:[%s3 + $0x340] sm:$0xf]
      %v2505 = vld [vmem:[%s3 + $0x344] sm:$0xf]
      %v2506 = vld [vmem:[%s3 + $0x348] sm:$0xf]
      %v2507 = vld [vmem:[%s3 + $0x34c] sm:$0xf]
      %v2508 = vld [vmem:[%s3 + $0x350] sm:$0xf]
      %v2509 = vld [vmem:[%s3 + $0x354] sm:$0xf]
      %v2510 = vld [vmem:[%s3 + $0x358] sm:$0xf]
      %v2511 = vld [vmem:[%s3 + $0x35c] sm:$0xf]
      %v2512 = vld [vmem:[%s3 + $0x360] sm:$0xf]
      %v2513 = vld [vmem:[%s3 + $0x364] sm:$0xf]
      %v2514 = vld [vmem:[%s3 + $0x368] sm:$0xf]
      %v2515 = vld [vmem:[%s3 + $0x36c] sm:$0xf]
      %v2516 = vld [vmem:[%s3 + $0x370] sm:$0xf]
      %v2517 = vld [vmem:[%s3 + $0x374] sm:$0xf]
      %v2518 = vld [vmem:[%s3 + $0x378] sm:$0xf]
      %v2519 = vld [vmem:[%s3 + $0x37c] sm:$0xf]
      %v2520 = vld [vmem:[%s3 + $0x380] sm:$0xf]
      %v2521 = vld [vmem:[%s3 + $0x384] sm:$0xf]
      %v2522 = vld [vmem:[%s3 + $0x388] sm:$0xf]
      %v2523 = vld [vmem:[%s3 + $0x38c] sm:$0xf]
      %v2524 = vld [vmem:[%s3 + $0x390] sm:$0xf]
      %v2525 = vld [vmem:[%s3 + $0x394] sm:$0xf]
      %v2526 = vld [vmem:[%s3 + $0x398] sm:$0xf]
      %v2527 = vld [vmem:[%s3 + $0x39c] sm:$0xf]
      %v2528 = vld [vmem:[%s3 + $0x3a0] sm:$0xf]
      %v2529 = vld [vmem:[%s3 + $0x3a4] sm:$0xf]
      %v2530 = vld [vmem:[%s3 + $0x3a8] sm:$0xf]
      %v2531 = vld [vmem:[%s3 + $0x3ac] sm:$0xf]
      %v2532 = vld [vmem:[%s3 + $0x3b0] sm:$0xf]
      %v2533 = vld [vmem:[%s3 + $0x3b4] sm:$0xf]
      %v2534 = vld [vmem:[%s3 + $0x3b8] sm:$0xf]
      %v2535 = vld [vmem:[%s3 + $0x3bc] sm:$0xf]
      %v2536 = vld [vmem:[%s3 + $0x3c0] sm:$0xf]
      %v2537 = vld [vmem:[%s3 + $0x3c4] sm:$0xf]
      %v2538 = vld [vmem:[%s3 + $0x3c8] sm:$0xf]
      %v2539 = vld [vmem:[%s3 + $0x3cc] sm:$0xf]
      %v2540 = vld [vmem:[%s3 + $0x3d0] sm:$0xf]
      %v2541 = vld [vmem:[%s3 + $0x3d4] sm:$0xf]
      %v2542 = vld [vmem:[%s3 + $0x3d8] sm:$0xf]
      %v2543 = vld [vmem:[%s3 + $0x3dc] sm:$0xf]
      %v2544 = vld [vmem:[%s3 + $0x3e0] sm:$0xf]
      %v2545 = vld [vmem:[%s3 + $0x3e4] sm:$0xf]
      %v2546 = vld [vmem:[%s3 + $0x3e8] sm:$0xf]
      %v2547 = vld [vmem:[%s3 + $0x3ec] sm:$0xf]
      %v2548 = vld [vmem:[%s3 + $0x3f0] sm:$0xf]
      %v2549 = vld [vmem:[%s3 + $0x3f4] sm:$0xf]
      %v2550 = vld [vmem:[%s3 + $0x3f8] sm:$0xf]
      %v2551 = vld [vmem:[%s3 + $0x3fc] sm:$0xf]
      %v2568 = vunpack.c.l.b16 %v2296
      %v2569 = vunpack.c.l.b16 %v2297
      %v2570 = vunpack.c.l.b16 %v2298
      %v2571 = vunpack.c.l.b16 %v2299
      %v2572 = vunpack.c.l.b16 %v2300
      %v2573 = vunpack.c.l.b16 %v2301
      %v2574 = vunpack.c.l.b16 %v2302
      %v2575 = vunpack.c.l.b16 %v2303
      %v2576 = vunpack.c.l.b16 %v2304
      %v2577 = vunpack.c.l.b16 %v2305
      %v2578 = vunpack.c.l.b16 %v2306
      %v2579 = vunpack.c.l.b16 %v2307
      %v2580 = vunpack.c.l.b16 %v2308
      %v2581 = vunpack.c.l.b16 %v2309
      %v2582 = vunpack.c.l.b16 %v2310
      %v2583 = vunpack.c.l.b16 %v2311
      %v2584 = vpack.c.b16 %v2569, %v2568
      %v2585 = vpack.c.b16 %v2571, %v2570
      %v2586 = vpack.c.b16 %v2573, %v2572
      %v2587 = vpack.c.b16 %v2575, %v2574
      %v2588 = vpack.c.b16 %v2577, %v2576
      %v2589 = vpack.c.b16 %v2579, %v2578
      %v2590 = vpack.c.b16 %v2581, %v2580
      %v2591 = vpack.c.b16 %v2583, %v2582
      %2600 = vmatprep.subr.bf16.mxu0 0
      %2601 = vmatpush1.bf16.msra.mxu0 %v2584
      %2602 = vmatprep.subr.bf16.mxu0 0
      %2603 = vmatpush1.bf16.msra.mxu0 %v2585
      %2604 = vmatprep.subr.bf16.mxu0 0
      %2605 = vmatpush1.bf16.msra.mxu0 %v2586
      %2606 = vmatprep.subr.bf16.mxu0 0
      %2607 = vmatpush1.bf16.msra.mxu0 %v2587
      %2608 = vmatprep.subr.bf16.mxu0 0
      %2609 = vmatpush1.bf16.msra.mxu0 %v2588
      %2610 = vmatprep.subr.bf16.mxu0 0
      %2611 = vmatpush1.bf16.msra.mxu0 %v2589
      %2612 = vmatprep.subr.bf16.mxu0 0
      %2613 = vmatpush1.bf16.msra.mxu0 %v2590
      %2614 = vmatprep.subr.bf16.mxu0 0
      %2615 = vmatpush1.bf16.msra.mxu0 %v2591
      %2616 = vmatprep.subr.bf16.mxu0 0
      %2617 = vmatpush1.bf16.msra.mxu0 0
      %2618 = vmatprep.subr.bf16.mxu0 0
      %2619 = vmatpush1.bf16.msra.mxu0 0
      %2620 = vmatprep.subr.bf16.mxu0 0
      %2621 = vmatpush1.bf16.msra.mxu0 0
      %2622 = vmatprep.subr.bf16.mxu0 0
      %2623 = vmatpush1.bf16.msra.mxu0 0
      %2624 = vmatprep.subr.bf16.mxu0 0
      %2625 = vmatpush1.bf16.msra.mxu0 0
      %2626 = vmatprep.subr.bf16.mxu0 0
      %2627 = vmatpush1.bf16.msra.mxu0 0
      %2628 = vmatprep.subr.bf16.mxu0 0
      %2629 = vmatpush1.bf16.msra.mxu0 0
      %2630 = vmatprep.subr.bf16.mxu0 0
      %2631 = vmatpush1.bf16.msra.mxu0 0
      %2632 = vmatprep.mubr.bf16.mxu0 0
      %2633 = vmatmul.mubr.bf16.gmra.mrb[0].mxu0 %v2168
      %v2634 = vpop.f32.mrb[0].mxu0
      %v2635 = vadd.f32 0.0, %v2634
      %v2636 = vpop.f32.mrb[0].mxu0
      %v2637 = vpop.f32.mrb[0].mxu0
      %v2638 = vadd.f32 0.0, %v2637
      %v2639 = vpop.f32.mrb[0].mxu0
      %2640 = vmatprep.mubr.bf16.mxu0 0
      %2641 = vmatmul.mubr.bf16.gmra.mrb[0].mxu0 %v2172
      %v2642 = vpop.f32.mrb[0].mxu0
      %v2643 = vadd.f32 0.0, %v2642
      %v2644 = vpop.f32.mrb[0].mxu0
      %v2645 = vpop.f32.mrb[0].mxu0
      %v2646 = vadd.f32 0.0, %v2645
      %v2647 = vpop.f32.mrb[0].mxu0
      %2648 = vdwg.mxu0
      %v2665 = vunpack.c.l.b16 %v2312
      %v2666 = vunpack.c.l.b16 %v2313
      %v2667 = vunpack.c.l.b16 %v2314
      %v2668 = vunpack.c.l.b16 %v2315
      %v2669 = vunpack.c.l.b16 %v2316
      %v2670 = vunpack.c.l.b16 %v2317
      %v2671 = vunpack.c.l.b16 %v2318
      %v2672 = vunpack.c.l.b16 %v2319
      %v2673 = vunpack.c.l.b16 %v2320
      %v2674 = vunpack.c.l.b16 %v2321
      %v2675 = vunpack.c.l.b16 %v2322
      %v2676 = vunpack.c.l.b16 %v2323
      %v2677 = vunpack.c.l.b16 %v2324
      %v2678 = vunpack.c.l.b16 %v2325
      %v2679 = vunpack.c.l.b16 %v2326
      %v2680 = vunpack.c.l.b16 %v2327
      %v2681 = vpack.c.b16 %v2666, %v2665
      %v2682 = vpack.c.b16 %v2668, %v2667
      %v2683 = vpack.c.b16 %v2670, %v2669
      %v2684 = vpack.c.b16 %v2672, %v2671
      %v2685 = vpack.c.b16 %v2674, %v2673
      %v2686 = vpack.c.b16 %v2676, %v2675
      %v2687 = vpack.c.b16 %v2678, %v2677
      %v2688 = vpack.c.b16 %v2680, %v2679
      %2697 = vmatprep.subr.bf16.mxu0 0
      %2698 = vmatpush1.bf16.msra.mxu0 %v2681
      %2699 = vmatprep.subr.bf16.mxu0 0
      %2700 = vmatpush1.bf16.msra.mxu0 %v2682
      %2701 = vmatprep.subr.bf16.mxu0 0
      %2702 = vmatpush1.bf16.msra.mxu0 %v2683
      %2703 = vmatprep.subr.bf16.mxu0 0
      %2704 = vmatpush1.bf16.msra.mxu0 %v2684
      %2705 = vmatprep.subr.bf16.mxu0 0
      %2706 = vmatpush1.bf16.msra.mxu0 %v2685
      %2707 = vmatprep.subr.bf16.mxu0 0
      %2708 = vmatpush1.bf16.msra.mxu0 %v2686
      %2709 = vmatprep.subr.bf16.mxu0 0
      %2710 = vmatpush1.bf16.msra.mxu0 %v2687
      %2711 = vmatprep.subr.bf16.mxu0 0
      %2712 = vmatpush1.bf16.msra.mxu0 %v2688
      %2713 = vmatprep.subr.bf16.mxu0 0
      %2714 = vmatpush1.bf16.msra.mxu0 0
      %2715 = vmatprep.subr.bf16.mxu0 0
      %2716 = vmatpush1.bf16.msra.mxu0 0
      %2717 = vmatprep.subr.bf16.mxu0 0
      %2718 = vmatpush1.bf16.msra.mxu0 0
      %2719 = vmatprep.subr.bf16.mxu0 0
      %2720 = vmatpush1.bf16.msra.mxu0 0
      %2721 = vmatprep.subr.bf16.mxu0 0
      %2722 = vmatpush1.bf16.msra.mxu0 0
      %2723 = vmatprep.subr.bf16.mxu0 0
      %2724 = vmatpush1.bf16.msra.mxu0 0
      %2725 = vmatprep.subr.bf16.mxu0 0
      %2726 = vmatpush1.bf16.msra.mxu0 0
      %2727 = vmatprep.subr.bf16.mxu0 0
      %2728 = vmatpush1.bf16.msra.mxu0 0
      %2729 = vmatprep.mubr.bf16.mxu0 0
      %2730 = vmatmul.mubr.bf16.gmra.mrb[0].mxu0 %v2176
      %v2731 = vpop.f32.mrb[0].mxu0
      %v2732 = vadd.f32 0.0, %v2731
      %v2733 = vpop.f32.mrb[0].mxu0
      %v2734 = vpop.f32.mrb[0].mxu0
      %v2735 = vadd.f32 0.0, %v2734
      %v2736 = vpop.f32.mrb[0].mxu0
      %2737 = vmatprep.mubr.bf16.mxu0 0
      %2738 = vmatmul.mubr.bf16.gmra.mrb[0].mxu0 %v2180
      %v2739 = vpop.f32.mrb[0].mxu0
      %v2740 = vadd.f32 0.0, %v2739
      %v2741 = vpop.f32.mrb[0].mxu0
      %v2742 = vpop.f32.mrb[0].mxu0
      %v2743 = vadd.f32 0.0, %v2742
      %v2744 = vpop.f32.mrb[0].mxu0
      %2745 = vdwg.mxu0
      %v2762 = vunpack.c.l.b16 %v2328
      %v2763 = vunpack.c.l.b16 %v2329
      %v2764 = vunpack.c.l.b16 %v2330
      %v2765 = vunpack.c.l.b16 %v2331
      %v2766 = vunpack.c.l.b16 %v2332
      %v2767 = vunpack.c.l.b16 %v2333
      %v2768 = vunpack.c.l.b16 %v2334
      %v2769 = vunpack.c.l.b16 %v2335
      %v2770 = vunpack.c.l.b16 %v2336
      %v2771 = vunpack.c.l.b16 %v2337
      %v2772 = vunpack.c.l.b16 %v2338
      %v2773 = vunpack.c.l.b16 %v2339
      %v2774 = vunpack.c.l.b16 %v2340
      %v2775 = vunpack.c.l.b16 %v2341
      %v2776 = vunpack.c.l.b16 %v2342
      %v2777 = vunpack.c.l.b16 %v2343
      %v2778 = vpack.c.b16 %v2763, %v2762
      %v2779 = vpack.c.b16 %v2765, %v2764
      %v2780 = vpack.c.b16 %v2767, %v2766
      %v2781 = vpack.c.b16 %v2769, %v2768
      %v2782 = vpack.c.b16 %v2771, %v2770
      %v2783 = vpack.c.b16 %v2773, %v2772
      %v2784 = vpack.c.b16 %v2775, %v2774
      %v2785 = vpack.c.b16 %v2777, %v2776
      %2794 = vmatprep.subr.bf16.mxu0 0
      %2795 = vmatpush1.bf16.msra.mxu0 %v2778
      %2796 = vmatprep.subr.bf16.mxu0 0
      %2797 = vmatpush1.bf16.msra.mxu0 %v2779
      %2798 = vmatprep.subr.bf16.mxu0 0
      %2799 = vmatpush1.bf16.msra.mxu0 %v2780
      %2800 = vmatprep.subr.bf16.mxu0 0
      %2801 = vmatpush1.bf16.msra.mxu0 %v2781
      %2802 = vmatprep.subr.bf16.mxu0 0
      %2803 = vmatpush1.bf16.msra.mxu0 %v2782
      %2804 = vmatprep.subr.bf16.mxu0 0
      %2805 = vmatpush1.bf16.msra.mxu0 %v2783
      %2806 = vmatprep.subr.bf16.mxu0 0
      %2807 = vmatpush1.bf16.msra.mxu0 %v2784
      %2808 = vmatprep.subr.bf16.mxu0 0
      %2809 = vmatpush1.bf16.msra.mxu0 %v2785
      %2810 = vmatprep.subr.bf16.mxu0 0
      %2811 = vmatpush1.bf16.msra.mxu0 0
      %2812 = vmatprep.subr.bf16.mxu0 0
      %2813 = vmatpush1.bf16.msra.mxu0 0
      %2814 = vmatprep.subr.bf16.mxu0 0
      %2815 = vmatpush1.bf16.msra.mxu0 0
      %2816 = vmatprep.subr.bf16.mxu0 0
      %2817 = vmatpush1.bf16.msra.mxu0 0
      %2818 = vmatprep.subr.bf16.mxu0 0
      %2819 = vmatpush1.bf16.msra.mxu0 0
      %2820 = vmatprep.subr.bf16.mxu0 0
      %2821 = vmatpush1.bf16.msra.mxu0 0
      %2822 = vmatprep.subr.bf16.mxu0 0
      %2823 = vmatpush1.bf16.msra.mxu0 0
      %2824 = vmatprep.subr.bf16.mxu0 0
      %2825 = vmatpush1.bf16.msra.mxu0 0
      %2826 = vmatprep.mubr.bf16.mxu0 0
      %2827 = vmatmul.mubr.bf16.gmra.mrb[0].mxu0 %v2184
      %v2828 = vpop.f32.mrb[0].mxu0
      %v2829 = vadd.f32 0.0, %v2828
      %v2830 = vpop.f32.mrb[0].mxu0
      %v2831 = vpop.f32.mrb[0].mxu0
      %v2832 = vadd.f32 0.0, %v2831
      %v2833 = vpop.f32.mrb[0].mxu0
      %2834 = vmatprep.mubr.bf16.mxu0 0
      %2835 = vmatmul.mubr.bf16.gmra.mrb[0].mxu0 %v2188
      %v2836 = vpop.f32.mrb[0].mxu0
      %v2837 = vadd.f32 0.0, %v2836
      %v2838 = vpop.f32.mrb[0].mxu0
      %v2839 = vpop.f32.mrb[0].mxu0
      %v2840 = vadd.f32 0.0, %v2839
      %v2841 = vpop.f32.mrb[0].mxu0
      %2842 = vdwg.mxu0
      %v2859 = vunpack.c.l.b16 %v2344
      %v2860 = vunpack.c.l.b16 %v2345
      %v2861 = vunpack.c.l.b16 %v2346
      %v2862 = vunpack.c.l.b16 %v2347
      %v2863 = vunpack.c.l.b16 %v2348
      %v2864 = vunpack.c.l.b16 %v2349
      %v2865 = vunpack.c.l.b16 %v2350
      %v2866 = vunpack.c.l.b16 %v2351
      %v2867 = vunpack.c.l.b16 %v2352
      %v2868 = vunpack.c.l.b16 %v2353
      %v2869 = vunpack.c.l.b16 %v2354
      %v2870 = vunpack.c.l.b16 %v2355
      %v2871 = vunpack.c.l.b16 %v2356
      %v2872 = vunpack.c.l.b16 %v2357
      %v2873 = vunpack.c.l.b16 %v2358
      %v2874 = vunpack.c.l.b16 %v2359
      %v2875 = vpack.c.b16 %v2860, %v2859
      %v2876 = vpack.c.b16 %v2862, %v2861
      %v2877 = vpack.c.b16 %v2864, %v2863
      %v2878 = vpack.c.b16 %v2866, %v2865
      %v2879 = vpack.c.b16 %v2868, %v2867
      %v2880 = vpack.c.b16 %v2870, %v2869
      %v2881 = vpack.c.b16 %v2872, %v2871
      %v2882 = vpack.c.b16 %v2874, %v2873
      %2891 = vmatprep.subr.bf16.mxu0 0
      %2892 = vmatpush1.bf16.msra.mxu0 %v2875
      %2893 = vmatprep.subr.bf16.mxu0 0
      %2894 = vmatpush1.bf16.msra.mxu0 %v2876
      %2895 = vmatprep.subr.bf16.mxu0 0
      %2896 = vmatpush1.bf16.msra.mxu0 %v2877
      %2897 = vmatprep.subr.bf16.mxu0 0
      %2898 = vmatpush1.bf16.msra.mxu0 %v2878
      %2899 = vmatprep.subr.bf16.mxu0 0
      %2900 = vmatpush1.bf16.msra.mxu0 %v2879
      %2901 = vmatprep.subr.bf16.mxu0 0
      %2902 = vmatpush1.bf16.msra.mxu0 %v2880
      %2903 = vmatprep.subr.bf16.mxu0 0
      %2904 = vmatpush1.bf16.msra.mxu0 %v2881
      %2905 = vmatprep.subr.bf16.mxu0 0
      %2906 = vmatpush1.bf16.msra.mxu0 %v2882
      %2907 = vmatprep.subr.bf16.mxu0 0
      %2908 = vmatpush1.bf16.msra.mxu0 0
      %2909 = vmatprep.subr.bf16.mxu0 0
      %2910 = vmatpush1.bf16.msra.mxu0 0
      %2911 = vmatprep.subr.bf16.mxu0 0
      %2912 = vmatpush1.bf16.msra.mxu0 0
      %2913 = vmatprep.subr.bf16.mxu0 0
      %2914 = vmatpush1.bf16.msra.mxu0 0
      %2915 = vmatprep.subr.bf16.mxu0 0
      %2916 = vmatpush1.bf16.msra.mxu0 0
      %2917 = vmatprep.subr.bf16.mxu0 0
      %2918 = vmatpush1.bf16.msra.mxu0 0
      %2919 = vmatprep.subr.bf16.mxu0 0
      %2920 = vmatpush1.bf16.msra.mxu0 0
      %2921 = vmatprep.subr.bf16.mxu0 0
      %2922 = vmatpush1.bf16.msra.mxu0 0
      %2923 = vmatprep.mubr.bf16.mxu0 0
      %2924 = vmatmul.mubr.bf16.gmra.mrb[0].mxu0 %v2192
      %v2925 = vpop.f32.mrb[0].mxu0
      %v2926 = vadd.f32 0.0, %v2925
      %v2927 = vpop.f32.mrb[0].mxu0
      %v2928 = vpop.f32.mrb[0].mxu0
      %v2929 = vadd.f32 0.0, %v2928
      %v2930 = vpop.f32.mrb[0].mxu0
      %2931 = vmatprep.mubr.bf16.mxu0 0
      %2932 = vmatmul.mubr.bf16.gmra.mrb[0].mxu0 %v2196
      %v2933 = vpop.f32.mrb[0].mxu0
      %v2934 = vadd.f32 0.0, %v2933
      %v2935 = vpop.f32.mrb[0].mxu0
      %v2936 = vpop.f32.mrb[0].mxu0
      %v2937 = vadd.f32 0.0, %v2936
      %v2938 = vpop.f32.mrb[0].mxu0
      %2939 = vdwg.mxu0
      %v2956 = vunpack.c.l.b16 %v2360
      %v2957 = vunpack.c.l.b16 %v2361
      %v2958 = vunpack.c.l.b16 %v2362
      %v2959 = vunpack.c.l.b16 %v2363
      %v2960 = vunpack.c.l.b16 %v2364
      %v2961 = vunpack.c.l.b16 %v2365
      %v2962 = vunpack.c.l.b16 %v2366
      %v2963 = vunpack.c.l.b16 %v2367
      %v2964 = vunpack.c.l.b16 %v2368
      %v2965 = vunpack.c.l.b16 %v2369
      %v2966 = vunpack.c.l.b16 %v2370
      %v2967 = vunpack.c.l.b16 %v2371
      %v2968 = vunpack.c.l.b16 %v2372
      %v2969 = vunpack.c.l.b16 %v2373
      %v2970 = vunpack.c.l.b16 %v2374
      %v2971 = vunpack.c.l.b16 %v2375
      %v2972 = vpack.c.b16 %v2957, %v2956
      %v2973 = vpack.c.b16 %v2959, %v2958
      %v2974 = vpack.c.b16 %v2961, %v2960
      %v2975 = vpack.c.b16 %v2963, %v2962
      %v2976 = vpack.c.b16 %v2965, %v2964
      %v2977 = vpack.c.b16 %v2967, %v2966
      %v2978 = vpack.c.b16 %v2969, %v2968
      %v2979 = vpack.c.b16 %v2971, %v2970
      %2988 = vmatprep.subr.bf16.mxu0 0
      %2989 = vmatpush1.bf16.msra.mxu0 %v2972
      %2990 = vmatprep.subr.bf16.mxu0 0
      %2991 = vmatpush1.bf16.msra.mxu0 %v2973
      %2992 = vmatprep.subr.bf16.mxu0 0
      %2993 = vmatpush1.bf16.msra.mxu0 %v2974
      %2994 = vmatprep.subr.bf16.mxu0 0
      %2995 = vmatpush1.bf16.msra.mxu0 %v2975
      %2996 = vmatprep.subr.bf16.mxu0 0
      %2997 = vmatpush1.bf16.msra.mxu0 %v2976
      %2998 = vmatprep.subr.bf16.mxu0 0
      %2999 = vmatpush1.bf16.msra.mxu0 %v2977
      %3000 = vmatprep.subr.bf16.mxu0 0
      %3001 = vmatpush1.bf16.msra.mxu0 %v2978
      %3002 = vmatprep.subr.bf16.mxu0 0
      %3003 = vmatpush1.bf16.msra.mxu0 %v2979
      %3004 = vmatprep.subr.bf16.mxu0 0
      %3005 = vmatpush1.bf16.msra.mxu0 0
      %3006 = vmatprep.subr.bf16.mxu0 0
      %3007 = vmatpush1.bf16.msra.mxu0 0
      %3008 = vmatprep.subr.bf16.mxu0 0
      %3009 = vmatpush1.bf16.msra.mxu0 0
      %3010 = vmatprep.subr.bf16.mxu0 0
      %3011 = vmatpush1.bf16.msra.mxu0 0
      %3012 = vmatprep.subr.bf16.mxu0 0
      %3013 = vmatpush1.bf16.msra.mxu0 0
      %3014 = vmatprep.subr.bf16.mxu0 0
      %3015 = vmatpush1.bf16.msra.mxu0 0
      %3016 = vmatprep.subr.bf16.mxu0 0
      %3017 = vmatpush1.bf16.msra.mxu0 0
      %3018 = vmatprep.subr.bf16.mxu0 0
      %3019 = vmatpush1.bf16.msra.mxu0 0
      %3020 = vmatprep.mubr.bf16.mxu0 0
      %3021 = vmatmul.mubr.bf16.gmra.mrb[0].mxu0 %v2200
      %v3022 = vpop.f32.mrb[0].mxu0
      %v3023 = vadd.f32 0.0, %v3022
      %v3024 = vpop.f32.mrb[0].mxu0
      %v3025 = vpop.f32.mrb[0].mxu0
      %v3026 = vadd.f32 0.0, %v3025
      %v3027 = vpop.f32.mrb[0].mxu0
      %3028 = vmatprep.mubr.bf16.mxu0 0
      %3029 = vmatmul.mubr.bf16.gmra.mrb[0].mxu0 %v2204
      %v3030 = vpop.f32.mrb[0].mxu0
      %v3031 = vadd.f32 0.0, %v3030
      %v3032 = vpop.f32.mrb[0].mxu0
      %v3033 = vpop.f32.mrb[0].mxu0
      %v3034 = vadd.f32 0.0, %v3033
      %v3035 = vpop.f32.mrb[0].mxu0
      %3036 = vdwg.mxu0
      %v3053 = vunpack.c.l.b16 %v2376
      %v3054 = vunpack.c.l.b16 %v2377
      %v3055 = vunpack.c.l.b16 %v2378
      %v3056 = vunpack.c.l.b16 %v2379
      %v3057 = vunpack.c.l.b16 %v2380
      %v3058 = vunpack.c.l.b16 %v2381
      %v3059 = vunpack.c.l.b16 %v2382
      %v3060 = vunpack.c.l.b16 %v2383
      %v3061 = vunpack.c.l.b16 %v2384
      %v3062 = vunpack.c.l.b16 %v2385
      %v3063 = vunpack.c.l.b16 %v2386
      %v3064 = vunpack.c.l.b16 %v2387
      %v3065 = vunpack.c.l.b16 %v2388
      %v3066 = vunpack.c.l.b16 %v2389
      %v3067 = vunpack.c.l.b16 %v2390
      %v3068 = vunpack.c.l.b16 %v2391
      %v3069 = vpack.c.b16 %v3054, %v3053
      %v3070 = vpack.c.b16 %v3056, %v3055
      %v3071 = vpack.c.b16 %v3058, %v3057
      %v3072 = vpack.c.b16 %v3060, %v3059
      %v3073 = vpack.c.b16 %v3062, %v3061
      %v3074 = vpack.c.b16 %v3064, %v3063
      %v3075 = vpack.c.b16 %v3066, %v3065
      %v3076 = vpack.c.b16 %v3068, %v3067
      %3085 = vmatprep.subr.bf16.mxu0 0
      %3086 = vmatpush1.bf16.msra.mxu0 %v3069
      %3087 = vmatprep.subr.bf16.mxu0 0
      %3088 = vmatpush1.bf16.msra.mxu0 %v3070
      %3089 = vmatprep.subr.bf16.mxu0 0
      %3090 = vmatpush1.bf16.msra.mxu0 %v3071
      %3091 = vmatprep.subr.bf16.mxu0 0
      %3092 = vmatpush1.bf16.msra.mxu0 %v3072
      %3093 = vmatprep.subr.bf16.mxu0 0
      %3094 = vmatpush1.bf16.msra.mxu0 %v3073
      %3095 = vmatprep.subr.bf16.mxu0 0
      %3096 = vmatpush1.bf16.msra.mxu0 %v3074
      %3097 = vmatprep.subr.bf16.mxu0 0
      %3098 = vmatpush1.bf16.msra.mxu0 %v3075
      %3099 = vmatprep.subr.bf16.mxu0 0
      %3100 = vmatpush1.bf16.msra.mxu0 %v3076
      %3101 = vmatprep.subr.bf16.mxu0 0
      %3102 = vmatpush1.bf16.msra.mxu0 0
      %3103 = vmatprep.subr.bf16.mxu0 0
      %3104 = vmatpush1.bf16.msra.mxu0 0
      %3105 = vmatprep.subr.bf16.mxu0 0
      %3106 = vmatpush1.bf16.msra.mxu0 0
      %3107 = vmatprep.subr.bf16.mxu0 0
      %3108 = vmatpush1.bf16.msra.mxu0 0
      %3109 = vmatprep.subr.bf16.mxu0 0
      %3110 = vmatpush1.bf16.msra.mxu0 0
      %3111 = vmatprep.subr.bf16.mxu0 0
      %3112 = vmatpush1.bf16.msra.mxu0 0
      %3113 = vmatprep.subr.bf16.mxu0 0
      %3114 = vmatpush1.bf16.msra.mxu0 0
      %3115 = vmatprep.subr.bf16.mxu0 0
      %3116 = vmatpush1.bf16.msra.mxu0 0
      %3117 = vmatprep.mubr.bf16.mxu0 0
      %3118 = vmatmul.mubr.bf16.gmra.mrb[0].mxu0 %v2208
      %v3119 = vpop.f32.mrb[0].mxu0
      %v3120 = vadd.f32 0.0, %v3119
      %v3121 = vpop.f32.mrb[0].mxu0
      %v3122 = vpop.f32.mrb[0].mxu0
      %v3123 = vadd.f32 0.0, %v3122
      %v3124 = vpop.f32.mrb[0].mxu0
      %3125 = vmatprep.mubr.bf16.mxu0 0
      %3126 = vmatmul.mubr.bf16.gmra.mrb[0].mxu0 %v2212
      %v3127 = vpop.f32.mrb[0].mxu0
      %v3128 = vadd.f32 0.0, %v3127
      %v3129 = vpop.f32.mrb[0].mxu0
      %v3130 = vpop.f32.mrb[0].mxu0
      %v3131 = vadd.f32 0.0, %v3130
      %v3132 = vpop.f32.mrb[0].mxu0
      %3133 = vdwg.mxu0
      %v3150 = vunpack.c.l.b16 %v2392
      %v3151 = vunpack.c.l.b16 %v2393
      %v3152 = vunpack.c.l.b16 %v2394
      %v3153 = vunpack.c.l.b16 %v2395
      %v3154 = vunpack.c.l.b16 %v2396
      %v3155 = vunpack.c.l.b16 %v2397
      %v3156 = vunpack.c.l.b16 %v2398
      %v3157 = vunpack.c.l.b16 %v2399
      %v3158 = vunpack.c.l.b16 %v2400
      %v3159 = vunpack.c.l.b16 %v2401
      %v3160 = vunpack.c.l.b16 %v2402
      %v3161 = vunpack.c.l.b16 %v2403
      %v3162 = vunpack.c.l.b16 %v2404
      %v3163 = vunpack.c.l.b16 %v2405
      %v3164 = vunpack.c.l.b16 %v2406
      %v3165 = vunpack.c.l.b16 %v2407
      %v3166 = vpack.c.b16 %v3151, %v3150
      %v3167 = vpack.c.b16 %v3153, %v3152
      %v3168 = vpack.c.b16 %v3155, %v3154
      %v3169 = vpack.c.b16 %v3157, %v3156
      %v3170 = vpack.c.b16 %v3159, %v3158
      %v3171 = vpack.c.b16 %v3161, %v3160
      %v3172 = vpack.c.b16 %v3163, %v3162
      %v3173 = vpack.c.b16 %v3165, %v3164
      %3182 = vmatprep.subr.bf16.mxu0 0
      %3183 = vmatpush1.bf16.msra.mxu0 %v3166
      %3184 = vmatprep.subr.bf16.mxu0 0
      %3185 = vmatpush1.bf16.msra.mxu0 %v3167
      %3186 = vmatprep.subr.bf16.mxu0 0
      %3187 = vmatpush1.bf16.msra.mxu0 %v3168
      %3188 = vmatprep.subr.bf16.mxu0 0
      %3189 = vmatpush1.bf16.msra.mxu0 %v3169
      %3190 = vmatprep.subr.bf16.mxu0 0
      %3191 = vmatpush1.bf16.msra.mxu0 %v3170
      %3192 = vmatprep.subr.bf16.mxu0 0
      %3193 = vmatpush1.bf16.msra.mxu0 %v3171
      %3194 = vmatprep.subr.bf16.mxu0 0
      %3195 = vmatpush1.bf16.msra.mxu0 %v3172
      %3196 = vmatprep.subr.bf16.mxu0 0
      %3197 = vmatpush1.bf16.msra.mxu0 %v3173
      %3198 = vmatprep.subr.bf16.mxu0 0
      %3199 = vmatpush1.bf16.msra.mxu0 0
      %3200 = vmatprep.subr.bf16.mxu0 0
      %3201 = vmatpush1.bf16.msra.mxu0 0
      %3202 = vmatprep.subr.bf16.mxu0 0
      %3203 = vmatpush1.bf16.msra.mxu0 0
      %3204 = vmatprep.subr.bf16.mxu0 0
      %3205 = vmatpush1.bf16.msra.mxu0 0
      %3206 = vmatprep.subr.bf16.mxu0 0
      %3207 = vmatpush1.bf16.msra.mxu0 0
      %3208 = vmatprep.subr.bf16.mxu0 0
      %3209 = vmatpush1.bf16.msra.mxu0 0
      %3210 = vmatprep.subr.bf16.mxu0 0
      %3211 = vmatpush1.bf16.msra.mxu0 0
      %3212 = vmatprep.subr.bf16.mxu0 0
      %3213 = vmatpush1.bf16.msra.mxu0 0
      %3214 = vmatprep.mubr.bf16.mxu0 0
      %3215 = vmatmul.mubr.bf16.gmra.mrb[0].mxu0 %v2216
      %v3216 = vpop.f32.mrb[0].mxu0
      %v3217 = vadd.f32 0.0, %v3216
      %v3218 = vpop.f32.mrb[0].mxu0
      %v3219 = vpop.f32.mrb[0].mxu0
      %v3220 = vadd.f32 0.0, %v3219
      %v3221 = vpop.f32.mrb[0].mxu0
      %3222 = vmatprep.mubr.bf16.mxu0 0
      %3223 = vmatmul.mubr.bf16.gmra.mrb[0].mxu0 %v2220
      %v3224 = vpop.f32.mrb[0].mxu0
      %v3225 = vadd.f32 0.0, %v3224
      %v3226 = vpop.f32.mrb[0].mxu0
      %v3227 = vpop.f32.mrb[0].mxu0
      %v3228 = vadd.f32 0.0, %v3227
      %v3229 = vpop.f32.mrb[0].mxu0
      %3230 = vdwg.mxu0
      %v3247 = vunpack.c.l.b16 %v2408
      %v3248 = vunpack.c.l.b16 %v2409
      %v3249 = vunpack.c.l.b16 %v2410
      %v3250 = vunpack.c.l.b16 %v2411
      %v3251 = vunpack.c.l.b16 %v2412
      %v3252 = vunpack.c.l.b16 %v2413
      %v3253 = vunpack.c.l.b16 %v2414
      %v3254 = vunpack.c.l.b16 %v2415
      %v3255 = vunpack.c.l.b16 %v2416
      %v3256 = vunpack.c.l.b16 %v2417
      %v3257 = vunpack.c.l.b16 %v2418
      %v3258 = vunpack.c.l.b16 %v2419
      %v3259 = vunpack.c.l.b16 %v2420
      %v3260 = vunpack.c.l.b16 %v2421
      %v3261 = vunpack.c.l.b16 %v2422
      %v3262 = vunpack.c.l.b16 %v2423
      %v3263 = vpack.c.b16 %v3248, %v3247
      %v3264 = vpack.c.b16 %v3250, %v3249
      %v3265 = vpack.c.b16 %v3252, %v3251
      %v3266 = vpack.c.b16 %v3254, %v3253
      %v3267 = vpack.c.b16 %v3256, %v3255
      %v3268 = vpack.c.b16 %v3258, %v3257
      %v3269 = vpack.c.b16 %v3260, %v3259
      %v3270 = vpack.c.b16 %v3262, %v3261
      %3279 = vmatprep.subr.bf16.mxu0 0
      %3280 = vmatpush1.bf16.msra.mxu0 %v3263
      %3281 = vmatprep.subr.bf16.mxu0 0
      %3282 = vmatpush1.bf16.msra.mxu0 %v3264
      %3283 = vmatprep.subr.bf16.mxu0 0
      %3284 = vmatpush1.bf16.msra.mxu0 %v3265
      %3285 = vmatprep.subr.bf16.mxu0 0
      %3286 = vmatpush1.bf16.msra.mxu0 %v3266
      %3287 = vmatprep.subr.bf16.mxu0 0
      %3288 = vmatpush1.bf16.msra.mxu0 %v3267
      %3289 = vmatprep.subr.bf16.mxu0 0
      %3290 = vmatpush1.bf16.msra.mxu0 %v3268
      %3291 = vmatprep.subr.bf16.mxu0 0
      %3292 = vmatpush1.bf16.msra.mxu0 %v3269
      %3293 = vmatprep.subr.bf16.mxu0 0
      %3294 = vmatpush1.bf16.msra.mxu0 %v3270
      %3295 = vmatprep.subr.bf16.mxu0 0
      %3296 = vmatpush1.bf16.msra.mxu0 0
      %3297 = vmatprep.subr.bf16.mxu0 0
      %3298 = vmatpush1.bf16.msra.mxu0 0
      %3299 = vmatprep.subr.bf16.mxu0 0
      %3300 = vmatpush1.bf16.msra.mxu0 0
      %3301 = vmatprep.subr.bf16.mxu0 0
      %3302 = vmatpush1.bf16.msra.mxu0 0
      %3303 = vmatprep.subr.bf16.mxu0 0
      %3304 = vmatpush1.bf16.msra.mxu0 0
      %3305 = vmatprep.subr.bf16.mxu0 0
      %3306 = vmatpush1.bf16.msra.mxu0 0
      %3307 = vmatprep.subr.bf16.mxu0 0
      %3308 = vmatpush1.bf16.msra.mxu0 0
      %3309 = vmatprep.subr.bf16.mxu0 0
      %3310 = vmatpush1.bf16.msra.mxu0 0
      %3311 = vmatprep.mubr.bf16.mxu0 0
      %3312 = vmatmul.mubr.bf16.gmra.mrb[0].mxu0 %v2224
      %v3313 = vpop.f32.mrb[0].mxu0
      %v3314 = vadd.f32 0.0, %v3313
      %v3315 = vpop.f32.mrb[0].mxu0
      %v3316 = vpop.f32.mrb[0].mxu0
      %v3317 = vadd.f32 0.0, %v3316
      %v3318 = vpop.f32.mrb[0].mxu0
      %3319 = vmatprep.mubr.bf16.mxu0 0
      %3320 = vmatmul.mubr.bf16.gmra.mrb[0].mxu0 %v2228
      %v3321 = vpop.f32.mrb[0].mxu0
      %v3322 = vadd.f32 0.0, %v3321
      %v3323 = vpop.f32.mrb[0].mxu0
      %v3324 = vpop.f32.mrb[0].mxu0
      %v3325 = vadd.f32 0.0, %v3324
      %v3326 = vpop.f32.mrb[0].mxu0
      %3327 = vdwg.mxu0
      %v3344 = vunpack.c.l.b16 %v2424
      %v3345 = vunpack.c.l.b16 %v2425
      %v3346 = vunpack.c.l.b16 %v2426
      %v3347 = vunpack.c.l.b16 %v2427
      %v3348 = vunpack.c.l.b16 %v2428
      %v3349 = vunpack.c.l.b16 %v2429
      %v3350 = vunpack.c.l.b16 %v2430
      %v3351 = vunpack.c.l.b16 %v2431
      %v3352 = vunpack.c.l.b16 %v2432
      %v3353 = vunpack.c.l.b16 %v2433
      %v3354 = vunpack.c.l.b16 %v2434
      %v3355 = vunpack.c.l.b16 %v2435
      %v3356 = vunpack.c.l.b16 %v2436
      %v3357 = vunpack.c.l.b16 %v2437
      %v3358 = vunpack.c.l.b16 %v2438
      %v3359 = vunpack.c.l.b16 %v2439
      %v3360 = vpack.c.b16 %v3345, %v3344
      %v3361 = vpack.c.b16 %v3347, %v3346
      %v3362 = vpack.c.b16 %v3349, %v3348
      %v3363 = vpack.c.b16 %v3351, %v3350
      %v3364 = vpack.c.b16 %v3353, %v3352
      %v3365 = vpack.c.b16 %v3355, %v3354
      %v3366 = vpack.c.b16 %v3357, %v3356
      %v3367 = vpack.c.b16 %v3359, %v3358
      %3376 = vmatprep.subr.bf16.mxu0 0
      %3377 = vmatpush1.bf16.msra.mxu0 %v3360
      %3378 = vmatprep.subr.bf16.mxu0 0
      %3379 = vmatpush1.bf16.msra.mxu0 %v3361
      %3380 = vmatprep.subr.bf16.mxu0 0
      %3381 = vmatpush1.bf16.msra.mxu0 %v3362
      %3382 = vmatprep.subr.bf16.mxu0 0
      %3383 = vmatpush1.bf16.msra.mxu0 %v3363
      %3384 = vmatprep.subr.bf16.mxu0 0
      %3385 = vmatpush1.bf16.msra.mxu0 %v3364
      %3386 = vmatprep.subr.bf16.mxu0 0
      %3387 = vmatpush1.bf16.msra.mxu0 %v3365
      %3388 = vmatprep.subr.bf16.mxu0 0
      %3389 = vmatpush1.bf16.msra.mxu0 %v3366
      %3390 = vmatprep.subr.bf16.mxu0 0
      %3391 = vmatpush1.bf16.msra.mxu0 %v3367
      %3392 = vmatprep.subr.bf16.mxu0 0
      %3393 = vmatpush1.bf16.msra.mxu0 0
      %3394 = vmatprep.subr.bf16.mxu0 0
      %3395 = vmatpush1.bf16.msra.mxu0 0
      %3396 = vmatprep.subr.bf16.mxu0 0
      %3397 = vmatpush1.bf16.msra.mxu0 0
      %3398 = vmatprep.subr.bf16.mxu0 0
      %3399 = vmatpush1.bf16.msra.mxu0 0
      %3400 = vmatprep.subr.bf16.mxu0 0
      %3401 = vmatpush1.bf16.msra.mxu0 0
      %3402 = vmatprep.subr.bf16.mxu0 0
      %3403 = vmatpush1.bf16.msra.mxu0 0
      %3404 = vmatprep.subr.bf16.mxu0 0
      %3405 = vmatpush1.bf16.msra.mxu0 0
      %3406 = vmatprep.subr.bf16.mxu0 0
      %3407 = vmatpush1.bf16.msra.mxu0 0
      %3408 = vmatprep.mubr.bf16.mxu0 0
      %3409 = vmatmul.mubr.bf16.gmra.mrb[0].mxu0 %v2232
      %v3410 = vpop.f32.mrb[0].mxu0
      %v3411 = vadd.f32 0.0, %v3410
      %v3412 = vpop.f32.mrb[0].mxu0
      %v3413 = vpop.f32.mrb[0].mxu0
      %v3414 = vadd.f32 0.0, %v3413
      %v3415 = vpop.f32.mrb[0].mxu0
      %3416 = vmatprep.mubr.bf16.mxu0 0
      %3417 = vmatmul.mubr.bf16.gmra.mrb[0].mxu0 %v2236
      %v3418 = vpop.f32.mrb[0].mxu0
      %v3419 = vadd.f32 0.0, %v3418
      %v3420 = vpop.f32.mrb[0].mxu0
      %v3421 = vpop.f32.mrb[0].mxu0
      %v3422 = vadd.f32 0.0, %v3421
      %v3423 = vpop.f32.mrb[0].mxu0
      %3424 = vdwg.mxu0
      %v3441 = vunpack.c.l.b16 %v2440
      %v3442 = vunpack.c.l.b16 %v2441
      %v3443 = vunpack.c.l.b16 %v2442
      %v3444 = vunpack.c.l.b16 %v2443
      %v3445 = vunpack.c.l.b16 %v2444
      %v3446 = vunpack.c.l.b16 %v2445
      %v3447 = vunpack.c.l.b16 %v2446
      %v3448 = vunpack.c.l.b16 %v2447
      %v3449 = vunpack.c.l.b16 %v2448
      %v3450 = vunpack.c.l.b16 %v2449
      %v3451 = vunpack.c.l.b16 %v2450
      %v3452 = vunpack.c.l.b16 %v2451
      %v3453 = vunpack.c.l.b16 %v2452
      %v3454 = vunpack.c.l.b16 %v2453
      %v3455 = vunpack.c.l.b16 %v2454
      %v3456 = vunpack.c.l.b16 %v2455
      %v3457 = vpack.c.b16 %v3442, %v3441
      %v3458 = vpack.c.b16 %v3444, %v3443
      %v3459 = vpack.c.b16 %v3446, %v3445
      %v3460 = vpack.c.b16 %v3448, %v3447
      %v3461 = vpack.c.b16 %v3450, %v3449
      %v3462 = vpack.c.b16 %v3452, %v3451
      %v3463 = vpack.c.b16 %v3454, %v3453
      %v3464 = vpack.c.b16 %v3456, %v3455
      %3473 = vmatprep.subr.bf16.mxu0 0
      %3474 = vmatpush1.bf16.msra.mxu0 %v3457
      %3475 = vmatprep.subr.bf16.mxu0 0
      %3476 = vmatpush1.bf16.msra.mxu0 %v3458
      %3477 = vmatprep.subr.bf16.mxu0 0
      %3478 = vmatpush1.bf16.msra.mxu0 %v3459
      %3479 = vmatprep.subr.bf16.mxu0 0
      %3480 = vmatpush1.bf16.msra.mxu0 %v3460
      %3481 = vmatprep.subr.bf16.mxu0 0
      %3482 = vmatpush1.bf16.msra.mxu0 %v3461
      %3483 = vmatprep.subr.bf16.mxu0 0
      %3484 = vmatpush1.bf16.msra.mxu0 %v3462
      %3485 = vmatprep.subr.bf16.mxu0 0
      %3486 = vmatpush1.bf16.msra.mxu0 %v3463
      %3487 = vmatprep.subr.bf16.mxu0 0
      %3488 = vmatpush1.bf16.msra.mxu0 %v3464
      %3489 = vmatprep.subr.bf16.mxu0 0
      %3490 = vmatpush1.bf16.msra.mxu0 0
      %3491 = vmatprep.subr.bf16.mxu0 0
      %3492 = vmatpush1.bf16.msra.mxu0 0
      %3493 = vmatprep.subr.bf16.mxu0 0
      %3494 = vmatpush1.bf16.msra.mxu0 0
      %3495 = vmatprep.subr.bf16.mxu0 0
      %3496 = vmatpush1.bf16.msra.mxu0 0
      %3497 = vmatprep.subr.bf16.mxu0 0
      %3498 = vmatpush1.bf16.msra.mxu0 0
      %3499 = vmatprep.subr.bf16.mxu0 0
      %3500 = vmatpush1.bf16.msra.mxu0 0
      %3501 = vmatprep.subr.bf16.mxu0 0
      %3502 = vmatpush1.bf16.msra.mxu0 0
      %3503 = vmatprep.subr.bf16.mxu0 0
      %3504 = vmatpush1.bf16.msra.mxu0 0
      %3505 = vmatprep.mubr.bf16.mxu0 0
      %3506 = vmatmul.mubr.bf16.gmra.mrb[0].mxu0 %v2240
      %v3507 = vpop.f32.mrb[0].mxu0
      %v3508 = vadd.f32 0.0, %v3507
      %v3509 = vpop.f32.mrb[0].mxu0
      %v3510 = vpop.f32.mrb[0].mxu0
      %v3511 = vadd.f32 0.0, %v3510
      %v3512 = vpop.f32.mrb[0].mxu0
      %3513 = vmatprep.mubr.bf16.mxu0 0
      %3514 = vmatmul.mubr.bf16.gmra.mrb[0].mxu0 %v2244
      %v3515 = vpop.f32.mrb[0].mxu0
      %v3516 = vadd.f32 0.0, %v3515
      %v3517 = vpop.f32.mrb[0].mxu0
      %v3518 = vpop.f32.mrb[0].mxu0
      %v3519 = vadd.f32 0.0, %v3518
      %v3520 = vpop.f32.mrb[0].mxu0
      %3521 = vdwg.mxu0
      %v3538 = vunpack.c.l.b16 %v2456
      %v3539 = vunpack.c.l.b16 %v2457
      %v3540 = vunpack.c.l.b16 %v2458
      %v3541 = vunpack.c.l.b16 %v2459
      %v3542 = vunpack.c.l.b16 %v2460
      %v3543 = vunpack.c.l.b16 %v2461
      %v3544 = vunpack.c.l.b16 %v2462
      %v3545 = vunpack.c.l.b16 %v2463
      %v3546 = vunpack.c.l.b16 %v2464
      %v3547 = vunpack.c.l.b16 %v2465
      %v3548 = vunpack.c.l.b16 %v2466
      %v3549 = vunpack.c.l.b16 %v2467
      %v3550 = vunpack.c.l.b16 %v2468
      %v3551 = vunpack.c.l.b16 %v2469
      %v3552 = vunpack.c.l.b16 %v2470
      %v3553 = vunpack.c.l.b16 %v2471
      %v3554 = vpack.c.b16 %v3539, %v3538
      %v3555 = vpack.c.b16 %v3541, %v3540
      %v3556 = vpack.c.b16 %v3543, %v3542
      %v3557 = vpack.c.b16 %v3545, %v3544
      %v3558 = vpack.c.b16 %v3547, %v3546
      %v3559 = vpack.c.b16 %v3549, %v3548
      %v3560 = vpack.c.b16 %v3551, %v3550
      %v3561 = vpack.c.b16 %v3553, %v3552
      %3570 = vmatprep.subr.bf16.mxu0 0
      %3571 = vmatpush1.bf16.msra.mxu0 %v3554
      %3572 = vmatprep.subr.bf16.mxu0 0
      %3573 = vmatpush1.bf16.msra.mxu0 %v3555
      %3574 = vmatprep.subr.bf16.mxu0 0
      %3575 = vmatpush1.bf16.msra.mxu0 %v3556
      %3576 = vmatprep.subr.bf16.mxu0 0
      %3577 = vmatpush1.bf16.msra.mxu0 %v3557
      %3578 = vmatprep.subr.bf16.mxu0 0
      %3579 = vmatpush1.bf16.msra.mxu0 %v3558
      %3580 = vmatprep.subr.bf16.mxu0 0
      %3581 = vmatpush1.bf16.msra.mxu0 %v3559
      %3582 = vmatprep.subr.bf16.mxu0 0
      %3583 = vmatpush1.bf16.msra.mxu0 %v3560
      %3584 = vmatprep.subr.bf16.mxu0 0
      %3585 = vmatpush1.bf16.msra.mxu0 %v3561
      %3586 = vmatprep.subr.bf16.mxu0 0
      %3587 = vmatpush1.bf16.msra.mxu0 0
      %3588 = vmatprep.subr.bf16.mxu0 0
      %3589 = vmatpush1.bf16.msra.mxu0 0
      %3590 = vmatprep.subr.bf16.mxu0 0
      %3591 = vmatpush1.bf16.msra.mxu0 0
      %3592 = vmatprep.subr.bf16.mxu0 0
      %3593 = vmatpush1.bf16.msra.mxu0 0
      %3594 = vmatprep.subr.bf16.mxu0 0
      %3595 = vmatpush1.bf16.msra.mxu0 0
      %3596 = vmatprep.subr.bf16.mxu0 0
      %3597 = vmatpush1.bf16.msra.mxu0 0
      %3598 = vmatprep.subr.bf16.mxu0 0
      %3599 = vmatpush1.bf16.msra.mxu0 0
      %3600 = vmatprep.subr.bf16.mxu0 0
      %3601 = vmatpush1.bf16.msra.mxu0 0
      %3602 = vmatprep.mubr.bf16.mxu0 0
      %3603 = vmatmul.mubr.bf16.gmra.mrb[0].mxu0 %v2248
      %v3604 = vpop.f32.mrb[0].mxu0
      %v3605 = vadd.f32 0.0, %v3604
      %v3606 = vpop.f32.mrb[0].mxu0
      %v3607 = vpop.f32.mrb[0].mxu0
      %v3608 = vadd.f32 0.0, %v3607
      %v3609 = vpop.f32.mrb[0].mxu0
      %3610 = vmatprep.mubr.bf16.mxu0 0
      %3611 = vmatmul.mubr.bf16.gmra.mrb[0].mxu0 %v2252
      %v3612 = vpop.f32.mrb[0].mxu0
      %v3613 = vadd.f32 0.0, %v3612
      %v3614 = vpop.f32.mrb[0].mxu0
      %v3615 = vpop.f32.mrb[0].mxu0
      %v3616 = vadd.f32 0.0, %v3615
      %v3617 = vpop.f32.mrb[0].mxu0
      %3618 = vdwg.mxu0
      %v3635 = vunpack.c.l.b16 %v2472
      %v3636 = vunpack.c.l.b16 %v2473
      %v3637 = vunpack.c.l.b16 %v2474
      %v3638 = vunpack.c.l.b16 %v2475
      %v3639 = vunpack.c.l.b16 %v2476
      %v3640 = vunpack.c.l.b16 %v2477
      %v3641 = vunpack.c.l.b16 %v2478
      %v3642 = vunpack.c.l.b16 %v2479
      %v3643 = vunpack.c.l.b16 %v2480
      %v3644 = vunpack.c.l.b16 %v2481
      %v3645 = vunpack.c.l.b16 %v2482
      %v3646 = vunpack.c.l.b16 %v2483
      %v3647 = vunpack.c.l.b16 %v2484
      %v3648 = vunpack.c.l.b16 %v2485
      %v3649 = vunpack.c.l.b16 %v2486
      %v3650 = vunpack.c.l.b16 %v2487
      %v3651 = vpack.c.b16 %v3636, %v3635
      %v3652 = vpack.c.b16 %v3638, %v3637
      %v3653 = vpack.c.b16 %v3640, %v3639
      %v3654 = vpack.c.b16 %v3642, %v3641
      %v3655 = vpack.c.b16 %v3644, %v3643
      %v3656 = vpack.c.b16 %v3646, %v3645
      %v3657 = vpack.c.b16 %v3648, %v3647
      %v3658 = vpack.c.b16 %v3650, %v3649
      %3667 = vmatprep.subr.bf16.mxu0 0
      %3668 = vmatpush1.bf16.msra.mxu0 %v3651
      %3669 = vmatprep.subr.bf16.mxu0 0
      %3670 = vmatpush1.bf16.msra.mxu0 %v3652
      %3671 = vmatprep.subr.bf16.mxu0 0
      %3672 = vmatpush1.bf16.msra.mxu0 %v3653
      %3673 = vmatprep.subr.bf16.mxu0 0
      %3674 = vmatpush1.bf16.msra.mxu0 %v3654
      %3675 = vmatprep.subr.bf16.mxu0 0
      %3676 = vmatpush1.bf16.msra.mxu0 %v3655
      %3677 = vmatprep.subr.bf16.mxu0 0
      %3678 = vmatpush1.bf16.msra.mxu0 %v3656
      %3679 = vmatprep.subr.bf16.mxu0 0
      %3680 = vmatpush1.bf16.msra.mxu0 %v3657
      %3681 = vmatprep.subr.bf16.mxu0 0
      %3682 = vmatpush1.bf16.msra.mxu0 %v3658
      %3683 = vmatprep.subr.bf16.mxu0 0
      %3684 = vmatpush1.bf16.msra.mxu0 0
      %3685 = vmatprep.subr.bf16.mxu0 0
      %3686 = vmatpush1.bf16.msra.mxu0 0
      %3687 = vmatprep.subr.bf16.mxu0 0
      %3688 = vmatpush1.bf16.msra.mxu0 0
      %3689 = vmatprep.subr.bf16.mxu0 0
      %3690 = vmatpush1.bf16.msra.mxu0 0
      %3691 = vmatprep.subr.bf16.mxu0 0
      %3692 = vmatpush1.bf16.msra.mxu0 0
      %3693 = vmatprep.subr.bf16.mxu0 0
      %3694 = vmatpush1.bf16.msra.mxu0 0
      %3695 = vmatprep.subr.bf16.mxu0 0
      %3696 = vmatpush1.bf16.msra.mxu0 0
      %3697 = vmatprep.subr.bf16.mxu0 0
      %3698 = vmatpush1.bf16.msra.mxu0 0
      %3699 = vmatprep.mubr.bf16.mxu0 0
      %3700 = vmatmul.mubr.bf16.gmra.mrb[0].mxu0 %v2256
      %v3701 = vpop.f32.mrb[0].mxu0
      %v3702 = vadd.f32 0.0, %v3701
      %v3703 = vpop.f32.mrb[0].mxu0
      %v3704 = vpop.f32.mrb[0].mxu0
      %v3705 = vadd.f32 0.0, %v3704
      %v3706 = vpop.f32.mrb[0].mxu0
      %3707 = vmatprep.mubr.bf16.mxu0 0
      %3708 = vmatmul.mubr.bf16.gmra.mrb[0].mxu0 %v2260
      %v3709 = vpop.f32.mrb[0].mxu0
      %v3710 = vadd.f32 0.0, %v3709
      %v3711 = vpop.f32.mrb[0].mxu0
      %v3712 = vpop.f32.mrb[0].mxu0
      %v3713 = vadd.f32 0.0, %v3712
      %v3714 = vpop.f32.mrb[0].mxu0
      %3715 = vdwg.mxu0
      %v3732 = vunpack.c.l.b16 %v2488
      %v3733 = vunpack.c.l.b16 %v2489
      %v3734 = vunpack.c.l.b16 %v2490
      %v3735 = vunpack.c.l.b16 %v2491
      %v3736 = vunpack.c.l.b16 %v2492
      %v3737 = vunpack.c.l.b16 %v2493
      %v3738 = vunpack.c.l.b16 %v2494
      %v3739 = vunpack.c.l.b16 %v2495
      %v3740 = vunpack.c.l.b16 %v2496
      %v3741 = vunpack.c.l.b16 %v2497
      %v3742 = vunpack.c.l.b16 %v2498
      %v3743 = vunpack.c.l.b16 %v2499
      %v3744 = vunpack.c.l.b16 %v2500
      %v3745 = vunpack.c.l.b16 %v2501
      %v3746 = vunpack.c.l.b16 %v2502
      %v3747 = vunpack.c.l.b16 %v2503
      %v3748 = vpack.c.b16 %v3733, %v3732
      %v3749 = vpack.c.b16 %v3735, %v3734
      %v3750 = vpack.c.b16 %v3737, %v3736
      %v3751 = vpack.c.b16 %v3739, %v3738
      %v3752 = vpack.c.b16 %v3741, %v3740
      %v3753 = vpack.c.b16 %v3743, %v3742
      %v3754 = vpack.c.b16 %v3745, %v3744
      %v3755 = vpack.c.b16 %v3747, %v3746
      %3764 = vmatprep.subr.bf16.mxu0 0
      %3765 = vmatpush1.bf16.msra.mxu0 %v3748
      %3766 = vmatprep.subr.bf16.mxu0 0
      %3767 = vmatpush1.bf16.msra.mxu0 %v3749
      %3768 = vmatprep.subr.bf16.mxu0 0
      %3769 = vmatpush1.bf16.msra.mxu0 %v3750
      %3770 = vmatprep.subr.bf16.mxu0 0
      %3771 = vmatpush1.bf16.msra.mxu0 %v3751
      %3772 = vmatprep.subr.bf16.mxu0 0
      %3773 = vmatpush1.bf16.msra.mxu0 %v3752
      %3774 = vmatprep.subr.bf16.mxu0 0
      %3775 = vmatpush1.bf16.msra.mxu0 %v3753
      %3776 = vmatprep.subr.bf16.mxu0 0
      %3777 = vmatpush1.bf16.msra.mxu0 %v3754
      %3778 = vmatprep.subr.bf16.mxu0 0
      %3779 = vmatpush1.bf16.msra.mxu0 %v3755
      %3780 = vmatprep.subr.bf16.mxu0 0
      %3781 = vmatpush1.bf16.msra.mxu0 0
      %3782 = vmatprep.subr.bf16.mxu0 0
      %3783 = vmatpush1.bf16.msra.mxu0 0
      %3784 = vmatprep.subr.bf16.mxu0 0
      %3785 = vmatpush1.bf16.msra.mxu0 0
      %3786 = vmatprep.subr.bf16.mxu0 0
      %3787 = vmatpush1.bf16.msra.mxu0 0
      %3788 = vmatprep.subr.bf16.mxu0 0
      %3789 = vmatpush1.bf16.msra.mxu0 0
      %3790 = vmatprep.subr.bf16.mxu0 0
      %3791 = vmatpush1.bf16.msra.mxu0 0
      %3792 = vmatprep.subr.bf16.mxu0 0
      %3793 = vmatpush1.bf16.msra.mxu0 0
      %3794 = vmatprep.subr.bf16.mxu0 0
      %3795 = vmatpush1.bf16.msra.mxu0 0
      %3796 = vmatprep.mubr.bf16.mxu0 0
      %3797 = vmatmul.mubr.bf16.gmra.mrb[0].mxu0 %v2264
      %v3798 = vpop.f32.mrb[0].mxu0
      %v3799 = vadd.f32 0.0, %v3798
      %v3800 = vpop.f32.mrb[0].mxu0
      %v3801 = vpop.f32.mrb[0].mxu0
      %v3802 = vadd.f32 0.0, %v3801
      %v3803 = vpop.f32.mrb[0].mxu0
      %3804 = vmatprep.mubr.bf16.mxu0 0
      %3805 = vmatmul.mubr.bf16.gmra.mrb[0].mxu0 %v2268
      %v3806 = vpop.f32.mrb[0].mxu0
      %v3807 = vadd.f32 0.0, %v3806
      %v3808 = vpop.f32.mrb[0].mxu0
      %v3809 = vpop.f32.mrb[0].mxu0
      %v3810 = vadd.f32 0.0, %v3809
      %v3811 = vpop.f32.mrb[0].mxu0
      %3812 = vdwg.mxu0
      %v3829 = vunpack.c.l.b16 %v2504
      %v3830 = vunpack.c.l.b16 %v2505
      %v3831 = vunpack.c.l.b16 %v2506
      %v3832 = vunpack.c.l.b16 %v2507
      %v3833 = vunpack.c.l.b16 %v2508
      %v3834 = vunpack.c.l.b16 %v2509
      %v3835 = vunpack.c.l.b16 %v2510
      %v3836 = vunpack.c.l.b16 %v2511
      %v3837 = vunpack.c.l.b16 %v2512
      %v3838 = vunpack.c.l.b16 %v2513
      %v3839 = vunpack.c.l.b16 %v2514
      %v3840 = vunpack.c.l.b16 %v2515
      %v3841 = vunpack.c.l.b16 %v2516
      %v3842 = vunpack.c.l.b16 %v2517
      %v3843 = vunpack.c.l.b16 %v2518
      %v3844 = vunpack.c.l.b16 %v2519
      %v3845 = vpack.c.b16 %v3830, %v3829
      %v3846 = vpack.c.b16 %v3832, %v3831
      %v3847 = vpack.c.b16 %v3834, %v3833
      %v3848 = vpack.c.b16 %v3836, %v3835
      %v3849 = vpack.c.b16 %v3838, %v3837
      %v3850 = vpack.c.b16 %v3840, %v3839
      %v3851 = vpack.c.b16 %v3842, %v3841
      %v3852 = vpack.c.b16 %v3844, %v3843
      %3861 = vmatprep.subr.bf16.mxu0 0
      %3862 = vmatpush1.bf16.msra.mxu0 %v3845
      %3863 = vmatprep.subr.bf16.mxu0 0
      %3864 = vmatpush1.bf16.msra.mxu0 %v3846
      %3865 = vmatprep.subr.bf16.mxu0 0
      %3866 = vmatpush1.bf16.msra.mxu0 %v3847
      %3867 = vmatprep.subr.bf16.mxu0 0
      %3868 = vmatpush1.bf16.msra.mxu0 %v3848
      %3869 = vmatprep.subr.bf16.mxu0 0
      %3870 = vmatpush1.bf16.msra.mxu0 %v3849
      %3871 = vmatprep.subr.bf16.mxu0 0
      %3872 = vmatpush1.bf16.msra.mxu0 %v3850
      %3873 = vmatprep.subr.bf16.mxu0 0
      %3874 = vmatpush1.bf16.msra.mxu0 %v3851
      %3875 = vmatprep.subr.bf16.mxu0 0
      %3876 = vmatpush1.bf16.msra.mxu0 %v3852
      %3877 = vmatprep.subr.bf16.mxu0 0
      %3878 = vmatpush1.bf16.msra.mxu0 0
      %3879 = vmatprep.subr.bf16.mxu0 0
      %3880 = vmatpush1.bf16.msra.mxu0 0
      %3881 = vmatprep.subr.bf16.mxu0 0
      %3882 = vmatpush1.bf16.msra.mxu0 0
      %3883 = vmatprep.subr.bf16.mxu0 0
      %3884 = vmatpush1.bf16.msra.mxu0 0
      %3885 = vmatprep.subr.bf16.mxu0 0
      %3886 = vmatpush1.bf16.msra.mxu0 0
      %3887 = vmatprep.subr.bf16.mxu0 0
      %3888 = vmatpush1.bf16.msra.mxu0 0
      %3889 = vmatprep.subr.bf16.mxu0 0
      %3890 = vmatpush1.bf16.msra.mxu0 0
      %3891 = vmatprep.subr.bf16.mxu0 0
      %3892 = vmatpush1.bf16.msra.mxu0 0
      %3893 = vmatprep.mubr.bf16.mxu0 0
      %3894 = vmatmul.mubr.bf16.gmra.mrb[0].mxu0 %v2272
      %v3895 = vpop.f32.mrb[0].mxu0
      %v3896 = vadd.f32 0.0, %v3895
      %v3897 = vpop.f32.mrb[0].mxu0
      %v3898 = vpop.f32.mrb[0].mxu0
      %v3899 = vadd.f32 0.0, %v3898
      %v3900 = vpop.f32.mrb[0].mxu0
      %3901 = vmatprep.mubr.bf16.mxu0 0
      %3902 = vmatmul.mubr.bf16.gmra.mrb[0].mxu0 %v2276
      %v3903 = vpop.f32.mrb[0].mxu0
      %v3904 = vadd.f32 0.0, %v3903
      %v3905 = vpop.f32.mrb[0].mxu0
      %v3906 = vpop.f32.mrb[0].mxu0
      %v3907 = vadd.f32 0.0, %v3906
      %v3908 = vpop.f32.mrb[0].mxu0
      %3909 = vdwg.mxu0
      %v3926 = vunpack.c.l.b16 %v2520
      %v3927 = vunpack.c.l.b16 %v2521
      %v3928 = vunpack.c.l.b16 %v2522
      %v3929 = vunpack.c.l.b16 %v2523
      %v3930 = vunpack.c.l.b16 %v2524
      %v3931 = vunpack.c.l.b16 %v2525
      %v3932 = vunpack.c.l.b16 %v2526
      %v3933 = vunpack.c.l.b16 %v2527
      %v3934 = vunpack.c.l.b16 %v2528
      %v3935 = vunpack.c.l.b16 %v2529
      %v3936 = vunpack.c.l.b16 %v2530
      %v3937 = vunpack.c.l.b16 %v2531
      %v3938 = vunpack.c.l.b16 %v2532
      %v3939 = vunpack.c.l.b16 %v2533
      %v3940 = vunpack.c.l.b16 %v2534
      %v3941 = vunpack.c.l.b16 %v2535
      %v3942 = vpack.c.b16 %v3927, %v3926
      %v3943 = vpack.c.b16 %v3929, %v3928
      %v3944 = vpack.c.b16 %v3931, %v3930
      %v3945 = vpack.c.b16 %v3933, %v3932
      %v3946 = vpack.c.b16 %v3935, %v3934
      %v3947 = vpack.c.b16 %v3937, %v3936
      %v3948 = vpack.c.b16 %v3939, %v3938
      %v3949 = vpack.c.b16 %v3941, %v3940
      %3958 = vmatprep.subr.bf16.mxu0 0
      %3959 = vmatpush1.bf16.msra.mxu0 %v3942
      %3960 = vmatprep.subr.bf16.mxu0 0
      %3961 = vmatpush1.bf16.msra.mxu0 %v3943
      %3962 = vmatprep.subr.bf16.mxu0 0
      %3963 = vmatpush1.bf16.msra.mxu0 %v3944
      %3964 = vmatprep.subr.bf16.mxu0 0
      %3965 = vmatpush1.bf16.msra.mxu0 %v3945
      %3966 = vmatprep.subr.bf16.mxu0 0
      %3967 = vmatpush1.bf16.msra.mxu0 %v3946
      %3968 = vmatprep.subr.bf16.mxu0 0
      %3969 = vmatpush1.bf16.msra.mxu0 %v3947
      %3970 = vmatprep.subr.bf16.mxu0 0
      %3971 = vmatpush1.bf16.msra.mxu0 %v3948
      %3972 = vmatprep.subr.bf16.mxu0 0
      %3973 = vmatpush1.bf16.msra.mxu0 %v3949
      %3974 = vmatprep.subr.bf16.mxu0 0
      %3975 = vmatpush1.bf16.msra.mxu0 0
      %3976 = vmatprep.subr.bf16.mxu0 0
      %3977 = vmatpush1.bf16.msra.mxu0 0
      %3978 = vmatprep.subr.bf16.mxu0 0
      %3979 = vmatpush1.bf16.msra.mxu0 0
      %3980 = vmatprep.subr.bf16.mxu0 0
      %3981 = vmatpush1.bf16.msra.mxu0 0
      %3982 = vmatprep.subr.bf16.mxu0 0
      %3983 = vmatpush1.bf16.msra.mxu0 0
      %3984 = vmatprep.subr.bf16.mxu0 0
      %3985 = vmatpush1.bf16.msra.mxu0 0
      %3986 = vmatprep.subr.bf16.mxu0 0
      %3987 = vmatpush1.bf16.msra.mxu0 0
      %3988 = vmatprep.subr.bf16.mxu0 0
      %3989 = vmatpush1.bf16.msra.mxu0 0
      %3990 = vmatprep.mubr.bf16.mxu0 0
      %3991 = vmatmul.mubr.bf16.gmra.mrb[0].mxu0 %v2280
      %v3992 = vpop.f32.mrb[0].mxu0
      %v3993 = vadd.f32 0.0, %v3992
      %v3994 = vpop.f32.mrb[0].mxu0
      %v3995 = vpop.f32.mrb[0].mxu0
      %v3996 = vadd.f32 0.0, %v3995
      %v3997 = vpop.f32.mrb[0].mxu0
      %3998 = vmatprep.mubr.bf16.mxu0 0
      %3999 = vmatmul.mubr.bf16.gmra.mrb[0].mxu0 %v2284
      %v4000 = vpop.f32.mrb[0].mxu0
      %v4001 = vadd.f32 0.0, %v4000
      %v4002 = vpop.f32.mrb[0].mxu0
      %v4003 = vpop.f32.mrb[0].mxu0
      %v4004 = vadd.f32 0.0, %v4003
      %v4005 = vpop.f32.mrb[0].mxu0
      %4006 = vdwg.mxu0
      %v4023 = vunpack.c.l.b16 %v2536
      %v4024 = vunpack.c.l.b16 %v2537
      %v4025 = vunpack.c.l.b16 %v2538
      %v4026 = vunpack.c.l.b16 %v2539
      %v4027 = vunpack.c.l.b16 %v2540
      %v4028 = vunpack.c.l.b16 %v2541
      %v4029 = vunpack.c.l.b16 %v2542
      %v4030 = vunpack.c.l.b16 %v2543
      %v4031 = vunpack.c.l.b16 %v2544
      %v4032 = vunpack.c.l.b16 %v2545
      %v4033 = vunpack.c.l.b16 %v2546
      %v4034 = vunpack.c.l.b16 %v2547
      %v4035 = vunpack.c.l.b16 %v2548
      %v4036 = vunpack.c.l.b16 %v2549
      %v4037 = vunpack.c.l.b16 %v2550
      %v4038 = vunpack.c.l.b16 %v2551
      %v4039 = vpack.c.b16 %v4024, %v4023
      %v4040 = vpack.c.b16 %v4026, %v4025
      %v4041 = vpack.c.b16 %v4028, %v4027
      %v4042 = vpack.c.b16 %v4030, %v4029
      %v4043 = vpack.c.b16 %v4032, %v4031
      %v4044 = vpack.c.b16 %v4034, %v4033
      %v4045 = vpack.c.b16 %v4036, %v4035
      %v4046 = vpack.c.b16 %v4038, %v4037
      %4055 = vmatprep.subr.bf16.mxu0 0
      %4056 = vmatpush1.bf16.msra.mxu0 %v4039
      %4057 = vmatprep.subr.bf16.mxu0 0
      %4058 = vmatpush1.bf16.msra.mxu0 %v4040
      %4059 = vmatprep.subr.bf16.mxu0 0
      %4060 = vmatpush1.bf16.msra.mxu0 %v4041
      %4061 = vmatprep.subr.bf16.mxu0 0
      %4062 = vmatpush1.bf16.msra.mxu0 %v4042
      %4063 = vmatprep.subr.bf16.mxu0 0
      %4064 = vmatpush1.bf16.msra.mxu0 %v4043
      %4065 = vmatprep.subr.bf16.mxu0 0
      %4066 = vmatpush1.bf16.msra.mxu0 %v4044
      %4067 = vmatprep.subr.bf16.mxu0 0
      %4068 = vmatpush1.bf16.msra.mxu0 %v4045
      %4069 = vmatprep.subr.bf16.mxu0 0
      %4070 = vmatpush1.bf16.msra.mxu0 %v4046
      %4071 = vmatprep.subr.bf16.mxu0 0
      %4072 = vmatpush1.bf16.msra.mxu0 0
      %4073 = vmatprep.subr.bf16.mxu0 0
      %4074 = vmatpush1.bf16.msra.mxu0 0
      %4075 = vmatprep.subr.bf16.mxu0 0
      %4076 = vmatpush1.bf16.msra.mxu0 0
      %4077 = vmatprep.subr.bf16.mxu0 0
      %4078 = vmatpush1.bf16.msra.mxu0 0
      %4079 = vmatprep.subr.bf16.mxu0 0
      %4080 = vmatpush1.bf16.msra.mxu0 0
      %4081 = vmatprep.subr.bf16.mxu0 0
      %4082 = vmatpush1.bf16.msra.mxu0 0
      %4083 = vmatprep.subr.bf16.mxu0 0
      %4084 = vmatpush1.bf16.msra.mxu0 0
      %4085 = vmatprep.subr.bf16.mxu0 0
      %4086 = vmatpush1.bf16.msra.mxu0 0
      %4087 = vmatprep.mubr.bf16.mxu0 0
      %4088 = vmatmul.mubr.bf16.gmra.mrb[0].mxu0 %v2288
      %v4089 = vpop.f32.mrb[0].mxu0
      %v4090 = vadd.f32 0.0, %v4089
      %v4091 = vpop.f32.mrb[0].mxu0
      %v4092 = vpop.f32.mrb[0].mxu0
      %v4093 = vadd.f32 0.0, %v4092
      %v4094 = vpop.f32.mrb[0].mxu0
      %4095 = vmatprep.mubr.bf16.mxu0 0
      %4096 = vmatmul.mubr.bf16.gmra.mrb[0].mxu0 %v2292
      %v4097 = vpop.f32.mrb[0].mxu0
      %v4098 = vadd.f32 0.0, %v4097
      %v4099 = vpop.f32.mrb[0].mxu0
      %v4100 = vpop.f32.mrb[0].mxu0
      %v4101 = vadd.f32 0.0, %v4100
      %v4102 = vpop.f32.mrb[0].mxu0
      %4103 = vdwg.mxu0
      %v4104 = vadd.f32 %v2635, %v2732
      %v4105 = vadd.f32 %v4104, %v2829
      %v4106 = vadd.f32 %v4105, %v2926
      %v4107 = vadd.f32 %v4106, %v3023
      %v4108 = vadd.f32 %v4107, %v3120
      %v4109 = vadd.f32 %v4108, %v3217
      %v4110 = vadd.f32 %v4109, %v3314
      %v4111 = vadd.f32 %v4110, %v3411
      %v4112 = vadd.f32 %v4111, %v3508
      %v4113 = vadd.f32 %v4112, %v3605
      %v4114 = vadd.f32 %v4113, %v3702
      %v4115 = vadd.f32 %v4114, %v3799
      %v4116 = vadd.f32 %v4115, %v3896
      %v4117 = vadd.f32 %v4116, %v3993
      %v4118 = vadd.f32 %v4117, %v4090
      %v4119 = vadd.f32 %v2638, %v2735
      %v4120 = vadd.f32 %v4119, %v2832
      %v4121 = vadd.f32 %v4120, %v2929
      %v4122 = vadd.f32 %v4121, %v3026
      %v4123 = vadd.f32 %v4122, %v3123
      %v4124 = vadd.f32 %v4123, %v3220
      %v4125 = vadd.f32 %v4124, %v3317
      %v4126 = vadd.f32 %v4125, %v3414
      %v4127 = vadd.f32 %v4126, %v3511
      %v4128 = vadd.f32 %v4127, %v3608
      %v4129 = vadd.f32 %v4128, %v3705
      %v4130 = vadd.f32 %v4129, %v3802
      %v4131 = vadd.f32 %v4130, %v3899
      %v4132 = vadd.f32 %v4131, %v3996
      %v4133 = vadd.f32 %v4132, %v4093
      %v4134 = vadd.f32 %v2643, %v2740
      %v4135 = vadd.f32 %v4134, %v2837
      %v4136 = vadd.f32 %v4135, %v2934
      %v4137 = vadd.f32 %v4136, %v3031
      %v4138 = vadd.f32 %v4137, %v3128
      %v4139 = vadd.f32 %v4138, %v3225
      %v4140 = vadd.f32 %v4139, %v3322
      %v4141 = vadd.f32 %v4140, %v3419
      %v4142 = vadd.f32 %v4141, %v3516
      %v4143 = vadd.f32 %v4142, %v3613
      %v4144 = vadd.f32 %v4143, %v3710
      %v4145 = vadd.f32 %v4144, %v3807
      %v4146 = vadd.f32 %v4145, %v3904
      %v4147 = vadd.f32 %v4146, %v4001
      %v4148 = vadd.f32 %v4147, %v4098
      %v4149 = vadd.f32 %v2646, %v2743
      %v4150 = vadd.f32 %v4149, %v2840
      %v4151 = vadd.f32 %v4150, %v2937
      %v4152 = vadd.f32 %v4151, %v3034
      %v4153 = vadd.f32 %v4152, %v3131
      %v4154 = vadd.f32 %v4153, %v3228
      %v4155 = vadd.f32 %v4154, %v3325
      %v4156 = vadd.f32 %v4155, %v3422
      %v4157 = vadd.f32 %v4156, %v3519
      %v4158 = vadd.f32 %v4157, %v3616
      %v4159 = vadd.f32 %v4158, %v3713
      %v4160 = vadd.f32 %v4159, %v3810
      %v4161 = vadd.f32 %v4160, %v3907
      %v4162 = vadd.f32 %v4161, %v4004
      %v4163 = vadd.f32 %v4162, %v4101
      %4164 = vmatprep.subr.bf16.mxu0 0
      %4165 = vmatpush1.bf16.msra.mxu0 %v2584
      %4166 = vmatprep.subr.bf16.mxu0 0
      %4167 = vmatpush1.bf16.msra.mxu0 %v2585
      %4168 = vmatprep.subr.bf16.mxu0 0
      %4169 = vmatpush1.bf16.msra.mxu0 %v2586
      %4170 = vmatprep.subr.bf16.mxu0 0
      %4171 = vmatpush1.bf16.msra.mxu0 %v2587
      %4172 = vmatprep.subr.bf16.mxu0 0
      %4173 = vmatpush1.bf16.msra.mxu0 %v2588
      %4174 = vmatprep.subr.bf16.mxu0 0
      %4175 = vmatpush1.bf16.msra.mxu0 %v2589
      %4176 = vmatprep.subr.bf16.mxu0 0
      %4177 = vmatpush1.bf16.msra.mxu0 %v2590
      %4178 = vmatprep.subr.bf16.mxu0 0
      %4179 = vmatpush1.bf16.msra.mxu0 %v2591
      %4180 = vmatprep.subr.bf16.mxu0 0
      %4181 = vmatpush1.bf16.msra.mxu0 0
      %4182 = vmatprep.subr.bf16.mxu0 0
      %4183 = vmatpush1.bf16.msra.mxu0 0
      %4184 = vmatprep.subr.bf16.mxu0 0
      %4185 = vmatpush1.bf16.msra.mxu0 0
      %4186 = vmatprep.subr.bf16.mxu0 0
      %4187 = vmatpush1.bf16.msra.mxu0 0
      %4188 = vmatprep.subr.bf16.mxu0 0
      %4189 = vmatpush1.bf16.msra.mxu0 0
      %4190 = vmatprep.subr.bf16.mxu0 0
      %4191 = vmatpush1.bf16.msra.mxu0 0
      %4192 = vmatprep.subr.bf16.mxu0 0
      %4193 = vmatpush1.bf16.msra.mxu0 0
      %4194 = vmatprep.subr.bf16.mxu0 0
      %4195 = vmatpush1.bf16.msra.mxu0 0
      %4196 = vmatprep.mubr.bf16.mxu0 0
      %4197 = vmatmul.mubr.bf16.gmra.mrb[0].mxu0 %v2169
      %v4198 = vpop.f32.mrb[0].mxu0
      %v4199 = vadd.f32 0.0, %v4198
      %v4200 = vpop.f32.mrb[0].mxu0
      %v4201 = vpop.f32.mrb[0].mxu0
      %v4202 = vadd.f32 0.0, %v4201
      %v4203 = vpop.f32.mrb[0].mxu0
      %4204 = vmatprep.mubr.bf16.mxu0 0
      %4205 = vmatmul.mubr.bf16.gmra.mrb[0].mxu0 %v2173
      %v4206 = vpop.f32.mrb[0].mxu0
      %v4207 = vadd.f32 0.0, %v4206
      %v4208 = vpop.f32.mrb[0].mxu0
      %v4209 = vpop.f32.mrb[0].mxu0
      %v4210 = vadd.f32 0.0, %v4209
      %v4211 = vpop.f32.mrb[0].mxu0
      %4212 = vdwg.mxu0
      %4213 = vmatprep.subr.bf16.mxu0 0
      %4214 = vmatpush1.bf16.msra.mxu0 %v2681
      %4215 = vmatprep.subr.bf16.mxu0 0
      %4216 = vmatpush1.bf16.msra.mxu0 %v2682
      %4217 = vmatprep.subr.bf16.mxu0 0
      %4218 = vmatpush1.bf16.msra.mxu0 %v2683
      %4219 = vmatprep.subr.bf16.mxu0 0
      %4220 = vmatpush1.bf16.msra.mxu0 %v2684
      %4221 = vmatprep.subr.bf16.mxu0 0
      %4222 = vmatpush1.bf16.msra.mxu0 %v2685
      %4223 = vmatprep.subr.bf16.mxu0 0
      %4224 = vmatpush1.bf16.msra.mxu0 %v2686
      %4225 = vmatprep.subr.bf16.mxu0 0
      %4226 = vmatpush1.bf16.msra.mxu0 %v2687
      %4227 = vmatprep.subr.bf16.mxu0 0
      %4228 = vmatpush1.bf16.msra.mxu0 %v2688
      %4229 = vmatprep.subr.bf16.mxu0 0
      %4230 = vmatpush1.bf16.msra.mxu0 0
      %4231 = vmatprep.subr.bf16.mxu0 0
      %4232 = vmatpush1.bf16.msra.mxu0 0
      %4233 = vmatprep.subr.bf16.mxu0 0
      %4234 = vmatpush1.bf16.msra.mxu0 0
      %4235 = vmatprep.subr.bf16.mxu0 0
      %4236 = vmatpush1.bf16.msra.mxu0 0
      %4237 = vmatprep.subr.bf16.mxu0 0
      %4238 = vmatpush1.bf16.msra.mxu0 0
      %4239 = vmatprep.subr.bf16.mxu0 0
      %4240 = vmatpush1.bf16.msra.mxu0 0
      %4241 = vmatprep.subr.bf16.mxu0 0
      %4242 = vmatpush1.bf16.msra.mxu0 0
      %4243 = vmatprep.subr.bf16.mxu0 0
      %4244 = vmatpush1.bf16.msra.mxu0 0
      %4245 = vmatprep.mubr.bf16.mxu0 0
      %4246 = vmatmul.mubr.bf16.gmra.mrb[0].mxu0 %v2177
      %v4247 = vpop.f32.mrb[0].mxu0
      %v4248 = vadd.f32 0.0, %v4247
      %v4249 = vpop.f32.mrb[0].mxu0
      %v4250 = vpop.f32.mrb[0].mxu0
      %v4251 = vadd.f32 0.0, %v4250
      %v4252 = vpop.f32.mrb[0].mxu0
      %4253 = vmatprep.mubr.bf16.mxu0 0
      %4254 = vmatmul.mubr.bf16.gmra.mrb[0].mxu0 %v2181
      %v4255 = vpop.f32.mrb[0].mxu0
      %v4256 = vadd.f32 0.0, %v4255
      %v4257 = vpop.f32.mrb[0].mxu0
      %v4258 = vpop.f32.mrb[0].mxu0
      %v4259 = vadd.f32 0.0, %v4258
      %v4260 = vpop.f32.mrb[0].mxu0
      %4261 = vdwg.mxu0
      %4262 = vmatprep.subr.bf16.mxu0 0
      %4263 = vmatpush1.bf16.msra.mxu0 %v2778
      %4264 = vmatprep.subr.bf16.mxu0 0
      %4265 = vmatpush1.bf16.msra.mxu0 %v2779
      %4266 = vmatprep.subr.bf16.mxu0 0
      %4267 = vmatpush1.bf16.msra.mxu0 %v2780
      %4268 = vmatprep.subr.bf16.mxu0 0
      %4269 = vmatpush1.bf16.msra.mxu0 %v2781
      %4270 = vmatprep.subr.bf16.mxu0 0
      %4271 = vmatpush1.bf16.msra.mxu0 %v2782
      %4272 = vmatprep.subr.bf16.mxu0 0
      %4273 = vmatpush1.bf16.msra.mxu0 %v2783
      %4274 = vmatprep.subr.bf16.mxu0 0
      %4275 = vmatpush1.bf16.msra.mxu0 %v2784
      %4276 = vmatprep.subr.bf16.mxu0 0
      %4277 = vmatpush1.bf16.msra.mxu0 %v2785
      %4278 = vmatprep.subr.bf16.mxu0 0
      %4279 = vmatpush1.bf16.msra.mxu0 0
      %4280 = vmatprep.subr.bf16.mxu0 0
      %4281 = vmatpush1.bf16.msra.mxu0 0
      %4282 = vmatprep.subr.bf16.mxu0 0
      %4283 = vmatpush1.bf16.msra.mxu0 0
      %4284 = vmatprep.subr.bf16.mxu0 0
      %4285 = vmatpush1.bf16.msra.mxu0 0
      %4286 = vmatprep.subr.bf16.mxu0 0
      %4287 = vmatpush1.bf16.msra.mxu0 0
      %4288 = vmatprep.subr.bf16.mxu0 0
      %4289 = vmatpush1.bf16.msra.mxu0 0
      %4290 = vmatprep.subr.bf16.mxu0 0
      %4291 = vmatpush1.bf16.msra.mxu0 0
      %4292 = vmatprep.subr.bf16.mxu0 0
      %4293 = vmatpush1.bf16.msra.mxu0 0
      %4294 = vmatprep.mubr.bf16.mxu0 0
      %4295 = vmatmul.mubr.bf16.gmra.mrb[0].mxu0 %v2185
      %v4296 = vpop.f32.mrb[0].mxu0
      %v4297 = vadd.f32 0.0, %v4296
      %v4298 = vpop.f32.mrb[0].mxu0
      %v4299 = vpop.f32.mrb[0].mxu0
      %v4300 = vadd.f32 0.0, %v4299
      %v4301 = vpop.f32.mrb[0].mxu0
      %4302 = vmatprep.mubr.bf16.mxu0 0
      %4303 = vmatmul.mubr.bf16.gmra.mrb[0].mxu0 %v2189
      %v4304 = vpop.f32.mrb[0].mxu0
      %v4305 = vadd.f32 0.0, %v4304
      %v4306 = vpop.f32.mrb[0].mxu0
      %v4307 = vpop.f32.mrb[0].mxu0
      %v4308 = vadd.f32 0.0, %v4307
      %v4309 = vpop.f32.mrb[0].mxu0
      %4310 = vdwg.mxu0
      %4311 = vmatprep.subr.bf16.mxu0 0
      %4312 = vmatpush1.bf16.msra.mxu0 %v2875
      %4313 = vmatprep.subr.bf16.mxu0 0
      %4314 = vmatpush1.bf16.msra.mxu0 %v2876
      %4315 = vmatprep.subr.bf16.mxu0 0
      %4316 = vmatpush1.bf16.msra.mxu0 %v2877
      %4317 = vmatprep.subr.bf16.mxu0 0
      %4318 = vmatpush1.bf16.msra.mxu0 %v2878
      %4319 = vmatprep.subr.bf16.mxu0 0
      %4320 = vmatpush1.bf16.msra.mxu0 %v2879
      %4321 = vmatprep.subr.bf16.mxu0 0
      %4322 = vmatpush1.bf16.msra.mxu0 %v2880
      %4323 = vmatprep.subr.bf16.mxu0 0
      %4324 = vmatpush1.bf16.msra.mxu0 %v2881
      %4325 = vmatprep.subr.bf16.mxu0 0
      %4326 = vmatpush1.bf16.msra.mxu0 %v2882
      %4327 = vmatprep.subr.bf16.mxu0 0
      %4328 = vmatpush1.bf16.msra.mxu0 0
      %4329 = vmatprep.subr.bf16.mxu0 0
      %4330 = vmatpush1.bf16.msra.mxu0 0
      %4331 = vmatprep.subr.bf16.mxu0 0
      %4332 = vmatpush1.bf16.msra.mxu0 0
      %4333 = vmatprep.subr.bf16.mxu0 0
      %4334 = vmatpush1.bf16.msra.mxu0 0
      %4335 = vmatprep.subr.bf16.mxu0 0
      %4336 = vmatpush1.bf16.msra.mxu0 0
      %4337 = vmatprep.subr.bf16.mxu0 0
      %4338 = vmatpush1.bf16.msra.mxu0 0
      %4339 = vmatprep.subr.bf16.mxu0 0
      %4340 = vmatpush1.bf16.msra.mxu0 0
      %4341 = vmatprep.subr.bf16.mxu0 0
      %4342 = vmatpush1.bf16.msra.mxu0 0
      %4343 = vmatprep.mubr.bf16.mxu0 0
      %4344 = vmatmul.mubr.bf16.gmra.mrb[0].mxu0 %v2193
      %v4345 = vpop.f32.mrb[0].mxu0
      %v4346 = vadd.f32 0.0, %v4345
      %v4347 = vpop.f32.mrb[0].mxu0
      %v4348 = vpop.f32.mrb[0].mxu0
      %v4349 = vadd.f32 0.0, %v4348
      %v4350 = vpop.f32.mrb[0].mxu0
      %4351 = vmatprep.mubr.bf16.mxu0 0
      %4352 = vmatmul.mubr.bf16.gmra.mrb[0].mxu0 %v2197
      %v4353 = vpop.f32.mrb[0].mxu0
      %v4354 = vadd.f32 0.0, %v4353
      %v4355 = vpop.f32.mrb[0].mxu0
      %v4356 = vpop.f32.mrb[0].mxu0
      %v4357 = vadd.f32 0.0, %v4356
      %v4358 = vpop.f32.mrb[0].mxu0
      %4359 = vdwg.mxu0
      %4360 = vmatprep.subr.bf16.mxu0 0
      %4361 = vmatpush1.bf16.msra.mxu0 %v2972
      %4362 = vmatprep.subr.bf16.mxu0 0
      %4363 = vmatpush1.bf16.msra.mxu0 %v2973
      %4364 = vmatprep.subr.bf16.mxu0 0
      %4365 = vmatpush1.bf16.msra.mxu0 %v2974
      %4366 = vmatprep.subr.bf16.mxu0 0
      %4367 = vmatpush1.bf16.msra.mxu0 %v2975
      %4368 = vmatprep.subr.bf16.mxu0 0
      %4369 = vmatpush1.bf16.msra.mxu0 %v2976
      %4370 = vmatprep.subr.bf16.mxu0 0
      %4371 = vmatpush1.bf16.msra.mxu0 %v2977
      %4372 = vmatprep.subr.bf16.mxu0 0
      %4373 = vmatpush1.bf16.msra.mxu0 %v2978
      %4374 = vmatprep.subr.bf16.mxu0 0
      %4375 = vmatpush1.bf16.msra.mxu0 %v2979
      %4376 = vmatprep.subr.bf16.mxu0 0
      %4377 = vmatpush1.bf16.msra.mxu0 0
      %4378 = vmatprep.subr.bf16.mxu0 0
      %4379 = vmatpush1.bf16.msra.mxu0 0
      %4380 = vmatprep.subr.bf16.mxu0 0
      %4381 = vmatpush1.bf16.msra.mxu0 0
      %4382 = vmatprep.subr.bf16.mxu0 0
      %4383 = vmatpush1.bf16.msra.mxu0 0
      %4384 = vmatprep.subr.bf16.mxu0 0
      %4385 = vmatpush1.bf16.msra.mxu0 0
      %4386 = vmatprep.subr.bf16.mxu0 0
      %4387 = vmatpush1.bf16.msra.mxu0 0
      %4388 = vmatprep.subr.bf16.mxu0 0
      %4389 = vmatpush1.bf16.msra.mxu0 0
      %4390 = vmatprep.subr.bf16.mxu0 0
      %4391 = vmatpush1.bf16.msra.mxu0 0
      %4392 = vmatprep.mubr.bf16.mxu0 0
      %4393 = vmatmul.mubr.bf16.gmra.mrb[0].mxu0 %v2201
      %v4394 = vpop.f32.mrb[0].mxu0
      %v4395 = vadd.f32 0.0, %v4394
      %v4396 = vpop.f32.mrb[0].mxu0
      %v4397 = vpop.f32.mrb[0].mxu0
      %v4398 = vadd.f32 0.0, %v4397
      %v4399 = vpop.f32.mrb[0].mxu0
      %4400 = vmatprep.mubr.bf16.mxu0 0
      %4401 = vmatmul.mubr.bf16.gmra.mrb[0].mxu0 %v2205
      %v4402 = vpop.f32.mrb[0].mxu0
      %v4403 = vadd.f32 0.0, %v4402
      %v4404 = vpop.f32.mrb[0].mxu0
      %v4405 = vpop.f32.mrb[0].mxu0
      %v4406 = vadd.f32 0.0, %v4405
      %v4407 = vpop.f32.mrb[0].mxu0
      %4408 = vdwg.mxu0
      %4409 = vmatprep.subr.bf16.mxu0 0
      %4410 = vmatpush1.bf16.msra.mxu0 %v3069
      %4411 = vmatprep.subr.bf16.mxu0 0
      %4412 = vmatpush1.bf16.msra.mxu0 %v3070
      %4413 = vmatprep.subr.bf16.mxu0 0
      %4414 = vmatpush1.bf16.msra.mxu0 %v3071
      %4415 = vmatprep.subr.bf16.mxu0 0
      %4416 = vmatpush1.bf16.msra.mxu0 %v3072
      %4417 = vmatprep.subr.bf16.mxu0 0
      %4418 = vmatpush1.bf16.msra.mxu0 %v3073
      %4419 = vmatprep.subr.bf16.mxu0 0
      %4420 = vmatpush1.bf16.msra.mxu0 %v3074
      %4421 = vmatprep.subr.bf16.mxu0 0
      %4422 = vmatpush1.bf16.msra.mxu0 %v3075
      %4423 = vmatprep.subr.bf16.mxu0 0
      %4424 = vmatpush1.bf16.msra.mxu0 %v3076
      %4425 = vmatprep.subr.bf16.mxu0 0
      %4426 = vmatpush1.bf16.msra.mxu0 0
      %4427 = vmatprep.subr.bf16.mxu0 0
      %4428 = vmatpush1.bf16.msra.mxu0 0
      %4429 = vmatprep.subr.bf16.mxu0 0
      %4430 = vmatpush1.bf16.msra.mxu0 0
      %4431 = vmatprep.subr.bf16.mxu0 0
      %4432 = vmatpush1.bf16.msra.mxu0 0
      %4433 = vmatprep.subr.bf16.mxu0 0
      %4434 = vmatpush1.bf16.msra.mxu0 0
      %4435 = vmatprep.subr.bf16.mxu0 0
      %4436 = vmatpush1.bf16.msra.mxu0 0
      %4437 = vmatprep.subr.bf16.mxu0 0
      %4438 = vmatpush1.bf16.msra.mxu0 0
      %4439 = vmatprep.subr.bf16.mxu0 0
      %4440 = vmatpush1.bf16.msra.mxu0 0
      %4441 = vmatprep.mubr.bf16.mxu0 0
      %4442 = vmatmul.mubr.bf16.gmra.mrb[0].mxu0 %v2209
      %v4443 = vpop.f32.mrb[0].mxu0
      %v4444 = vadd.f32 0.0, %v4443
      %v4445 = vpop.f32.mrb[0].mxu0
      %v4446 = vpop.f32.mrb[0].mxu0
      %v4447 = vadd.f32 0.0, %v4446
      %v4448 = vpop.f32.mrb[0].mxu0
      %4449 = vmatprep.mubr.bf16.mxu0 0
      %4450 = vmatmul.mubr.bf16.gmra.mrb[0].mxu0 %v2213
      %v4451 = vpop.f32.mrb[0].mxu0
      %v4452 = vadd.f32 0.0, %v4451
      %v4453 = vpop.f32.mrb[0].mxu0
      %v4454 = vpop.f32.mrb[0].mxu0
      %v4455 = vadd.f32 0.0, %v4454
      %v4456 = vpop.f32.mrb[0].mxu0
      %4457 = vdwg.mxu0
      %4458 = vmatprep.subr.bf16.mxu0 0
      %4459 = vmatpush1.bf16.msra.mxu0 %v3166
      %4460 = vmatprep.subr.bf16.mxu0 0
      %4461 = vmatpush1.bf16.msra.mxu0 %v3167
      %4462 = vmatprep.subr.bf16.mxu0 0
      %4463 = vmatpush1.bf16.msra.mxu0 %v3168
      %4464 = vmatprep.subr.bf16.mxu0 0
      %4465 = vmatpush1.bf16.msra.mxu0 %v3169
      %4466 = vmatprep.subr.bf16.mxu0 0
      %4467 = vmatpush1.bf16.msra.mxu0 %v3170
      %4468 = vmatprep.subr.bf16.mxu0 0
      %4469 = vmatpush1.bf16.msra.mxu0 %v3171
      %4470 = vmatprep.subr.bf16.mxu0 0
      %4471 = vmatpush1.bf16.msra.mxu0 %v3172
      %4472 = vmatprep.subr.bf16.mxu0 0
      %4473 = vmatpush1.bf16.msra.mxu0 %v3173
      %4474 = vmatprep.subr.bf16.mxu0 0
      %4475 = vmatpush1.bf16.msra.mxu0 0
      %4476 = vmatprep.subr.bf16.mxu0 0
      %4477 = vmatpush1.bf16.msra.mxu0 0
      %4478 = vmatprep.subr.bf16.mxu0 0
      %4479 = vmatpush1.bf16.msra.mxu0 0
      %4480 = vmatprep.subr.bf16.mxu0 0
      %4481 = vmatpush1.bf16.msra.mxu0 0
      %4482 = vmatprep.subr.bf16.mxu0 0
      %4483 = vmatpush1.bf16.msra.mxu0 0
      %4484 = vmatprep.subr.bf16.mxu0 0
      %4485 = vmatpush1.bf16.msra.mxu0 0
      %4486 = vmatprep.subr.bf16.mxu0 0
      %4487 = vmatpush1.bf16.msra.mxu0 0
      %4488 = vmatprep.subr.bf16.mxu0 0
      %4489 = vmatpush1.bf16.msra.mxu0 0
      %4490 = vmatprep.mubr.bf16.mxu0 0
      %4491 = vmatmul.mubr.bf16.gmra.mrb[0].mxu0 %v2217
      %v4492 = vpop.f32.mrb[0].mxu0
      %v4493 = vadd.f32 0.0, %v4492
      %v4494 = vpop.f32.mrb[0].mxu0
      %v4495 = vpop.f32.mrb[0].mxu0
      %v4496 = vadd.f32 0.0, %v4495
      %v4497 = vpop.f32.mrb[0].mxu0
      %4498 = vmatprep.mubr.bf16.mxu0 0
      %4499 = vmatmul.mubr.bf16.gmra.mrb[0].mxu0 %v2221
      %v4500 = vpop.f32.mrb[0].mxu0
      %v4501 = vadd.f32 0.0, %v4500
      %v4502 = vpop.f32.mrb[0].mxu0
      %v4503 = vpop.f32.mrb[0].mxu0
      %v4504 = vadd.f32 0.0, %v4503
      %v4505 = vpop.f32.mrb[0].mxu0
      %4506 = vdwg.mxu0
      %4507 = vmatprep.subr.bf16.mxu0 0
      %4508 = vmatpush1.bf16.msra.mxu0 %v3263
      %4509 = vmatprep.subr.bf16.mxu0 0
      %4510 = vmatpush1.bf16.msra.mxu0 %v3264
      %4511 = vmatprep.subr.bf16.mxu0 0
      %4512 = vmatpush1.bf16.msra.mxu0 %v3265
      %4513 = vmatprep.subr.bf16.mxu0 0
      %4514 = vmatpush1.bf16.msra.mxu0 %v3266
      %4515 = vmatprep.subr.bf16.mxu0 0
      %4516 = vmatpush1.bf16.msra.mxu0 %v3267
      %4517 = vmatprep.subr.bf16.mxu0 0
      %4518 = vmatpush1.bf16.msra.mxu0 %v3268
      %4519 = vmatprep.subr.bf16.mxu0 0
      %4520 = vmatpush1.bf16.msra.mxu0 %v3269
      %4521 = vmatprep.subr.bf16.mxu0 0
      %4522 = vmatpush1.bf16.msra.mxu0 %v3270
      %4523 = vmatprep.subr.bf16.mxu0 0
      %4524 = vmatpush1.bf16.msra.mxu0 0
      %4525 = vmatprep.subr.bf16.mxu0 0
      %4526 = vmatpush1.bf16.msra.mxu0 0
      %4527 = vmatprep.subr.bf16.mxu0 0
      %4528 = vmatpush1.bf16.msra.mxu0 0
      %4529 = vmatprep.subr.bf16.mxu0 0
      %4530 = vmatpush1.bf16.msra.mxu0 0
      %4531 = vmatprep.subr.bf16.mxu0 0
      %4532 = vmatpush1.bf16.msra.mxu0 0
      %4533 = vmatprep.subr.bf16.mxu0 0
      %4534 = vmatpush1.bf16.msra.mxu0 0
      %4535 = vmatprep.subr.bf16.mxu0 0
      %4536 = vmatpush1.bf16.msra.mxu0 0
      %4537 = vmatprep.subr.bf16.mxu0 0
      %4538 = vmatpush1.bf16.msra.mxu0 0
      %4539 = vmatprep.mubr.bf16.mxu0 0
      %4540 = vmatmul.mubr.bf16.gmra.mrb[0].mxu0 %v2225
      %v4541 = vpop.f32.mrb[0].mxu0
      %v4542 = vadd.f32 0.0, %v4541
      %v4543 = vpop.f32.mrb[0].mxu0
      %v4544 = vpop.f32.mrb[0].mxu0
      %v4545 = vadd.f32 0.0, %v4544
      %v4546 = vpop.f32.mrb[0].mxu0
      %4547 = vmatprep.mubr.bf16.mxu0 0
      %4548 = vmatmul.mubr.bf16.gmra.mrb[0].mxu0 %v2229
      %v4549 = vpop.f32.mrb[0].mxu0
      %v4550 = vadd.f32 0.0, %v4549
      %v4551 = vpop.f32.mrb[0].mxu0
      %v4552 = vpop.f32.mrb[0].mxu0
      %v4553 = vadd.f32 0.0, %v4552
      %v4554 = vpop.f32.mrb[0].mxu0
      %4555 = vdwg.mxu0
      %4556 = vmatprep.subr.bf16.mxu0 0
      %4557 = vmatpush1.bf16.msra.mxu0 %v3360
      %4558 = vmatprep.subr.bf16.mxu0 0
      %4559 = vmatpush1.bf16.msra.mxu0 %v3361
      %4560 = vmatprep.subr.bf16.mxu0 0
      %4561 = vmatpush1.bf16.msra.mxu0 %v3362
      %4562 = vmatprep.subr.bf16.mxu0 0
      %4563 = vmatpush1.bf16.msra.mxu0 %v3363
      %4564 = vmatprep.subr.bf16.mxu0 0
      %4565 = vmatpush1.bf16.msra.mxu0 %v3364
      %4566 = vmatprep.subr.bf16.mxu0 0
      %4567 = vmatpush1.bf16.msra.mxu0 %v3365
      %4568 = vmatprep.subr.bf16.mxu0 0
      %4569 = vmatpush1.bf16.msra.mxu0 %v3366
      %4570 = vmatprep.subr.bf16.mxu0 0
      %4571 = vmatpush1.bf16.msra.mxu0 %v3367
      %4572 = vmatprep.subr.bf16.mxu0 0
      %4573 = vmatpush1.bf16.msra.mxu0 0
      %4574 = vmatprep.subr.bf16.mxu0 0
      %4575 = vmatpush1.bf16.msra.mxu0 0
      %4576 = vmatprep.subr.bf16.mxu0 0
      %4577 = vmatpush1.bf16.msra.mxu0 0
      %4578 = vmatprep.subr.bf16.mxu0 0
      %4579 = vmatpush1.bf16.msra.mxu0 0
      %4580 = vmatprep.subr.bf16.mxu0 0
      %4581 = vmatpush1.bf16.msra.mxu0 0
      %4582 = vmatprep.subr.bf16.mxu0 0
      %4583 = vmatpush1.bf16.msra.mxu0 0
      %4584 = vmatprep.subr.bf16.mxu0 0
      %4585 = vmatpush1.bf16.msra.mxu0 0
      %4586 = vmatprep.subr.bf16.mxu0 0
      %4587 = vmatpush1.bf16.msra.mxu0 0
      %4588 = vmatprep.mubr.bf16.mxu0 0
      %4589 = vmatmul.mubr.bf16.gmra.mrb[0].mxu0 %v2233
      %v4590 = vpop.f32.mrb[0].mxu0
      %v4591 = vadd.f32 0.0, %v4590
      %v4592 = vpop.f32.mrb[0].mxu0
      %v4593 = vpop.f32.mrb[0].mxu0
      %v4594 = vadd.f32 0.0, %v4593
      %v4595 = vpop.f32.mrb[0].mxu0
      %4596 = vmatprep.mubr.bf16.mxu0 0
      %4597 = vmatmul.mubr.bf16.gmra.mrb[0].mxu0 %v2237
      %v4598 = vpop.f32.mrb[0].mxu0
      %v4599 = vadd.f32 0.0, %v4598
      %v4600 = vpop.f32.mrb[0].mxu0
      %v4601 = vpop.f32.mrb[0].mxu0
      %v4602 = vadd.f32 0.0, %v4601
      %v4603 = vpop.f32.mrb[0].mxu0
      %4604 = vdwg.mxu0
      %4605 = vmatprep.subr.bf16.mxu0 0
      %4606 = vmatpush1.bf16.msra.mxu0 %v3457
      %4607 = vmatprep.subr.bf16.mxu0 0
      %4608 = vmatpush1.bf16.msra.mxu0 %v3458
      %4609 = vmatprep.subr.bf16.mxu0 0
      %4610 = vmatpush1.bf16.msra.mxu0 %v3459
      %4611 = vmatprep.subr.bf16.mxu0 0
      %4612 = vmatpush1.bf16.msra.mxu0 %v3460
      %4613 = vmatprep.subr.bf16.mxu0 0
      %4614 = vmatpush1.bf16.msra.mxu0 %v3461
      %4615 = vmatprep.subr.bf16.mxu0 0
      %4616 = vmatpush1.bf16.msra.mxu0 %v3462
      %4617 = vmatprep.subr.bf16.mxu0 0
      %4618 = vmatpush1.bf16.msra.mxu0 %v3463
      %4619 = vmatprep.subr.bf16.mxu0 0
      %4620 = vmatpush1.bf16.msra.mxu0 %v3464
      %4621 = vmatprep.subr.bf16.mxu0 0
      %4622 = vmatpush1.bf16.msra.mxu0 0
      %4623 = vmatprep.subr.bf16.mxu0 0
      %4624 = vmatpush1.bf16.msra.mxu0 0
      %4625 = vmatprep.subr.bf16.mxu0 0
      %4626 = vmatpush1.bf16.msra.mxu0 0
      %4627 = vmatprep.subr.bf16.mxu0 0
      %4628 = vmatpush1.bf16.msra.mxu0 0
      %4629 = vmatprep.subr.bf16.mxu0 0
      %4630 = vmatpush1.bf16.msra.mxu0 0
      %4631 = vmatprep.subr.bf16.mxu0 0
      %4632 = vmatpush1.bf16.msra.mxu0 0
      %4633 = vmatprep.subr.bf16.mxu0 0
      %4634 = vmatpush1.bf16.msra.mxu0 0
      %4635 = vmatprep.subr.bf16.mxu0 0
      %4636 = vmatpush1.bf16.msra.mxu0 0
      %4637 = vmatprep.mubr.bf16.mxu0 0
      %4638 = vmatmul.mubr.bf16.gmra.mrb[0].mxu0 %v2241
      %v4639 = vpop.f32.mrb[0].mxu0
      %v4640 = vadd.f32 0.0, %v4639
      %v4641 = vpop.f32.mrb[0].mxu0
      %v4642 = vpop.f32.mrb[0].mxu0
      %v4643 = vadd.f32 0.0, %v4642
      %v4644 = vpop.f32.mrb[0].mxu0
      %4645 = vmatprep.mubr.bf16.mxu0 0
      %4646 = vmatmul.mubr.bf16.gmra.mrb[0].mxu0 %v2245
      %v4647 = vpop.f32.mrb[0].mxu0
      %v4648 = vadd.f32 0.0, %v4647
      %v4649 = vpop.f32.mrb[0].mxu0
      %v4650 = vpop.f32.mrb[0].mxu0
      %v4651 = vadd.f32 0.0, %v4650
      %v4652 = vpop.f32.mrb[0].mxu0
      %4653 = vdwg.mxu0
      %4654 = vmatprep.subr.bf16.mxu0 0
      %4655 = vmatpush1.bf16.msra.mxu0 %v3554
      %4656 = vmatprep.subr.bf16.mxu0 0
      %4657 = vmatpush1.bf16.msra.mxu0 %v3555
      %4658 = vmatprep.subr.bf16.mxu0 0
      %4659 = vmatpush1.bf16.msra.mxu0 %v3556
      %4660 = vmatprep.subr.bf16.mxu0 0
      %4661 = vmatpush1.bf16.msra.mxu0 %v3557
      %4662 = vmatprep.subr.bf16.mxu0 0
      %4663 = vmatpush1.bf16.msra.mxu0 %v3558
      %4664 = vmatprep.subr.bf16.mxu0 0
      %4665 = vmatpush1.bf16.msra.mxu0 %v3559
      %4666 = vmatprep.subr.bf16.mxu0 0
      %4667 = vmatpush1.bf16.msra.mxu0 %v3560
      %4668 = vmatprep.subr.bf16.mxu0 0
      %4669 = vmatpush1.bf16.msra.mxu0 %v3561
      %4670 = vmatprep.subr.bf16.mxu0 0
      %4671 = vmatpush1.bf16.msra.mxu0 0
      %4672 = vmatprep.subr.bf16.mxu0 0
      %4673 = vmatpush1.bf16.msra.mxu0 0
      %4674 = vmatprep.subr.bf16.mxu0 0
      %4675 = vmatpush1.bf16.msra.mxu0 0
      %4676 = vmatprep.subr.bf16.mxu0 0
      %4677 = vmatpush1.bf16.msra.mxu0 0
      %4678 = vmatprep.subr.bf16.mxu0 0
      %4679 = vmatpush1.bf16.msra.mxu0 0
      %4680 = vmatprep.subr.bf16.mxu0 0
      %4681 = vmatpush1.bf16.msra.mxu0 0
      %4682 = vmatprep.subr.bf16.mxu0 0
      %4683 = vmatpush1.bf16.msra.mxu0 0
      %4684 = vmatprep.subr.bf16.mxu0 0
      %4685 = vmatpush1.bf16.msra.mxu0 0
      %4686 = vmatprep.mubr.bf16.mxu0 0
      %4687 = vmatmul.mubr.bf16.gmra.mrb[0].mxu0 %v2249
      %v4688 = vpop.f32.mrb[0].mxu0
      %v4689 = vadd.f32 0.0, %v4688
      %v4690 = vpop.f32.mrb[0].mxu0
      %v4691 = vpop.f32.mrb[0].mxu0
      %v4692 = vadd.f32 0.0, %v4691
      %v4693 = vpop.f32.mrb[0].mxu0
      %4694 = vmatprep.mubr.bf16.mxu0 0
      %4695 = vmatmul.mubr.bf16.gmra.mrb[0].mxu0 %v2253
      %v4696 = vpop.f32.mrb[0].mxu0
      %v4697 = vadd.f32 0.0, %v4696
      %v4698 = vpop.f32.mrb[0].mxu0
      %v4699 = vpop.f32.mrb[0].mxu0
      %v4700 = vadd.f32 0.0, %v4699
      %v4701 = vpop.f32.mrb[0].mxu0
      %4702 = vdwg.mxu0
      %4703 = vmatprep.subr.bf16.mxu0 0
      %4704 = vmatpush1.bf16.msra.mxu0 %v3651
      %4705 = vmatprep.subr.bf16.mxu0 0
      %4706 = vmatpush1.bf16.msra.mxu0 %v3652
      %4707 = vmatprep.subr.bf16.mxu0 0
      %4708 = vmatpush1.bf16.msra.mxu0 %v3653
      %4709 = vmatprep.subr.bf16.mxu0 0
      %4710 = vmatpush1.bf16.msra.mxu0 %v3654
      %4711 = vmatprep.subr.bf16.mxu0 0
      %4712 = vmatpush1.bf16.msra.mxu0 %v3655
      %4713 = vmatprep.subr.bf16.mxu0 0
      %4714 = vmatpush1.bf16.msra.mxu0 %v3656
      %4715 = vmatprep.subr.bf16.mxu0 0
      %4716 = vmatpush1.bf16.msra.mxu0 %v3657
      %4717 = vmatprep.subr.bf16.mxu0 0
      %4718 = vmatpush1.bf16.msra.mxu0 %v3658
      %4719 = vmatprep.subr.bf16.mxu0 0
      %4720 = vmatpush1.bf16.msra.mxu0 0
      %4721 = vmatprep.subr.bf16.mxu0 0
      %4722 = vmatpush1.bf16.msra.mxu0 0
      %4723 = vmatprep.subr.bf16.mxu0 0
      %4724 = vmatpush1.bf16.msra.mxu0 0
      %4725 = vmatprep.subr.bf16.mxu0 0
      %4726 = vmatpush1.bf16.msra.mxu0 0
      %4727 = vmatprep.subr.bf16.mxu0 0
      %4728 = vmatpush1.bf16.msra.mxu0 0
      %4729 = vmatprep.subr.bf16.mxu0 0
      %4730 = vmatpush1.bf16.msra.mxu0 0
      %4731 = vmatprep.subr.bf16.mxu0 0
      %4732 = vmatpush1.bf16.msra.mxu0 0
      %4733 = vmatprep.subr.bf16.mxu0 0
      %4734 = vmatpush1.bf16.msra.mxu0 0
      %4735 = vmatprep.mubr.bf16.mxu0 0
      %4736 = vmatmul.mubr.bf16.gmra.mrb[0].mxu0 %v2257
      %v4737 = vpop.f32.mrb[0].mxu0
      %v4738 = vadd.f32 0.0, %v4737
      %v4739 = vpop.f32.mrb[0].mxu0
      %v4740 = vpop.f32.mrb[0].mxu0
      %v4741 = vadd.f32 0.0, %v4740
      %v4742 = vpop.f32.mrb[0].mxu0
      %4743 = vmatprep.mubr.bf16.mxu0 0
      %4744 = vmatmul.mubr.bf16.gmra.mrb[0].mxu0 %v2261
      %v4745 = vpop.f32.mrb[0].mxu0
      %v4746 = vadd.f32 0.0, %v4745
      %v4747 = vpop.f32.mrb[0].mxu0
      %v4748 = vpop.f32.mrb[0].mxu0
      %v4749 = vadd.f32 0.0, %v4748
      %v4750 = vpop.f32.mrb[0].mxu0
      %4751 = vdwg.mxu0
      %4752 = vmatprep.subr.bf16.mxu0 0
      %4753 = vmatpush1.bf16.msra.mxu0 %v3748
      %4754 = vmatprep.subr.bf16.mxu0 0
      %4755 = vmatpush1.bf16.msra.mxu0 %v3749
      %4756 = vmatprep.subr.bf16.mxu0 0
      %4757 = vmatpush1.bf16.msra.mxu0 %v3750
      %4758 = vmatprep.subr.bf16.mxu0 0
      %4759 = vmatpush1.bf16.msra.mxu0 %v3751
      %4760 = vmatprep.subr.bf16.mxu0 0
      %4761 = vmatpush1.bf16.msra.mxu0 %v3752
      %4762 = vmatprep.subr.bf16.mxu0 0
      %4763 = vmatpush1.bf16.msra.mxu0 %v3753
      %4764 = vmatprep.subr.bf16.mxu0 0
      %4765 = vmatpush1.bf16.msra.mxu0 %v3754
      %4766 = vmatprep.subr.bf16.mxu0 0
      %4767 = vmatpush1.bf16.msra.mxu0 %v3755
      %4768 = vmatprep.subr.bf16.mxu0 0
      %4769 = vmatpush1.bf16.msra.mxu0 0
      %4770 = vmatprep.subr.bf16.mxu0 0
      %4771 = vmatpush1.bf16.msra.mxu0 0
      %4772 = vmatprep.subr.bf16.mxu0 0
      %4773 = vmatpush1.bf16.msra.mxu0 0
      %4774 = vmatprep.subr.bf16.mxu0 0
      %4775 = vmatpush1.bf16.msra.mxu0 0
      %4776 = vmatprep.subr.bf16.mxu0 0
      %4777 = vmatpush1.bf16.msra.mxu0 0
      %4778 = vmatprep.subr.bf16.mxu0 0
      %4779 = vmatpush1.bf16.msra.mxu0 0
      %4780 = vmatprep.subr.bf16.mxu0 0
      %4781 = vmatpush1.bf16.msra.mxu0 0
      %4782 = vmatprep.subr.bf16.mxu0 0
      %4783 = vmatpush1.bf16.msra.mxu0 0
      %4784 = vmatprep.mubr.bf16.mxu0 0
      %4785 = vmatmul.mubr.bf16.gmra.mrb[0].mxu0 %v2265
      %v4786 = vpop.f32.mrb[0].mxu0
      %v4787 = vadd.f32 0.0, %v4786
      %v4788 = vpop.f32.mrb[0].mxu0
      %v4789 = vpop.f32.mrb[0].mxu0
      %v4790 = vadd.f32 0.0, %v4789
      %v4791 = vpop.f32.mrb[0].mxu0
      %4792 = vmatprep.mubr.bf16.mxu0 0
      %4793 = vmatmul.mubr.bf16.gmra.mrb[0].mxu0 %v2269
      %v4794 = vpop.f32.mrb[0].mxu0
      %v4795 = vadd.f32 0.0, %v4794
      %v4796 = vpop.f32.mrb[0].mxu0
      %v4797 = vpop.f32.mrb[0].mxu0
      %v4798 = vadd.f32 0.0, %v4797
      %v4799 = vpop.f32.mrb[0].mxu0
      %4800 = vdwg.mxu0
      %4801 = vmatprep.subr.bf16.mxu0 0
      %4802 = vmatpush1.bf16.msra.mxu0 %v3845
      %4803 = vmatprep.subr.bf16.mxu0 0
      %4804 = vmatpush1.bf16.msra.mxu0 %v3846
      %4805 = vmatprep.subr.bf16.mxu0 0
      %4806 = vmatpush1.bf16.msra.mxu0 %v3847
      %4807 = vmatprep.subr.bf16.mxu0 0
      %4808 = vmatpush1.bf16.msra.mxu0 %v3848
      %4809 = vmatprep.subr.bf16.mxu0 0
      %4810 = vmatpush1.bf16.msra.mxu0 %v3849
      %4811 = vmatprep.subr.bf16.mxu0 0
      %4812 = vmatpush1.bf16.msra.mxu0 %v3850
      %4813 = vmatprep.subr.bf16.mxu0 0
      %4814 = vmatpush1.bf16.msra.mxu0 %v3851
      %4815 = vmatprep.subr.bf16.mxu0 0
      %4816 = vmatpush1.bf16.msra.mxu0 %v3852
      %4817 = vmatprep.subr.bf16.mxu0 0
      %4818 = vmatpush1.bf16.msra.mxu0 0
      %4819 = vmatprep.subr.bf16.mxu0 0
      %4820 = vmatpush1.bf16.msra.mxu0 0
      %4821 = vmatprep.subr.bf16.mxu0 0
      %4822 = vmatpush1.bf16.msra.mxu0 0
      %4823 = vmatprep.subr.bf16.mxu0 0
      %4824 = vmatpush1.bf16.msra.mxu0 0
      %4825 = vmatprep.subr.bf16.mxu0 0
      %4826 = vmatpush1.bf16.msra.mxu0 0
      %4827 = vmatprep.subr.bf16.mxu0 0
      %4828 = vmatpush1.bf16.msra.mxu0 0
      %4829 = vmatprep.subr.bf16.mxu0 0
      %4830 = vmatpush1.bf16.msra.mxu0 0
      %4831 = vmatprep.subr.bf16.mxu0 0
      %4832 = vmatpush1.bf16.msra.mxu0 0
      %4833 = vmatprep.mubr.bf16.mxu0 0
      %4834 = vmatmul.mubr.bf16.gmra.mrb[0].mxu0 %v2273
      %v4835 = vpop.f32.mrb[0].mxu0
      %v4836 = vadd.f32 0.0, %v4835
      %v4837 = vpop.f32.mrb[0].mxu0
      %v4838 = vpop.f32.mrb[0].mxu0
      %v4839 = vadd.f32 0.0, %v4838
      %v4840 = vpop.f32.mrb[0].mxu0
      %4841 = vmatprep.mubr.bf16.mxu0 0
      %4842 = vmatmul.mubr.bf16.gmra.mrb[0].mxu0 %v2277
      %v4843 = vpop.f32.mrb[0].mxu0
      %v4844 = vadd.f32 0.0, %v4843
      %v4845 = vpop.f32.mrb[0].mxu0
      %v4846 = vpop.f32.mrb[0].mxu0
      %v4847 = vadd.f32 0.0, %v4846
      %v4848 = vpop.f32.mrb[0].mxu0
      %4849 = vdwg.mxu0
      %4850 = vmatprep.subr.bf16.mxu0 0
      %4851 = vmatpush1.bf16.msra.mxu0 %v3942
      %4852 = vmatprep.subr.bf16.mxu0 0
      %4853 = vmatpush1.bf16.msra.mxu0 %v3943
      %4854 = vmatprep.subr.bf16.mxu0 0
      %4855 = vmatpush1.bf16.msra.mxu0 %v3944
      %4856 = vmatprep.subr.bf16.mxu0 0
      %4857 = vmatpush1.bf16.msra.mxu0 %v3945
      %4858 = vmatprep.subr.bf16.mxu0 0
      %4859 = vmatpush1.bf16.msra.mxu0 %v3946
      %4860 = vmatprep.subr.bf16.mxu0 0
      %4861 = vmatpush1.bf16.msra.mxu0 %v3947
      %4862 = vmatprep.subr.bf16.mxu0 0
      %4863 = vmatpush1.bf16.msra.mxu0 %v3948
      %4864 = vmatprep.subr.bf16.mxu0 0
      %4865 = vmatpush1.bf16.msra.mxu0 %v3949
      %4866 = vmatprep.subr.bf16.mxu0 0
      %4867 = vmatpush1.bf16.msra.mxu0 0
      %4868 = vmatprep.subr.bf16.mxu0 0
      %4869 = vmatpush1.bf16.msra.mxu0 0
      %4870 = vmatprep.subr.bf16.mxu0 0
      %4871 = vmatpush1.bf16.msra.mxu0 0
      %4872 = vmatprep.subr.bf16.mxu0 0
      %4873 = vmatpush1.bf16.msra.mxu0 0
      %4874 = vmatprep.subr.bf16.mxu0 0
      %4875 = vmatpush1.bf16.msra.mxu0 0
      %4876 = vmatprep.subr.bf16.mxu0 0
      %4877 = vmatpush1.bf16.msra.mxu0 0
      %4878 = vmatprep.subr.bf16.mxu0 0
      %4879 = vmatpush1.bf16.msra.mxu0 0
      %4880 = vmatprep.subr.bf16.mxu0 0
      %4881 = vmatpush1.bf16.msra.mxu0 0
      %4882 = vmatprep.mubr.bf16.mxu0 0
      %4883 = vmatmul.mubr.bf16.gmra.mrb[0].mxu0 %v2281
      %v4884 = vpop.f32.mrb[0].mxu0
      %v4885 = vadd.f32 0.0, %v4884
      %v4886 = vpop.f32.mrb[0].mxu0
      %v4887 = vpop.f32.mrb[0].mxu0
      %v4888 = vadd.f32 0.0, %v4887
      %v4889 = vpop.f32.mrb[0].mxu0
      %4890 = vmatprep.mubr.bf16.mxu0 0
      %4891 = vmatmul.mubr.bf16.gmra.mrb[0].mxu0 %v2285
      %v4892 = vpop.f32.mrb[0].mxu0
      %v4893 = vadd.f32 0.0, %v4892
      %v4894 = vpop.f32.mrb[0].mxu0
      %v4895 = vpop.f32.mrb[0].mxu0
      %v4896 = vadd.f32 0.0, %v4895
      %v4897 = vpop.f32.mrb[0].mxu0
      %4898 = vdwg.mxu0
      %4899 = vmatprep.subr.bf16.mxu0 0
      %4900 = vmatpush1.bf16.msra.mxu0 %v4039
      %4901 = vmatprep.subr.bf16.mxu0 0
      %4902 = vmatpush1.bf16.msra.mxu0 %v4040
      %4903 = vmatprep.subr.bf16.mxu0 0
      %4904 = vmatpush1.bf16.msra.mxu0 %v4041
      %4905 = vmatprep.subr.bf16.mxu0 0
      %4906 = vmatpush1.bf16.msra.mxu0 %v4042
      %4907 = vmatprep.subr.bf16.mxu0 0
      %4908 = vmatpush1.bf16.msra.mxu0 %v4043
      %4909 = vmatprep.subr.bf16.mxu0 0
      %4910 = vmatpush1.bf16.msra.mxu0 %v4044
      %4911 = vmatprep.subr.bf16.mxu0 0
      %4912 = vmatpush1.bf16.msra.mxu0 %v4045
      %4913 = vmatprep.subr.bf16.mxu0 0
      %4914 = vmatpush1.bf16.msra.mxu0 %v4046
      %4915 = vmatprep.subr.bf16.mxu0 0
      %4916 = vmatpush1.bf16.msra.mxu0 0
      %4917 = vmatprep.subr.bf16.mxu0 0
      %4918 = vmatpush1.bf16.msra.mxu0 0
      %4919 = vmatprep.subr.bf16.mxu0 0
      %4920 = vmatpush1.bf16.msra.mxu0 0
      %4921 = vmatprep.subr.bf16.mxu0 0
      %4922 = vmatpush1.bf16.msra.mxu0 0
      %4923 = vmatprep.subr.bf16.mxu0 0
      %4924 = vmatpush1.bf16.msra.mxu0 0
      %4925 = vmatprep.subr.bf16.mxu0 0
      %4926 = vmatpush1.bf16.msra.mxu0 0
      %4927 = vmatprep.subr.bf16.mxu0 0
      %4928 = vmatpush1.bf16.msra.mxu0 0
      %4929 = vmatprep.subr.bf16.mxu0 0
      %4930 = vmatpush1.bf16.msra.mxu0 0
      %4931 = vmatprep.mubr.bf16.mxu0 0
      %4932 = vmatmul.mubr.bf16.gmra.mrb[0].mxu0 %v2289
      %v4933 = vpop.f32.mrb[0].mxu0
      %v4934 = vadd.f32 0.0, %v4933
      %v4935 = vpop.f32.mrb[0].mxu0
      %v4936 = vpop.f32.mrb[0].mxu0
      %v4937 = vadd.f32 0.0, %v4936
      %v4938 = vpop.f32.mrb[0].mxu0
      %4939 = vmatprep.mubr.bf16.mxu0 0
      %4940 = vmatmul.mubr.bf16.gmra.mrb[0].mxu0 %v2293
      %v4941 = vpop.f32.mrb[0].mxu0
      %v4942 = vadd.f32 0.0, %v4941
      %v4943 = vpop.f32.mrb[0].mxu0
      %v4944 = vpop.f32.mrb[0].mxu0
      %v4945 = vadd.f32 0.0, %v4944
      %v4946 = vpop.f32.mrb[0].mxu0
      %4947 = vdwg.mxu0
      %v4948 = vadd.f32 %v4199, %v4248
      %v4949 = vadd.f32 %v4948, %v4297
      %v4950 = vadd.f32 %v4949, %v4346
      %v4951 = vadd.f32 %v4950, %v4395
      %v4952 = vadd.f32 %v4951, %v4444
      %v4953 = vadd.f32 %v4952, %v4493
      %v4954 = vadd.f32 %v4953, %v4542
      %v4955 = vadd.f32 %v4954, %v4591
      %v4956 = vadd.f32 %v4955, %v4640
      %v4957 = vadd.f32 %v4956, %v4689
      %v4958 = vadd.f32 %v4957, %v4738
      %v4959 = vadd.f32 %v4958, %v4787
      %v4960 = vadd.f32 %v4959, %v4836
      %v4961 = vadd.f32 %v4960, %v4885
      %v4962 = vadd.f32 %v4961, %v4934
      %v4963 = vadd.f32 %v4202, %v4251
      %v4964 = vadd.f32 %v4963, %v4300
      %v4965 = vadd.f32 %v4964, %v4349
      %v4966 = vadd.f32 %v4965, %v4398
      %v4967 = vadd.f32 %v4966, %v4447
      %v4968 = vadd.f32 %v4967, %v4496
      %v4969 = vadd.f32 %v4968, %v4545
      %v4970 = vadd.f32 %v4969, %v4594
      %v4971 = vadd.f32 %v4970, %v4643
      %v4972 = vadd.f32 %v4971, %v4692
      %v4973 = vadd.f32 %v4972, %v4741
      %v4974 = vadd.f32 %v4973, %v4790
      %v4975 = vadd.f32 %v4974, %v4839
      %v4976 = vadd.f32 %v4975, %v4888
      %v4977 = vadd.f32 %v4976, %v4937
      %v4978 = vadd.f32 %v4207, %v4256
      %v4979 = vadd.f32 %v4978, %v4305
      %v4980 = vadd.f32 %v4979, %v4354
      %v4981 = vadd.f32 %v4980, %v4403
      %v4982 = vadd.f32 %v4981, %v4452
      %v4983 = vadd.f32 %v4982, %v4501
      %v4984 = vadd.f32 %v4983, %v4550
      %v4985 = vadd.f32 %v4984, %v4599
      %v4986 = vadd.f32 %v4985, %v4648
      %v4987 = vadd.f32 %v4986, %v4697
      %v4988 = vadd.f32 %v4987, %v4746
      %v4989 = vadd.f32 %v4988, %v4795
      %v4990 = vadd.f32 %v4989, %v4844
      %v4991 = vadd.f32 %v4990, %v4893
      %v4992 = vadd.f32 %v4991, %v4942
      %v4993 = vadd.f32 %v4210, %v4259
      %v4994 = vadd.f32 %v4993, %v4308
      %v4995 = vadd.f32 %v4994, %v4357
      %v4996 = vadd.f32 %v4995, %v4406
      %v4997 = vadd.f32 %v4996, %v4455
      %v4998 = vadd.f32 %v4997, %v4504
      %v4999 = vadd.f32 %v4998, %v4553
      %v5000 = vadd.f32 %v4999, %v4602
      %v5001 = vadd.f32 %v5000, %v4651
      %v5002 = vadd.f32 %v5001, %v4700
      %v5003 = vadd.f32 %v5002, %v4749
      %v5004 = vadd.f32 %v5003, %v4798
      %v5005 = vadd.f32 %v5004, %v4847
      %v5006 = vadd.f32 %v5005, %v4896
      %v5007 = vadd.f32 %v5006, %v4945
      %5008 = vmatprep.subr.bf16.mxu0 0
      %5009 = vmatpush1.bf16.msra.mxu0 %v2584
      %5010 = vmatprep.subr.bf16.mxu0 0
      %5011 = vmatpush1.bf16.msra.mxu0 %v2585
      %5012 = vmatprep.subr.bf16.mxu0 0
      %5013 = vmatpush1.bf16.msra.mxu0 %v2586
      %5014 = vmatprep.subr.bf16.mxu0 0
      %5015 = vmatpush1.bf16.msra.mxu0 %v2587
      %5016 = vmatprep.subr.bf16.mxu0 0
      %5017 = vmatpush1.bf16.msra.mxu0 %v2588
      %5018 = vmatprep.subr.bf16.mxu0 0
      %5019 = vmatpush1.bf16.msra.mxu0 %v2589
      %5020 = vmatprep.subr.bf16.mxu0 0
      %5021 = vmatpush1.bf16.msra.mxu0 %v2590
      %5022 = vmatprep.subr.bf16.mxu0 0
      %5023 = vmatpush1.bf16.msra.mxu0 %v2591
      %5024 = vmatprep.subr.bf16.mxu0 0
      %5025 = vmatpush1.bf16.msra.mxu0 0
      %5026 = vmatprep.subr.bf16.mxu0 0
      %5027 = vmatpush1.bf16.msra.mxu0 0
      %5028 = vmatprep.subr.bf16.mxu0 0
      %5029 = vmatpush1.bf16.msra.mxu0 0
      %5030 = vmatprep.subr.bf16.mxu0 0
      %5031 = vmatpush1.bf16.msra.mxu0 0
      %5032 = vmatprep.subr.bf16.mxu0 0
      %5033 = vmatpush1.bf16.msra.mxu0 0
      %5034 = vmatprep.subr.bf16.mxu0 0
      %5035 = vmatpush1.bf16.msra.mxu0 0
      %5036 = vmatprep.subr.bf16.mxu0 0
      %5037 = vmatpush1.bf16.msra.mxu0 0
      %5038 = vmatprep.subr.bf16.mxu0 0
      %5039 = vmatpush1.bf16.msra.mxu0 0
      %5040 = vmatprep.mubr.bf16.mxu0 0
      %5041 = vmatmul.mubr.bf16.gmra.mrb[0].mxu0 %v2170
      %v5042 = vpop.f32.mrb[0].mxu0
      %v5043 = vadd.f32 0.0, %v5042
      %v5044 = vpop.f32.mrb[0].mxu0
      %v5045 = vpop.f32.mrb[0].mxu0
      %v5046 = vadd.f32 0.0, %v5045
      %v5047 = vpop.f32.mrb[0].mxu0
      %5048 = vmatprep.mubr.bf16.mxu0 0
      %5049 = vmatmul.mubr.bf16.gmra.mrb[0].mxu0 %v2174
      %v5050 = vpop.f32.mrb[0].mxu0
      %v5051 = vadd.f32 0.0, %v5050
      %v5052 = vpop.f32.mrb[0].mxu0
      %v5053 = vpop.f32.mrb[0].mxu0
      %v5054 = vadd.f32 0.0, %v5053
      %v5055 = vpop.f32.mrb[0].mxu0
      %5056 = vdwg.mxu0
      %5057 = vmatprep.subr.bf16.mxu0 0
      %5058 = vmatpush1.bf16.msra.mxu0 %v2681
      %5059 = vmatprep.subr.bf16.mxu0 0
      %5060 = vmatpush1.bf16.msra.mxu0 %v2682
      %5061 = vmatprep.subr.bf16.mxu0 0
      %5062 = vmatpush1.bf16.msra.mxu0 %v2683
      %5063 = vmatprep.subr.bf16.mxu0 0
      %5064 = vmatpush1.bf16.msra.mxu0 %v2684
      %5065 = vmatprep.subr.bf16.mxu0 0
      %5066 = vmatpush1.bf16.msra.mxu0 %v2685
      %5067 = vmatprep.subr.bf16.mxu0 0
      %5068 = vmatpush1.bf16.msra.mxu0 %v2686
      %5069 = vmatprep.subr.bf16.mxu0 0
      %5070 = vmatpush1.bf16.msra.mxu0 %v2687
      %5071 = vmatprep.subr.bf16.mxu0 0
      %5072 = vmatpush1.bf16.msra.mxu0 %v2688
      %5073 = vmatprep.subr.bf16.mxu0 0
      %5074 = vmatpush1.bf16.msra.mxu0 0
      %5075 = vmatprep.subr.bf16.mxu0 0
      %5076 = vmatpush1.bf16.msra.mxu0 0
      %5077 = vmatprep.subr.bf16.mxu0 0
      %5078 = vmatpush1.bf16.msra.mxu0 0
      %5079 = vmatprep.subr.bf16.mxu0 0
      %5080 = vmatpush1.bf16.msra.mxu0 0
      %5081 = vmatprep.subr.bf16.mxu0 0
      %5082 = vmatpush1.bf16.msra.mxu0 0
      %5083 = vmatprep.subr.bf16.mxu0 0
      %5084 = vmatpush1.bf16.msra.mxu0 0
      %5085 = vmatprep.subr.bf16.mxu0 0
      %5086 = vmatpush1.bf16.msra.mxu0 0
      %5087 = vmatprep.subr.bf16.mxu0 0
      %5088 = vmatpush1.bf16.msra.mxu0 0
      %5089 = vmatprep.mubr.bf16.mxu0 0
      %5090 = vmatmul.mubr.bf16.gmra.mrb[0].mxu0 %v2178
      %v5091 = vpop.f32.mrb[0].mxu0
      %v5092 = vadd.f32 0.0, %v5091
      %v5093 = vpop.f32.mrb[0].mxu0
      %v5094 = vpop.f32.mrb[0].mxu0
      %v5095 = vadd.f32 0.0, %v5094
      %v5096 = vpop.f32.mrb[0].mxu0
      %5097 = vmatprep.mubr.bf16.mxu0 0
      %5098 = vmatmul.mubr.bf16.gmra.mrb[0].mxu0 %v2182
      %v5099 = vpop.f32.mrb[0].mxu0
      %v5100 = vadd.f32 0.0, %v5099
      %v5101 = vpop.f32.mrb[0].mxu0
      %v5102 = vpop.f32.mrb[0].mxu0
      %v5103 = vadd.f32 0.0, %v5102
      %v5104 = vpop.f32.mrb[0].mxu0
      %5105 = vdwg.mxu0
      %5106 = vmatprep.subr.bf16.mxu0 0
      %5107 = vmatpush1.bf16.msra.mxu0 %v2778
      %5108 = vmatprep.subr.bf16.mxu0 0
      %5109 = vmatpush1.bf16.msra.mxu0 %v2779
      %5110 = vmatprep.subr.bf16.mxu0 0
      %5111 = vmatpush1.bf16.msra.mxu0 %v2780
      %5112 = vmatprep.subr.bf16.mxu0 0
      %5113 = vmatpush1.bf16.msra.mxu0 %v2781
      %5114 = vmatprep.subr.bf16.mxu0 0
      %5115 = vmatpush1.bf16.msra.mxu0 %v2782
      %5116 = vmatprep.subr.bf16.mxu0 0
      %5117 = vmatpush1.bf16.msra.mxu0 %v2783
      %5118 = vmatprep.subr.bf16.mxu0 0
      %5119 = vmatpush1.bf16.msra.mxu0 %v2784
      %5120 = vmatprep.subr.bf16.mxu0 0
      %5121 = vmatpush1.bf16.msra.mxu0 %v2785
      %5122 = vmatprep.subr.bf16.mxu0 0
      %5123 = vmatpush1.bf16.msra.mxu0 0
      %5124 = vmatprep.subr.bf16.mxu0 0
      %5125 = vmatpush1.bf16.msra.mxu0 0
      %5126 = vmatprep.subr.bf16.mxu0 0
      %5127 = vmatpush1.bf16.msra.mxu0 0
      %5128 = vmatprep.subr.bf16.mxu0 0
      %5129 = vmatpush1.bf16.msra.mxu0 0
      %5130 = vmatprep.subr.bf16.mxu0 0
      %5131 = vmatpush1.bf16.msra.mxu0 0
      %5132 = vmatprep.subr.bf16.mxu0 0
      %5133 = vmatpush1.bf16.msra.mxu0 0
      %5134 = vmatprep.subr.bf16.mxu0 0
      %5135 = vmatpush1.bf16.msra.mxu0 0
      %5136 = vmatprep.subr.bf16.mxu0 0
      %5137 = vmatpush1.bf16.msra.mxu0 0
      %5138 = vmatprep.mubr.bf16.mxu0 0
      %5139 = vmatmul.mubr.bf16.gmra.mrb[0].mxu0 %v2186
      %v5140 = vpop.f32.mrb[0].mxu0
      %v5141 = vadd.f32 0.0, %v5140
      %v5142 = vpop.f32.mrb[0].mxu0
      %v5143 = vpop.f32.mrb[0].mxu0
      %v5144 = vadd.f32 0.0, %v5143
      %v5145 = vpop.f32.mrb[0].mxu0
      %5146 = vmatprep.mubr.bf16.mxu0 0
      %5147 = vmatmul.mubr.bf16.gmra.mrb[0].mxu0 %v2190
      %v5148 = vpop.f32.mrb[0].mxu0
      %v5149 = vadd.f32 0.0, %v5148
      %v5150 = vpop.f32.mrb[0].mxu0
      %v5151 = vpop.f32.mrb[0].mxu0
      %v5152 = vadd.f32 0.0, %v5151
      %v5153 = vpop.f32.mrb[0].mxu0
      %5154 = vdwg.mxu0
      %5155 = vmatprep.subr.bf16.mxu0 0
      %5156 = vmatpush1.bf16.msra.mxu0 %v2875
      %5157 = vmatprep.subr.bf16.mxu0 0
      %5158 = vmatpush1.bf16.msra.mxu0 %v2876
      %5159 = vmatprep.subr.bf16.mxu0 0
      %5160 = vmatpush1.bf16.msra.mxu0 %v2877
      %5161 = vmatprep.subr.bf16.mxu0 0
      %5162 = vmatpush1.bf16.msra.mxu0 %v2878
      %5163 = vmatprep.subr.bf16.mxu0 0
      %5164 = vmatpush1.bf16.msra.mxu0 %v2879
      %5165 = vmatprep.subr.bf16.mxu0 0
      %5166 = vmatpush1.bf16.msra.mxu0 %v2880
      %5167 = vmatprep.subr.bf16.mxu0 0
      %5168 = vmatpush1.bf16.msra.mxu0 %v2881
      %5169 = vmatprep.subr.bf16.mxu0 0
      %5170 = vmatpush1.bf16.msra.mxu0 %v2882
      %5171 = vmatprep.subr.bf16.mxu0 0
      %5172 = vmatpush1.bf16.msra.mxu0 0
      %5173 = vmatprep.subr.bf16.mxu0 0
      %5174 = vmatpush1.bf16.msra.mxu0 0
      %5175 = vmatprep.subr.bf16.mxu0 0
      %5176 = vmatpush1.bf16.msra.mxu0 0
      %5177 = vmatprep.subr.bf16.mxu0 0
      %5178 = vmatpush1.bf16.msra.mxu0 0
      %5179 = vmatprep.subr.bf16.mxu0 0
      %5180 = vmatpush1.bf16.msra.mxu0 0
      %5181 = vmatprep.subr.bf16.mxu0 0
      %5182 = vmatpush1.bf16.msra.mxu0 0
      %5183 = vmatprep.subr.bf16.mxu0 0
      %5184 = vmatpush1.bf16.msra.mxu0 0
      %5185 = vmatprep.subr.bf16.mxu0 0
      %5186 = vmatpush1.bf16.msra.mxu0 0
      %5187 = vmatprep.mubr.bf16.mxu0 0
      %5188 = vmatmul.mubr.bf16.gmra.mrb[0].mxu0 %v2194
      %v5189 = vpop.f32.mrb[0].mxu0
      %v5190 = vadd.f32 0.0, %v5189
      %v5191 = vpop.f32.mrb[0].mxu0
      %v5192 = vpop.f32.mrb[0].mxu0
      %v5193 = vadd.f32 0.0, %v5192
      %v5194 = vpop.f32.mrb[0].mxu0
      %5195 = vmatprep.mubr.bf16.mxu0 0
      %5196 = vmatmul.mubr.bf16.gmra.mrb[0].mxu0 %v2198
      %v5197 = vpop.f32.mrb[0].mxu0
      %v5198 = vadd.f32 0.0, %v5197
      %v5199 = vpop.f32.mrb[0].mxu0
      %v5200 = vpop.f32.mrb[0].mxu0
      %v5201 = vadd.f32 0.0, %v5200
      %v5202 = vpop.f32.mrb[0].mxu0
      %5203 = vdwg.mxu0
      %5204 = vmatprep.subr.bf16.mxu0 0
      %5205 = vmatpush1.bf16.msra.mxu0 %v2972
      %5206 = vmatprep.subr.bf16.mxu0 0
      %5207 = vmatpush1.bf16.msra.mxu0 %v2973
      %5208 = vmatprep.subr.bf16.mxu0 0
      %5209 = vmatpush1.bf16.msra.mxu0 %v2974
      %5210 = vmatprep.subr.bf16.mxu0 0
      %5211 = vmatpush1.bf16.msra.mxu0 %v2975
      %5212 = vmatprep.subr.bf16.mxu0 0
      %5213 = vmatpush1.bf16.msra.mxu0 %v2976
      %5214 = vmatprep.subr.bf16.mxu0 0
      %5215 = vmatpush1.bf16.msra.mxu0 %v2977
      %5216 = vmatprep.subr.bf16.mxu0 0
      %5217 = vmatpush1.bf16.msra.mxu0 %v2978
      %5218 = vmatprep.subr.bf16.mxu0 0
      %5219 = vmatpush1.bf16.msra.mxu0 %v2979
      %5220 = vmatprep.subr.bf16.mxu0 0
      %5221 = vmatpush1.bf16.msra.mxu0 0
      %5222 = vmatprep.subr.bf16.mxu0 0
      %5223 = vmatpush1.bf16.msra.mxu0 0
      %5224 = vmatprep.subr.bf16.mxu0 0
      %5225 = vmatpush1.bf16.msra.mxu0 0
      %5226 = vmatprep.subr.bf16.mxu0 0
      %5227 = vmatpush1.bf16.msra.mxu0 0
      %5228 = vmatprep.subr.bf16.mxu0 0
      %5229 = vmatpush1.bf16.msra.mxu0 0
      %5230 = vmatprep.subr.bf16.mxu0 0
      %5231 = vmatpush1.bf16.msra.mxu0 0
      %5232 = vmatprep.subr.bf16.mxu0 0
      %5233 = vmatpush1.bf16.msra.mxu0 0
      %5234 = vmatprep.subr.bf16.mxu0 0
      %5235 = vmatpush1.bf16.msra.mxu0 0
      %5236 = vmatprep.mubr.bf16.mxu0 0
      %5237 = vmatmul.mubr.bf16.gmra.mrb[0].mxu0 %v2202
      %v5238 = vpop.f32.mrb[0].mxu0
      %v5239 = vadd.f32 0.0, %v5238
      %v5240 = vpop.f32.mrb[0].mxu0
      %v5241 = vpop.f32.mrb[0].mxu0
      %v5242 = vadd.f32 0.0, %v5241
      %v5243 = vpop.f32.mrb[0].mxu0
      %5244 = vmatprep.mubr.bf16.mxu0 0
      %5245 = vmatmul.mubr.bf16.gmra.mrb[0].mxu0 %v2206
      %v5246 = vpop.f32.mrb[0].mxu0
      %v5247 = vadd.f32 0.0, %v5246
      %v5248 = vpop.f32.mrb[0].mxu0
      %v5249 = vpop.f32.mrb[0].mxu0
      %v5250 = vadd.f32 0.0, %v5249
      %v5251 = vpop.f32.mrb[0].mxu0
      %5252 = vdwg.mxu0
      %5253 = vmatprep.subr.bf16.mxu0 0
      %5254 = vmatpush1.bf16.msra.mxu0 %v3069
      %5255 = vmatprep.subr.bf16.mxu0 0
      %5256 = vmatpush1.bf16.msra.mxu0 %v3070
      %5257 = vmatprep.subr.bf16.mxu0 0
      %5258 = vmatpush1.bf16.msra.mxu0 %v3071
      %5259 = vmatprep.subr.bf16.mxu0 0
      %5260 = vmatpush1.bf16.msra.mxu0 %v3072
      %5261 = vmatprep.subr.bf16.mxu0 0
      %5262 = vmatpush1.bf16.msra.mxu0 %v3073
      %5263 = vmatprep.subr.bf16.mxu0 0
      %5264 = vmatpush1.bf16.msra.mxu0 %v3074
      %5265 = vmatprep.subr.bf16.mxu0 0
      %5266 = vmatpush1.bf16.msra.mxu0 %v3075
      %5267 = vmatprep.subr.bf16.mxu0 0
      %5268 = vmatpush1.bf16.msra.mxu0 %v3076
      %5269 = vmatprep.subr.bf16.mxu0 0
      %5270 = vmatpush1.bf16.msra.mxu0 0
      %5271 = vmatprep.subr.bf16.mxu0 0
      %5272 = vmatpush1.bf16.msra.mxu0 0
      %5273 = vmatprep.subr.bf16.mxu0 0
      %5274 = vmatpush1.bf16.msra.mxu0 0
      %5275 = vmatprep.subr.bf16.mxu0 0
      %5276 = vmatpush1.bf16.msra.mxu0 0
      %5277 = vmatprep.subr.bf16.mxu0 0
      %5278 = vmatpush1.bf16.msra.mxu0 0
      %5279 = vmatprep.subr.bf16.mxu0 0
      %5280 = vmatpush1.bf16.msra.mxu0 0
      %5281 = vmatprep.subr.bf16.mxu0 0
      %5282 = vmatpush1.bf16.msra.mxu0 0
      %5283 = vmatprep.subr.bf16.mxu0 0
      %5284 = vmatpush1.bf16.msra.mxu0 0
      %5285 = vmatprep.mubr.bf16.mxu0 0
      %5286 = vmatmul.mubr.bf16.gmra.mrb[0].mxu0 %v2210
      %v5287 = vpop.f32.mrb[0].mxu0
      %v5288 = vadd.f32 0.0, %v5287
      %v5289 = vpop.f32.mrb[0].mxu0
      %v5290 = vpop.f32.mrb[0].mxu0
      %v5291 = vadd.f32 0.0, %v5290
      %v5292 = vpop.f32.mrb[0].mxu0
      %5293 = vmatprep.mubr.bf16.mxu0 0
      %5294 = vmatmul.mubr.bf16.gmra.mrb[0].mxu0 %v2214
      %v5295 = vpop.f32.mrb[0].mxu0
      %v5296 = vadd.f32 0.0, %v5295
      %v5297 = vpop.f32.mrb[0].mxu0
      %v5298 = vpop.f32.mrb[0].mxu0
      %v5299 = vadd.f32 0.0, %v5298
      %v5300 = vpop.f32.mrb[0].mxu0
      %5301 = vdwg.mxu0
      %5302 = vmatprep.subr.bf16.mxu0 0
      %5303 = vmatpush1.bf16.msra.mxu0 %v3166
      %5304 = vmatprep.subr.bf16.mxu0 0
      %5305 = vmatpush1.bf16.msra.mxu0 %v3167
      %5306 = vmatprep.subr.bf16.mxu0 0
      %5307 = vmatpush1.bf16.msra.mxu0 %v3168
      %5308 = vmatprep.subr.bf16.mxu0 0
      %5309 = vmatpush1.bf16.msra.mxu0 %v3169
      %5310 = vmatprep.subr.bf16.mxu0 0
      %5311 = vmatpush1.bf16.msra.mxu0 %v3170
      %5312 = vmatprep.subr.bf16.mxu0 0
      %5313 = vmatpush1.bf16.msra.mxu0 %v3171
      %5314 = vmatprep.subr.bf16.mxu0 0
      %5315 = vmatpush1.bf16.msra.mxu0 %v3172
      %5316 = vmatprep.subr.bf16.mxu0 0
      %5317 = vmatpush1.bf16.msra.mxu0 %v3173
      %5318 = vmatprep.subr.bf16.mxu0 0
      %5319 = vmatpush1.bf16.msra.mxu0 0
      %5320 = vmatprep.subr.bf16.mxu0 0
      %5321 = vmatpush1.bf16.msra.mxu0 0
      %5322 = vmatprep.subr.bf16.mxu0 0
      %5323 = vmatpush1.bf16.msra.mxu0 0
      %5324 = vmatprep.subr.bf16.mxu0 0
      %5325 = vmatpush1.bf16.msra.mxu0 0
      %5326 = vmatprep.subr.bf16.mxu0 0
      %5327 = vmatpush1.bf16.msra.mxu0 0
      %5328 = vmatprep.subr.bf16.mxu0 0
      %5329 = vmatpush1.bf16.msra.mxu0 0
      %5330 = vmatprep.subr.bf16.mxu0 0
      %5331 = vmatpush1.bf16.msra.mxu0 0
      %5332 = vmatprep.subr.bf16.mxu0 0
      %5333 = vmatpush1.bf16.msra.mxu0 0
      %5334 = vmatprep.mubr.bf16.mxu0 0
      %5335 = vmatmul.mubr.bf16.gmra.mrb[0].mxu0 %v2218
      %v5336 = vpop.f32.mrb[0].mxu0
      %v5337 = vadd.f32 0.0, %v5336
      %v5338 = vpop.f32.mrb[0].mxu0
      %v5339 = vpop.f32.mrb[0].mxu0
      %v5340 = vadd.f32 0.0, %v5339
      %v5341 = vpop.f32.mrb[0].mxu0
      %5342 = vmatprep.mubr.bf16.mxu0 0
      %5343 = vmatmul.mubr.bf16.gmra.mrb[0].mxu0 %v2222
      %v5344 = vpop.f32.mrb[0].mxu0
      %v5345 = vadd.f32 0.0, %v5344
      %v5346 = vpop.f32.mrb[0].mxu0
      %v5347 = vpop.f32.mrb[0].mxu0
      %v5348 = vadd.f32 0.0, %v5347
      %v5349 = vpop.f32.mrb[0].mxu0
      %5350 = vdwg.mxu0
      %5351 = vmatprep.subr.bf16.mxu0 0
      %5352 = vmatpush1.bf16.msra.mxu0 %v3263
      %5353 = vmatprep.subr.bf16.mxu0 0
      %5354 = vmatpush1.bf16.msra.mxu0 %v3264
      %5355 = vmatprep.subr.bf16.mxu0 0
      %5356 = vmatpush1.bf16.msra.mxu0 %v3265
      %5357 = vmatprep.subr.bf16.mxu0 0
      %5358 = vmatpush1.bf16.msra.mxu0 %v3266
      %5359 = vmatprep.subr.bf16.mxu0 0
      %5360 = vmatpush1.bf16.msra.mxu0 %v3267
      %5361 = vmatprep.subr.bf16.mxu0 0
      %5362 = vmatpush1.bf16.msra.mxu0 %v3268
      %5363 = vmatprep.subr.bf16.mxu0 0
      %5364 = vmatpush1.bf16.msra.mxu0 %v3269
      %5365 = vmatprep.subr.bf16.mxu0 0
      %5366 = vmatpush1.bf16.msra.mxu0 %v3270
      %5367 = vmatprep.subr.bf16.mxu0 0
      %5368 = vmatpush1.bf16.msra.mxu0 0
      %5369 = vmatprep.subr.bf16.mxu0 0
      %5370 = vmatpush1.bf16.msra.mxu0 0
      %5371 = vmatprep.subr.bf16.mxu0 0
      %5372 = vmatpush1.bf16.msra.mxu0 0
      %5373 = vmatprep.subr.bf16.mxu0 0
      %5374 = vmatpush1.bf16.msra.mxu0 0
      %5375 = vmatprep.subr.bf16.mxu0 0
      %5376 = vmatpush1.bf16.msra.mxu0 0
      %5377 = vmatprep.subr.bf16.mxu0 0
      %5378 = vmatpush1.bf16.msra.mxu0 0
      %5379 = vmatprep.subr.bf16.mxu0 0
      %5380 = vmatpush1.bf16.msra.mxu0 0
      %5381 = vmatprep.subr.bf16.mxu0 0
      %5382 = vmatpush1.bf16.msra.mxu0 0
      %5383 = vmatprep.mubr.bf16.mxu0 0
      %5384 = vmatmul.mubr.bf16.gmra.mrb[0].mxu0 %v2226
      %v5385 = vpop.f32.mrb[0].mxu0
      %v5386 = vadd.f32 0.0, %v5385
      %v5387 = vpop.f32.mrb[0].mxu0
      %v5388 = vpop.f32.mrb[0].mxu0
      %v5389 = vadd.f32 0.0, %v5388
      %v5390 = vpop.f32.mrb[0].mxu0
      %5391 = vmatprep.mubr.bf16.mxu0 0
      %5392 = vmatmul.mubr.bf16.gmra.mrb[0].mxu0 %v2230
      %v5393 = vpop.f32.mrb[0].mxu0
      %v5394 = vadd.f32 0.0, %v5393
      %v5395 = vpop.f32.mrb[0].mxu0
      %v5396 = vpop.f32.mrb[0].mxu0
      %v5397 = vadd.f32 0.0, %v5396
      %v5398 = vpop.f32.mrb[0].mxu0
      %5399 = vdwg.mxu0
      %5400 = vmatprep.subr.bf16.mxu0 0
      %5401 = vmatpush1.bf16.msra.mxu0 %v3360
      %5402 = vmatprep.subr.bf16.mxu0 0
      %5403 = vmatpush1.bf16.msra.mxu0 %v3361
      %5404 = vmatprep.subr.bf16.mxu0 0
      %5405 = vmatpush1.bf16.msra.mxu0 %v3362
      %5406 = vmatprep.subr.bf16.mxu0 0
      %5407 = vmatpush1.bf16.msra.mxu0 %v3363
      %5408 = vmatprep.subr.bf16.mxu0 0
      %5409 = vmatpush1.bf16.msra.mxu0 %v3364
      %5410 = vmatprep.subr.bf16.mxu0 0
      %5411 = vmatpush1.bf16.msra.mxu0 %v3365
      %5412 = vmatprep.subr.bf16.mxu0 0
      %5413 = vmatpush1.bf16.msra.mxu0 %v3366
      %5414 = vmatprep.subr.bf16.mxu0 0
      %5415 = vmatpush1.bf16.msra.mxu0 %v3367
      %5416 = vmatprep.subr.bf16.mxu0 0
      %5417 = vmatpush1.bf16.msra.mxu0 0
      %5418 = vmatprep.subr.bf16.mxu0 0
      %5419 = vmatpush1.bf16.msra.mxu0 0
      %5420 = vmatprep.subr.bf16.mxu0 0
      %5421 = vmatpush1.bf16.msra.mxu0 0
      %5422 = vmatprep.subr.bf16.mxu0 0
      %5423 = vmatpush1.bf16.msra.mxu0 0
      %5424 = vmatprep.subr.bf16.mxu0 0
      %5425 = vmatpush1.bf16.msra.mxu0 0
      %5426 = vmatprep.subr.bf16.mxu0 0
      %5427 = vmatpush1.bf16.msra.mxu0 0
      %5428 = vmatprep.subr.bf16.mxu0 0
      %5429 = vmatpush1.bf16.msra.mxu0 0
      %5430 = vmatprep.subr.bf16.mxu0 0
      %5431 = vmatpush1.bf16.msra.mxu0 0
      %5432 = vmatprep.mubr.bf16.mxu0 0
      %5433 = vmatmul.mubr.bf16.gmra.mrb[0].mxu0 %v2234
      %v5434 = vpop.f32.mrb[0].mxu0
      %v5435 = vadd.f32 0.0, %v5434
      %v5436 = vpop.f32.mrb[0].mxu0
      %v5437 = vpop.f32.mrb[0].mxu0
      %v5438 = vadd.f32 0.0, %v5437
      %v5439 = vpop.f32.mrb[0].mxu0
      %5440 = vmatprep.mubr.bf16.mxu0 0
      %5441 = vmatmul.mubr.bf16.gmra.mrb[0].mxu0 %v2238
      %v5442 = vpop.f32.mrb[0].mxu0
      %v5443 = vadd.f32 0.0, %v5442
      %v5444 = vpop.f32.mrb[0].mxu0
      %v5445 = vpop.f32.mrb[0].mxu0
      %v5446 = vadd.f32 0.0, %v5445
      %v5447 = vpop.f32.mrb[0].mxu0
      %5448 = vdwg.mxu0
      %5449 = vmatprep.subr.bf16.mxu0 0
      %5450 = vmatpush1.bf16.msra.mxu0 %v3457
      %5451 = vmatprep.subr.bf16.mxu0 0
      %5452 = vmatpush1.bf16.msra.mxu0 %v3458
      %5453 = vmatprep.subr.bf16.mxu0 0
      %5454 = vmatpush1.bf16.msra.mxu0 %v3459
      %5455 = vmatprep.subr.bf16.mxu0 0
      %5456 = vmatpush1.bf16.msra.mxu0 %v3460
      %5457 = vmatprep.subr.bf16.mxu0 0
      %5458 = vmatpush1.bf16.msra.mxu0 %v3461
      %5459 = vmatprep.subr.bf16.mxu0 0
      %5460 = vmatpush1.bf16.msra.mxu0 %v3462
      %5461 = vmatprep.subr.bf16.mxu0 0
      %5462 = vmatpush1.bf16.msra.mxu0 %v3463
      %5463 = vmatprep.subr.bf16.mxu0 0
      %5464 = vmatpush1.bf16.msra.mxu0 %v3464
      %5465 = vmatprep.subr.bf16.mxu0 0
      %5466 = vmatpush1.bf16.msra.mxu0 0
      %5467 = vmatprep.subr.bf16.mxu0 0
      %5468 = vmatpush1.bf16.msra.mxu0 0
      %5469 = vmatprep.subr.bf16.mxu0 0
      %5470 = vmatpush1.bf16.msra.mxu0 0
      %5471 = vmatprep.subr.bf16.mxu0 0
      %5472 = vmatpush1.bf16.msra.mxu0 0
      %5473 = vmatprep.subr.bf16.mxu0 0
      %5474 = vmatpush1.bf16.msra.mxu0 0
      %5475 = vmatprep.subr.bf16.mxu0 0
      %5476 = vmatpush1.bf16.msra.mxu0 0
      %5477 = vmatprep.subr.bf16.mxu0 0
      %5478 = vmatpush1.bf16.msra.mxu0 0
      %5479 = vmatprep.subr.bf16.mxu0 0
      %5480 = vmatpush1.bf16.msra.mxu0 0
      %5481 = vmatprep.mubr.bf16.mxu0 0
      %5482 = vmatmul.mubr.bf16.gmra.mrb[0].mxu0 %v2242
      %v5483 = vpop.f32.mrb[0].mxu0
      %v5484 = vadd.f32 0.0, %v5483
      %v5485 = vpop.f32.mrb[0].mxu0
      %v5486 = vpop.f32.mrb[0].mxu0
      %v5487 = vadd.f32 0.0, %v5486
      %v5488 = vpop.f32.mrb[0].mxu0
      %5489 = vmatprep.mubr.bf16.mxu0 0
      %5490 = vmatmul.mubr.bf16.gmra.mrb[0].mxu0 %v2246
      %v5491 = vpop.f32.mrb[0].mxu0
      %v5492 = vadd.f32 0.0, %v5491
      %v5493 = vpop.f32.mrb[0].mxu0
      %v5494 = vpop.f32.mrb[0].mxu0
      %v5495 = vadd.f32 0.0, %v5494
      %v5496 = vpop.f32.mrb[0].mxu0
      %5497 = vdwg.mxu0
      %5498 = vmatprep.subr.bf16.mxu0 0
      %5499 = vmatpush1.bf16.msra.mxu0 %v3554
      %5500 = vmatprep.subr.bf16.mxu0 0
      %5501 = vmatpush1.bf16.msra.mxu0 %v3555
      %5502 = vmatprep.subr.bf16.mxu0 0
      %5503 = vmatpush1.bf16.msra.mxu0 %v3556
      %5504 = vmatprep.subr.bf16.mxu0 0
      %5505 = vmatpush1.bf16.msra.mxu0 %v3557
      %5506 = vmatprep.subr.bf16.mxu0 0
      %5507 = vmatpush1.bf16.msra.mxu0 %v3558
      %5508 = vmatprep.subr.bf16.mxu0 0
      %5509 = vmatpush1.bf16.msra.mxu0 %v3559
      %5510 = vmatprep.subr.bf16.mxu0 0
      %5511 = vmatpush1.bf16.msra.mxu0 %v3560
      %5512 = vmatprep.subr.bf16.mxu0 0
      %5513 = vmatpush1.bf16.msra.mxu0 %v3561
      %5514 = vmatprep.subr.bf16.mxu0 0
      %5515 = vmatpush1.bf16.msra.mxu0 0
      %5516 = vmatprep.subr.bf16.mxu0 0
      %5517 = vmatpush1.bf16.msra.mxu0 0
      %5518 = vmatprep.subr.bf16.mxu0 0
      %5519 = vmatpush1.bf16.msra.mxu0 0
      %5520 = vmatprep.subr.bf16.mxu0 0
      %5521 = vmatpush1.bf16.msra.mxu0 0
      %5522 = vmatprep.subr.bf16.mxu0 0
      %5523 = vmatpush1.bf16.msra.mxu0 0
      %5524 = vmatprep.subr.bf16.mxu0 0
      %5525 = vmatpush1.bf16.msra.mxu0 0
      %5526 = vmatprep.subr.bf16.mxu0 0
      %5527 = vmatpush1.bf16.msra.mxu0 0
      %5528 = vmatprep.subr.bf16.mxu0 0
      %5529 = vmatpush1.bf16.msra.mxu0 0
      %5530 = vmatprep.mubr.bf16.mxu0 0
      %5531 = vmatmul.mubr.bf16.gmra.mrb[0].mxu0 %v2250
      %v5532 = vpop.f32.mrb[0].mxu0
      %v5533 = vadd.f32 0.0, %v5532
      %v5534 = vpop.f32.mrb[0].mxu0
      %v5535 = vpop.f32.mrb[0].mxu0
      %v5536 = vadd.f32 0.0, %v5535
      %v5537 = vpop.f32.mrb[0].mxu0
      %5538 = vmatprep.mubr.bf16.mxu0 0
      %5539 = vmatmul.mubr.bf16.gmra.mrb[0].mxu0 %v2254
      %v5540 = vpop.f32.mrb[0].mxu0
      %v5541 = vadd.f32 0.0, %v5540
      %v5542 = vpop.f32.mrb[0].mxu0
      %v5543 = vpop.f32.mrb[0].mxu0
      %v5544 = vadd.f32 0.0, %v5543
      %v5545 = vpop.f32.mrb[0].mxu0
      %5546 = vdwg.mxu0
      %5547 = vmatprep.subr.bf16.mxu0 0
      %5548 = vmatpush1.bf16.msra.mxu0 %v3651
      %5549 = vmatprep.subr.bf16.mxu0 0
      %5550 = vmatpush1.bf16.msra.mxu0 %v3652
      %5551 = vmatprep.subr.bf16.mxu0 0
      %5552 = vmatpush1.bf16.msra.mxu0 %v3653
      %5553 = vmatprep.subr.bf16.mxu0 0
      %5554 = vmatpush1.bf16.msra.mxu0 %v3654
      %5555 = vmatprep.subr.bf16.mxu0 0
      %5556 = vmatpush1.bf16.msra.mxu0 %v3655
      %5557 = vmatprep.subr.bf16.mxu0 0
      %5558 = vmatpush1.bf16.msra.mxu0 %v3656
      %5559 = vmatprep.subr.bf16.mxu0 0
      %5560 = vmatpush1.bf16.msra.mxu0 %v3657
      %5561 = vmatprep.subr.bf16.mxu0 0
      %5562 = vmatpush1.bf16.msra.mxu0 %v3658
      %5563 = vmatprep.subr.bf16.mxu0 0
      %5564 = vmatpush1.bf16.msra.mxu0 0
      %5565 = vmatprep.subr.bf16.mxu0 0
      %5566 = vmatpush1.bf16.msra.mxu0 0
      %5567 = vmatprep.subr.bf16.mxu0 0
      %5568 = vmatpush1.bf16.msra.mxu0 0
      %5569 = vmatprep.subr.bf16.mxu0 0
      %5570 = vmatpush1.bf16.msra.mxu0 0
      %5571 = vmatprep.subr.bf16.mxu0 0
      %5572 = vmatpush1.bf16.msra.mxu0 0
      %5573 = vmatprep.subr.bf16.mxu0 0
      %5574 = vmatpush1.bf16.msra.mxu0 0
      %5575 = vmatprep.subr.bf16.mxu0 0
      %5576 = vmatpush1.bf16.msra.mxu0 0
      %5577 = vmatprep.subr.bf16.mxu0 0
      %5578 = vmatpush1.bf16.msra.mxu0 0
      %5579 = vmatprep.mubr.bf16.mxu0 0
      %5580 = vmatmul.mubr.bf16.gmra.mrb[0].mxu0 %v2258
      %v5581 = vpop.f32.mrb[0].mxu0
      %v5582 = vadd.f32 0.0, %v5581
      %v5583 = vpop.f32.mrb[0].mxu0
      %v5584 = vpop.f32.mrb[0].mxu0
      %v5585 = vadd.f32 0.0, %v5584
      %v5586 = vpop.f32.mrb[0].mxu0
      %5587 = vmatprep.mubr.bf16.mxu0 0
      %5588 = vmatmul.mubr.bf16.gmra.mrb[0].mxu0 %v2262
      %v5589 = vpop.f32.mrb[0].mxu0
      %v5590 = vadd.f32 0.0, %v5589
      %v5591 = vpop.f32.mrb[0].mxu0
      %v5592 = vpop.f32.mrb[0].mxu0
      %v5593 = vadd.f32 0.0, %v5592
      %v5594 = vpop.f32.mrb[0].mxu0
      %5595 = vdwg.mxu0
      %5596 = vmatprep.subr.bf16.mxu0 0
      %5597 = vmatpush1.bf16.msra.mxu0 %v3748
      %5598 = vmatprep.subr.bf16.mxu0 0
      %5599 = vmatpush1.bf16.msra.mxu0 %v3749
      %5600 = vmatprep.subr.bf16.mxu0 0
      %5601 = vmatpush1.bf16.msra.mxu0 %v3750
      %5602 = vmatprep.subr.bf16.mxu0 0
      %5603 = vmatpush1.bf16.msra.mxu0 %v3751
      %5604 = vmatprep.subr.bf16.mxu0 0
      %5605 = vmatpush1.bf16.msra.mxu0 %v3752
      %5606 = vmatprep.subr.bf16.mxu0 0
      %5607 = vmatpush1.bf16.msra.mxu0 %v3753
      %5608 = vmatprep.subr.bf16.mxu0 0
      %5609 = vmatpush1.bf16.msra.mxu0 %v3754
      %5610 = vmatprep.subr.bf16.mxu0 0
      %5611 = vmatpush1.bf16.msra.mxu0 %v3755
      %5612 = vmatprep.subr.bf16.mxu0 0
      %5613 = vmatpush1.bf16.msra.mxu0 0
      %5614 = vmatprep.subr.bf16.mxu0 0
      %5615 = vmatpush1.bf16.msra.mxu0 0
      %5616 = vmatprep.subr.bf16.mxu0 0
      %5617 = vmatpush1.bf16.msra.mxu0 0
      %5618 = vmatprep.subr.bf16.mxu0 0
      %5619 = vmatpush1.bf16.msra.mxu0 0
      %5620 = vmatprep.subr.bf16.mxu0 0
      %5621 = vmatpush1.bf16.msra.mxu0 0
      %5622 = vmatprep.subr.bf16.mxu0 0
      %5623 = vmatpush1.bf16.msra.mxu0 0
      %5624 = vmatprep.subr.bf16.mxu0 0
      %5625 = vmatpush1.bf16.msra.mxu0 0
      %5626 = vmatprep.subr.bf16.mxu0 0
      %5627 = vmatpush1.bf16.msra.mxu0 0
      %5628 = vmatprep.mubr.bf16.mxu0 0
      %5629 = vmatmul.mubr.bf16.gmra.mrb[0].mxu0 %v2266
      %v5630 = vpop.f32.mrb[0].mxu0
      %v5631 = vadd.f32 0.0, %v5630
      %v5632 = vpop.f32.mrb[0].mxu0
      %v5633 = vpop.f32.mrb[0].mxu0
      %v5634 = vadd.f32 0.0, %v5633
      %v5635 = vpop.f32.mrb[0].mxu0
      %5636 = vmatprep.mubr.bf16.mxu0 0
      %5637 = vmatmul.mubr.bf16.gmra.mrb[0].mxu0 %v2270
      %v5638 = vpop.f32.mrb[0].mxu0
      %v5639 = vadd.f32 0.0, %v5638
      %v5640 = vpop.f32.mrb[0].mxu0
      %v5641 = vpop.f32.mrb[0].mxu0
      %v5642 = vadd.f32 0.0, %v5641
      %v5643 = vpop.f32.mrb[0].mxu0
      %5644 = vdwg.mxu0
      %5645 = vmatprep.subr.bf16.mxu0 0
      %5646 = vmatpush1.bf16.msra.mxu0 %v3845
      %5647 = vmatprep.subr.bf16.mxu0 0
      %5648 = vmatpush1.bf16.msra.mxu0 %v3846
      %5649 = vmatprep.subr.bf16.mxu0 0
      %5650 = vmatpush1.bf16.msra.mxu0 %v3847
      %5651 = vmatprep.subr.bf16.mxu0 0
      %5652 = vmatpush1.bf16.msra.mxu0 %v3848
      %5653 = vmatprep.subr.bf16.mxu0 0
      %5654 = vmatpush1.bf16.msra.mxu0 %v3849
      %5655 = vmatprep.subr.bf16.mxu0 0
      %5656 = vmatpush1.bf16.msra.mxu0 %v3850
      %5657 = vmatprep.subr.bf16.mxu0 0
      %5658 = vmatpush1.bf16.msra.mxu0 %v3851
      %5659 = vmatprep.subr.bf16.mxu0 0
      %5660 = vmatpush1.bf16.msra.mxu0 %v3852
      %5661 = vmatprep.subr.bf16.mxu0 0
      %5662 = vmatpush1.bf16.msra.mxu0 0
      %5663 = vmatprep.subr.bf16.mxu0 0
      %5664 = vmatpush1.bf16.msra.mxu0 0
      %5665 = vmatprep.subr.bf16.mxu0 0
      %5666 = vmatpush1.bf16.msra.mxu0 0
      %5667 = vmatprep.subr.bf16.mxu0 0
      %5668 = vmatpush1.bf16.msra.mxu0 0
      %5669 = vmatprep.subr.bf16.mxu0 0
      %5670 = vmatpush1.bf16.msra.mxu0 0
      %5671 = vmatprep.subr.bf16.mxu0 0
      %5672 = vmatpush1.bf16.msra.mxu0 0
      %5673 = vmatprep.subr.bf16.mxu0 0
      %5674 = vmatpush1.bf16.msra.mxu0 0
      %5675 = vmatprep.subr.bf16.mxu0 0
      %5676 = vmatpush1.bf16.msra.mxu0 0
      %5677 = vmatprep.mubr.bf16.mxu0 0
      %5678 = vmatmul.mubr.bf16.gmra.mrb[0].mxu0 %v2274
      %v5679 = vpop.f32.mrb[0].mxu0
      %v5680 = vadd.f32 0.0, %v5679
      %v5681 = vpop.f32.mrb[0].mxu0
      %v5682 = vpop.f32.mrb[0].mxu0
      %v5683 = vadd.f32 0.0, %v5682
      %v5684 = vpop.f32.mrb[0].mxu0
      %5685 = vmatprep.mubr.bf16.mxu0 0
      %5686 = vmatmul.mubr.bf16.gmra.mrb[0].mxu0 %v2278
      %v5687 = vpop.f32.mrb[0].mxu0
      %v5688 = vadd.f32 0.0, %v5687
      %v5689 = vpop.f32.mrb[0].mxu0
      %v5690 = vpop.f32.mrb[0].mxu0
      %v5691 = vadd.f32 0.0, %v5690
      %v5692 = vpop.f32.mrb[0].mxu0
      %5693 = vdwg.mxu0
      %5694 = vmatprep.subr.bf16.mxu0 0
      %5695 = vmatpush1.bf16.msra.mxu0 %v3942
      %5696 = vmatprep.subr.bf16.mxu0 0
      %5697 = vmatpush1.bf16.msra.mxu0 %v3943
      %5698 = vmatprep.subr.bf16.mxu0 0
      %5699 = vmatpush1.bf16.msra.mxu0 %v3944
      %5700 = vmatprep.subr.bf16.mxu0 0
      %5701 = vmatpush1.bf16.msra.mxu0 %v3945
      %5702 = vmatprep.subr.bf16.mxu0 0
      %5703 = vmatpush1.bf16.msra.mxu0 %v3946
      %5704 = vmatprep.subr.bf16.mxu0 0
      %5705 = vmatpush1.bf16.msra.mxu0 %v3947
      %5706 = vmatprep.subr.bf16.mxu0 0
      %5707 = vmatpush1.bf16.msra.mxu0 %v3948
      %5708 = vmatprep.subr.bf16.mxu0 0
      %5709 = vmatpush1.bf16.msra.mxu0 %v3949
      %5710 = vmatprep.subr.bf16.mxu0 0
      %5711 = vmatpush1.bf16.msra.mxu0 0
      %5712 = vmatprep.subr.bf16.mxu0 0
      %5713 = vmatpush1.bf16.msra.mxu0 0
      %5714 = vmatprep.subr.bf16.mxu0 0
      %5715 = vmatpush1.bf16.msra.mxu0 0
      %5716 = vmatprep.subr.bf16.mxu0 0
      %5717 = vmatpush1.bf16.msra.mxu0 0
      %5718 = vmatprep.subr.bf16.mxu0 0
      %5719 = vmatpush1.bf16.msra.mxu0 0
      %5720 = vmatprep.subr.bf16.mxu0 0
      %5721 = vmatpush1.bf16.msra.mxu0 0
      %5722 = vmatprep.subr.bf16.mxu0 0
      %5723 = vmatpush1.bf16.msra.mxu0 0
      %5724 = vmatprep.subr.bf16.mxu0 0
      %5725 = vmatpush1.bf16.msra.mxu0 0
      %5726 = vmatprep.mubr.bf16.mxu0 0
      %5727 = vmatmul.mubr.bf16.gmra.mrb[0].mxu0 %v2282
      %v5728 = vpop.f32.mrb[0].mxu0
      %v5729 = vadd.f32 0.0, %v5728
      %v5730 = vpop.f32.mrb[0].mxu0
      %v5731 = vpop.f32.mrb[0].mxu0
      %v5732 = vadd.f32 0.0, %v5731
      %v5733 = vpop.f32.mrb[0].mxu0
      %5734 = vmatprep.mubr.bf16.mxu0 0
      %5735 = vmatmul.mubr.bf16.gmra.mrb[0].mxu0 %v2286
      %v5736 = vpop.f32.mrb[0].mxu0
      %v5737 = vadd.f32 0.0, %v5736
      %v5738 = vpop.f32.mrb[0].mxu0
      %v5739 = vpop.f32.mrb[0].mxu0
      %v5740 = vadd.f32 0.0, %v5739
      %v5741 = vpop.f32.mrb[0].mxu0
      %5742 = vdwg.mxu0
      %5743 = vmatprep.subr.bf16.mxu0 0
      %5744 = vmatpush1.bf16.msra.mxu0 %v4039
      %5745 = vmatprep.subr.bf16.mxu0 0
      %5746 = vmatpush1.bf16.msra.mxu0 %v4040
      %5747 = vmatprep.subr.bf16.mxu0 0
      %5748 = vmatpush1.bf16.msra.mxu0 %v4041
      %5749 = vmatprep.subr.bf16.mxu0 0
      %5750 = vmatpush1.bf16.msra.mxu0 %v4042
      %5751 = vmatprep.subr.bf16.mxu0 0
      %5752 = vmatpush1.bf16.msra.mxu0 %v4043
      %5753 = vmatprep.subr.bf16.mxu0 0
      %5754 = vmatpush1.bf16.msra.mxu0 %v4044
      %5755 = vmatprep.subr.bf16.mxu0 0
      %5756 = vmatpush1.bf16.msra.mxu0 %v4045
      %5757 = vmatprep.subr.bf16.mxu0 0
      %5758 = vmatpush1.bf16.msra.mxu0 %v4046
      %5759 = vmatprep.subr.bf16.mxu0 0
      %5760 = vmatpush1.bf16.msra.mxu0 0
      %5761 = vmatprep.subr.bf16.mxu0 0
      %5762 = vmatpush1.bf16.msra.mxu0 0
      %5763 = vmatprep.subr.bf16.mxu0 0
      %5764 = vmatpush1.bf16.msra.mxu0 0
      %5765 = vmatprep.subr.bf16.mxu0 0
      %5766 = vmatpush1.bf16.msra.mxu0 0
      %5767 = vmatprep.subr.bf16.mxu0 0
      %5768 = vmatpush1.bf16.msra.mxu0 0
      %5769 = vmatprep.subr.bf16.mxu0 0
      %5770 = vmatpush1.bf16.msra.mxu0 0
      %5771 = vmatprep.subr.bf16.mxu0 0
      %5772 = vmatpush1.bf16.msra.mxu0 0
      %5773 = vmatprep.subr.bf16.mxu0 0
      %5774 = vmatpush1.bf16.msra.mxu0 0
      %5775 = vmatprep.mubr.bf16.mxu0 0
      %5776 = vmatmul.mubr.bf16.gmra.mrb[0].mxu0 %v2290
      %v5777 = vpop.f32.mrb[0].mxu0
      %v5778 = vadd.f32 0.0, %v5777
      %v5779 = vpop.f32.mrb[0].mxu0
      %v5780 = vpop.f32.mrb[0].mxu0
      %v5781 = vadd.f32 0.0, %v5780
      %v5782 = vpop.f32.mrb[0].mxu0
      %5783 = vmatprep.mubr.bf16.mxu0 0
      %5784 = vmatmul.mubr.bf16.gmra.mrb[0].mxu0 %v2294
      %v5785 = vpop.f32.mrb[0].mxu0
      %v5786 = vadd.f32 0.0, %v5785
      %v5787 = vpop.f32.mrb[0].mxu0
      %v5788 = vpop.f32.mrb[0].mxu0
      %v5789 = vadd.f32 0.0, %v5788
      %v5790 = vpop.f32.mrb[0].mxu0
      %5791 = vdwg.mxu0
      %v5792 = vadd.f32 %v5043, %v5092
      %v5793 = vadd.f32 %v5792, %v5141
      %v5794 = vadd.f32 %v5793, %v5190
      %v5795 = vadd.f32 %v5794, %v5239
      %v5796 = vadd.f32 %v5795, %v5288
      %v5797 = vadd.f32 %v5796, %v5337
      %v5798 = vadd.f32 %v5797, %v5386
      %v5799 = vadd.f32 %v5798, %v5435
      %v5800 = vadd.f32 %v5799, %v5484
      %v5801 = vadd.f32 %v5800, %v5533
      %v5802 = vadd.f32 %v5801, %v5582
      %v5803 = vadd.f32 %v5802, %v5631
      %v5804 = vadd.f32 %v5803, %v5680
      %v5805 = vadd.f32 %v5804, %v5729
      %v5806 = vadd.f32 %v5805, %v5778
      %v5807 = vadd.f32 %v5046, %v5095
      %v5808 = vadd.f32 %v5807, %v5144
      %v5809 = vadd.f32 %v5808, %v5193
      %v5810 = vadd.f32 %v5809, %v5242
      %v5811 = vadd.f32 %v5810, %v5291
      %v5812 = vadd.f32 %v5811, %v5340
      %v5813 = vadd.f32 %v5812, %v5389
      %v5814 = vadd.f32 %v5813, %v5438
      %v5815 = vadd.f32 %v5814, %v5487
      %v5816 = vadd.f32 %v5815, %v5536
      %v5817 = vadd.f32 %v5816, %v5585
      %v5818 = vadd.f32 %v5817, %v5634
      %v5819 = vadd.f32 %v5818, %v5683
      %v5820 = vadd.f32 %v5819, %v5732
      %v5821 = vadd.f32 %v5820, %v5781
      %v5822 = vadd.f32 %v5051, %v5100
      %v5823 = vadd.f32 %v5822, %v5149
      %v5824 = vadd.f32 %v5823, %v5198
      %v5825 = vadd.f32 %v5824, %v5247
      %v5826 = vadd.f32 %v5825, %v5296
      %v5827 = vadd.f32 %v5826, %v5345
      %v5828 = vadd.f32 %v5827, %v5394
      %v5829 = vadd.f32 %v5828, %v5443
      %v5830 = vadd.f32 %v5829, %v5492
      %v5831 = vadd.f32 %v5830, %v5541
      %v5832 = vadd.f32 %v5831, %v5590
      %v5833 = vadd.f32 %v5832, %v5639
      %v5834 = vadd.f32 %v5833, %v5688
      %v5835 = vadd.f32 %v5834, %v5737
      %v5836 = vadd.f32 %v5835, %v5786
      %v5837 = vadd.f32 %v5054, %v5103
      %v5838 = vadd.f32 %v5837, %v5152
      %v5839 = vadd.f32 %v5838, %v5201
      %v5840 = vadd.f32 %v5839, %v5250
      %v5841 = vadd.f32 %v5840, %v5299
      %v5842 = vadd.f32 %v5841, %v5348
      %v5843 = vadd.f32 %v5842, %v5397
      %v5844 = vadd.f32 %v5843, %v5446
      %v5845 = vadd.f32 %v5844, %v5495
      %v5846 = vadd.f32 %v5845, %v5544
      %v5847 = vadd.f32 %v5846, %v5593
      %v5848 = vadd.f32 %v5847, %v5642
      %v5849 = vadd.f32 %v5848, %v5691
      %v5850 = vadd.f32 %v5849, %v5740
      %v5851 = vadd.f32 %v5850, %v5789
      %5852 = vmatprep.subr.bf16.mxu0 0
      %5853 = vmatpush1.bf16.msra.mxu0 %v2584
      %5854 = vmatprep.subr.bf16.mxu0 0
      %5855 = vmatpush1.bf16.msra.mxu0 %v2585
      %5856 = vmatprep.subr.bf16.mxu0 0
      %5857 = vmatpush1.bf16.msra.mxu0 %v2586
      %5858 = vmatprep.subr.bf16.mxu0 0
      %5859 = vmatpush1.bf16.msra.mxu0 %v2587
      %5860 = vmatprep.subr.bf16.mxu0 0
      %5861 = vmatpush1.bf16.msra.mxu0 %v2588
      %5862 = vmatprep.subr.bf16.mxu0 0
      %5863 = vmatpush1.bf16.msra.mxu0 %v2589
      %5864 = vmatprep.subr.bf16.mxu0 0
      %5865 = vmatpush1.bf16.msra.mxu0 %v2590
      %5866 = vmatprep.subr.bf16.mxu0 0
      %5867 = vmatpush1.bf16.msra.mxu0 %v2591
      %5868 = vmatprep.subr.bf16.mxu0 0
      %5869 = vmatpush1.bf16.msra.mxu0 0
      %5870 = vmatprep.subr.bf16.mxu0 0
      %5871 = vmatpush1.bf16.msra.mxu0 0
      %5872 = vmatprep.subr.bf16.mxu0 0
      %5873 = vmatpush1.bf16.msra.mxu0 0
      %5874 = vmatprep.subr.bf16.mxu0 0
      %5875 = vmatpush1.bf16.msra.mxu0 0
      %5876 = vmatprep.subr.bf16.mxu0 0
      %5877 = vmatpush1.bf16.msra.mxu0 0
      %5878 = vmatprep.subr.bf16.mxu0 0
      %5879 = vmatpush1.bf16.msra.mxu0 0
      %5880 = vmatprep.subr.bf16.mxu0 0
      %5881 = vmatpush1.bf16.msra.mxu0 0
      %5882 = vmatprep.subr.bf16.mxu0 0
      %5883 = vmatpush1.bf16.msra.mxu0 0
      %5884 = vmatprep.mubr.bf16.mxu0 0
      %5885 = vmatmul.mubr.bf16.gmra.mrb[0].mxu0 %v2171
      %v5886 = vpop.f32.mrb[0].mxu0
      %v5887 = vadd.f32 0.0, %v5886
      %v5888 = vpop.f32.mrb[0].mxu0
      %v5889 = vpop.f32.mrb[0].mxu0
      %v5890 = vadd.f32 0.0, %v5889
      %v5891 = vpop.f32.mrb[0].mxu0
      %5892 = vmatprep.mubr.bf16.mxu0 0
      %5893 = vmatmul.mubr.bf16.gmra.mrb[0].mxu0 %v2175
      %v5894 = vpop.f32.mrb[0].mxu0
      %v5895 = vadd.f32 0.0, %v5894
      %v5896 = vpop.f32.mrb[0].mxu0
      %v5897 = vpop.f32.mrb[0].mxu0
      %v5898 = vadd.f32 0.0, %v5897
      %v5899 = vpop.f32.mrb[0].mxu0
      %5900 = vdwg.mxu0
      %5901 = vmatprep.subr.bf16.mxu0 0
      %5902 = vmatpush1.bf16.msra.mxu0 %v2681
      %5903 = vmatprep.subr.bf16.mxu0 0
      %5904 = vmatpush1.bf16.msra.mxu0 %v2682
      %5905 = vmatprep.subr.bf16.mxu0 0
      %5906 = vmatpush1.bf16.msra.mxu0 %v2683
      %5907 = vmatprep.subr.bf16.mxu0 0
      %5908 = vmatpush1.bf16.msra.mxu0 %v2684
      %5909 = vmatprep.subr.bf16.mxu0 0
      %5910 = vmatpush1.bf16.msra.mxu0 %v2685
      %5911 = vmatprep.subr.bf16.mxu0 0
      %5912 = vmatpush1.bf16.msra.mxu0 %v2686
      %5913 = vmatprep.subr.bf16.mxu0 0
      %5914 = vmatpush1.bf16.msra.mxu0 %v2687
      %5915 = vmatprep.subr.bf16.mxu0 0
      %5916 = vmatpush1.bf16.msra.mxu0 %v2688
      %5917 = vmatprep.subr.bf16.mxu0 0
      %5918 = vmatpush1.bf16.msra.mxu0 0
      %5919 = vmatprep.subr.bf16.mxu0 0
      %5920 = vmatpush1.bf16.msra.mxu0 0
      %5921 = vmatprep.subr.bf16.mxu0 0
      %5922 = vmatpush1.bf16.msra.mxu0 0
      %5923 = vmatprep.subr.bf16.mxu0 0
      %5924 = vmatpush1.bf16.msra.mxu0 0
      %5925 = vmatprep.subr.bf16.mxu0 0
      %5926 = vmatpush1.bf16.msra.mxu0 0
      %5927 = vmatprep.subr.bf16.mxu0 0
      %5928 = vmatpush1.bf16.msra.mxu0 0
      %5929 = vmatprep.subr.bf16.mxu0 0
      %5930 = vmatpush1.bf16.msra.mxu0 0
      %5931 = vmatprep.subr.bf16.mxu0 0
      %5932 = vmatpush1.bf16.msra.mxu0 0
      %5933 = vmatprep.mubr.bf16.mxu0 0
      %5934 = vmatmul.mubr.bf16.gmra.mrb[0].mxu0 %v2179
      %v5935 = vpop.f32.mrb[0].mxu0
      %v5936 = vadd.f32 0.0, %v5935
      %v5937 = vpop.f32.mrb[0].mxu0
      %v5938 = vpop.f32.mrb[0].mxu0
      %v5939 = vadd.f32 0.0, %v5938
      %v5940 = vpop.f32.mrb[0].mxu0
      %5941 = vmatprep.mubr.bf16.mxu0 0
      %5942 = vmatmul.mubr.bf16.gmra.mrb[0].mxu0 %v2183
      %v5943 = vpop.f32.mrb[0].mxu0
      %v5944 = vadd.f32 0.0, %v5943
      %v5945 = vpop.f32.mrb[0].mxu0
      %v5946 = vpop.f32.mrb[0].mxu0
      %v5947 = vadd.f32 0.0, %v5946
      %v5948 = vpop.f32.mrb[0].mxu0
      %5949 = vdwg.mxu0
      %5950 = vmatprep.subr.bf16.mxu0 0
      %5951 = vmatpush1.bf16.msra.mxu0 %v2778
      %5952 = vmatprep.subr.bf16.mxu0 0
      %5953 = vmatpush1.bf16.msra.mxu0 %v2779
      %5954 = vmatprep.subr.bf16.mxu0 0
      %5955 = vmatpush1.bf16.msra.mxu0 %v2780
      %5956 = vmatprep.subr.bf16.mxu0 0
      %5957 = vmatpush1.bf16.msra.mxu0 %v2781
      %5958 = vmatprep.subr.bf16.mxu0 0
      %5959 = vmatpush1.bf16.msra.mxu0 %v2782
      %5960 = vmatprep.subr.bf16.mxu0 0
      %5961 = vmatpush1.bf16.msra.mxu0 %v2783
      %5962 = vmatprep.subr.bf16.mxu0 0
      %5963 = vmatpush1.bf16.msra.mxu0 %v2784
      %5964 = vmatprep.subr.bf16.mxu0 0
      %5965 = vmatpush1.bf16.msra.mxu0 %v2785
      %5966 = vmatprep.subr.bf16.mxu0 0
      %5967 = vmatpush1.bf16.msra.mxu0 0
      %5968 = vmatprep.subr.bf16.mxu0 0
      %5969 = vmatpush1.bf16.msra.mxu0 0
      %5970 = vmatprep.subr.bf16.mxu0 0
      %5971 = vmatpush1.bf16.msra.mxu0 0
      %5972 = vmatprep.subr.bf16.mxu0 0
      %5973 = vmatpush1.bf16.msra.mxu0 0
      %5974 = vmatprep.subr.bf16.mxu0 0
      %5975 = vmatpush1.bf16.msra.mxu0 0
      %5976 = vmatprep.subr.bf16.mxu0 0
      %5977 = vmatpush1.bf16.msra.mxu0 0
      %5978 = vmatprep.subr.bf16.mxu0 0
      %5979 = vmatpush1.bf16.msra.mxu0 0
      %5980 = vmatprep.subr.bf16.mxu0 0
      %5981 = vmatpush1.bf16.msra.mxu0 0
      %5982 = vmatprep.mubr.bf16.mxu0 0
      %5983 = vmatmul.mubr.bf16.gmra.mrb[0].mxu0 %v2187
      %v5984 = vpop.f32.mrb[0].mxu0
      %v5985 = vadd.f32 0.0, %v5984
      %v5986 = vpop.f32.mrb[0].mxu0
      %v5987 = vpop.f32.mrb[0].mxu0
      %v5988 = vadd.f32 0.0, %v5987
      %v5989 = vpop.f32.mrb[0].mxu0
      %5990 = vmatprep.mubr.bf16.mxu0 0
      %5991 = vmatmul.mubr.bf16.gmra.mrb[0].mxu0 %v2191
      %v5992 = vpop.f32.mrb[0].mxu0
      %v5993 = vadd.f32 0.0, %v5992
      %v5994 = vpop.f32.mrb[0].mxu0
      %v5995 = vpop.f32.mrb[0].mxu0
      %v5996 = vadd.f32 0.0, %v5995
      %v5997 = vpop.f32.mrb[0].mxu0
      %5998 = vdwg.mxu0
      %5999 = vmatprep.subr.bf16.mxu0 0
      %6000 = vmatpush1.bf16.msra.mxu0 %v2875
      %6001 = vmatprep.subr.bf16.mxu0 0
      %6002 = vmatpush1.bf16.msra.mxu0 %v2876
      %6003 = vmatprep.subr.bf16.mxu0 0
      %6004 = vmatpush1.bf16.msra.mxu0 %v2877
      %6005 = vmatprep.subr.bf16.mxu0 0
      %6006 = vmatpush1.bf16.msra.mxu0 %v2878
      %6007 = vmatprep.subr.bf16.mxu0 0
      %6008 = vmatpush1.bf16.msra.mxu0 %v2879
      %6009 = vmatprep.subr.bf16.mxu0 0
      %6010 = vmatpush1.bf16.msra.mxu0 %v2880
      %6011 = vmatprep.subr.bf16.mxu0 0
      %6012 = vmatpush1.bf16.msra.mxu0 %v2881
      %6013 = vmatprep.subr.bf16.mxu0 0
      %6014 = vmatpush1.bf16.msra.mxu0 %v2882
      %6015 = vmatprep.subr.bf16.mxu0 0
      %6016 = vmatpush1.bf16.msra.mxu0 0
      %6017 = vmatprep.subr.bf16.mxu0 0
      %6018 = vmatpush1.bf16.msra.mxu0 0
      %6019 = vmatprep.subr.bf16.mxu0 0
      %6020 = vmatpush1.bf16.msra.mxu0 0
      %6021 = vmatprep.subr.bf16.mxu0 0
      %6022 = vmatpush1.bf16.msra.mxu0 0
      %6023 = vmatprep.subr.bf16.mxu0 0
      %6024 = vmatpush1.bf16.msra.mxu0 0
      %6025 = vmatprep.subr.bf16.mxu0 0
      %6026 = vmatpush1.bf16.msra.mxu0 0
      %6027 = vmatprep.subr.bf16.mxu0 0
      %6028 = vmatpush1.bf16.msra.mxu0 0
      %6029 = vmatprep.subr.bf16.mxu0 0
      %6030 = vmatpush1.bf16.msra.mxu0 0
      %6031 = vmatprep.mubr.bf16.mxu0 0
      %6032 = vmatmul.mubr.bf16.gmra.mrb[0].mxu0 %v2195
      %v6033 = vpop.f32.mrb[0].mxu0
      %v6034 = vadd.f32 0.0, %v6033
      %v6035 = vpop.f32.mrb[0].mxu0
      %v6036 = vpop.f32.mrb[0].mxu0
      %v6037 = vadd.f32 0.0, %v6036
      %v6038 = vpop.f32.mrb[0].mxu0
      %6039 = vmatprep.mubr.bf16.mxu0 0
      %6040 = vmatmul.mubr.bf16.gmra.mrb[0].mxu0 %v2199
      %v6041 = vpop.f32.mrb[0].mxu0
      %v6042 = vadd.f32 0.0, %v6041
      %v6043 = vpop.f32.mrb[0].mxu0
      %v6044 = vpop.f32.mrb[0].mxu0
      %v6045 = vadd.f32 0.0, %v6044
      %v6046 = vpop.f32.mrb[0].mxu0
      %6047 = vdwg.mxu0
      %6048 = vmatprep.subr.bf16.mxu0 0
      %6049 = vmatpush1.bf16.msra.mxu0 %v2972
      %6050 = vmatprep.subr.bf16.mxu0 0
      %6051 = vmatpush1.bf16.msra.mxu0 %v2973
      %6052 = vmatprep.subr.bf16.mxu0 0
      %6053 = vmatpush1.bf16.msra.mxu0 %v2974
      %6054 = vmatprep.subr.bf16.mxu0 0
      %6055 = vmatpush1.bf16.msra.mxu0 %v2975
      %6056 = vmatprep.subr.bf16.mxu0 0
      %6057 = vmatpush1.bf16.msra.mxu0 %v2976
      %6058 = vmatprep.subr.bf16.mxu0 0
      %6059 = vmatpush1.bf16.msra.mxu0 %v2977
      %6060 = vmatprep.subr.bf16.mxu0 0
      %6061 = vmatpush1.bf16.msra.mxu0 %v2978
      %6062 = vmatprep.subr.bf16.mxu0 0
      %6063 = vmatpush1.bf16.msra.mxu0 %v2979
      %6064 = vmatprep.subr.bf16.mxu0 0
      %6065 = vmatpush1.bf16.msra.mxu0 0
      %6066 = vmatprep.subr.bf16.mxu0 0
      %6067 = vmatpush1.bf16.msra.mxu0 0
      %6068 = vmatprep.subr.bf16.mxu0 0
      %6069 = vmatpush1.bf16.msra.mxu0 0
      %6070 = vmatprep.subr.bf16.mxu0 0
      %6071 = vmatpush1.bf16.msra.mxu0 0
      %6072 = vmatprep.subr.bf16.mxu0 0
      %6073 = vmatpush1.bf16.msra.mxu0 0
      %6074 = vmatprep.subr.bf16.mxu0 0
      %6075 = vmatpush1.bf16.msra.mxu0 0
      %6076 = vmatprep.subr.bf16.mxu0 0
      %6077 = vmatpush1.bf16.msra.mxu0 0
      %6078 = vmatprep.subr.bf16.mxu0 0
      %6079 = vmatpush1.bf16.msra.mxu0 0
      %6080 = vmatprep.mubr.bf16.mxu0 0
      %6081 = vmatmul.mubr.bf16.gmra.mrb[0].mxu0 %v2203
      %v6082 = vpop.f32.mrb[0].mxu0
      %v6083 = vadd.f32 0.0, %v6082
      %v6084 = vpop.f32.mrb[0].mxu0
      %v6085 = vpop.f32.mrb[0].mxu0
      %v6086 = vadd.f32 0.0, %v6085
      %v6087 = vpop.f32.mrb[0].mxu0
      %6088 = vmatprep.mubr.bf16.mxu0 0
      %6089 = vmatmul.mubr.bf16.gmra.mrb[0].mxu0 %v2207
      %v6090 = vpop.f32.mrb[0].mxu0
      %v6091 = vadd.f32 0.0, %v6090
      %v6092 = vpop.f32.mrb[0].mxu0
      %v6093 = vpop.f32.mrb[0].mxu0
      %v6094 = vadd.f32 0.0, %v6093
      %v6095 = vpop.f32.mrb[0].mxu0
      %6096 = vdwg.mxu0
      %6097 = vmatprep.subr.bf16.mxu0 0
      %6098 = vmatpush1.bf16.msra.mxu0 %v3069
      %6099 = vmatprep.subr.bf16.mxu0 0
      %6100 = vmatpush1.bf16.msra.mxu0 %v3070
      %6101 = vmatprep.subr.bf16.mxu0 0
      %6102 = vmatpush1.bf16.msra.mxu0 %v3071
      %6103 = vmatprep.subr.bf16.mxu0 0
      %6104 = vmatpush1.bf16.msra.mxu0 %v3072
      %6105 = vmatprep.subr.bf16.mxu0 0
      %6106 = vmatpush1.bf16.msra.mxu0 %v3073
      %6107 = vmatprep.subr.bf16.mxu0 0
      %6108 = vmatpush1.bf16.msra.mxu0 %v3074
      %6109 = vmatprep.subr.bf16.mxu0 0
      %6110 = vmatpush1.bf16.msra.mxu0 %v3075
      %6111 = vmatprep.subr.bf16.mxu0 0
      %6112 = vmatpush1.bf16.msra.mxu0 %v3076
      %6113 = vmatprep.subr.bf16.mxu0 0
      %6114 = vmatpush1.bf16.msra.mxu0 0
      %6115 = vmatprep.subr.bf16.mxu0 0
      %6116 = vmatpush1.bf16.msra.mxu0 0
      %6117 = vmatprep.subr.bf16.mxu0 0
      %6118 = vmatpush1.bf16.msra.mxu0 0
      %6119 = vmatprep.subr.bf16.mxu0 0
      %6120 = vmatpush1.bf16.msra.mxu0 0
      %6121 = vmatprep.subr.bf16.mxu0 0
      %6122 = vmatpush1.bf16.msra.mxu0 0
      %6123 = vmatprep.subr.bf16.mxu0 0
      %6124 = vmatpush1.bf16.msra.mxu0 0
      %6125 = vmatprep.subr.bf16.mxu0 0
      %6126 = vmatpush1.bf16.msra.mxu0 0
      %6127 = vmatprep.subr.bf16.mxu0 0
      %6128 = vmatpush1.bf16.msra.mxu0 0
      %6129 = vmatprep.mubr.bf16.mxu0 0
      %6130 = vmatmul.mubr.bf16.gmra.mrb[0].mxu0 %v2211
      %v6131 = vpop.f32.mrb[0].mxu0
      %v6132 = vadd.f32 0.0, %v6131
      %v6133 = vpop.f32.mrb[0].mxu0
      %v6134 = vpop.f32.mrb[0].mxu0
      %v6135 = vadd.f32 0.0, %v6134
      %v6136 = vpop.f32.mrb[0].mxu0
      %6137 = vmatprep.mubr.bf16.mxu0 0
      %6138 = vmatmul.mubr.bf16.gmra.mrb[0].mxu0 %v2215
      %v6139 = vpop.f32.mrb[0].mxu0
      %v6140 = vadd.f32 0.0, %v6139
      %v6141 = vpop.f32.mrb[0].mxu0
      %v6142 = vpop.f32.mrb[0].mxu0
      %v6143 = vadd.f32 0.0, %v6142
      %v6144 = vpop.f32.mrb[0].mxu0
      %6145 = vdwg.mxu0
      %6146 = vmatprep.subr.bf16.mxu0 0
      %6147 = vmatpush1.bf16.msra.mxu0 %v3166
      %6148 = vmatprep.subr.bf16.mxu0 0
      %6149 = vmatpush1.bf16.msra.mxu0 %v3167
      %6150 = vmatprep.subr.bf16.mxu0 0
      %6151 = vmatpush1.bf16.msra.mxu0 %v3168
      %6152 = vmatprep.subr.bf16.mxu0 0
      %6153 = vmatpush1.bf16.msra.mxu0 %v3169
      %6154 = vmatprep.subr.bf16.mxu0 0
      %6155 = vmatpush1.bf16.msra.mxu0 %v3170
      %6156 = vmatprep.subr.bf16.mxu0 0
      %6157 = vmatpush1.bf16.msra.mxu0 %v3171
      %6158 = vmatprep.subr.bf16.mxu0 0
      %6159 = vmatpush1.bf16.msra.mxu0 %v3172
      %6160 = vmatprep.subr.bf16.mxu0 0
      %6161 = vmatpush1.bf16.msra.mxu0 %v3173
      %6162 = vmatprep.subr.bf16.mxu0 0
      %6163 = vmatpush1.bf16.msra.mxu0 0
      %6164 = vmatprep.subr.bf16.mxu0 0
      %6165 = vmatpush1.bf16.msra.mxu0 0
      %6166 = vmatprep.subr.bf16.mxu0 0
      %6167 = vmatpush1.bf16.msra.mxu0 0
      %6168 = vmatprep.subr.bf16.mxu0 0
      %6169 = vmatpush1.bf16.msra.mxu0 0
      %6170 = vmatprep.subr.bf16.mxu0 0
      %6171 = vmatpush1.bf16.msra.mxu0 0
      %6172 = vmatprep.subr.bf16.mxu0 0
      %6173 = vmatpush1.bf16.msra.mxu0 0
      %6174 = vmatprep.subr.bf16.mxu0 0
      %6175 = vmatpush1.bf16.msra.mxu0 0
      %6176 = vmatprep.subr.bf16.mxu0 0
      %6177 = vmatpush1.bf16.msra.mxu0 0
      %6178 = vmatprep.mubr.bf16.mxu0 0
      %6179 = vmatmul.mubr.bf16.gmra.mrb[0].mxu0 %v2219
      %v6180 = vpop.f32.mrb[0].mxu0
      %v6181 = vadd.f32 0.0, %v6180
      %v6182 = vpop.f32.mrb[0].mxu0
      %v6183 = vpop.f32.mrb[0].mxu0
      %v6184 = vadd.f32 0.0, %v6183
      %v6185 = vpop.f32.mrb[0].mxu0
      %6186 = vmatprep.mubr.bf16.mxu0 0
      %6187 = vmatmul.mubr.bf16.gmra.mrb[0].mxu0 %v2223
      %v6188 = vpop.f32.mrb[0].mxu0
      %v6189 = vadd.f32 0.0, %v6188
      %v6190 = vpop.f32.mrb[0].mxu0
      %v6191 = vpop.f32.mrb[0].mxu0
      %v6192 = vadd.f32 0.0, %v6191
      %v6193 = vpop.f32.mrb[0].mxu0
      %6194 = vdwg.mxu0
      %6195 = vmatprep.subr.bf16.mxu0 0
      %6196 = vmatpush1.bf16.msra.mxu0 %v3263
      %6197 = vmatprep.subr.bf16.mxu0 0
      %6198 = vmatpush1.bf16.msra.mxu0 %v3264
      %6199 = vmatprep.subr.bf16.mxu0 0
      %6200 = vmatpush1.bf16.msra.mxu0 %v3265
      %6201 = vmatprep.subr.bf16.mxu0 0
      %6202 = vmatpush1.bf16.msra.mxu0 %v3266
      %6203 = vmatprep.subr.bf16.mxu0 0
      %6204 = vmatpush1.bf16.msra.mxu0 %v3267
      %6205 = vmatprep.subr.bf16.mxu0 0
      %6206 = vmatpush1.bf16.msra.mxu0 %v3268
      %6207 = vmatprep.subr.bf16.mxu0 0
      %6208 = vmatpush1.bf16.msra.mxu0 %v3269
      %6209 = vmatprep.subr.bf16.mxu0 0
      %6210 = vmatpush1.bf16.msra.mxu0 %v3270
      %6211 = vmatprep.subr.bf16.mxu0 0
      %6212 = vmatpush1.bf16.msra.mxu0 0
      %6213 = vmatprep.subr.bf16.mxu0 0
      %6214 = vmatpush1.bf16.msra.mxu0 0
      %6215 = vmatprep.subr.bf16.mxu0 0
      %6216 = vmatpush1.bf16.msra.mxu0 0
      %6217 = vmatprep.subr.bf16.mxu0 0
      %6218 = vmatpush1.bf16.msra.mxu0 0
      %6219 = vmatprep.subr.bf16.mxu0 0
      %6220 = vmatpush1.bf16.msra.mxu0 0
      %6221 = vmatprep.subr.bf16.mxu0 0
      %6222 = vmatpush1.bf16.msra.mxu0 0
      %6223 = vmatprep.subr.bf16.mxu0 0
      %6224 = vmatpush1.bf16.msra.mxu0 0
      %6225 = vmatprep.subr.bf16.mxu0 0
      %6226 = vmatpush1.bf16.msra.mxu0 0
      %6227 = vmatprep.mubr.bf16.mxu0 0
      %6228 = vmatmul.mubr.bf16.gmra.mrb[0].mxu0 %v2227
      %v6229 = vpop.f32.mrb[0].mxu0
      %v6230 = vadd.f32 0.0, %v6229
      %v6231 = vpop.f32.mrb[0].mxu0
      %v6232 = vpop.f32.mrb[0].mxu0
      %v6233 = vadd.f32 0.0, %v6232
      %v6234 = vpop.f32.mrb[0].mxu0
      %6235 = vmatprep.mubr.bf16.mxu0 0
      %6236 = vmatmul.mubr.bf16.gmra.mrb[0].mxu0 %v2231
      %v6237 = vpop.f32.mrb[0].mxu0
      %v6238 = vadd.f32 0.0, %v6237
      %v6239 = vpop.f32.mrb[0].mxu0
      %v6240 = vpop.f32.mrb[0].mxu0
      %v6241 = vadd.f32 0.0, %v6240
      %v6242 = vpop.f32.mrb[0].mxu0
      %6243 = vdwg.mxu0
      %6244 = vmatprep.subr.bf16.mxu0 0
      %6245 = vmatpush1.bf16.msra.mxu0 %v3360
      %6246 = vmatprep.subr.bf16.mxu0 0
      %6247 = vmatpush1.bf16.msra.mxu0 %v3361
      %6248 = vmatprep.subr.bf16.mxu0 0
      %6249 = vmatpush1.bf16.msra.mxu0 %v3362
      %6250 = vmatprep.subr.bf16.mxu0 0
      %6251 = vmatpush1.bf16.msra.mxu0 %v3363
      %6252 = vmatprep.subr.bf16.mxu0 0
      %6253 = vmatpush1.bf16.msra.mxu0 %v3364
      %6254 = vmatprep.subr.bf16.mxu0 0
      %6255 = vmatpush1.bf16.msra.mxu0 %v3365
      %6256 = vmatprep.subr.bf16.mxu0 0
      %6257 = vmatpush1.bf16.msra.mxu0 %v3366
      %6258 = vmatprep.subr.bf16.mxu0 0
      %6259 = vmatpush1.bf16.msra.mxu0 %v3367
      %6260 = vmatprep.subr.bf16.mxu0 0
      %6261 = vmatpush1.bf16.msra.mxu0 0
      %6262 = vmatprep.subr.bf16.mxu0 0
      %6263 = vmatpush1.bf16.msra.mxu0 0
      %6264 = vmatprep.subr.bf16.mxu0 0
      %6265 = vmatpush1.bf16.msra.mxu0 0
      %6266 = vmatprep.subr.bf16.mxu0 0
      %6267 = vmatpush1.bf16.msra.mxu0 0
      %6268 = vmatprep.subr.bf16.mxu0 0
      %6269 = vmatpush1.bf16.msra.mxu0 0
      %6270 = vmatprep.subr.bf16.mxu0 0
      %6271 = vmatpush1.bf16.msra.mxu0 0
      %6272 = vmatprep.subr.bf16.mxu0 0
      %6273 = vmatpush1.bf16.msra.mxu0 0
      %6274 = vmatprep.subr.bf16.mxu0 0
      %6275 = vmatpush1.bf16.msra.mxu0 0
      %6276 = vmatprep.mubr.bf16.mxu0 0
      %6277 = vmatmul.mubr.bf16.gmra.mrb[0].mxu0 %v2235
      %v6278 = vpop.f32.mrb[0].mxu0
      %v6279 = vadd.f32 0.0, %v6278
      %v6280 = vpop.f32.mrb[0].mxu0
      %v6281 = vpop.f32.mrb[0].mxu0
      %v6282 = vadd.f32 0.0, %v6281
      %v6283 = vpop.f32.mrb[0].mxu0
      %6284 = vmatprep.mubr.bf16.mxu0 0
      %6285 = vmatmul.mubr.bf16.gmra.mrb[0].mxu0 %v2239
      %v6286 = vpop.f32.mrb[0].mxu0
      %v6287 = vadd.f32 0.0, %v6286
      %v6288 = vpop.f32.mrb[0].mxu0
      %v6289 = vpop.f32.mrb[0].mxu0
      %v6290 = vadd.f32 0.0, %v6289
      %v6291 = vpop.f32.mrb[0].mxu0
      %6292 = vdwg.mxu0
      %6293 = vmatprep.subr.bf16.mxu0 0
      %6294 = vmatpush1.bf16.msra.mxu0 %v3457
      %6295 = vmatprep.subr.bf16.mxu0 0
      %6296 = vmatpush1.bf16.msra.mxu0 %v3458
      %6297 = vmatprep.subr.bf16.mxu0 0
      %6298 = vmatpush1.bf16.msra.mxu0 %v3459
      %6299 = vmatprep.subr.bf16.mxu0 0
      %6300 = vmatpush1.bf16.msra.mxu0 %v3460
      %6301 = vmatprep.subr.bf16.mxu0 0
      %6302 = vmatpush1.bf16.msra.mxu0 %v3461
      %6303 = vmatprep.subr.bf16.mxu0 0
      %6304 = vmatpush1.bf16.msra.mxu0 %v3462
      %6305 = vmatprep.subr.bf16.mxu0 0
      %6306 = vmatpush1.bf16.msra.mxu0 %v3463
      %6307 = vmatprep.subr.bf16.mxu0 0
      %6308 = vmatpush1.bf16.msra.mxu0 %v3464
      %6309 = vmatprep.subr.bf16.mxu0 0
      %6310 = vmatpush1.bf16.msra.mxu0 0
      %6311 = vmatprep.subr.bf16.mxu0 0
      %6312 = vmatpush1.bf16.msra.mxu0 0
      %6313 = vmatprep.subr.bf16.mxu0 0
      %6314 = vmatpush1.bf16.msra.mxu0 0
      %6315 = vmatprep.subr.bf16.mxu0 0
      %6316 = vmatpush1.bf16.msra.mxu0 0
      %6317 = vmatprep.subr.bf16.mxu0 0
      %6318 = vmatpush1.bf16.msra.mxu0 0
      %6319 = vmatprep.subr.bf16.mxu0 0
      %6320 = vmatpush1.bf16.msra.mxu0 0
      %6321 = vmatprep.subr.bf16.mxu0 0
      %6322 = vmatpush1.bf16.msra.mxu0 0
      %6323 = vmatprep.subr.bf16.mxu0 0
      %6324 = vmatpush1.bf16.msra.mxu0 0
      %6325 = vmatprep.mubr.bf16.mxu0 0
      %6326 = vmatmul.mubr.bf16.gmra.mrb[0].mxu0 %v2243
      %v6327 = vpop.f32.mrb[0].mxu0
      %v6328 = vadd.f32 0.0, %v6327
      %v6329 = vpop.f32.mrb[0].mxu0
      %v6330 = vpop.f32.mrb[0].mxu0
      %v6331 = vadd.f32 0.0, %v6330
      %v6332 = vpop.f32.mrb[0].mxu0
      %6333 = vmatprep.mubr.bf16.mxu0 0
      %6334 = vmatmul.mubr.bf16.gmra.mrb[0].mxu0 %v2247
      %v6335 = vpop.f32.mrb[0].mxu0
      %v6336 = vadd.f32 0.0, %v6335
      %v6337 = vpop.f32.mrb[0].mxu0
      %v6338 = vpop.f32.mrb[0].mxu0
      %v6339 = vadd.f32 0.0, %v6338
      %v6340 = vpop.f32.mrb[0].mxu0
      %6341 = vdwg.mxu0
      %6342 = vmatprep.subr.bf16.mxu0 0
      %6343 = vmatpush1.bf16.msra.mxu0 %v3554
      %6344 = vmatprep.subr.bf16.mxu0 0
      %6345 = vmatpush1.bf16.msra.mxu0 %v3555
      %6346 = vmatprep.subr.bf16.mxu0 0
      %6347 = vmatpush1.bf16.msra.mxu0 %v3556
      %6348 = vmatprep.subr.bf16.mxu0 0
      %6349 = vmatpush1.bf16.msra.mxu0 %v3557
      %6350 = vmatprep.subr.bf16.mxu0 0
      %6351 = vmatpush1.bf16.msra.mxu0 %v3558
      %6352 = vmatprep.subr.bf16.mxu0 0
      %6353 = vmatpush1.bf16.msra.mxu0 %v3559
      %6354 = vmatprep.subr.bf16.mxu0 0
      %6355 = vmatpush1.bf16.msra.mxu0 %v3560
      %6356 = vmatprep.subr.bf16.mxu0 0
      %6357 = vmatpush1.bf16.msra.mxu0 %v3561
      %6358 = vmatprep.subr.bf16.mxu0 0
      %6359 = vmatpush1.bf16.msra.mxu0 0
      %6360 = vmatprep.subr.bf16.mxu0 0
      %6361 = vmatpush1.bf16.msra.mxu0 0
      %6362 = vmatprep.subr.bf16.mxu0 0
      %6363 = vmatpush1.bf16.msra.mxu0 0
      %6364 = vmatprep.subr.bf16.mxu0 0
      %6365 = vmatpush1.bf16.msra.mxu0 0
      %6366 = vmatprep.subr.bf16.mxu0 0
      %6367 = vmatpush1.bf16.msra.mxu0 0
      %6368 = vmatprep.subr.bf16.mxu0 0
      %6369 = vmatpush1.bf16.msra.mxu0 0
      %6370 = vmatprep.subr.bf16.mxu0 0
      %6371 = vmatpush1.bf16.msra.mxu0 0
      %6372 = vmatprep.subr.bf16.mxu0 0
      %6373 = vmatpush1.bf16.msra.mxu0 0
      %6374 = vmatprep.mubr.bf16.mxu0 0
      %6375 = vmatmul.mubr.bf16.gmra.mrb[0].mxu0 %v2251
      %v6376 = vpop.f32.mrb[0].mxu0
      %v6377 = vadd.f32 0.0, %v6376
      %v6378 = vpop.f32.mrb[0].mxu0
      %v6379 = vpop.f32.mrb[0].mxu0
      %v6380 = vadd.f32 0.0, %v6379
      %v6381 = vpop.f32.mrb[0].mxu0
      %6382 = vmatprep.mubr.bf16.mxu0 0
      %6383 = vmatmul.mubr.bf16.gmra.mrb[0].mxu0 %v2255
      %v6384 = vpop.f32.mrb[0].mxu0
      %v6385 = vadd.f32 0.0, %v6384
      %v6386 = vpop.f32.mrb[0].mxu0
      %v6387 = vpop.f32.mrb[0].mxu0
      %v6388 = vadd.f32 0.0, %v6387
      %v6389 = vpop.f32.mrb[0].mxu0
      %6390 = vdwg.mxu0
      %6391 = vmatprep.subr.bf16.mxu0 0
      %6392 = vmatpush1.bf16.msra.mxu0 %v3651
      %6393 = vmatprep.subr.bf16.mxu0 0
      %6394 = vmatpush1.bf16.msra.mxu0 %v3652
      %6395 = vmatprep.subr.bf16.mxu0 0
      %6396 = vmatpush1.bf16.msra.mxu0 %v3653
      %6397 = vmatprep.subr.bf16.mxu0 0
      %6398 = vmatpush1.bf16.msra.mxu0 %v3654
      %6399 = vmatprep.subr.bf16.mxu0 0
      %6400 = vmatpush1.bf16.msra.mxu0 %v3655
      %6401 = vmatprep.subr.bf16.mxu0 0
      %6402 = vmatpush1.bf16.msra.mxu0 %v3656
      %6403 = vmatprep.subr.bf16.mxu0 0
      %6404 = vmatpush1.bf16.msra.mxu0 %v3657
      %6405 = vmatprep.subr.bf16.mxu0 0
      %6406 = vmatpush1.bf16.msra.mxu0 %v3658
      %6407 = vmatprep.subr.bf16.mxu0 0
      %6408 = vmatpush1.bf16.msra.mxu0 0
      %6409 = vmatprep.subr.bf16.mxu0 0
      %6410 = vmatpush1.bf16.msra.mxu0 0
      %6411 = vmatprep.subr.bf16.mxu0 0
      %6412 = vmatpush1.bf16.msra.mxu0 0
      %6413 = vmatprep.subr.bf16.mxu0 0
      %6414 = vmatpush1.bf16.msra.mxu0 0
      %6415 = vmatprep.subr.bf16.mxu0 0
      %6416 = vmatpush1.bf16.msra.mxu0 0
      %6417 = vmatprep.subr.bf16.mxu0 0
      %6418 = vmatpush1.bf16.msra.mxu0 0
      %6419 = vmatprep.subr.bf16.mxu0 0
      %6420 = vmatpush1.bf16.msra.mxu0 0
      %6421 = vmatprep.subr.bf16.mxu0 0
      %6422 = vmatpush1.bf16.msra.mxu0 0
      %6423 = vmatprep.mubr.bf16.mxu0 0
      %6424 = vmatmul.mubr.bf16.gmra.mrb[0].mxu0 %v2259
      %v6425 = vpop.f32.mrb[0].mxu0
      %v6426 = vadd.f32 0.0, %v6425
      %v6427 = vpop.f32.mrb[0].mxu0
      %v6428 = vpop.f32.mrb[0].mxu0
      %v6429 = vadd.f32 0.0, %v6428
      %v6430 = vpop.f32.mrb[0].mxu0
      %6431 = vmatprep.mubr.bf16.mxu0 0
      %6432 = vmatmul.mubr.bf16.gmra.mrb[0].mxu0 %v2263
      %v6433 = vpop.f32.mrb[0].mxu0
      %v6434 = vadd.f32 0.0, %v6433
      %v6435 = vpop.f32.mrb[0].mxu0
      %v6436 = vpop.f32.mrb[0].mxu0
      %v6437 = vadd.f32 0.0, %v6436
      %v6438 = vpop.f32.mrb[0].mxu0
      %6439 = vdwg.mxu0
      %6440 = vmatprep.subr.bf16.mxu0 0
      %6441 = vmatpush1.bf16.msra.mxu0 %v3748
      %6442 = vmatprep.subr.bf16.mxu0 0
      %6443 = vmatpush1.bf16.msra.mxu0 %v3749
      %6444 = vmatprep.subr.bf16.mxu0 0
      %6445 = vmatpush1.bf16.msra.mxu0 %v3750
      %6446 = vmatprep.subr.bf16.mxu0 0
      %6447 = vmatpush1.bf16.msra.mxu0 %v3751
      %6448 = vmatprep.subr.bf16.mxu0 0
      %6449 = vmatpush1.bf16.msra.mxu0 %v3752
      %6450 = vmatprep.subr.bf16.mxu0 0
      %6451 = vmatpush1.bf16.msra.mxu0 %v3753
      %6452 = vmatprep.subr.bf16.mxu0 0
      %6453 = vmatpush1.bf16.msra.mxu0 %v3754
      %6454 = vmatprep.subr.bf16.mxu0 0
      %6455 = vmatpush1.bf16.msra.mxu0 %v3755
      %6456 = vmatprep.subr.bf16.mxu0 0
      %6457 = vmatpush1.bf16.msra.mxu0 0
      %6458 = vmatprep.subr.bf16.mxu0 0
      %6459 = vmatpush1.bf16.msra.mxu0 0
      %6460 = vmatprep.subr.bf16.mxu0 0
      %6461 = vmatpush1.bf16.msra.mxu0 0
      %6462 = vmatprep.subr.bf16.mxu0 0
      %6463 = vmatpush1.bf16.msra.mxu0 0
      %6464 = vmatprep.subr.bf16.mxu0 0
      %6465 = vmatpush1.bf16.msra.mxu0 0
      %6466 = vmatprep.subr.bf16.mxu0 0
      %6467 = vmatpush1.bf16.msra.mxu0 0
      %6468 = vmatprep.subr.bf16.mxu0 0
      %6469 = vmatpush1.bf16.msra.mxu0 0
      %6470 = vmatprep.subr.bf16.mxu0 0
      %6471 = vmatpush1.bf16.msra.mxu0 0
      %6472 = vmatprep.mubr.bf16.mxu0 0
      %6473 = vmatmul.mubr.bf16.gmra.mrb[0].mxu0 %v2267
      %v6474 = vpop.f32.mrb[0].mxu0
      %v6475 = vadd.f32 0.0, %v6474
      %v6476 = vpop.f32.mrb[0].mxu0
      %v6477 = vpop.f32.mrb[0].mxu0
      %v6478 = vadd.f32 0.0, %v6477
      %v6479 = vpop.f32.mrb[0].mxu0
      %6480 = vmatprep.mubr.bf16.mxu0 0
      %6481 = vmatmul.mubr.bf16.gmra.mrb[0].mxu0 %v2271
      %v6482 = vpop.f32.mrb[0].mxu0
      %v6483 = vadd.f32 0.0, %v6482
      %v6484 = vpop.f32.mrb[0].mxu0
      %v6485 = vpop.f32.mrb[0].mxu0
      %v6486 = vadd.f32 0.0, %v6485
      %v6487 = vpop.f32.mrb[0].mxu0
      %6488 = vdwg.mxu0
      %6489 = vmatprep.subr.bf16.mxu0 0
      %6490 = vmatpush1.bf16.msra.mxu0 %v3845
      %6491 = vmatprep.subr.bf16.mxu0 0
      %6492 = vmatpush1.bf16.msra.mxu0 %v3846
      %6493 = vmatprep.subr.bf16.mxu0 0
      %6494 = vmatpush1.bf16.msra.mxu0 %v3847
      %6495 = vmatprep.subr.bf16.mxu0 0
      %6496 = vmatpush1.bf16.msra.mxu0 %v3848
      %6497 = vmatprep.subr.bf16.mxu0 0
      %6498 = vmatpush1.bf16.msra.mxu0 %v3849
      %6499 = vmatprep.subr.bf16.mxu0 0
      %6500 = vmatpush1.bf16.msra.mxu0 %v3850
      %6501 = vmatprep.subr.bf16.mxu0 0
      %6502 = vmatpush1.bf16.msra.mxu0 %v3851
      %6503 = vmatprep.subr.bf16.mxu0 0
      %6504 = vmatpush1.bf16.msra.mxu0 %v3852
      %6505 = vmatprep.subr.bf16.mxu0 0
      %6506 = vmatpush1.bf16.msra.mxu0 0
      %6507 = vmatprep.subr.bf16.mxu0 0
      %6508 = vmatpush1.bf16.msra.mxu0 0
      %6509 = vmatprep.subr.bf16.mxu0 0
      %6510 = vmatpush1.bf16.msra.mxu0 0
      %6511 = vmatprep.subr.bf16.mxu0 0
      %6512 = vmatpush1.bf16.msra.mxu0 0
      %6513 = vmatprep.subr.bf16.mxu0 0
      %6514 = vmatpush1.bf16.msra.mxu0 0
      %6515 = vmatprep.subr.bf16.mxu0 0
      %6516 = vmatpush1.bf16.msra.mxu0 0
      %6517 = vmatprep.subr.bf16.mxu0 0
      %6518 = vmatpush1.bf16.msra.mxu0 0
      %6519 = vmatprep.subr.bf16.mxu0 0
      %6520 = vmatpush1.bf16.msra.mxu0 0
      %6521 = vmatprep.mubr.bf16.mxu0 0
      %6522 = vmatmul.mubr.bf16.gmra.mrb[0].mxu0 %v2275
      %v6523 = vpop.f32.mrb[0].mxu0
      %v6524 = vadd.f32 0.0, %v6523
      %v6525 = vpop.f32.mrb[0].mxu0
      %v6526 = vpop.f32.mrb[0].mxu0
      %v6527 = vadd.f32 0.0, %v6526
      %v6528 = vpop.f32.mrb[0].mxu0
      %6529 = vmatprep.mubr.bf16.mxu0 0
      %6530 = vmatmul.mubr.bf16.gmra.mrb[0].mxu0 %v2279
      %v6531 = vpop.f32.mrb[0].mxu0
      %v6532 = vadd.f32 0.0, %v6531
      %v6533 = vpop.f32.mrb[0].mxu0
      %v6534 = vpop.f32.mrb[0].mxu0
      %v6535 = vadd.f32 0.0, %v6534
      %v6536 = vpop.f32.mrb[0].mxu0
      %6537 = vdwg.mxu0
      %6538 = vmatprep.subr.bf16.mxu0 0
      %6539 = vmatpush1.bf16.msra.mxu0 %v3942
      %6540 = vmatprep.subr.bf16.mxu0 0
      %6541 = vmatpush1.bf16.msra.mxu0 %v3943
      %6542 = vmatprep.subr.bf16.mxu0 0
      %6543 = vmatpush1.bf16.msra.mxu0 %v3944
      %6544 = vmatprep.subr.bf16.mxu0 0
      %6545 = vmatpush1.bf16.msra.mxu0 %v3945
      %6546 = vmatprep.subr.bf16.mxu0 0
      %6547 = vmatpush1.bf16.msra.mxu0 %v3946
      %6548 = vmatprep.subr.bf16.mxu0 0
      %6549 = vmatpush1.bf16.msra.mxu0 %v3947
      %6550 = vmatprep.subr.bf16.mxu0 0
      %6551 = vmatpush1.bf16.msra.mxu0 %v3948
      %6552 = vmatprep.subr.bf16.mxu0 0
      %6553 = vmatpush1.bf16.msra.mxu0 %v3949
      %6554 = vmatprep.subr.bf16.mxu0 0
      %6555 = vmatpush1.bf16.msra.mxu0 0
      %6556 = vmatprep.subr.bf16.mxu0 0
      %6557 = vmatpush1.bf16.msra.mxu0 0
      %6558 = vmatprep.subr.bf16.mxu0 0
      %6559 = vmatpush1.bf16.msra.mxu0 0
      %6560 = vmatprep.subr.bf16.mxu0 0
      %6561 = vmatpush1.bf16.msra.mxu0 0
      %6562 = vmatprep.subr.bf16.mxu0 0
      %6563 = vmatpush1.bf16.msra.mxu0 0
      %6564 = vmatprep.subr.bf16.mxu0 0
      %6565 = vmatpush1.bf16.msra.mxu0 0
      %6566 = vmatprep.subr.bf16.mxu0 0
      %6567 = vmatpush1.bf16.msra.mxu0 0
      %6568 = vmatprep.subr.bf16.mxu0 0
      %6569 = vmatpush1.bf16.msra.mxu0 0
      %6570 = vmatprep.mubr.bf16.mxu0 0
      %6571 = vmatmul.mubr.bf16.gmra.mrb[0].mxu0 %v2283
      %v6572 = vpop.f32.mrb[0].mxu0
      %v6573 = vadd.f32 0.0, %v6572
      %v6574 = vpop.f32.mrb[0].mxu0
      %v6575 = vpop.f32.mrb[0].mxu0
      %v6576 = vadd.f32 0.0, %v6575
      %v6577 = vpop.f32.mrb[0].mxu0
      %6578 = vmatprep.mubr.bf16.mxu0 0
      %6579 = vmatmul.mubr.bf16.gmra.mrb[0].mxu0 %v2287
      %v6580 = vpop.f32.mrb[0].mxu0
      %v6581 = vadd.f32 0.0, %v6580
      %v6582 = vpop.f32.mrb[0].mxu0
      %v6583 = vpop.f32.mrb[0].mxu0
      %v6584 = vadd.f32 0.0, %v6583
      %v6585 = vpop.f32.mrb[0].mxu0
      %6586 = vdwg.mxu0
      %6587 = vmatprep.subr.bf16.mxu0 0
      %6588 = vmatpush1.bf16.msra.mxu0 %v4039
      %6589 = vmatprep.subr.bf16.mxu0 0
      %6590 = vmatpush1.bf16.msra.mxu0 %v4040
      %6591 = vmatprep.subr.bf16.mxu0 0
      %6592 = vmatpush1.bf16.msra.mxu0 %v4041
      %6593 = vmatprep.subr.bf16.mxu0 0
      %6594 = vmatpush1.bf16.msra.mxu0 %v4042
      %6595 = vmatprep.subr.bf16.mxu0 0
      %6596 = vmatpush1.bf16.msra.mxu0 %v4043
      %6597 = vmatprep.subr.bf16.mxu0 0
      %6598 = vmatpush1.bf16.msra.mxu0 %v4044
      %6599 = vmatprep.subr.bf16.mxu0 0
      %6600 = vmatpush1.bf16.msra.mxu0 %v4045
      %6601 = vmatprep.subr.bf16.mxu0 0
      %6602 = vmatpush1.bf16.msra.mxu0 %v4046
      %6603 = vmatprep.subr.bf16.mxu0 0
      %6604 = vmatpush1.bf16.msra.mxu0 0
      %6605 = vmatprep.subr.bf16.mxu0 0
      %6606 = vmatpush1.bf16.msra.mxu0 0
      %6607 = vmatprep.subr.bf16.mxu0 0
      %6608 = vmatpush1.bf16.msra.mxu0 0
      %6609 = vmatprep.subr.bf16.mxu0 0
      %6610 = vmatpush1.bf16.msra.mxu0 0
      %6611 = vmatprep.subr.bf16.mxu0 0
      %6612 = vmatpush1.bf16.msra.mxu0 0
      %6613 = vmatprep.subr.bf16.mxu0 0
      %6614 = vmatpush1.bf16.msra.mxu0 0
      %6615 = vmatprep.subr.bf16.mxu0 0
      %6616 = vmatpush1.bf16.msra.mxu0 0
      %6617 = vmatprep.subr.bf16.mxu0 0
      %6618 = vmatpush1.bf16.msra.mxu0 0
      %6619 = vmatprep.mubr.bf16.mxu0 0
      %6620 = vmatmul.mubr.bf16.gmra.mrb[0].mxu0 %v2291
      %v6621 = vpop.f32.mrb[0].mxu0
      %v6622 = vadd.f32 0.0, %v6621
      %v6623 = vpop.f32.mrb[0].mxu0
      %v6624 = vpop.f32.mrb[0].mxu0
      %v6625 = vadd.f32 0.0, %v6624
      %v6626 = vpop.f32.mrb[0].mxu0
      %6627 = vmatprep.mubr.bf16.mxu0 0
      %6628 = vmatmul.mubr.bf16.gmra.mrb[0].mxu0 %v2295
      %v6629 = vpop.f32.mrb[0].mxu0
      %v6630 = vadd.f32 0.0, %v6629
      %v6631 = vpop.f32.mrb[0].mxu0
      %v6632 = vpop.f32.mrb[0].mxu0
      %v6633 = vadd.f32 0.0, %v6632
      %v6634 = vpop.f32.mrb[0].mxu0
      %6635 = vdwg.mxu0
      %v6636 = vadd.f32 %v5887, %v5936
      %v6637 = vadd.f32 %v6636, %v5985
      %v6638 = vadd.f32 %v6637, %v6034
      %v6639 = vadd.f32 %v6638, %v6083
      %v6640 = vadd.f32 %v6639, %v6132
      %v6641 = vadd.f32 %v6640, %v6181
      %v6642 = vadd.f32 %v6641, %v6230
      %v6643 = vadd.f32 %v6642, %v6279
      %v6644 = vadd.f32 %v6643, %v6328
      %v6645 = vadd.f32 %v6644, %v6377
      %v6646 = vadd.f32 %v6645, %v6426
      %v6647 = vadd.f32 %v6646, %v6475
      %v6648 = vadd.f32 %v6647, %v6524
      %v6649 = vadd.f32 %v6648, %v6573
      %v6650 = vadd.f32 %v6649, %v6622
      %v6651 = vadd.f32 %v5890, %v5939
      %v6652 = vadd.f32 %v6651, %v5988
      %v6653 = vadd.f32 %v6652, %v6037
      %v6654 = vadd.f32 %v6653, %v6086
      %v6655 = vadd.f32 %v6654, %v6135
      %v6656 = vadd.f32 %v6655, %v6184
      %v6657 = vadd.f32 %v6656, %v6233
      %v6658 = vadd.f32 %v6657, %v6282
      %v6659 = vadd.f32 %v6658, %v6331
      %v6660 = vadd.f32 %v6659, %v6380
      %v6661 = vadd.f32 %v6660, %v6429
      %v6662 = vadd.f32 %v6661, %v6478
      %v6663 = vadd.f32 %v6662, %v6527
      %v6664 = vadd.f32 %v6663, %v6576
      %v6665 = vadd.f32 %v6664, %v6625
      %v6666 = vadd.f32 %v5895, %v5944
      %v6667 = vadd.f32 %v6666, %v5993
      %v6668 = vadd.f32 %v6667, %v6042
      %v6669 = vadd.f32 %v6668, %v6091
      %v6670 = vadd.f32 %v6669, %v6140
      %v6671 = vadd.f32 %v6670, %v6189
      %v6672 = vadd.f32 %v6671, %v6238
      %v6673 = vadd.f32 %v6672, %v6287
      %v6674 = vadd.f32 %v6673, %v6336
      %v6675 = vadd.f32 %v6674, %v6385
      %v6676 = vadd.f32 %v6675, %v6434
      %v6677 = vadd.f32 %v6676, %v6483
      %v6678 = vadd.f32 %v6677, %v6532
      %v6679 = vadd.f32 %v6678, %v6581
      %v6680 = vadd.f32 %v6679, %v6630
      %v6681 = vadd.f32 %v5898, %v5947
      %v6682 = vadd.f32 %v6681, %v5996
      %v6683 = vadd.f32 %v6682, %v6045
      %v6684 = vadd.f32 %v6683, %v6094
      %v6685 = vadd.f32 %v6684, %v6143
      %v6686 = vadd.f32 %v6685, %v6192
      %v6687 = vadd.f32 %v6686, %v6241
      %v6688 = vadd.f32 %v6687, %v6290
      %v6689 = vadd.f32 %v6688, %v6339
      %v6690 = vadd.f32 %v6689, %v6388
      %v6691 = vadd.f32 %v6690, %v6437
      %v6692 = vadd.f32 %v6691, %v6486
      %v6693 = vadd.f32 %v6692, %v6535
      %v6694 = vadd.f32 %v6693, %v6584
      %v6695 = vadd.f32 %v6694, %v6633
      %s6696 = scalar_lea.vmem %s6, 1
      %v6697 = vld [vmem:[%s6696] ss:$8 sm:$0xf]
      %v6699 = vlaneseq
      %v6700 = vshrl.u32 %v6699, 7
      %v6701 = vsub.s32 0, %v6700
      %v6702 = vrot.slane %v6697, %v6701
      %v6703 = vlaneseq
      %v6704 = vshrl.u32 %v6703, 7
      %v6705 = vsub.s32 1, %v6704
      %v6706 = vrot.slane %v6697, %v6705
      %v6707 = vlaneseq
      %v6708 = vshrl.u32 %v6707, 7
      %v6709 = vsub.s32 2, %v6708
      %v6710 = vrot.slane %v6697, %v6709
      %v6711 = vlaneseq
      %v6712 = vshrl.u32 %v6711, 7
      %v6713 = vsub.s32 3, %v6712
      %v6714 = vrot.slane %v6697, %v6713
      %v6719 = vadd.f32 %v4118, %v6702
      %v6720 = vadd.f32 %v4962, %v6706
      %v6721 = vadd.f32 %v5806, %v6710
      %v6722 = vadd.f32 %v6650, %v6714
      %v6723 = vadd.f32 %v4133, %v6702
      %v6724 = vadd.f32 %v4977, %v6706
      %v6725 = vadd.f32 %v5821, %v6710
      %v6726 = vadd.f32 %v6665, %v6714
      %v6727 = vadd.f32 %v4148, %v6702
      %v6728 = vadd.f32 %v4992, %v6706
      %v6729 = vadd.f32 %v5836, %v6710
      %v6730 = vadd.f32 %v6680, %v6714
      %v6731 = vadd.f32 %v4163, %v6702
      %v6732 = vadd.f32 %v5007, %v6706
      %v6733 = vadd.f32 %v5851, %v6710
      %v6734 = vadd.f32 %v6695, %v6714
      %v6735 = vmul.f32 %v6719, 0.2
      %v6736 = vmul.f32 %v6720, 0.2
      %v6737 = vmul.f32 %v6721, 0.2
      %v6738 = vmul.f32 %v6722, 0.2
      %v6739 = vmul.f32 %v6723, 0.2
      %v6740 = vmul.f32 %v6724, 0.2
      %v6741 = vmul.f32 %v6725, 0.2
      %v6742 = vmul.f32 %v6726, 0.2
      %v6743 = vmul.f32 %v6727, 0.2
      %v6744 = vmul.f32 %v6728, 0.2
      %v6745 = vmul.f32 %v6729, 0.2
      %v6746 = vmul.f32 %v6730, 0.2
      %v6747 = vmul.f32 %v6731, 0.2
      %v6748 = vmul.f32 %v6732, 0.2
      %v6749 = vmul.f32 %v6733, 0.2
      %v6750 = vmul.f32 %v6734, 0.2
      %v6751 = vmax.f32 %v6719, %v6735
      %v6752 = vmax.f32 %v6720, %v6736
      %v6753 = vmax.f32 %v6721, %v6737
      %v6754 = vmax.f32 %v6722, %v6738
      %v6755 = vmax.f32 %v6723, %v6739
      %v6756 = vmax.f32 %v6724, %v6740
      %v6757 = vmax.f32 %v6725, %v6741
      %v6758 = vmax.f32 %v6726, %v6742
      %v6759 = vmax.f32 %v6727, %v6743
      %v6760 = vmax.f32 %v6728, %v6744
      %v6761 = vmax.f32 %v6729, %v6745
      %v6762 = vmax.f32 %v6730, %v6746
      %v6763 = vmax.f32 %v6731, %v6747
      %v6764 = vmax.f32 %v6732, %v6748
      %v6765 = vmax.f32 %v6733, %v6749
      %v6766 = vmax.f32 %v6734, %v6750
      %v6767 = vld [vmem:[%s4] sm:$0xff]
      %v6768 = vld [vmem:[%s4 + $0x8] sm:$0xff]
      %v6769 = vld [vmem:[%s4 + $0x10] sm:$0xff]
      %v6770 = vld [vmem:[%s4 + $0x18] sm:$0xff]
      %v6771 = vld [vmem:[%s4 + $0x20] sm:$0xff]
      %v6772 = vld [vmem:[%s4 + $0x28] sm:$0xff]
      %v6773 = vld [vmem:[%s4 + $0x30] sm:$0xff]
      %v6774 = vld [vmem:[%s4 + $0x38] sm:$0xff]
      %v6775 = vld [vmem:[%s4 + $0x40] sm:$0xff]
      %v6776 = vld [vmem:[%s4 + $0x48] sm:$0xff]
      %v6777 = vld [vmem:[%s4 + $0x50] sm:$0xff]
      %v6778 = vld [vmem:[%s4 + $0x58] sm:$0xff]
      %v6779 = vld [vmem:[%s4 + $0x60] sm:$0xff]
      %v6780 = vld [vmem:[%s4 + $0x68] sm:$0xff]
      %v6781 = vld [vmem:[%s4 + $0x70] sm:$0xff]
      %v6782 = vld [vmem:[%s4 + $0x78] sm:$0xff]
      %v6783 = vmul.f32 %v6751, %v6767
      %v6784 = vmul.f32 %v6752, %v6768
      %v6785 = vmul.f32 %v6753, %v6769
      %v6786 = vmul.f32 %v6754, %v6770
      %v6787 = vmul.f32 %v6755, %v6771
      %v6788 = vmul.f32 %v6756, %v6772
      %v6789 = vmul.f32 %v6757, %v6773
      %v6790 = vmul.f32 %v6758, %v6774
      %v6791 = vmul.f32 %v6759, %v6775
      %v6792 = vmul.f32 %v6760, %v6776
      %v6793 = vmul.f32 %v6761, %v6777
      %v6794 = vmul.f32 %v6762, %v6778
      %v6795 = vmul.f32 %v6763, %v6779
      %v6796 = vmul.f32 %v6764, %v6780
      %v6797 = vmul.f32 %v6765, %v6781
      %v6798 = vmul.f32 %v6766, %v6782
      %v6799 = vpack.c.bf16 %v6787, %v6783
      %v6800 = vpack.c.bf16 %v6788, %v6784
      %v6801 = vpack.c.bf16 %v6789, %v6785
      %v6802 = vpack.c.bf16 %v6790, %v6786
      %v6803 = vpack.c.bf16 %v6795, %v6791
      %v6804 = vpack.c.bf16 %v6796, %v6792
      %v6805 = vpack.c.bf16 %v6797, %v6793
      %v6806 = vpack.c.bf16 %v6798, %v6794
      %v6807 = vld [vmem:[%s5] sm:$0xf]
      %v6808 = vld [vmem:[%s5 + $0x4] sm:$0xf]
      %v6809 = vld [vmem:[%s5 + $0x8] sm:$0xf]
      %v6810 = vld [vmem:[%s5 + $0xc] sm:$0xf]
      %v6811 = vld [vmem:[%s5 + $0x10] sm:$0xf]
      %v6812 = vld [vmem:[%s5 + $0x14] sm:$0xf]
      %v6813 = vld [vmem:[%s5 + $0x18] sm:$0xf]
      %v6814 = vld [vmem:[%s5 + $0x1c] sm:$0xf]
      %v6815 = vld [vmem:[%s5 + $0x20] sm:$0xf]
      %v6816 = vld [vmem:[%s5 + $0x24] sm:$0xf]
      %v6817 = vld [vmem:[%s5 + $0x28] sm:$0xf]
      %v6818 = vld [vmem:[%s5 + $0x2c] sm:$0xf]
      %v6819 = vld [vmem:[%s5 + $0x30] sm:$0xf]
      %v6820 = vld [vmem:[%s5 + $0x34] sm:$0xf]
      %v6821 = vld [vmem:[%s5 + $0x38] sm:$0xf]
      %v6822 = vld [vmem:[%s5 + $0x3c] sm:$0xf]
      %v6823 = vld [vmem:[%s5 + $0x40] sm:$0xf]
      %v6824 = vld [vmem:[%s5 + $0x44] sm:$0xf]
      %v6825 = vld [vmem:[%s5 + $0x48] sm:$0xf]
      %v6826 = vld [vmem:[%s5 + $0x4c] sm:$0xf]
      %v6827 = vld [vmem:[%s5 + $0x50] sm:$0xf]
      %v6828 = vld [vmem:[%s5 + $0x54] sm:$0xf]
      %v6829 = vld [vmem:[%s5 + $0x58] sm:$0xf]
      %v6830 = vld [vmem:[%s5 + $0x5c] sm:$0xf]
      %v6831 = vld [vmem:[%s5 + $0x60] sm:$0xf]
      %v6832 = vld [vmem:[%s5 + $0x64] sm:$0xf]
      %v6833 = vld [vmem:[%s5 + $0x68] sm:$0xf]
      %v6834 = vld [vmem:[%s5 + $0x6c] sm:$0xf]
      %v6835 = vld [vmem:[%s5 + $0x70] sm:$0xf]
      %v6836 = vld [vmem:[%s5 + $0x74] sm:$0xf]
      %v6837 = vld [vmem:[%s5 + $0x78] sm:$0xf]
      %v6838 = vld [vmem:[%s5 + $0x7c] sm:$0xf]
      %v6839 = vld [vmem:[%s5 + $0x80] sm:$0xf]
      %v6840 = vld [vmem:[%s5 + $0x84] sm:$0xf]
      %v6841 = vld [vmem:[%s5 + $0x88] sm:$0xf]
      %v6842 = vld [vmem:[%s5 + $0x8c] sm:$0xf]
      %v6843 = vld [vmem:[%s5 + $0x90] sm:$0xf]
      %v6844 = vld [vmem:[%s5 + $0x94] sm:$0xf]
      %v6845 = vld [vmem:[%s5 + $0x98] sm:$0xf]
      %v6846 = vld [vmem:[%s5 + $0x9c] sm:$0xf]
      %v6847 = vld [vmem:[%s5 + $0xa0] sm:$0xf]
      %v6848 = vld [vmem:[%s5 + $0xa4] sm:$0xf]
      %v6849 = vld [vmem:[%s5 + $0xa8] sm:$0xf]
      %v6850 = vld [vmem:[%s5 + $0xac] sm:$0xf]
      %v6851 = vld [vmem:[%s5 + $0xb0] sm:$0xf]
      %v6852 = vld [vmem:[%s5 + $0xb4] sm:$0xf]
      %v6853 = vld [vmem:[%s5 + $0xb8] sm:$0xf]
      %v6854 = vld [vmem:[%s5 + $0xbc] sm:$0xf]
      %v6855 = vld [vmem:[%s5 + $0xc0] sm:$0xf]
      %v6856 = vld [vmem:[%s5 + $0xc4] sm:$0xf]
      %v6857 = vld [vmem:[%s5 + $0xc8] sm:$0xf]
      %v6858 = vld [vmem:[%s5 + $0xcc] sm:$0xf]
      %v6859 = vld [vmem:[%s5 + $0xd0] sm:$0xf]
      %v6860 = vld [vmem:[%s5 + $0xd4] sm:$0xf]
      %v6861 = vld [vmem:[%s5 + $0xd8] sm:$0xf]
      %v6862 = vld [vmem:[%s5 + $0xdc] sm:$0xf]
      %v6863 = vld [vmem:[%s5 + $0xe0] sm:$0xf]
      %v6864 = vld [vmem:[%s5 + $0xe4] sm:$0xf]
      %v6865 = vld [vmem:[%s5 + $0xe8] sm:$0xf]
      %v6866 = vld [vmem:[%s5 + $0xec] sm:$0xf]
      %v6867 = vld [vmem:[%s5 + $0xf0] sm:$0xf]
      %v6868 = vld [vmem:[%s5 + $0xf4] sm:$0xf]
      %v6869 = vld [vmem:[%s5 + $0xf8] sm:$0xf]
      %v6870 = vld [vmem:[%s5 + $0xfc] sm:$0xf]
      %v6935 = vunpack.c.l.b16 %v6807
      %v6936 = vunpack.c.l.b16 %v6808
      %v6937 = vunpack.c.l.b16 %v6809
      %v6938 = vunpack.c.l.b16 %v6810
      %v6939 = vunpack.c.l.b16 %v6811
      %v6940 = vunpack.c.l.b16 %v6812
      %v6941 = vunpack.c.l.b16 %v6813
      %v6942 = vunpack.c.l.b16 %v6814
      %v6943 = vunpack.c.l.b16 %v6815
      %v6944 = vunpack.c.l.b16 %v6816
      %v6945 = vunpack.c.l.b16 %v6817
      %v6946 = vunpack.c.l.b16 %v6818
      %v6947 = vunpack.c.l.b16 %v6819
      %v6948 = vunpack.c.l.b16 %v6820
      %v6949 = vunpack.c.l.b16 %v6821
      %v6950 = vunpack.c.l.b16 %v6822
      %v6951 = vunpack.c.l.b16 %v6823
      %v6952 = vunpack.c.l.b16 %v6824
      %v6953 = vunpack.c.l.b16 %v6825
      %v6954 = vunpack.c.l.b16 %v6826
      %v6955 = vunpack.c.l.b16 %v6827
      %v6956 = vunpack.c.l.b16 %v6828
      %v6957 = vunpack.c.l.b16 %v6829
      %v6958 = vunpack.c.l.b16 %v6830
      %v6959 = vunpack.c.l.b16 %v6831
      %v6960 = vunpack.c.l.b16 %v6832
      %v6961 = vunpack.c.l.b16 %v6833
      %v6962 = vunpack.c.l.b16 %v6834
      %v6963 = vunpack.c.l.b16 %v6835
      %v6964 = vunpack.c.l.b16 %v6836
      %v6965 = vunpack.c.l.b16 %v6837
      %v6966 = vunpack.c.l.b16 %v6838
      %v6967 = vunpack.c.l.b16 %v6839
      %v6968 = vunpack.c.l.b16 %v6840
      %v6969 = vunpack.c.l.b16 %v6841
      %v6970 = vunpack.c.l.b16 %v6842
      %v6971 = vunpack.c.l.b16 %v6843
      %v6972 = vunpack.c.l.b16 %v6844
      %v6973 = vunpack.c.l.b16 %v6845
      %v6974 = vunpack.c.l.b16 %v6846
      %v6975 = vunpack.c.l.b16 %v6847
      %v6976 = vunpack.c.l.b16 %v6848
      %v6977 = vunpack.c.l.b16 %v6849
      %v6978 = vunpack.c.l.b16 %v6850
      %v6979 = vunpack.c.l.b16 %v6851
      %v6980 = vunpack.c.l.b16 %v6852
      %v6981 = vunpack.c.l.b16 %v6853
      %v6982 = vunpack.c.l.b16 %v6854
      %v6983 = vunpack.c.l.b16 %v6855
      %v6984 = vunpack.c.l.b16 %v6856
      %v6985 = vunpack.c.l.b16 %v6857
      %v6986 = vunpack.c.l.b16 %v6858
      %v6987 = vunpack.c.l.b16 %v6859
      %v6988 = vunpack.c.l.b16 %v6860
      %v6989 = vunpack.c.l.b16 %v6861
      %v6990 = vunpack.c.l.b16 %v6862
      %v6991 = vunpack.c.l.b16 %v6863
      %v6992 = vunpack.c.l.b16 %v6864
      %v6993 = vunpack.c.l.b16 %v6865
      %v6994 = vunpack.c.l.b16 %v6866
      %v6995 = vunpack.c.l.b16 %v6867
      %v6996 = vunpack.c.l.b16 %v6868
      %v6997 = vunpack.c.l.b16 %v6869
      %v6998 = vunpack.c.l.b16 %v6870
      %v6999 = vpack.c.b16 %v6936, %v6935
      %v7000 = vpack.c.b16 %v6938, %v6937
      %v7001 = vpack.c.b16 %v6940, %v6939
      %v7002 = vpack.c.b16 %v6942, %v6941
      %v7003 = vpack.c.b16 %v6944, %v6943
      %v7004 = vpack.c.b16 %v6946, %v6945
      %v7005 = vpack.c.b16 %v6948, %v6947
      %v7006 = vpack.c.b16 %v6950, %v6949
      %v7007 = vpack.c.b16 %v6952, %v6951
      %v7008 = vpack.c.b16 %v6954, %v6953
      %v7009 = vpack.c.b16 %v6956, %v6955
      %v7010 = vpack.c.b16 %v6958, %v6957
      %v7011 = vpack.c.b16 %v6960, %v6959
      %v7012 = vpack.c.b16 %v6962, %v6961
      %v7013 = vpack.c.b16 %v6964, %v6963
      %v7014 = vpack.c.b16 %v6966, %v6965
      %v7015 = vpack.c.b16 %v6968, %v6967
      %v7016 = vpack.c.b16 %v6970, %v6969
      %v7017 = vpack.c.b16 %v6972, %v6971
      %v7018 = vpack.c.b16 %v6974, %v6973
      %v7019 = vpack.c.b16 %v6976, %v6975
      %v7020 = vpack.c.b16 %v6978, %v6977
      %v7021 = vpack.c.b16 %v6980, %v6979
      %v7022 = vpack.c.b16 %v6982, %v6981
      %v7023 = vpack.c.b16 %v6984, %v6983
      %v7024 = vpack.c.b16 %v6986, %v6985
      %v7025 = vpack.c.b16 %v6988, %v6987
      %v7026 = vpack.c.b16 %v6990, %v6989
      %v7027 = vpack.c.b16 %v6992, %v6991
      %v7028 = vpack.c.b16 %v6994, %v6993
      %v7029 = vpack.c.b16 %v6996, %v6995
      %v7030 = vpack.c.b16 %v6998, %v6997
      %7063 = vmatprep.subr.bf16.mxu0 0
      %7064 = vmatpush1.bf16.msra.mxu0 %v6999
      %7065 = vmatprep.subr.bf16.mxu0 0
      %7066 = vmatpush1.bf16.msra.mxu0 %v7000
      %7067 = vmatprep.subr.bf16.mxu0 0
      %7068 = vmatpush1.bf16.msra.mxu0 %v7001
      %7069 = vmatprep.subr.bf16.mxu0 0
      %7070 = vmatpush1.bf16.msra.mxu0 %v7002
      %7071 = vmatprep.subr.bf16.mxu0 0
      %7072 = vmatpush1.bf16.msra.mxu0 %v7003
      %7073 = vmatprep.subr.bf16.mxu0 0
      %7074 = vmatpush1.bf16.msra.mxu0 %v7004
      %7075 = vmatprep.subr.bf16.mxu0 0
      %7076 = vmatpush1.bf16.msra.mxu0 %v7005
      %7077 = vmatprep.subr.bf16.mxu0 0
      %7078 = vmatpush1.bf16.msra.mxu0 %v7006
      %7079 = vmatprep.subr.bf16.mxu0 0
      %7080 = vmatpush1.bf16.msra.mxu0 %v7007
      %7081 = vmatprep.subr.bf16.mxu0 0
      %7082 = vmatpush1.bf16.msra.mxu0 %v7008
      %7083 = vmatprep.subr.bf16.mxu0 0
      %7084 = vmatpush1.bf16.msra.mxu0 %v7009
      %7085 = vmatprep.subr.bf16.mxu0 0
      %7086 = vmatpush1.bf16.msra.mxu0 %v7010
      %7087 = vmatprep.subr.bf16.mxu0 0
      %7088 = vmatpush1.bf16.msra.mxu0 %v7011
      %7089 = vmatprep.subr.bf16.mxu0 0
      %7090 = vmatpush1.bf16.msra.mxu0 %v7012
      %7091 = vmatprep.subr.bf16.mxu0 0
      %7092 = vmatpush1.bf16.msra.mxu0 %v7013
      %7093 = vmatprep.subr.bf16.mxu0 0
      %7094 = vmatpush1.bf16.msra.mxu0 %v7014
      %7095 = vmatprep.mubr.bf16.mxu0 %v6800
      %7096 = vmatmul.mubr.bf16.gmra.mrb[0].mxu0 %v6799
      %v7097 = vpop.f32.mrb[0].mxu0
      %v7098 = vadd.f32 0.0, %v7097
      %v7099 = vpop.f32.mrb[0].mxu0
      %v7100 = vpop.f32.mrb[0].mxu0
      %v7101 = vadd.f32 0.0, %v7100
      %v7102 = vpop.f32.mrb[0].mxu0
      %7103 = vmatprep.mubr.bf16.mxu0 %v6804
      %7104 = vmatmul.mubr.bf16.gmra.mrb[0].mxu0 %v6803
      %v7105 = vpop.f32.mrb[0].mxu0
      %v7106 = vadd.f32 0.0, %v7105
      %v7107 = vpop.f32.mrb[0].mxu0
      %v7108 = vpop.f32.mrb[0].mxu0
      %v7109 = vadd.f32 0.0, %v7108
      %v7110 = vpop.f32.mrb[0].mxu0
      %7111 = vdwg.mxu0
      %7112 = vmatprep.subr.bf16.mxu0 0
      %7113 = vmatpush1.bf16.msra.mxu0 %v7015
      %7114 = vmatprep.subr.bf16.mxu0 0
      %7115 = vmatpush1.bf16.msra.mxu0 %v7016
      %7116 = vmatprep.subr.bf16.mxu0 0
      %7117 = vmatpush1.bf16.msra.mxu0 %v7017
      %7118 = vmatprep.subr.bf16.mxu0 0
      %7119 = vmatpush1.bf16.msra.mxu0 %v7018
      %7120 = vmatprep.subr.bf16.mxu0 0
      %7121 = vmatpush1.bf16.msra.mxu0 %v7019
      %7122 = vmatprep.subr.bf16.mxu0 0
      %7123 = vmatpush1.bf16.msra.mxu0 %v7020
      %7124 = vmatprep.subr.bf16.mxu0 0
      %7125 = vmatpush1.bf16.msra.mxu0 %v7021
      %7126 = vmatprep.subr.bf16.mxu0 0
      %7127 = vmatpush1.bf16.msra.mxu0 %v7022
      %7128 = vmatprep.subr.bf16.mxu0 0
      %7129 = vmatpush1.bf16.msra.mxu0 %v7023
      %7130 = vmatprep.subr.bf16.mxu0 0
      %7131 = vmatpush1.bf16.msra.mxu0 %v7024
      %7132 = vmatprep.subr.bf16.mxu0 0
      %7133 = vmatpush1.bf16.msra.mxu0 %v7025
      %7134 = vmatprep.subr.bf16.mxu0 0
      %7135 = vmatpush1.bf16.msra.mxu0 %v7026
      %7136 = vmatprep.subr.bf16.mxu0 0
      %7137 = vmatpush1.bf16.msra.mxu0 %v7027
      %7138 = vmatprep.subr.bf16.mxu0 0
      %7139 = vmatpush1.bf16.msra.mxu0 %v7028
      %7140 = vmatprep.subr.bf16.mxu0 0
      %7141 = vmatpush1.bf16.msra.mxu0 %v7029
      %7142 = vmatprep.subr.bf16.mxu0 0
      %7143 = vmatpush1.bf16.msra.mxu0 %v7030
      %7144 = vmatprep.mubr.bf16.mxu0 %v6802
      %7145 = vmatmul.mubr.bf16.gmra.mrb[0].mxu0 %v6801
      %v7146 = vpop.f32.mrb[0].mxu0
      %v7147 = vadd.f32 %v7098, %v7146
      %v7148 = vpop.f32.mrb[0].mxu0
      %v7149 = vpop.f32.mrb[0].mxu0
      %v7150 = vadd.f32 %v7101, %v7149
      %v7151 = vpop.f32.mrb[0].mxu0
      %7152 = vmatprep.mubr.bf16.mxu0 %v6806
      %7153 = vmatmul.mubr.bf16.gmra.mrb[0].mxu0 %v6805
      %v7154 = vpop.f32.mrb[0].mxu0
      %v7155 = vadd.f32 %v7106, %v7154
      %v7156 = vpop.f32.mrb[0].mxu0
      %v7157 = vpop.f32.mrb[0].mxu0
      %v7158 = vadd.f32 %v7109, %v7157
      %v7159 = vpop.f32.mrb[0].mxu0
      %7160 = vdwg.mxu0
      %v7161 = vadd.f32 %v7147, %v7150
      %v7162 = vadd.f32 %v7161, %v7155
      %v7163 = vadd.f32 %v7162, %v7158
      %v7164 = vrot.slane %v7163, 4
      %v7165 = vadd.f32 %v7163, %v7164
      %v7166 = vrot.slane %v7165, 2
      %v7167 = vadd.f32 %v7165, %v7166
      %v7168 = vrot.slane %v7167, 1
      %v7169 = vadd.f32 %v7167, %v7168
      %v7170 = vld [vmem:[%s6 + $0x2] ss:$0 sm:$0xff]
      %7172 = vset.pattern.permute.xlu0 0
      %7173 = vperm.xlu0 %7172, %v7170
      %v7174 = vpop.permute.xlu0 %7173
      %v7176 = vadd.f32 %v7169, %v7174
      %7177 = vst [vmem:[%s276] sm:$0xff] %v7176
      %p7178 = scmp.lt.s32.totalorder %s18, 1
      %s7179 = scalar_select %p7178, %s18, 1
      %s7180 = smul.addr %s7179, 8
      %s7181 = scalar_lea.vmem %s7, %s7180
      // Predicated region
      $region49: #{discriminator_forward.1} parent=47 // pred_check
        %p7182 = pneg %p188
      $region50: #{discriminator_forward.1} parent=47 // pred_check_branch
        %7184 = sbr.rel (%p7182) target = $region52
      $region51: #{discriminator_forward.1} parent=47 // pred_region
        _
      $region52: #{discriminator_forward.1} parent=47 // pred_fallthru
        _
    $region48: #{discriminator_forward.1} parent=5 // pred_fallthru
      _
    %p7185 = scmp.le.s32.totalorder 2, %s13
    // Predicated region
    $region53: #{discriminator_forward.1} parent=5 // pred_check
      %p7186 = pneg %p7185
    $region54: #{discriminator_forward.1} parent=5 // pred_check_branch
      %7188 = sbr.rel (%p7186) target = $region56
    $region55: #{discriminator_forward.1} parent=5 // pred_region
      %s7189 = ssub.s32 %s13, 2
      // Predicated region
      $region57: #{discriminator_forward.1} parent=55 // pred_check
        %p7190 = pneg %p194
      $region58: #{discriminator_forward.1} parent=55 // pred_check_branch
        %7192 = sbr.rel (%p7190) target = $region60
      $region59: #{discriminator_forward.1} parent=55 // pred_region
        %p7193 = scmp.lt.s32.totalorder %s19, 1
        %s7194 = scalar_select %p7193, %s19, 1
        %s7195 = smul.addr %s7194, 8
        %s7196 = scalar_lea.vmem %s7, %s7195
      $region60: #{discriminator_forward.1} parent=55 // pred_fallthru
        _
    $region56: #{discriminator_forward.1} parent=5 // pred_fallthru
      _
  $region6: #{discriminator_forward.1} parent=0 // loop_footer
    %s17 = sadd.s32 1, %s13
  $region7: #{discriminator_forward.1} parent=0 // loop_footer_branch
    %12 = sbr.rel target = $region3
  $region8: #{discriminator_forward.1} parent=0 // loop_exit
    _

</llo_original>
